<compile_context>
chip_gen: v5e
topology: v5e:2x2
jax: 0.10.0
libtpu: 0.0.40
codegen_flags: <defaults>
</compile_context>

<pallas_src>
import jax
import jax.numpy as jnp
from jax.experimental import pallas as pl
from jax.experimental.pallas import tpu as pltpu


def ctr_attention_kernel(e_ref, a_ref, d_ref, o_ref):
    # e_ref: [L, D]       candidate embeddings (rows 1..loc_max of the table)
    # a_ref: [Bn, D, M]   self_attn block, M=100 lane-dense
    # d_ref: [Bn, L, M]   sum_K(self_delta)^T with the value weight folded in
    # o_ref: [Bn, L]      output block (no size-1 dims)
    #
    #   out[b, l] = sum_{m,d} w[m] * delta[b, l, m] * E[l, d] * A[b, m, d]
    #             = sum_d E[l, d] * ( sum_m (w*delta)[b, l, m] * A_t[b, d, m] )
    #
    # Inner contraction over m: flash-style batched MXU matmul (batch dim on
    # both operands, contracting the shared minor/lane dim).  E then enters via
    # an elementwise multiply (implicit broadcast over the leading batch dim
    # only) and a lane reduction -- no materialized broadcast_to, no matvec.
    t = jnp.einsum('blm,bdm->bld', d_ref[...], a_ref[...],
                   preferred_element_type=jnp.float32)          # [Bn, L, D]
    out = jnp.sum(t * e_ref[...], axis=-1)                      # [Bn, L]
    o_ref[...] = out.astype(o_ref.dtype)


def ctr_attention(self_attn, self_delta, emb_weight, value_w, loc_max,
                  block_n=128):
    N, M, D = self_attn.shape
    _, M2, L, K = self_delta.shape
    assert M2 == M and L == loc_max

    # ---- wrapper glue (plain XLA, not the hot path) -------------------------
    # Lane-dense layouts: M=100 on the minor (lane) dim of both big streams.
    a_t = jnp.swapaxes(self_attn, -1, -2)                       # [N, D, M]
    # torch.sum(self_delta, -1).transpose(-1, -2), with the value-layer weight
    # (nn.Linear(100, 1, bias=False)) folded in for free.
    dw = jnp.swapaxes(jnp.sum(self_delta, -1), -1, -2) * value_w.reshape(-1)  # [N, L, M]
    # torch.linspace(1, loc_max, loc_max).long() == ids 1..loc_max -> static
    # slice of the embedding table (batch-invariant, read once per grid step).
    emb_cand = emb_weight[1:loc_max + 1]                        # [L, D]

    # ---- batch blocking: no padding; ragged tail handled by Pallas ----------
    Bn = min(block_n, N)
    if Bn < N:
        Bn = max(8, (Bn // 8) * 8)        # keep the output block sublane-aligned
    grid = (pl.cdiv(N, Bn),)

    out = pl.pallas_call(
        ctr_attention_kernel,
        out_shape=jax.ShapeDtypeStruct((N, L), jnp.float32),
        grid=grid,
        in_specs=[
            pl.BlockSpec((L, D), lambda i: (0, 0)),             # shared E
            pl.BlockSpec((Bn, D, M), lambda i: (i, 0, 0)),      # self_attn^T block
            pl.BlockSpec((Bn, L, M), lambda i: (i, 0, 0)),      # weighted delta block
        ],
        out_specs=pl.BlockSpec((Bn, L), lambda i: (i, 0)),
        compiler_params=pltpu.CompilerParams(
            dimension_semantics=("parallel",),                  # shard batch blocks over TCs
            vmem_limit_bytes=32 * 1024 * 1024),
    )(emb_cand, a_t, dw)
    return out


def ctr_attention_ref(self_attn, self_delta, emb_weight, value_w, loc_max):
    # Pure-JAX reference mirroring the PyTorch forward exactly.
    dsum = jnp.sum(self_delta, -1)                              # [N, M, L]
    delta_t = jnp.swapaxes(dsum, -1, -2)                        # [N, L, M]
    N = self_attn.shape[0]
    D = emb_weight.shape[1]
    emb_cand = jnp.broadcast_to(emb_weight[1:loc_max + 1], (N, loc_max, D))
    attn = jnp.einsum('nld,nmd->nlm', emb_cand, self_attn) * delta_t
    return jnp.einsum('nlm,m->nl', attn, value_w[0])            # [N, L]


if __name__ == "__main__":
    # M = 100 is fixed by nn.Linear(100, 1); loc_max kept small (L = 16).
    # N = 256 with the default block_n = 128 gives a 2-step "parallel" grid
    # (both v7x TensorCores busy) with full, evenly divided blocks.
    N, M, D, K = 256, 100, 32, 4
    loc_max = 16
    L = loc_max

    key = jax.random.PRNGKey(0)
    k1, k2, k3, k4 = jax.random.split(key, 4)

    self_attn = jax.random.normal(k1, (N, M, D), dtype=jnp.float32)
    self_delta = jax.random.normal(k2, (N, M, L, K), dtype=jnp.float32)
    emb_weight = jax.random.normal(k3, (loc_max + 1, D), dtype=jnp.float32) * 0.1  # emb_loc table
    value_w = jax.random.normal(k4, (1, M), dtype=jnp.float32) * 0.1                # Linear(100,1).weight
    traj_len = jnp.full((N,), M, dtype=jnp.int32)  # unused by forward (signature parity)

    out = ctr_attention(self_attn, self_delta, emb_weight, value_w, loc_max)
    out = jax.block_until_ready(out)

    ref = ctr_attention_ref(self_attn, self_delta, emb_weight, value_w, loc_max)
    assert out.shape == (N, L)
    assert jnp.allclose(out, ref, atol=1e-3, rtol=1e-3), "mismatch vs reference"

    print("KERNEL_OK")
</pallas_src>

<mosaic_0001>
module attributes {stable_mosaic.version = 11 : i64} {
  func.func @ctr_attention_kernel(%arg0: i32, %arg1: memref<16x32xf32, #tpu.memory_space<vmem>>, %arg2: memref<128x32x100xf32, #tpu.memory_space<vmem>>, %arg3: memref<128x16x100xf32, #tpu.memory_space<vmem>>, %arg4: memref<128x16xf32, #tpu.memory_space<vmem>>) attributes {dimension_semantics = [#tpu.dimension_semantics<parallel>], iteration_bounds = array<i64: 2>, scalar_prefetch = 0 : i64, scratch_operands = 0 : i64, tpu.core_type = #tpu.core_type<tc>, window_params = [{pipeline_mode = #tpu.pipeline_mode<synchronous>, transform_indices = @transform_0, window_bounds = array<i64: 16, 32>}, {transform_indices = @transform_1, window_bounds = array<i64: 128, 32, 100>}, {transform_indices = @transform_2, window_bounds = array<i64: 128, 16, 100>}, {transform_indices = @transform_3, window_bounds = array<i64: 128, 16>}]} {
    %c0 = arith.constant 0 : index
    %c0_0 = arith.constant 0 : index
    %c0_1 = arith.constant 0 : index
    %0 = vector.load %arg3[%c0, %c0_0, %c0_1] : memref<128x16x100xf32, #tpu.memory_space<vmem>>, vector<128x16x100xf32>
    %c0_2 = arith.constant 0 : index
    %c0_3 = arith.constant 0 : index
    %c0_4 = arith.constant 0 : index
    %1 = vector.load %arg2[%c0_2, %c0_3, %c0_4] : memref<128x32x100xf32, #tpu.memory_space<vmem>>, vector<128x32x100xf32>
    "tpu.trace_start"() <{level = 10 : i32, message = "blm,bdm->bld"}> : () -> ()
    %cst = arith.constant dense<0.000000e+00> : vector<128x16x32xf32>
    %2 = tpu.matmul %0, %1, %cst {dimension_numbers = #tpu.dot_dimension_numbers<[2], [2], [1], [1], [0, 0, 0, 1, 1, 1], [0], [0]>} : vector<128x16x100xf32>, vector<128x32x100xf32>, vector<128x16x32xf32> -> vector<128x16x32xf32>
    "tpu.trace_stop"() : () -> ()
    %c0_5 = arith.constant 0 : index
    %c0_6 = arith.constant 0 : index
    %3 = vector.load %arg1[%c0_5, %c0_6] : memref<16x32xf32, #tpu.memory_space<vmem>>, vector<16x32xf32>
    %4 = vector.shape_cast %3 : vector<16x32xf32> to vector<1x16x32xf32>
    %5 = vector.broadcast %4 : vector<1x16x32xf32> to vector<128x16x32xf32>
    %6 = arith.mulf %2, %5 : vector<128x16x32xf32>
    %cst_7 = arith.constant dense<0.000000e+00> : vector<128x16xf32>
    %7 = vector.multi_reduction <add>, %6, %cst_7 [2] : vector<128x16x32xf32> to vector<128x16xf32>
    %c0_8 = arith.constant 0 : index
    %c0_9 = arith.constant 0 : index
    %8 = vector.load %arg4[%c0_8, %c0_9] : memref<128x16xf32, #tpu.memory_space<vmem>>, vector<128x16xf32>
    tpu.vector_store %arg4[%c0_8, %c0_9], %7 {strides = array<i32>} : memref<128x16xf32, #tpu.memory_space<vmem>>, vector<128x16xf32>,
    return
  }
  func.func @transform_0(%arg0: i32) -> (i32, i32) {
    %c0_i32 = arith.constant 0 : i32
    %c0_i32_0 = arith.constant 0 : i32
    %c0_i32_1 = arith.constant 0 : i32
    return %c0_i32, %c0_i32_0 : i32, i32
  }
  func.func @transform_1(%arg0: i32) -> (i32, i32, i32) {
    %c0_i32 = arith.constant 0 : i32
    %c0_i32_0 = arith.constant 0 : i32
    %c0_i32_1 = arith.constant 0 : i32
    return %arg0, %c0_i32, %c0_i32_0 : i32, i32, i32
  }
  func.func @transform_2(%arg0: i32) -> (i32, i32, i32) {
    %c0_i32 = arith.constant 0 : i32
    %c0_i32_0 = arith.constant 0 : i32
    %c0_i32_1 = arith.constant 0 : i32
    return %arg0, %c0_i32, %c0_i32_0 : i32, i32, i32
  }
  func.func @transform_3(%arg0: i32) -> (i32, i32) {
    %c0_i32 = arith.constant 0 : i32
    %c0_i32_0 = arith.constant 0 : i32
    return %arg0, %c0_i32 : i32, i32
  }
}

</mosaic_0001>

<llo_original>
// kernel: tpu_custom_call.1
$region0: #{tpu_custom_call.1}
  #allocation0 [shape = 'u32[]', space=smem, size = 0x4, offset = 0x4, fixed_abs, tag = 'smem constant byte address 0x4 - core index']
  #allocation1 [shape = 'u32[72,128]{1,0:T(1,128)}', space=vmem, size = 0x9000, scoped, tag = 'internal scratch']
  %s0 = inlined_call_operand.vmem [shape: f32[16,32], index: 0, kind: input, shape index: {}]
  %s1 = inlined_call_operand.vmem [shape: f32[256,32,100], index: 1, kind: input, shape index: {}]
  %s2 = inlined_call_operand.vmem [shape: f32[256,16,100], index: 2, kind: input, shape index: {}]
  %s3 = inlined_call_operand.vmem [shape: f32[256,16], index: 3, kind: output, shape index: {}]
  %s4 = sld [smem:[#allocation0]]
  $region45: #{tpu_custom_call.1} parent=0
    _
  %s6 = ssub.s32 1, %s4
  %s7 = scalar_select 0, %s6, %s4
  loop: start=0, step=1, limit=4
  $region2: #{tpu_custom_call.1} parent=0 // loop_pre_header
    _
  $region3: #{tpu_custom_call.1} parent=0 // loop_header
    %s9 = sphi 0, %s13
    %p10 = scmp.ge.s32.totalorder %s9, 4
    %s17 = sphi 0, %s17
    %s19 = sphi 0, %s17
    %s20 = sphi 0, %s19
    %s34 = sphi 0, %s20
    %s40 = sphi 0, %s42
    %s43 = sphi 0, %s40
    %s44 = sphi 0, %s43
    %s60 = sphi 0, %s44
    %s66 = sphi 0, %s68
    %s69 = sphi 0, %s66
    %s70 = sphi 0, %s69
    %s86 = sphi 0, %s70
    %s92 = sphi 0, %s94
    %s95 = sphi 0, %s92
    %s96 = sphi 0, %s95
    %s112 = sphi 0, %s96
  $region4: #{tpu_custom_call.1} parent=0 // loop_header_branch
    %12 = sbr.rel (%p10) target = $region8
  $region5: #{tpu_custom_call.1} parent=0 // loop_body
    %s14 = ssub.s32 %s9, 1
    %s15 = ssub.s32 %s9, 2
    %s16 = sadd.s32 %s9, 1
    %s18 = sadd.s32 %s17, 1
    %p21 = scmp.eq.s32.totalorder %s9, 1
    %p22 = scmp.ne.s32.totalorder %s17, %s19
    %p23 = scmp.eq.s32.totalorder %s9, 0
    %p24 = por %p22, %p23
    %p25 = scmp.ne.s32.totalorder %s17, %s19
    %p26 = scmp.eq.s32.totalorder %s14, 1
    %p27 = por %p25, %p26
    %p28 = scmp.ne.s32.totalorder %s19, %s20
    %p29 = scmp.eq.s32.totalorder %s14, 0
    %p30 = por %p28, %p29
    %p31 = scmp.ne.s32.totalorder %s19, %s20
    %p32 = scmp.eq.s32.totalorder %s15, 1
    %p33 = por %p31, %p32
    %p35 = scmp.ne.s32.totalorder %s20, %s34
    %p36 = scmp.eq.s32.totalorder %s15, 0
    %p37 = por %p35, %p36
    %s38 = ssub.s32 %s9, %s16
    %p39 = scmp.eq.s32.totalorder %s38, 0
    %s41 = sadd.s32 %s40, 1
    %s42 = scalar_select %p39, %s40, %s41
    %p45 = pneg %p39
    %p46 = scmp.eq.s32.totalorder %s9, 1
    %p47 = por %p45, %p46
    %p48 = scmp.ne.s32.totalorder %s40, %s43
    %p49 = scmp.eq.s32.totalorder %s9, 0
    %p50 = por %p48, %p49
    %p51 = scmp.ne.s32.totalorder %s40, %s43
    %p52 = scmp.eq.s32.totalorder %s14, 1
    %p53 = por %p51, %p52
    %p54 = scmp.ne.s32.totalorder %s43, %s44
    %p55 = scmp.eq.s32.totalorder %s14, 0
    %p56 = por %p54, %p55
    %p57 = scmp.ne.s32.totalorder %s43, %s44
    %p58 = scmp.eq.s32.totalorder %s15, 1
    %p59 = por %p57, %p58
    %p61 = scmp.ne.s32.totalorder %s44, %s60
    %p62 = scmp.eq.s32.totalorder %s15, 0
    %p63 = por %p61, %p62
    %s64 = ssub.s32 %s9, %s16
    %p65 = scmp.eq.s32.totalorder %s64, 0
    %s67 = sadd.s32 %s66, 1
    %s68 = scalar_select %p65, %s66, %s67
    %p71 = pneg %p65
    %p72 = scmp.eq.s32.totalorder %s9, 1
    %p73 = por %p71, %p72
    %p74 = scmp.ne.s32.totalorder %s66, %s69
    %p75 = scmp.eq.s32.totalorder %s9, 0
    %p76 = por %p74, %p75
    %p77 = scmp.ne.s32.totalorder %s66, %s69
    %p78 = scmp.eq.s32.totalorder %s14, 1
    %p79 = por %p77, %p78
    %p80 = scmp.ne.s32.totalorder %s69, %s70
    %p81 = scmp.eq.s32.totalorder %s14, 0
    %p82 = por %p80, %p81
    %p83 = scmp.ne.s32.totalorder %s69, %s70
    %p84 = scmp.eq.s32.totalorder %s15, 1
    %p85 = por %p83, %p84
    %p87 = scmp.ne.s32.totalorder %s70, %s86
    %p88 = scmp.eq.s32.totalorder %s15, 0
    %p89 = por %p87, %p88
    %s90 = ssub.s32 %s9, %s16
    %p91 = scmp.eq.s32.totalorder %s90, 0
    %s93 = sadd.s32 %s92, 1
    %s94 = scalar_select %p91, %s92, %s93
    %p97 = pneg %p91
    %p98 = scmp.eq.s32.totalorder %s9, 1
    %p99 = por %p97, %p98
    %p100 = scmp.ne.s32.totalorder %s92, %s95
    %p101 = scmp.eq.s32.totalorder %s9, 0
    %p102 = por %p100, %p101
    %p103 = scmp.ne.s32.totalorder %s92, %s95
    %p104 = scmp.eq.s32.totalorder %s14, 1
    %p105 = por %p103, %p104
    %p106 = scmp.ne.s32.totalorder %s95, %s96
    %p107 = scmp.eq.s32.totalorder %s14, 0
    %p108 = por %p106, %p107
    %p109 = scmp.ne.s32.totalorder %s95, %s96
    %p110 = scmp.eq.s32.totalorder %s15, 1
    %p111 = por %p109, %p110
    %p113 = scmp.ne.s32.totalorder %s96, %s112
    %p114 = scmp.eq.s32.totalorder %s15, 0
    %p115 = por %p113, %p114
    %p116 = scmp.le.s32.totalorder 1, %s9
    %p117 = scmp.lt.s32.totalorder %s9, 3
    %p118 = pnand %p116, %p117
    %p119 = pneg %p118
    // Predicated region
    $region9: #{tpu_custom_call.1} parent=5 // pred_check
      _
    $region10: #{tpu_custom_call.1} parent=5 // pred_check_branch
      %121 = sbr.rel (%p118) target = $region12
    $region11: #{tpu_custom_call.1} parent=5 // pred_region
      %s122 = ssub.s32 %s9, 1
      // Predicated region
      $region13: #{tpu_custom_call.1} parent=11 // pred_check
        %p123 = pneg %p30
      $region14: #{tpu_custom_call.1} parent=11 // pred_check_branch
        %125 = sbr.rel (%p123) target = $region16
      $region15: #{tpu_custom_call.1} parent=11 // pred_region
        _
      $region16: #{tpu_custom_call.1} parent=11 // pred_fallthru
        _
    $region12: #{tpu_custom_call.1} parent=5 // pred_fallthru
      _
    %p126 = scmp.lt.s32.totalorder %s9, 2
    // Predicated region
    $region17: #{tpu_custom_call.1} parent=5 // pred_check
      %p127 = pneg %p126
    $region18: #{tpu_custom_call.1} parent=5 // pred_check_branch
      %129 = sbr.rel (%p127) target = $region20
    $region19: #{tpu_custom_call.1} parent=5 // pred_region
      // Predicated region
      $region21: #{tpu_custom_call.1} parent=19 // pred_check
        %p130 = pneg %p50
      $region22: #{tpu_custom_call.1} parent=19 // pred_check_branch
        %132 = sbr.rel (%p130) target = $region24
      $region23: #{tpu_custom_call.1} parent=19 // pred_region
        %s133 = smul.u32 128, %s9
        %p134 = scmp.lt.s32.totalorder %s133, 255
        %s135 = scalar_select %p134, %s133, 255
        %s136 = smul.addr %s135, 4
        %s137 = smul.addr %s136, 8
        %s138 = scalar_lea.vmem %s1, %s137
        %s139 = smul.u32 128, %s9
      $region24: #{tpu_custom_call.1} parent=19 // pred_fallthru
        _
      // Predicated region
      $region25: #{tpu_custom_call.1} parent=19 // pred_check
        %p140 = pneg %p76
      $region26: #{tpu_custom_call.1} parent=19 // pred_check_branch
        %142 = sbr.rel (%p140) target = $region28
      $region27: #{tpu_custom_call.1} parent=19 // pred_region
        %s143 = smul.u32 128, %s9
        %p144 = scmp.lt.s32.totalorder %s143, 255
        %s145 = scalar_select %p144, %s143, 255
        %s146 = smul.addr %s145, 2
        %s147 = smul.addr %s146, 8
        %s148 = scalar_lea.vmem %s2, %s147
        %s149 = smul.u32 128, %s9
      $region28: #{tpu_custom_call.1} parent=19 // pred_fallthru
        _
    $region20: #{tpu_custom_call.1} parent=5 // pred_fallthru
      _
    %p150 = scmp.le.s32.totalorder 1, %s9
    %p151 = scmp.lt.s32.totalorder %s9, 3
    %p152 = pnand %p150, %p151
    %p153 = pneg %p152
    // Predicated region
    $region29: #{tpu_custom_call.1} parent=5 // pred_check
      _
    $region30: #{tpu_custom_call.1} parent=5 // pred_check_branch
      %155 = sbr.rel (%p152) target = $region32
    $region31: #{tpu_custom_call.1} parent=5 // pred_region
      %s156 = ssub.s32 %s9, 1
      %p157 = pneg %p30
      %p158 = pneg %p27
      %s159 = smul.u32 128, %s14
      %p160 = scmp.lt.s32.totalorder %s159, 255
      %s161 = scalar_select %p160, %s159, 255
      %s162 = smul.addr %s161, 4
      %s163 = smul.addr %s162, 8
      %s164 = scalar_lea.vmem %s1, %s163
      %p165 = pneg %p56
      %p166 = pneg %p53
      %s167 = smul.u32 128, %s14
      %p168 = scmp.lt.s32.totalorder %s167, 255
      %s169 = scalar_select %p168, %s167, 255
      %s170 = smul.addr %s169, 2
      %s171 = smul.addr %s170, 8
      %s172 = scalar_lea.vmem %s2, %s171
      %p173 = pneg %p82
      %p174 = pneg %p79
      %p175 = pneg %p108
      %p176 = pneg %p105
      %s177 = smul.u32 16, %s14
      %p178 = scmp.lt.s32.totalorder %s177, 31
      %s179 = scalar_select %p178, %s177, 31
      %s180 = smul.addr %s179, 8
      %s181 = scalar_lea.vmem %s3, %s180
      %s182 = smul.u32 128, %s14
      %p183 = scmp.lt.s32.totalorder %s182, 255
      %s184 = scalar_select %p183, %s182, 255
      %s185 = smul.addr %s184, 4
      %s186 = smul.addr %s185, 8
      %s187 = scalar_lea.vmem %s1, %s186
      %s188 = smul.u32 128, %s14
      %s189 = smul.u32 128, %s14
      %p190 = scmp.lt.s32.totalorder %s189, 255
      %s191 = scalar_select %p190, %s189, 255
      %s192 = smul.addr %s191, 2
      %s193 = smul.addr %s192, 8
      %s194 = scalar_lea.vmem %s2, %s193
      %s195 = smul.u32 128, %s14
      %s196 = smul.u32 16, %s14
      %p197 = scmp.lt.s32.totalorder %s196, 31
      %s198 = scalar_select %p197, %s196, 31
      %s199 = smul.addr %s198, 8
      %s200 = scalar_lea.vmem %s3, %s199
      %s201 = smul.u32 16, %s14
      %v202 = vld [vmem:[%s194] sm:$0xff]
      %v203 = vld [vmem:[%s194 + $0x8] sm:$0xff]
      %v204 = vld [vmem:[%s194 + $0x10] sm:$0xff]
      %v205 = vld [vmem:[%s194 + $0x18] sm:$0xff]
      %v206 = vld [vmem:[%s194 + $0x20] sm:$0xff]
      %v207 = vld [vmem:[%s194 + $0x28] sm:$0xff]
      %v208 = vld [vmem:[%s194 + $0x30] sm:$0xff]
      %v209 = vld [vmem:[%s194 + $0x38] sm:$0xff]
      %v210 = vld [vmem:[%s194 + $0x40] sm:$0xff]
      %v211 = vld [vmem:[%s194 + $0x48] sm:$0xff]
      %v212 = vld [vmem:[%s194 + $0x50] sm:$0xff]
      %v213 = vld [vmem:[%s194 + $0x58] sm:$0xff]
      %v214 = vld [vmem:[%s194 + $0x60] sm:$0xff]
      %v215 = vld [vmem:[%s194 + $0x68] sm:$0xff]
      %v216 = vld [vmem:[%s194 + $0x70] sm:$0xff]
      %v217 = vld [vmem:[%s194 + $0x78] sm:$0xff]
      %v218 = vld [vmem:[%s194 + $0x80] sm:$0xff]
      %v219 = vld [vmem:[%s194 + $0x88] sm:$0xff]
      %v220 = vld [vmem:[%s194 + $0x90] sm:$0xff]
      %v221 = vld [vmem:[%s194 + $0x98] sm:$0xff]
      %v222 = vld [vmem:[%s194 + $0xa0] sm:$0xff]
      %v223 = vld [vmem:[%s194 + $0xa8] sm:$0xff]
      %v224 = vld [vmem:[%s194 + $0xb0] sm:$0xff]
      %v225 = vld [vmem:[%s194 + $0xb8] sm:$0xff]
      %v226 = vld [vmem:[%s194 + $0xc0] sm:$0xff]
      %v227 = vld [vmem:[%s194 + $0xc8] sm:$0xff]
      %v228 = vld [vmem:[%s194 + $0xd0] sm:$0xff]
      %v229 = vld [vmem:[%s194 + $0xd8] sm:$0xff]
      %v230 = vld [vmem:[%s194 + $0xe0] sm:$0xff]
      %v231 = vld [vmem:[%s194 + $0xe8] sm:$0xff]
      %v232 = vld [vmem:[%s194 + $0xf0] sm:$0xff]
      %v233 = vld [vmem:[%s194 + $0xf8] sm:$0xff]
      %v234 = vld [vmem:[%s194 + $0x100] sm:$0xff]
      %v235 = vld [vmem:[%s194 + $0x108] sm:$0xff]
      %v236 = vld [vmem:[%s194 + $0x110] sm:$0xff]
      %v237 = vld [vmem:[%s194 + $0x118] sm:$0xff]
      %v238 = vld [vmem:[%s194 + $0x120] sm:$0xff]
      %v239 = vld [vmem:[%s194 + $0x128] sm:$0xff]
      %v240 = vld [vmem:[%s194 + $0x130] sm:$0xff]
      %v241 = vld [vmem:[%s194 + $0x138] sm:$0xff]
      %v242 = vld [vmem:[%s194 + $0x140] sm:$0xff]
      %v243 = vld [vmem:[%s194 + $0x148] sm:$0xff]
      %v244 = vld [vmem:[%s194 + $0x150] sm:$0xff]
      %v245 = vld [vmem:[%s194 + $0x158] sm:$0xff]
      %v246 = vld [vmem:[%s194 + $0x160] sm:$0xff]
      %v247 = vld [vmem:[%s194 + $0x168] sm:$0xff]
      %v248 = vld [vmem:[%s194 + $0x170] sm:$0xff]
      %v249 = vld [vmem:[%s194 + $0x178] sm:$0xff]
      %v250 = vld [vmem:[%s194 + $0x180] sm:$0xff]
      %v251 = vld [vmem:[%s194 + $0x188] sm:$0xff]
      %v252 = vld [vmem:[%s194 + $0x190] sm:$0xff]
      %v253 = vld [vmem:[%s194 + $0x198] sm:$0xff]
      %v254 = vld [vmem:[%s194 + $0x1a0] sm:$0xff]
      %v255 = vld [vmem:[%s194 + $0x1a8] sm:$0xff]
      %v256 = vld [vmem:[%s194 + $0x1b0] sm:$0xff]
      %v257 = vld [vmem:[%s194 + $0x1b8] sm:$0xff]
      %v258 = vld [vmem:[%s194 + $0x1c0] sm:$0xff]
      %v259 = vld [vmem:[%s194 + $0x1c8] sm:$0xff]
      %v260 = vld [vmem:[%s194 + $0x1d0] sm:$0xff]
      %v261 = vld [vmem:[%s194 + $0x1d8] sm:$0xff]
      %v262 = vld [vmem:[%s194 + $0x1e0] sm:$0xff]
      %v263 = vld [vmem:[%s194 + $0x1e8] sm:$0xff]
      %v264 = vld [vmem:[%s194 + $0x1f0] sm:$0xff]
      %v265 = vld [vmem:[%s194 + $0x1f8] sm:$0xff]
      %v266 = vld [vmem:[%s194 + $0x200] sm:$0xff]
      %v267 = vld [vmem:[%s194 + $0x208] sm:$0xff]
      %v268 = vld [vmem:[%s194 + $0x210] sm:$0xff]
      %v269 = vld [vmem:[%s194 + $0x218] sm:$0xff]
      %v270 = vld [vmem:[%s194 + $0x220] sm:$0xff]
      %v271 = vld [vmem:[%s194 + $0x228] sm:$0xff]
      %v272 = vld [vmem:[%s194 + $0x230] sm:$0xff]
      %v273 = vld [vmem:[%s194 + $0x238] sm:$0xff]
      %v274 = vld [vmem:[%s194 + $0x240] sm:$0xff]
      %v275 = vld [vmem:[%s194 + $0x248] sm:$0xff]
      %v276 = vld [vmem:[%s194 + $0x250] sm:$0xff]
      %v277 = vld [vmem:[%s194 + $0x258] sm:$0xff]
      %v278 = vld [vmem:[%s194 + $0x260] sm:$0xff]
      %v279 = vld [vmem:[%s194 + $0x268] sm:$0xff]
      %v280 = vld [vmem:[%s194 + $0x270] sm:$0xff]
      %v281 = vld [vmem:[%s194 + $0x278] sm:$0xff]
      %v282 = vld [vmem:[%s194 + $0x280] sm:$0xff]
      %v283 = vld [vmem:[%s194 + $0x288] sm:$0xff]
      %v284 = vld [vmem:[%s194 + $0x290] sm:$0xff]
      %v285 = vld [vmem:[%s194 + $0x298] sm:$0xff]
      %v286 = vld [vmem:[%s194 + $0x2a0] sm:$0xff]
      %v287 = vld [vmem:[%s194 + $0x2a8] sm:$0xff]
      %v288 = vld [vmem:[%s194 + $0x2b0] sm:$0xff]
      %v289 = vld [vmem:[%s194 + $0x2b8] sm:$0xff]
      %v290 = vld [vmem:[%s194 + $0x2c0] sm:$0xff]
      %v291 = vld [vmem:[%s194 + $0x2c8] sm:$0xff]
      %v292 = vld [vmem:[%s194 + $0x2d0] sm:$0xff]
      %v293 = vld [vmem:[%s194 + $0x2d8] sm:$0xff]
      %v294 = vld [vmem:[%s194 + $0x2e0] sm:$0xff]
      %v295 = vld [vmem:[%s194 + $0x2e8] sm:$0xff]
      %v296 = vld [vmem:[%s194 + $0x2f0] sm:$0xff]
      %v297 = vld [vmem:[%s194 + $0x2f8] sm:$0xff]
      %v298 = vld [vmem:[%s194 + $0x300] sm:$0xff]
      %v299 = vld [vmem:[%s194 + $0x308] sm:$0xff]
      %v300 = vld [vmem:[%s194 + $0x310] sm:$0xff]
      %v301 = vld [vmem:[%s194 + $0x318] sm:$0xff]
      %v302 = vld [vmem:[%s194 + $0x320] sm:$0xff]
      %v303 = vld [vmem:[%s194 + $0x328] sm:$0xff]
      %v304 = vld [vmem:[%s194 + $0x330] sm:$0xff]
      %v305 = vld [vmem:[%s194 + $0x338] sm:$0xff]
      %v306 = vld [vmem:[%s194 + $0x340] sm:$0xff]
      %v307 = vld [vmem:[%s194 + $0x348] sm:$0xff]
      %v308 = vld [vmem:[%s194 + $0x350] sm:$0xff]
      %v309 = vld [vmem:[%s194 + $0x358] sm:$0xff]
      %v310 = vld [vmem:[%s194 + $0x360] sm:$0xff]
      %v311 = vld [vmem:[%s194 + $0x368] sm:$0xff]
      %v312 = vld [vmem:[%s194 + $0x370] sm:$0xff]
      %v313 = vld [vmem:[%s194 + $0x378] sm:$0xff]
      %v314 = vld [vmem:[%s194 + $0x380] sm:$0xff]
      %v315 = vld [vmem:[%s194 + $0x388] sm:$0xff]
      %v316 = vld [vmem:[%s194 + $0x390] sm:$0xff]
      %v317 = vld [vmem:[%s194 + $0x398] sm:$0xff]
      %v318 = vld [vmem:[%s194 + $0x3a0] sm:$0xff]
      %v319 = vld [vmem:[%s194 + $0x3a8] sm:$0xff]
      %v320 = vld [vmem:[%s194 + $0x3b0] sm:$0xff]
      %v321 = vld [vmem:[%s194 + $0x3b8] sm:$0xff]
      %v322 = vld [vmem:[%s194 + $0x3c0] sm:$0xff]
      %v323 = vld [vmem:[%s194 + $0x3c8] sm:$0xff]
      %v324 = vld [vmem:[%s194 + $0x3d0] sm:$0xff]
      %v325 = vld [vmem:[%s194 + $0x3d8] sm:$0xff]
      %v326 = vld [vmem:[%s194 + $0x3e0] sm:$0xff]
      %v327 = vld [vmem:[%s194 + $0x3e8] sm:$0xff]
      %v328 = vld [vmem:[%s194 + $0x3f0] sm:$0xff]
      %v329 = vld [vmem:[%s194 + $0x3f8] sm:$0xff]
      %v330 = vld [vmem:[%s194 + $0x400] sm:$0xff]
      %v331 = vld [vmem:[%s194 + $0x408] sm:$0xff]
      %v332 = vld [vmem:[%s194 + $0x410] sm:$0xff]
      %v333 = vld [vmem:[%s194 + $0x418] sm:$0xff]
      %v334 = vld [vmem:[%s194 + $0x420] sm:$0xff]
      %v335 = vld [vmem:[%s194 + $0x428] sm:$0xff]
      %v336 = vld [vmem:[%s194 + $0x430] sm:$0xff]
      %v337 = vld [vmem:[%s194 + $0x438] sm:$0xff]
      %v338 = vld [vmem:[%s194 + $0x440] sm:$0xff]
      %v339 = vld [vmem:[%s194 + $0x448] sm:$0xff]
      %v340 = vld [vmem:[%s194 + $0x450] sm:$0xff]
      %v341 = vld [vmem:[%s194 + $0x458] sm:$0xff]
      %v342 = vld [vmem:[%s194 + $0x460] sm:$0xff]
      %v343 = vld [vmem:[%s194 + $0x468] sm:$0xff]
      %v344 = vld [vmem:[%s194 + $0x470] sm:$0xff]
      %v345 = vld [vmem:[%s194 + $0x478] sm:$0xff]
      %v346 = vld [vmem:[%s194 + $0x480] sm:$0xff]
      %v347 = vld [vmem:[%s194 + $0x488] sm:$0xff]
      %v348 = vld [vmem:[%s194 + $0x490] sm:$0xff]
      %v349 = vld [vmem:[%s194 + $0x498] sm:$0xff]
      %v350 = vld [vmem:[%s194 + $0x4a0] sm:$0xff]
      %v351 = vld [vmem:[%s194 + $0x4a8] sm:$0xff]
      %v352 = vld [vmem:[%s194 + $0x4b0] sm:$0xff]
      %v353 = vld [vmem:[%s194 + $0x4b8] sm:$0xff]
      %v354 = vld [vmem:[%s194 + $0x4c0] sm:$0xff]
      %v355 = vld [vmem:[%s194 + $0x4c8] sm:$0xff]
      %v356 = vld [vmem:[%s194 + $0x4d0] sm:$0xff]
      %v357 = vld [vmem:[%s194 + $0x4d8] sm:$0xff]
      %v358 = vld [vmem:[%s194 + $0x4e0] sm:$0xff]
      %v359 = vld [vmem:[%s194 + $0x4e8] sm:$0xff]
      %v360 = vld [vmem:[%s194 + $0x4f0] sm:$0xff]
      %v361 = vld [vmem:[%s194 + $0x4f8] sm:$0xff]
      %v362 = vld [vmem:[%s194 + $0x500] sm:$0xff]
      %v363 = vld [vmem:[%s194 + $0x508] sm:$0xff]
      %v364 = vld [vmem:[%s194 + $0x510] sm:$0xff]
      %v365 = vld [vmem:[%s194 + $0x518] sm:$0xff]
      %v366 = vld [vmem:[%s194 + $0x520] sm:$0xff]
      %v367 = vld [vmem:[%s194 + $0x528] sm:$0xff]
      %v368 = vld [vmem:[%s194 + $0x530] sm:$0xff]
      %v369 = vld [vmem:[%s194 + $0x538] sm:$0xff]
      %v370 = vld [vmem:[%s194 + $0x540] sm:$0xff]
      %v371 = vld [vmem:[%s194 + $0x548] sm:$0xff]
      %v372 = vld [vmem:[%s194 + $0x550] sm:$0xff]
      %v373 = vld [vmem:[%s194 + $0x558] sm:$0xff]
      %v374 = vld [vmem:[%s194 + $0x560] sm:$0xff]
      %v375 = vld [vmem:[%s194 + $0x568] sm:$0xff]
      %v376 = vld [vmem:[%s194 + $0x570] sm:$0xff]
      %v377 = vld [vmem:[%s194 + $0x578] sm:$0xff]
      %v378 = vld [vmem:[%s194 + $0x580] sm:$0xff]
      %v379 = vld [vmem:[%s194 + $0x588] sm:$0xff]
      %v380 = vld [vmem:[%s194 + $0x590] sm:$0xff]
      %v381 = vld [vmem:[%s194 + $0x598] sm:$0xff]
      %v382 = vld [vmem:[%s194 + $0x5a0] sm:$0xff]
      %v383 = vld [vmem:[%s194 + $0x5a8] sm:$0xff]
      %v384 = vld [vmem:[%s194 + $0x5b0] sm:$0xff]
      %v385 = vld [vmem:[%s194 + $0x5b8] sm:$0xff]
      %v386 = vld [vmem:[%s194 + $0x5c0] sm:$0xff]
      %v387 = vld [vmem:[%s194 + $0x5c8] sm:$0xff]
      %v388 = vld [vmem:[%s194 + $0x5d0] sm:$0xff]
      %v389 = vld [vmem:[%s194 + $0x5d8] sm:$0xff]
      %v390 = vld [vmem:[%s194 + $0x5e0] sm:$0xff]
      %v391 = vld [vmem:[%s194 + $0x5e8] sm:$0xff]
      %v392 = vld [vmem:[%s194 + $0x5f0] sm:$0xff]
      %v393 = vld [vmem:[%s194 + $0x5f8] sm:$0xff]
      %v394 = vld [vmem:[%s194 + $0x600] sm:$0xff]
      %v395 = vld [vmem:[%s194 + $0x608] sm:$0xff]
      %v396 = vld [vmem:[%s194 + $0x610] sm:$0xff]
      %v397 = vld [vmem:[%s194 + $0x618] sm:$0xff]
      %v398 = vld [vmem:[%s194 + $0x620] sm:$0xff]
      %v399 = vld [vmem:[%s194 + $0x628] sm:$0xff]
      %v400 = vld [vmem:[%s194 + $0x630] sm:$0xff]
      %v401 = vld [vmem:[%s194 + $0x638] sm:$0xff]
      %v402 = vld [vmem:[%s194 + $0x640] sm:$0xff]
      %v403 = vld [vmem:[%s194 + $0x648] sm:$0xff]
      %v404 = vld [vmem:[%s194 + $0x650] sm:$0xff]
      %v405 = vld [vmem:[%s194 + $0x658] sm:$0xff]
      %v406 = vld [vmem:[%s194 + $0x660] sm:$0xff]
      %v407 = vld [vmem:[%s194 + $0x668] sm:$0xff]
      %v408 = vld [vmem:[%s194 + $0x670] sm:$0xff]
      %v409 = vld [vmem:[%s194 + $0x678] sm:$0xff]
      %v410 = vld [vmem:[%s194 + $0x680] sm:$0xff]
      %v411 = vld [vmem:[%s194 + $0x688] sm:$0xff]
      %v412 = vld [vmem:[%s194 + $0x690] sm:$0xff]
      %v413 = vld [vmem:[%s194 + $0x698] sm:$0xff]
      %v414 = vld [vmem:[%s194 + $0x6a0] sm:$0xff]
      %v415 = vld [vmem:[%s194 + $0x6a8] sm:$0xff]
      %v416 = vld [vmem:[%s194 + $0x6b0] sm:$0xff]
      %v417 = vld [vmem:[%s194 + $0x6b8] sm:$0xff]
      %v418 = vld [vmem:[%s194 + $0x6c0] sm:$0xff]
      %v419 = vld [vmem:[%s194 + $0x6c8] sm:$0xff]
      %v420 = vld [vmem:[%s194 + $0x6d0] sm:$0xff]
      %v421 = vld [vmem:[%s194 + $0x6d8] sm:$0xff]
      %v422 = vld [vmem:[%s194 + $0x6e0] sm:$0xff]
      %v423 = vld [vmem:[%s194 + $0x6e8] sm:$0xff]
      %v424 = vld [vmem:[%s194 + $0x6f0] sm:$0xff]
      %v425 = vld [vmem:[%s194 + $0x6f8] sm:$0xff]
      %v426 = vld [vmem:[%s194 + $0x700] sm:$0xff]
      %v427 = vld [vmem:[%s194 + $0x708] sm:$0xff]
      %v428 = vld [vmem:[%s194 + $0x710] sm:$0xff]
      %v429 = vld [vmem:[%s194 + $0x718] sm:$0xff]
      %v430 = vld [vmem:[%s194 + $0x720] sm:$0xff]
      %v431 = vld [vmem:[%s194 + $0x728] sm:$0xff]
      %v432 = vld [vmem:[%s194 + $0x730] sm:$0xff]
      %v433 = vld [vmem:[%s194 + $0x738] sm:$0xff]
      %v434 = vld [vmem:[%s194 + $0x740] sm:$0xff]
      %v435 = vld [vmem:[%s194 + $0x748] sm:$0xff]
      %v436 = vld [vmem:[%s194 + $0x750] sm:$0xff]
      %v437 = vld [vmem:[%s194 + $0x758] sm:$0xff]
      %v438 = vld [vmem:[%s194 + $0x760] sm:$0xff]
      %v439 = vld [vmem:[%s194 + $0x768] sm:$0xff]
      %v440 = vld [vmem:[%s194 + $0x770] sm:$0xff]
      %v441 = vld [vmem:[%s194 + $0x778] sm:$0xff]
      %v442 = vld [vmem:[%s194 + $0x780] sm:$0xff]
      %v443 = vld [vmem:[%s194 + $0x788] sm:$0xff]
      %v444 = vld [vmem:[%s194 + $0x790] sm:$0xff]
      %v445 = vld [vmem:[%s194 + $0x798] sm:$0xff]
      %v446 = vld [vmem:[%s194 + $0x7a0] sm:$0xff]
      %v447 = vld [vmem:[%s194 + $0x7a8] sm:$0xff]
      %v448 = vld [vmem:[%s194 + $0x7b0] sm:$0xff]
      %v449 = vld [vmem:[%s194 + $0x7b8] sm:$0xff]
      %v450 = vld [vmem:[%s194 + $0x7c0] sm:$0xff]
      %v451 = vld [vmem:[%s194 + $0x7c8] sm:$0xff]
      %v452 = vld [vmem:[%s194 + $0x7d0] sm:$0xff]
      %v453 = vld [vmem:[%s194 + $0x7d8] sm:$0xff]
      %v454 = vld [vmem:[%s194 + $0x7e0] sm:$0xff]
      %v455 = vld [vmem:[%s194 + $0x7e8] sm:$0xff]
      %v456 = vld [vmem:[%s194 + $0x7f0] sm:$0xff]
      %v457 = vld [vmem:[%s194 + $0x7f8] sm:$0xff]
      %v458 = vld [vmem:[%s187] sm:$0xff]
      %v459 = vld [vmem:[%s187 + $0x8] sm:$0xff]
      %v460 = vld [vmem:[%s187 + $0x10] sm:$0xff]
      %v461 = vld [vmem:[%s187 + $0x18] sm:$0xff]
      %v462 = vld [vmem:[%s187 + $0x20] sm:$0xff]
      %v463 = vld [vmem:[%s187 + $0x28] sm:$0xff]
      %v464 = vld [vmem:[%s187 + $0x30] sm:$0xff]
      %v465 = vld [vmem:[%s187 + $0x38] sm:$0xff]
      %v466 = vld [vmem:[%s187 + $0x40] sm:$0xff]
      %v467 = vld [vmem:[%s187 + $0x48] sm:$0xff]
      %v468 = vld [vmem:[%s187 + $0x50] sm:$0xff]
      %v469 = vld [vmem:[%s187 + $0x58] sm:$0xff]
      %v470 = vld [vmem:[%s187 + $0x60] sm:$0xff]
      %v471 = vld [vmem:[%s187 + $0x68] sm:$0xff]
      %v472 = vld [vmem:[%s187 + $0x70] sm:$0xff]
      %v473 = vld [vmem:[%s187 + $0x78] sm:$0xff]
      %v474 = vld [vmem:[%s187 + $0x80] sm:$0xff]
      %v475 = vld [vmem:[%s187 + $0x88] sm:$0xff]
      %v476 = vld [vmem:[%s187 + $0x90] sm:$0xff]
      %v477 = vld [vmem:[%s187 + $0x98] sm:$0xff]
      %v478 = vld [vmem:[%s187 + $0xa0] sm:$0xff]
      %v479 = vld [vmem:[%s187 + $0xa8] sm:$0xff]
      %v480 = vld [vmem:[%s187 + $0xb0] sm:$0xff]
      %v481 = vld [vmem:[%s187 + $0xb8] sm:$0xff]
      %v482 = vld [vmem:[%s187 + $0xc0] sm:$0xff]
      %v483 = vld [vmem:[%s187 + $0xc8] sm:$0xff]
      %v484 = vld [vmem:[%s187 + $0xd0] sm:$0xff]
      %v485 = vld [vmem:[%s187 + $0xd8] sm:$0xff]
      %v486 = vld [vmem:[%s187 + $0xe0] sm:$0xff]
      %v487 = vld [vmem:[%s187 + $0xe8] sm:$0xff]
      %v488 = vld [vmem:[%s187 + $0xf0] sm:$0xff]
      %v489 = vld [vmem:[%s187 + $0xf8] sm:$0xff]
      %v490 = vld [vmem:[%s187 + $0x100] sm:$0xff]
      %v491 = vld [vmem:[%s187 + $0x108] sm:$0xff]
      %v492 = vld [vmem:[%s187 + $0x110] sm:$0xff]
      %v493 = vld [vmem:[%s187 + $0x118] sm:$0xff]
      %v494 = vld [vmem:[%s187 + $0x120] sm:$0xff]
      %v495 = vld [vmem:[%s187 + $0x128] sm:$0xff]
      %v496 = vld [vmem:[%s187 + $0x130] sm:$0xff]
      %v497 = vld [vmem:[%s187 + $0x138] sm:$0xff]
      %v498 = vld [vmem:[%s187 + $0x140] sm:$0xff]
      %v499 = vld [vmem:[%s187 + $0x148] sm:$0xff]
      %v500 = vld [vmem:[%s187 + $0x150] sm:$0xff]
      %v501 = vld [vmem:[%s187 + $0x158] sm:$0xff]
      %v502 = vld [vmem:[%s187 + $0x160] sm:$0xff]
      %v503 = vld [vmem:[%s187 + $0x168] sm:$0xff]
      %v504 = vld [vmem:[%s187 + $0x170] sm:$0xff]
      %v505 = vld [vmem:[%s187 + $0x178] sm:$0xff]
      %v506 = vld [vmem:[%s187 + $0x180] sm:$0xff]
      %v507 = vld [vmem:[%s187 + $0x188] sm:$0xff]
      %v508 = vld [vmem:[%s187 + $0x190] sm:$0xff]
      %v509 = vld [vmem:[%s187 + $0x198] sm:$0xff]
      %v510 = vld [vmem:[%s187 + $0x1a0] sm:$0xff]
      %v511 = vld [vmem:[%s187 + $0x1a8] sm:$0xff]
      %v512 = vld [vmem:[%s187 + $0x1b0] sm:$0xff]
      %v513 = vld [vmem:[%s187 + $0x1b8] sm:$0xff]
      %v514 = vld [vmem:[%s187 + $0x1c0] sm:$0xff]
      %v515 = vld [vmem:[%s187 + $0x1c8] sm:$0xff]
      %v516 = vld [vmem:[%s187 + $0x1d0] sm:$0xff]
      %v517 = vld [vmem:[%s187 + $0x1d8] sm:$0xff]
      %v518 = vld [vmem:[%s187 + $0x1e0] sm:$0xff]
      %v519 = vld [vmem:[%s187 + $0x1e8] sm:$0xff]
      %v520 = vld [vmem:[%s187 + $0x1f0] sm:$0xff]
      %v521 = vld [vmem:[%s187 + $0x1f8] sm:$0xff]
      %v522 = vld [vmem:[%s187 + $0x200] sm:$0xff]
      %v523 = vld [vmem:[%s187 + $0x208] sm:$0xff]
      %v524 = vld [vmem:[%s187 + $0x210] sm:$0xff]
      %v525 = vld [vmem:[%s187 + $0x218] sm:$0xff]
      %v526 = vld [vmem:[%s187 + $0x220] sm:$0xff]
      %v527 = vld [vmem:[%s187 + $0x228] sm:$0xff]
      %v528 = vld [vmem:[%s187 + $0x230] sm:$0xff]
      %v529 = vld [vmem:[%s187 + $0x238] sm:$0xff]
      %v530 = vld [vmem:[%s187 + $0x240] sm:$0xff]
      %v531 = vld [vmem:[%s187 + $0x248] sm:$0xff]
      %v532 = vld [vmem:[%s187 + $0x250] sm:$0xff]
      %v533 = vld [vmem:[%s187 + $0x258] sm:$0xff]
      %v534 = vld [vmem:[%s187 + $0x260] sm:$0xff]
      %v535 = vld [vmem:[%s187 + $0x268] sm:$0xff]
      %v536 = vld [vmem:[%s187 + $0x270] sm:$0xff]
      %v537 = vld [vmem:[%s187 + $0x278] sm:$0xff]
      %v538 = vld [vmem:[%s187 + $0x280] sm:$0xff]
      %v539 = vld [vmem:[%s187 + $0x288] sm:$0xff]
      %v540 = vld [vmem:[%s187 + $0x290] sm:$0xff]
      %v541 = vld [vmem:[%s187 + $0x298] sm:$0xff]
      %v542 = vld [vmem:[%s187 + $0x2a0] sm:$0xff]
      %v543 = vld [vmem:[%s187 + $0x2a8] sm:$0xff]
      %v544 = vld [vmem:[%s187 + $0x2b0] sm:$0xff]
      %v545 = vld [vmem:[%s187 + $0x2b8] sm:$0xff]
      %v546 = vld [vmem:[%s187 + $0x2c0] sm:$0xff]
      %v547 = vld [vmem:[%s187 + $0x2c8] sm:$0xff]
      %v548 = vld [vmem:[%s187 + $0x2d0] sm:$0xff]
      %v549 = vld [vmem:[%s187 + $0x2d8] sm:$0xff]
      %v550 = vld [vmem:[%s187 + $0x2e0] sm:$0xff]
      %v551 = vld [vmem:[%s187 + $0x2e8] sm:$0xff]
      %v552 = vld [vmem:[%s187 + $0x2f0] sm:$0xff]
      %v553 = vld [vmem:[%s187 + $0x2f8] sm:$0xff]
      %v554 = vld [vmem:[%s187 + $0x300] sm:$0xff]
      %v555 = vld [vmem:[%s187 + $0x308] sm:$0xff]
      %v556 = vld [vmem:[%s187 + $0x310] sm:$0xff]
      %v557 = vld [vmem:[%s187 + $0x318] sm:$0xff]
      %v558 = vld [vmem:[%s187 + $0x320] sm:$0xff]
      %v559 = vld [vmem:[%s187 + $0x328] sm:$0xff]
      %v560 = vld [vmem:[%s187 + $0x330] sm:$0xff]
      %v561 = vld [vmem:[%s187 + $0x338] sm:$0xff]
      %v562 = vld [vmem:[%s187 + $0x340] sm:$0xff]
      %v563 = vld [vmem:[%s187 + $0x348] sm:$0xff]
      %v564 = vld [vmem:[%s187 + $0x350] sm:$0xff]
      %v565 = vld [vmem:[%s187 + $0x358] sm:$0xff]
      %v566 = vld [vmem:[%s187 + $0x360] sm:$0xff]
      %v567 = vld [vmem:[%s187 + $0x368] sm:$0xff]
      %v568 = vld [vmem:[%s187 + $0x370] sm:$0xff]
      %v569 = vld [vmem:[%s187 + $0x378] sm:$0xff]
      %v570 = vld [vmem:[%s187 + $0x380] sm:$0xff]
      %v571 = vld [vmem:[%s187 + $0x388] sm:$0xff]
      %v572 = vld [vmem:[%s187 + $0x390] sm:$0xff]
      %v573 = vld [vmem:[%s187 + $0x398] sm:$0xff]
      %v574 = vld [vmem:[%s187 + $0x3a0] sm:$0xff]
      %v575 = vld [vmem:[%s187 + $0x3a8] sm:$0xff]
      %v576 = vld [vmem:[%s187 + $0x3b0] sm:$0xff]
      %v577 = vld [vmem:[%s187 + $0x3b8] sm:$0xff]
      %v578 = vld [vmem:[%s187 + $0x3c0] sm:$0xff]
      %v579 = vld [vmem:[%s187 + $0x3c8] sm:$0xff]
      %v580 = vld [vmem:[%s187 + $0x3d0] sm:$0xff]
      %v581 = vld [vmem:[%s187 + $0x3d8] sm:$0xff]
      %v582 = vld [vmem:[%s187 + $0x3e0] sm:$0xff]
      %v583 = vld [vmem:[%s187 + $0x3e8] sm:$0xff]
      %v584 = vld [vmem:[%s187 + $0x3f0] sm:$0xff]
      %v585 = vld [vmem:[%s187 + $0x3f8] sm:$0xff]
      %v586 = vld [vmem:[%s187 + $0x400] sm:$0xff]
      %v587 = vld [vmem:[%s187 + $0x408] sm:$0xff]
      %v588 = vld [vmem:[%s187 + $0x410] sm:$0xff]
      %v589 = vld [vmem:[%s187 + $0x418] sm:$0xff]
      %v590 = vld [vmem:[%s187 + $0x420] sm:$0xff]
      %v591 = vld [vmem:[%s187 + $0x428] sm:$0xff]
      %v592 = vld [vmem:[%s187 + $0x430] sm:$0xff]
      %v593 = vld [vmem:[%s187 + $0x438] sm:$0xff]
      %v594 = vld [vmem:[%s187 + $0x440] sm:$0xff]
      %v595 = vld [vmem:[%s187 + $0x448] sm:$0xff]
      %v596 = vld [vmem:[%s187 + $0x450] sm:$0xff]
      %v597 = vld [vmem:[%s187 + $0x458] sm:$0xff]
      %v598 = vld [vmem:[%s187 + $0x460] sm:$0xff]
      %v599 = vld [vmem:[%s187 + $0x468] sm:$0xff]
      %v600 = vld [vmem:[%s187 + $0x470] sm:$0xff]
      %v601 = vld [vmem:[%s187 + $0x478] sm:$0xff]
      %v602 = vld [vmem:[%s187 + $0x480] sm:$0xff]
      %v603 = vld [vmem:[%s187 + $0x488] sm:$0xff]
      %v604 = vld [vmem:[%s187 + $0x490] sm:$0xff]
      %v605 = vld [vmem:[%s187 + $0x498] sm:$0xff]
      %v606 = vld [vmem:[%s187 + $0x4a0] sm:$0xff]
      %v607 = vld [vmem:[%s187 + $0x4a8] sm:$0xff]
      %v608 = vld [vmem:[%s187 + $0x4b0] sm:$0xff]
      %v609 = vld [vmem:[%s187 + $0x4b8] sm:$0xff]
      %v610 = vld [vmem:[%s187 + $0x4c0] sm:$0xff]
      %v611 = vld [vmem:[%s187 + $0x4c8] sm:$0xff]
      %v612 = vld [vmem:[%s187 + $0x4d0] sm:$0xff]
      %v613 = vld [vmem:[%s187 + $0x4d8] sm:$0xff]
      %v614 = vld [vmem:[%s187 + $0x4e0] sm:$0xff]
      %v615 = vld [vmem:[%s187 + $0x4e8] sm:$0xff]
      %v616 = vld [vmem:[%s187 + $0x4f0] sm:$0xff]
      %v617 = vld [vmem:[%s187 + $0x4f8] sm:$0xff]
      %v618 = vld [vmem:[%s187 + $0x500] sm:$0xff]
      %v619 = vld [vmem:[%s187 + $0x508] sm:$0xff]
      %v620 = vld [vmem:[%s187 + $0x510] sm:$0xff]
      %v621 = vld [vmem:[%s187 + $0x518] sm:$0xff]
      %v622 = vld [vmem:[%s187 + $0x520] sm:$0xff]
      %v623 = vld [vmem:[%s187 + $0x528] sm:$0xff]
      %v624 = vld [vmem:[%s187 + $0x530] sm:$0xff]
      %v625 = vld [vmem:[%s187 + $0x538] sm:$0xff]
      %v626 = vld [vmem:[%s187 + $0x540] sm:$0xff]
      %v627 = vld [vmem:[%s187 + $0x548] sm:$0xff]
      %v628 = vld [vmem:[%s187 + $0x550] sm:$0xff]
      %v629 = vld [vmem:[%s187 + $0x558] sm:$0xff]
      %v630 = vld [vmem:[%s187 + $0x560] sm:$0xff]
      %v631 = vld [vmem:[%s187 + $0x568] sm:$0xff]
      %v632 = vld [vmem:[%s187 + $0x570] sm:$0xff]
      %v633 = vld [vmem:[%s187 + $0x578] sm:$0xff]
      %v634 = vld [vmem:[%s187 + $0x580] sm:$0xff]
      %v635 = vld [vmem:[%s187 + $0x588] sm:$0xff]
      %v636 = vld [vmem:[%s187 + $0x590] sm:$0xff]
      %v637 = vld [vmem:[%s187 + $0x598] sm:$0xff]
      %v638 = vld [vmem:[%s187 + $0x5a0] sm:$0xff]
      %v639 = vld [vmem:[%s187 + $0x5a8] sm:$0xff]
      %v640 = vld [vmem:[%s187 + $0x5b0] sm:$0xff]
      %v641 = vld [vmem:[%s187 + $0x5b8] sm:$0xff]
      %v642 = vld [vmem:[%s187 + $0x5c0] sm:$0xff]
      %v643 = vld [vmem:[%s187 + $0x5c8] sm:$0xff]
      %v644 = vld [vmem:[%s187 + $0x5d0] sm:$0xff]
      %v645 = vld [vmem:[%s187 + $0x5d8] sm:$0xff]
      %v646 = vld [vmem:[%s187 + $0x5e0] sm:$0xff]
      %v647 = vld [vmem:[%s187 + $0x5e8] sm:$0xff]
      %v648 = vld [vmem:[%s187 + $0x5f0] sm:$0xff]
      %v649 = vld [vmem:[%s187 + $0x5f8] sm:$0xff]
      %v650 = vld [vmem:[%s187 + $0x600] sm:$0xff]
      %v651 = vld [vmem:[%s187 + $0x608] sm:$0xff]
      %v652 = vld [vmem:[%s187 + $0x610] sm:$0xff]
      %v653 = vld [vmem:[%s187 + $0x618] sm:$0xff]
      %v654 = vld [vmem:[%s187 + $0x620] sm:$0xff]
      %v655 = vld [vmem:[%s187 + $0x628] sm:$0xff]
      %v656 = vld [vmem:[%s187 + $0x630] sm:$0xff]
      %v657 = vld [vmem:[%s187 + $0x638] sm:$0xff]
      %v658 = vld [vmem:[%s187 + $0x640] sm:$0xff]
      %v659 = vld [vmem:[%s187 + $0x648] sm:$0xff]
      %v660 = vld [vmem:[%s187 + $0x650] sm:$0xff]
      %v661 = vld [vmem:[%s187 + $0x658] sm:$0xff]
      %v662 = vld [vmem:[%s187 + $0x660] sm:$0xff]
      %v663 = vld [vmem:[%s187 + $0x668] sm:$0xff]
      %v664 = vld [vmem:[%s187 + $0x670] sm:$0xff]
      %v665 = vld [vmem:[%s187 + $0x678] sm:$0xff]
      %v666 = vld [vmem:[%s187 + $0x680] sm:$0xff]
      %v667 = vld [vmem:[%s187 + $0x688] sm:$0xff]
      %v668 = vld [vmem:[%s187 + $0x690] sm:$0xff]
      %v669 = vld [vmem:[%s187 + $0x698] sm:$0xff]
      %v670 = vld [vmem:[%s187 + $0x6a0] sm:$0xff]
      %v671 = vld [vmem:[%s187 + $0x6a8] sm:$0xff]
      %v672 = vld [vmem:[%s187 + $0x6b0] sm:$0xff]
      %v673 = vld [vmem:[%s187 + $0x6b8] sm:$0xff]
      %v674 = vld [vmem:[%s187 + $0x6c0] sm:$0xff]
      %v675 = vld [vmem:[%s187 + $0x6c8] sm:$0xff]
      %v676 = vld [vmem:[%s187 + $0x6d0] sm:$0xff]
      %v677 = vld [vmem:[%s187 + $0x6d8] sm:$0xff]
      %v678 = vld [vmem:[%s187 + $0x6e0] sm:$0xff]
      %v679 = vld [vmem:[%s187 + $0x6e8] sm:$0xff]
      %v680 = vld [vmem:[%s187 + $0x6f0] sm:$0xff]
      %v681 = vld [vmem:[%s187 + $0x6f8] sm:$0xff]
      %v682 = vld [vmem:[%s187 + $0x700] sm:$0xff]
      %v683 = vld [vmem:[%s187 + $0x708] sm:$0xff]
      %v684 = vld [vmem:[%s187 + $0x710] sm:$0xff]
      %v685 = vld [vmem:[%s187 + $0x718] sm:$0xff]
      %v686 = vld [vmem:[%s187 + $0x720] sm:$0xff]
      %v687 = vld [vmem:[%s187 + $0x728] sm:$0xff]
      %v688 = vld [vmem:[%s187 + $0x730] sm:$0xff]
      %v689 = vld [vmem:[%s187 + $0x738] sm:$0xff]
      %v690 = vld [vmem:[%s187 + $0x740] sm:$0xff]
      %v691 = vld [vmem:[%s187 + $0x748] sm:$0xff]
      %v692 = vld [vmem:[%s187 + $0x750] sm:$0xff]
      %v693 = vld [vmem:[%s187 + $0x758] sm:$0xff]
      %v694 = vld [vmem:[%s187 + $0x760] sm:$0xff]
      %v695 = vld [vmem:[%s187 + $0x768] sm:$0xff]
      %v696 = vld [vmem:[%s187 + $0x770] sm:$0xff]
      %v697 = vld [vmem:[%s187 + $0x778] sm:$0xff]
      %v698 = vld [vmem:[%s187 + $0x780] sm:$0xff]
      %v699 = vld [vmem:[%s187 + $0x788] sm:$0xff]
      %v700 = vld [vmem:[%s187 + $0x790] sm:$0xff]
      %v701 = vld [vmem:[%s187 + $0x798] sm:$0xff]
      %v702 = vld [vmem:[%s187 + $0x7a0] sm:$0xff]
      %v703 = vld [vmem:[%s187 + $0x7a8] sm:$0xff]
      %v704 = vld [vmem:[%s187 + $0x7b0] sm:$0xff]
      %v705 = vld [vmem:[%s187 + $0x7b8] sm:$0xff]
      %v706 = vld [vmem:[%s187 + $0x7c0] sm:$0xff]
      %v707 = vld [vmem:[%s187 + $0x7c8] sm:$0xff]
      %v708 = vld [vmem:[%s187 + $0x7d0] sm:$0xff]
      %v709 = vld [vmem:[%s187 + $0x7d8] sm:$0xff]
      %v710 = vld [vmem:[%s187 + $0x7e0] sm:$0xff]
      %v711 = vld [vmem:[%s187 + $0x7e8] sm:$0xff]
      %v712 = vld [vmem:[%s187 + $0x7f0] sm:$0xff]
      %v713 = vld [vmem:[%s187 + $0x7f8] sm:$0xff]
      %v714 = vld [vmem:[%s187 + $0x800] sm:$0xff]
      %v715 = vld [vmem:[%s187 + $0x808] sm:$0xff]
      %v716 = vld [vmem:[%s187 + $0x810] sm:$0xff]
      %v717 = vld [vmem:[%s187 + $0x818] sm:$0xff]
      %v718 = vld [vmem:[%s187 + $0x820] sm:$0xff]
      %v719 = vld [vmem:[%s187 + $0x828] sm:$0xff]
      %v720 = vld [vmem:[%s187 + $0x830] sm:$0xff]
      %v721 = vld [vmem:[%s187 + $0x838] sm:$0xff]
      %v722 = vld [vmem:[%s187 + $0x840] sm:$0xff]
      %v723 = vld [vmem:[%s187 + $0x848] sm:$0xff]
      %v724 = vld [vmem:[%s187 + $0x850] sm:$0xff]
      %v725 = vld [vmem:[%s187 + $0x858] sm:$0xff]
      %v726 = vld [vmem:[%s187 + $0x860] sm:$0xff]
      %v727 = vld [vmem:[%s187 + $0x868] sm:$0xff]
      %v728 = vld [vmem:[%s187 + $0x870] sm:$0xff]
      %v729 = vld [vmem:[%s187 + $0x878] sm:$0xff]
      %v730 = vld [vmem:[%s187 + $0x880] sm:$0xff]
      %v731 = vld [vmem:[%s187 + $0x888] sm:$0xff]
      %v732 = vld [vmem:[%s187 + $0x890] sm:$0xff]
      %v733 = vld [vmem:[%s187 + $0x898] sm:$0xff]
      %v734 = vld [vmem:[%s187 + $0x8a0] sm:$0xff]
      %v735 = vld [vmem:[%s187 + $0x8a8] sm:$0xff]
      %v736 = vld [vmem:[%s187 + $0x8b0] sm:$0xff]
      %v737 = vld [vmem:[%s187 + $0x8b8] sm:$0xff]
      %v738 = vld [vmem:[%s187 + $0x8c0] sm:$0xff]
      %v739 = vld [vmem:[%s187 + $0x8c8] sm:$0xff]
      %v740 = vld [vmem:[%s187 + $0x8d0] sm:$0xff]
      %v741 = vld [vmem:[%s187 + $0x8d8] sm:$0xff]
      %v742 = vld [vmem:[%s187 + $0x8e0] sm:$0xff]
      %v743 = vld [vmem:[%s187 + $0x8e8] sm:$0xff]
      %v744 = vld [vmem:[%s187 + $0x8f0] sm:$0xff]
      %v745 = vld [vmem:[%s187 + $0x8f8] sm:$0xff]
      %v746 = vld [vmem:[%s187 + $0x900] sm:$0xff]
      %v747 = vld [vmem:[%s187 + $0x908] sm:$0xff]
      %v748 = vld [vmem:[%s187 + $0x910] sm:$0xff]
      %v749 = vld [vmem:[%s187 + $0x918] sm:$0xff]
      %v750 = vld [vmem:[%s187 + $0x920] sm:$0xff]
      %v751 = vld [vmem:[%s187 + $0x928] sm:$0xff]
      %v752 = vld [vmem:[%s187 + $0x930] sm:$0xff]
      %v753 = vld [vmem:[%s187 + $0x938] sm:$0xff]
      %v754 = vld [vmem:[%s187 + $0x940] sm:$0xff]
      %v755 = vld [vmem:[%s187 + $0x948] sm:$0xff]
      %v756 = vld [vmem:[%s187 + $0x950] sm:$0xff]
      %v757 = vld [vmem:[%s187 + $0x958] sm:$0xff]
      %v758 = vld [vmem:[%s187 + $0x960] sm:$0xff]
      %v759 = vld [vmem:[%s187 + $0x968] sm:$0xff]
      %v760 = vld [vmem:[%s187 + $0x970] sm:$0xff]
      %v761 = vld [vmem:[%s187 + $0x978] sm:$0xff]
      %v762 = vld [vmem:[%s187 + $0x980] sm:$0xff]
      %v763 = vld [vmem:[%s187 + $0x988] sm:$0xff]
      %v764 = vld [vmem:[%s187 + $0x990] sm:$0xff]
      %v765 = vld [vmem:[%s187 + $0x998] sm:$0xff]
      %v766 = vld [vmem:[%s187 + $0x9a0] sm:$0xff]
      %v767 = vld [vmem:[%s187 + $0x9a8] sm:$0xff]
      %v768 = vld [vmem:[%s187 + $0x9b0] sm:$0xff]
      %v769 = vld [vmem:[%s187 + $0x9b8] sm:$0xff]
      %v770 = vld [vmem:[%s187 + $0x9c0] sm:$0xff]
      %v771 = vld [vmem:[%s187 + $0x9c8] sm:$0xff]
      %v772 = vld [vmem:[%s187 + $0x9d0] sm:$0xff]
      %v773 = vld [vmem:[%s187 + $0x9d8] sm:$0xff]
      %v774 = vld [vmem:[%s187 + $0x9e0] sm:$0xff]
      %v775 = vld [vmem:[%s187 + $0x9e8] sm:$0xff]
      %v776 = vld [vmem:[%s187 + $0x9f0] sm:$0xff]
      %v777 = vld [vmem:[%s187 + $0x9f8] sm:$0xff]
      %v778 = vld [vmem:[%s187 + $0xa00] sm:$0xff]
      %v779 = vld [vmem:[%s187 + $0xa08] sm:$0xff]
      %v780 = vld [vmem:[%s187 + $0xa10] sm:$0xff]
      %v781 = vld [vmem:[%s187 + $0xa18] sm:$0xff]
      %v782 = vld [vmem:[%s187 + $0xa20] sm:$0xff]
      %v783 = vld [vmem:[%s187 + $0xa28] sm:$0xff]
      %v784 = vld [vmem:[%s187 + $0xa30] sm:$0xff]
      %v785 = vld [vmem:[%s187 + $0xa38] sm:$0xff]
      %v786 = vld [vmem:[%s187 + $0xa40] sm:$0xff]
      %v787 = vld [vmem:[%s187 + $0xa48] sm:$0xff]
      %v788 = vld [vmem:[%s187 + $0xa50] sm:$0xff]
      %v789 = vld [vmem:[%s187 + $0xa58] sm:$0xff]
      %v790 = vld [vmem:[%s187 + $0xa60] sm:$0xff]
      %v791 = vld [vmem:[%s187 + $0xa68] sm:$0xff]
      %v792 = vld [vmem:[%s187 + $0xa70] sm:$0xff]
      %v793 = vld [vmem:[%s187 + $0xa78] sm:$0xff]
      %v794 = vld [vmem:[%s187 + $0xa80] sm:$0xff]
      %v795 = vld [vmem:[%s187 + $0xa88] sm:$0xff]
      %v796 = vld [vmem:[%s187 + $0xa90] sm:$0xff]
      %v797 = vld [vmem:[%s187 + $0xa98] sm:$0xff]
      %v798 = vld [vmem:[%s187 + $0xaa0] sm:$0xff]
      %v799 = vld [vmem:[%s187 + $0xaa8] sm:$0xff]
      %v800 = vld [vmem:[%s187 + $0xab0] sm:$0xff]
      %v801 = vld [vmem:[%s187 + $0xab8] sm:$0xff]
      %v802 = vld [vmem:[%s187 + $0xac0] sm:$0xff]
      %v803 = vld [vmem:[%s187 + $0xac8] sm:$0xff]
      %v804 = vld [vmem:[%s187 + $0xad0] sm:$0xff]
      %v805 = vld [vmem:[%s187 + $0xad8] sm:$0xff]
      %v806 = vld [vmem:[%s187 + $0xae0] sm:$0xff]
      %v807 = vld [vmem:[%s187 + $0xae8] sm:$0xff]
      %v808 = vld [vmem:[%s187 + $0xaf0] sm:$0xff]
      %v809 = vld [vmem:[%s187 + $0xaf8] sm:$0xff]
      %v810 = vld [vmem:[%s187 + $0xb00] sm:$0xff]
      %v811 = vld [vmem:[%s187 + $0xb08] sm:$0xff]
      %v812 = vld [vmem:[%s187 + $0xb10] sm:$0xff]
      %v813 = vld [vmem:[%s187 + $0xb18] sm:$0xff]
      %v814 = vld [vmem:[%s187 + $0xb20] sm:$0xff]
      %v815 = vld [vmem:[%s187 + $0xb28] sm:$0xff]
      %v816 = vld [vmem:[%s187 + $0xb30] sm:$0xff]
      %v817 = vld [vmem:[%s187 + $0xb38] sm:$0xff]
      %v818 = vld [vmem:[%s187 + $0xb40] sm:$0xff]
      %v819 = vld [vmem:[%s187 + $0xb48] sm:$0xff]
      %v820 = vld [vmem:[%s187 + $0xb50] sm:$0xff]
      %v821 = vld [vmem:[%s187 + $0xb58] sm:$0xff]
      %v822 = vld [vmem:[%s187 + $0xb60] sm:$0xff]
      %v823 = vld [vmem:[%s187 + $0xb68] sm:$0xff]
      %v824 = vld [vmem:[%s187 + $0xb70] sm:$0xff]
      %v825 = vld [vmem:[%s187 + $0xb78] sm:$0xff]
      %v826 = vld [vmem:[%s187 + $0xb80] sm:$0xff]
      %v827 = vld [vmem:[%s187 + $0xb88] sm:$0xff]
      %v828 = vld [vmem:[%s187 + $0xb90] sm:$0xff]
      %v829 = vld [vmem:[%s187 + $0xb98] sm:$0xff]
      %v830 = vld [vmem:[%s187 + $0xba0] sm:$0xff]
      %v831 = vld [vmem:[%s187 + $0xba8] sm:$0xff]
      %v832 = vld [vmem:[%s187 + $0xbb0] sm:$0xff]
      %v833 = vld [vmem:[%s187 + $0xbb8] sm:$0xff]
      %v834 = vld [vmem:[%s187 + $0xbc0] sm:$0xff]
      %v835 = vld [vmem:[%s187 + $0xbc8] sm:$0xff]
      %v836 = vld [vmem:[%s187 + $0xbd0] sm:$0xff]
      %v837 = vld [vmem:[%s187 + $0xbd8] sm:$0xff]
      %v838 = vld [vmem:[%s187 + $0xbe0] sm:$0xff]
      %v839 = vld [vmem:[%s187 + $0xbe8] sm:$0xff]
      %v840 = vld [vmem:[%s187 + $0xbf0] sm:$0xff]
      %v841 = vld [vmem:[%s187 + $0xbf8] sm:$0xff]
      %v842 = vld [vmem:[%s187 + $0xc00] sm:$0xff]
      %v843 = vld [vmem:[%s187 + $0xc08] sm:$0xff]
      %v844 = vld [vmem:[%s187 + $0xc10] sm:$0xff]
      %v845 = vld [vmem:[%s187 + $0xc18] sm:$0xff]
      %v846 = vld [vmem:[%s187 + $0xc20] sm:$0xff]
      %v847 = vld [vmem:[%s187 + $0xc28] sm:$0xff]
      %v848 = vld [vmem:[%s187 + $0xc30] sm:$0xff]
      %v849 = vld [vmem:[%s187 + $0xc38] sm:$0xff]
      %v850 = vld [vmem:[%s187 + $0xc40] sm:$0xff]
      %v851 = vld [vmem:[%s187 + $0xc48] sm:$0xff]
      %v852 = vld [vmem:[%s187 + $0xc50] sm:$0xff]
      %v853 = vld [vmem:[%s187 + $0xc58] sm:$0xff]
      %v854 = vld [vmem:[%s187 + $0xc60] sm:$0xff]
      %v855 = vld [vmem:[%s187 + $0xc68] sm:$0xff]
      %v856 = vld [vmem:[%s187 + $0xc70] sm:$0xff]
      %v857 = vld [vmem:[%s187 + $0xc78] sm:$0xff]
      %v858 = vld [vmem:[%s187 + $0xc80] sm:$0xff]
      %v859 = vld [vmem:[%s187 + $0xc88] sm:$0xff]
      %v860 = vld [vmem:[%s187 + $0xc90] sm:$0xff]
      %v861 = vld [vmem:[%s187 + $0xc98] sm:$0xff]
      %v862 = vld [vmem:[%s187 + $0xca0] sm:$0xff]
      %v863 = vld [vmem:[%s187 + $0xca8] sm:$0xff]
      %v864 = vld [vmem:[%s187 + $0xcb0] sm:$0xff]
      %v865 = vld [vmem:[%s187 + $0xcb8] sm:$0xff]
      %v866 = vld [vmem:[%s187 + $0xcc0] sm:$0xff]
      %v867 = vld [vmem:[%s187 + $0xcc8] sm:$0xff]
      %v868 = vld [vmem:[%s187 + $0xcd0] sm:$0xff]
      %v869 = vld [vmem:[%s187 + $0xcd8] sm:$0xff]
      %v870 = vld [vmem:[%s187 + $0xce0] sm:$0xff]
      %v871 = vld [vmem:[%s187 + $0xce8] sm:$0xff]
      %v872 = vld [vmem:[%s187 + $0xcf0] sm:$0xff]
      %v873 = vld [vmem:[%s187 + $0xcf8] sm:$0xff]
      %v874 = vld [vmem:[%s187 + $0xd00] sm:$0xff]
      %v875 = vld [vmem:[%s187 + $0xd08] sm:$0xff]
      %v876 = vld [vmem:[%s187 + $0xd10] sm:$0xff]
      %v877 = vld [vmem:[%s187 + $0xd18] sm:$0xff]
      %v878 = vld [vmem:[%s187 + $0xd20] sm:$0xff]
      %v879 = vld [vmem:[%s187 + $0xd28] sm:$0xff]
      %v880 = vld [vmem:[%s187 + $0xd30] sm:$0xff]
      %v881 = vld [vmem:[%s187 + $0xd38] sm:$0xff]
      %v882 = vld [vmem:[%s187 + $0xd40] sm:$0xff]
      %v883 = vld [vmem:[%s187 + $0xd48] sm:$0xff]
      %v884 = vld [vmem:[%s187 + $0xd50] sm:$0xff]
      %v885 = vld [vmem:[%s187 + $0xd58] sm:$0xff]
      %v886 = vld [vmem:[%s187 + $0xd60] sm:$0xff]
      %v887 = vld [vmem:[%s187 + $0xd68] sm:$0xff]
      %v888 = vld [vmem:[%s187 + $0xd70] sm:$0xff]
      %v889 = vld [vmem:[%s187 + $0xd78] sm:$0xff]
      %v890 = vld [vmem:[%s187 + $0xd80] sm:$0xff]
      %v891 = vld [vmem:[%s187 + $0xd88] sm:$0xff]
      %v892 = vld [vmem:[%s187 + $0xd90] sm:$0xff]
      %v893 = vld [vmem:[%s187 + $0xd98] sm:$0xff]
      %v894 = vld [vmem:[%s187 + $0xda0] sm:$0xff]
      %v895 = vld [vmem:[%s187 + $0xda8] sm:$0xff]
      %v896 = vld [vmem:[%s187 + $0xdb0] sm:$0xff]
      %v897 = vld [vmem:[%s187 + $0xdb8] sm:$0xff]
      %v898 = vld [vmem:[%s187 + $0xdc0] sm:$0xff]
      %v899 = vld [vmem:[%s187 + $0xdc8] sm:$0xff]
      %v900 = vld [vmem:[%s187 + $0xdd0] sm:$0xff]
      %v901 = vld [vmem:[%s187 + $0xdd8] sm:$0xff]
      %v902 = vld [vmem:[%s187 + $0xde0] sm:$0xff]
      %v903 = vld [vmem:[%s187 + $0xde8] sm:$0xff]
      %v904 = vld [vmem:[%s187 + $0xdf0] sm:$0xff]
      %v905 = vld [vmem:[%s187 + $0xdf8] sm:$0xff]
      %v906 = vld [vmem:[%s187 + $0xe00] sm:$0xff]
      %v907 = vld [vmem:[%s187 + $0xe08] sm:$0xff]
      %v908 = vld [vmem:[%s187 + $0xe10] sm:$0xff]
      %v909 = vld [vmem:[%s187 + $0xe18] sm:$0xff]
      %v910 = vld [vmem:[%s187 + $0xe20] sm:$0xff]
      %v911 = vld [vmem:[%s187 + $0xe28] sm:$0xff]
      %v912 = vld [vmem:[%s187 + $0xe30] sm:$0xff]
      %v913 = vld [vmem:[%s187 + $0xe38] sm:$0xff]
      %v914 = vld [vmem:[%s187 + $0xe40] sm:$0xff]
      %v915 = vld [vmem:[%s187 + $0xe48] sm:$0xff]
      %v916 = vld [vmem:[%s187 + $0xe50] sm:$0xff]
      %v917 = vld [vmem:[%s187 + $0xe58] sm:$0xff]
      %v918 = vld [vmem:[%s187 + $0xe60] sm:$0xff]
      %v919 = vld [vmem:[%s187 + $0xe68] sm:$0xff]
      %v920 = vld [vmem:[%s187 + $0xe70] sm:$0xff]
      %v921 = vld [vmem:[%s187 + $0xe78] sm:$0xff]
      %v922 = vld [vmem:[%s187 + $0xe80] sm:$0xff]
      %v923 = vld [vmem:[%s187 + $0xe88] sm:$0xff]
      %v924 = vld [vmem:[%s187 + $0xe90] sm:$0xff]
      %v925 = vld [vmem:[%s187 + $0xe98] sm:$0xff]
      %v926 = vld [vmem:[%s187 + $0xea0] sm:$0xff]
      %v927 = vld [vmem:[%s187 + $0xea8] sm:$0xff]
      %v928 = vld [vmem:[%s187 + $0xeb0] sm:$0xff]
      %v929 = vld [vmem:[%s187 + $0xeb8] sm:$0xff]
      %v930 = vld [vmem:[%s187 + $0xec0] sm:$0xff]
      %v931 = vld [vmem:[%s187 + $0xec8] sm:$0xff]
      %v932 = vld [vmem:[%s187 + $0xed0] sm:$0xff]
      %v933 = vld [vmem:[%s187 + $0xed8] sm:$0xff]
      %v934 = vld [vmem:[%s187 + $0xee0] sm:$0xff]
      %v935 = vld [vmem:[%s187 + $0xee8] sm:$0xff]
      %v936 = vld [vmem:[%s187 + $0xef0] sm:$0xff]
      %v937 = vld [vmem:[%s187 + $0xef8] sm:$0xff]
      %v938 = vld [vmem:[%s187 + $0xf00] sm:$0xff]
      %v939 = vld [vmem:[%s187 + $0xf08] sm:$0xff]
      %v940 = vld [vmem:[%s187 + $0xf10] sm:$0xff]
      %v941 = vld [vmem:[%s187 + $0xf18] sm:$0xff]
      %v942 = vld [vmem:[%s187 + $0xf20] sm:$0xff]
      %v943 = vld [vmem:[%s187 + $0xf28] sm:$0xff]
      %v944 = vld [vmem:[%s187 + $0xf30] sm:$0xff]
      %v945 = vld [vmem:[%s187 + $0xf38] sm:$0xff]
      %v946 = vld [vmem:[%s187 + $0xf40] sm:$0xff]
      %v947 = vld [vmem:[%s187 + $0xf48] sm:$0xff]
      %v948 = vld [vmem:[%s187 + $0xf50] sm:$0xff]
      %v949 = vld [vmem:[%s187 + $0xf58] sm:$0xff]
      %v950 = vld [vmem:[%s187 + $0xf60] sm:$0xff]
      %v951 = vld [vmem:[%s187 + $0xf68] sm:$0xff]
      %v952 = vld [vmem:[%s187 + $0xf70] sm:$0xff]
      %v953 = vld [vmem:[%s187 + $0xf78] sm:$0xff]
      %v954 = vld [vmem:[%s187 + $0xf80] sm:$0xff]
      %v955 = vld [vmem:[%s187 + $0xf88] sm:$0xff]
      %v956 = vld [vmem:[%s187 + $0xf90] sm:$0xff]
      %v957 = vld [vmem:[%s187 + $0xf98] sm:$0xff]
      %v958 = vld [vmem:[%s187 + $0xfa0] sm:$0xff]
      %v959 = vld [vmem:[%s187 + $0xfa8] sm:$0xff]
      %v960 = vld [vmem:[%s187 + $0xfb0] sm:$0xff]
      %v961 = vld [vmem:[%s187 + $0xfb8] sm:$0xff]
      %v962 = vld [vmem:[%s187 + $0xfc0] sm:$0xff]
      %v963 = vld [vmem:[%s187 + $0xfc8] sm:$0xff]
      %v964 = vld [vmem:[%s187 + $0xfd0] sm:$0xff]
      %v965 = vld [vmem:[%s187 + $0xfd8] sm:$0xff]
      %v966 = vld [vmem:[%s187 + $0xfe0] sm:$0xff]
      %v967 = vld [vmem:[%s187 + $0xfe8] sm:$0xff]
      %v968 = vld [vmem:[%s187 + $0xff0] sm:$0xff]
      %v969 = vld [vmem:[%s187 + $0xff8] sm:$0xff]
      %vm970 = vcmask 818176
      %v972 = vsel %vm970, %v202, 0
      %v975 = vsel %vm970, %v203, 0
      %v978 = vsel %vm970, %v458, 0
      %v981 = vsel %vm970, %v459, 0
      %v984 = vsel %vm970, %v460, 0
      %v987 = vsel %vm970, %v461, 0
      %989 = vmatpush.xpose.msra.mxu0 0.0
      %990 = vmatpush.xpose.msra.mxu0 0.0
      %991 = vmatpush.xpose.msra.mxu0 0.0
      %992 = vmatpush.xpose.msra.mxu0 0.0
      %993 = vmatpush.xpose.msra.mxu0 0.0
      %994 = vmatpush.xpose.msra.mxu0 0.0
      %995 = vmatpush.xpose.msra.mxu0 0.0
      %996 = vmatpush.xpose.msra.mxu0 0.0
      %997 = vmatpush.xpose.msra.mxu0 0.0
      %998 = vmatpush.xpose.msra.mxu0 0.0
      %999 = vmatpush.xpose.msra.mxu0 0.0
      %1000 = vmatpush.xpose.msra.mxu0 0.0
      %1001 = vmatpush.xpose.msra.mxu0 %v987
      %1002 = vmatpush.xpose.msra.mxu0 %v984
      %1003 = vmatpush.xpose.msra.mxu0 %v981
      %1004 = vmatpush.xpose.msra.mxu0 %v978
      %1005 = vmatmul.f32.gmra.mxu0 %v972
      %v1006 = vpop.f32.mrf.mxu0
      %v1007 = vadd.f32 0.0, %v1006
      %1008 = vmatmul.f32.gmra.mxu0 %v975
      %v1009 = vpop.f32.mrf.mxu0
      %v1010 = vadd.f32 0.0, %v1009
      %1011 = vdwg.mxu0
      %v1013 = vsel %vm970, %v204, 0
      %v1016 = vsel %vm970, %v205, 0
      %v1019 = vsel %vm970, %v462, 0
      %v1022 = vsel %vm970, %v463, 0
      %v1025 = vsel %vm970, %v464, 0
      %v1028 = vsel %vm970, %v465, 0
      %1030 = vmatpush.xpose.msra.mxu0 0.0
      %1031 = vmatpush.xpose.msra.mxu0 0.0
      %1032 = vmatpush.xpose.msra.mxu0 0.0
      %1033 = vmatpush.xpose.msra.mxu0 0.0
      %1034 = vmatpush.xpose.msra.mxu0 0.0
      %1035 = vmatpush.xpose.msra.mxu0 0.0
      %1036 = vmatpush.xpose.msra.mxu0 0.0
      %1037 = vmatpush.xpose.msra.mxu0 0.0
      %1038 = vmatpush.xpose.msra.mxu0 0.0
      %1039 = vmatpush.xpose.msra.mxu0 0.0
      %1040 = vmatpush.xpose.msra.mxu0 0.0
      %1041 = vmatpush.xpose.msra.mxu0 0.0
      %1042 = vmatpush.xpose.msra.mxu0 %v1028
      %1043 = vmatpush.xpose.msra.mxu0 %v1025
      %1044 = vmatpush.xpose.msra.mxu0 %v1022
      %1045 = vmatpush.xpose.msra.mxu0 %v1019
      %1046 = vmatmul.f32.gmra.mxu0 %v1013
      %v1047 = vpop.f32.mrf.mxu0
      %v1048 = vadd.f32 0.0, %v1047
      %1049 = vmatmul.f32.gmra.mxu0 %v1016
      %v1050 = vpop.f32.mrf.mxu0
      %v1051 = vadd.f32 0.0, %v1050
      %1052 = vdwg.mxu0
      %v1054 = vsel %vm970, %v206, 0
      %v1057 = vsel %vm970, %v207, 0
      %v1060 = vsel %vm970, %v466, 0
      %v1063 = vsel %vm970, %v467, 0
      %v1066 = vsel %vm970, %v468, 0
      %v1069 = vsel %vm970, %v469, 0
      %1071 = vmatpush.xpose.msra.mxu0 0.0
      %1072 = vmatpush.xpose.msra.mxu0 0.0
      %1073 = vmatpush.xpose.msra.mxu0 0.0
      %1074 = vmatpush.xpose.msra.mxu0 0.0
      %1075 = vmatpush.xpose.msra.mxu0 0.0
      %1076 = vmatpush.xpose.msra.mxu0 0.0
      %1077 = vmatpush.xpose.msra.mxu0 0.0
      %1078 = vmatpush.xpose.msra.mxu0 0.0
      %1079 = vmatpush.xpose.msra.mxu0 0.0
      %1080 = vmatpush.xpose.msra.mxu0 0.0
      %1081 = vmatpush.xpose.msra.mxu0 0.0
      %1082 = vmatpush.xpose.msra.mxu0 0.0
      %1083 = vmatpush.xpose.msra.mxu0 %v1069
      %1084 = vmatpush.xpose.msra.mxu0 %v1066
      %1085 = vmatpush.xpose.msra.mxu0 %v1063
      %1086 = vmatpush.xpose.msra.mxu0 %v1060
      %1087 = vmatmul.f32.gmra.mxu0 %v1054
      %v1088 = vpop.f32.mrf.mxu0
      %v1089 = vadd.f32 0.0, %v1088
      %1090 = vmatmul.f32.gmra.mxu0 %v1057
      %v1091 = vpop.f32.mrf.mxu0
      %v1092 = vadd.f32 0.0, %v1091
      %1093 = vdwg.mxu0
      %v1095 = vsel %vm970, %v208, 0
      %v1098 = vsel %vm970, %v209, 0
      %v1101 = vsel %vm970, %v470, 0
      %v1104 = vsel %vm970, %v471, 0
      %v1107 = vsel %vm970, %v472, 0
      %v1110 = vsel %vm970, %v473, 0
      %1112 = vmatpush.xpose.msra.mxu0 0.0
      %1113 = vmatpush.xpose.msra.mxu0 0.0
      %1114 = vmatpush.xpose.msra.mxu0 0.0
      %1115 = vmatpush.xpose.msra.mxu0 0.0
      %1116 = vmatpush.xpose.msra.mxu0 0.0
      %1117 = vmatpush.xpose.msra.mxu0 0.0
      %1118 = vmatpush.xpose.msra.mxu0 0.0
      %1119 = vmatpush.xpose.msra.mxu0 0.0
      %1120 = vmatpush.xpose.msra.mxu0 0.0
      %1121 = vmatpush.xpose.msra.mxu0 0.0
      %1122 = vmatpush.xpose.msra.mxu0 0.0
      %1123 = vmatpush.xpose.msra.mxu0 0.0
      %1124 = vmatpush.xpose.msra.mxu0 %v1110
      %1125 = vmatpush.xpose.msra.mxu0 %v1107
      %1126 = vmatpush.xpose.msra.mxu0 %v1104
      %1127 = vmatpush.xpose.msra.mxu0 %v1101
      %1128 = vmatmul.f32.gmra.mxu0 %v1095
      %v1129 = vpop.f32.mrf.mxu0
      %v1130 = vadd.f32 0.0, %v1129
      %1131 = vmatmul.f32.gmra.mxu0 %v1098
      %v1132 = vpop.f32.mrf.mxu0
      %v1133 = vadd.f32 0.0, %v1132
      %1134 = vdwg.mxu0
      %v1136 = vsel %vm970, %v210, 0
      %v1139 = vsel %vm970, %v211, 0
      %v1142 = vsel %vm970, %v474, 0
      %v1145 = vsel %vm970, %v475, 0
      %v1148 = vsel %vm970, %v476, 0
      %v1151 = vsel %vm970, %v477, 0
      %1153 = vmatpush.xpose.msra.mxu0 0.0
      %1154 = vmatpush.xpose.msra.mxu0 0.0
      %1155 = vmatpush.xpose.msra.mxu0 0.0
      %1156 = vmatpush.xpose.msra.mxu0 0.0
      %1157 = vmatpush.xpose.msra.mxu0 0.0
      %1158 = vmatpush.xpose.msra.mxu0 0.0
      %1159 = vmatpush.xpose.msra.mxu0 0.0
      %1160 = vmatpush.xpose.msra.mxu0 0.0
      %1161 = vmatpush.xpose.msra.mxu0 0.0
      %1162 = vmatpush.xpose.msra.mxu0 0.0
      %1163 = vmatpush.xpose.msra.mxu0 0.0
      %1164 = vmatpush.xpose.msra.mxu0 0.0
      %1165 = vmatpush.xpose.msra.mxu0 %v1151
      %1166 = vmatpush.xpose.msra.mxu0 %v1148
      %1167 = vmatpush.xpose.msra.mxu0 %v1145
      %1168 = vmatpush.xpose.msra.mxu0 %v1142
      %1169 = vmatmul.f32.gmra.mxu0 %v1136
      %v1170 = vpop.f32.mrf.mxu0
      %v1171 = vadd.f32 0.0, %v1170
      %1172 = vmatmul.f32.gmra.mxu0 %v1139
      %v1173 = vpop.f32.mrf.mxu0
      %v1174 = vadd.f32 0.0, %v1173
      %1175 = vdwg.mxu0
      %v1177 = vsel %vm970, %v212, 0
      %v1180 = vsel %vm970, %v213, 0
      %v1183 = vsel %vm970, %v478, 0
      %v1186 = vsel %vm970, %v479, 0
      %v1189 = vsel %vm970, %v480, 0
      %v1192 = vsel %vm970, %v481, 0
      %1194 = vmatpush.xpose.msra.mxu0 0.0
      %1195 = vmatpush.xpose.msra.mxu0 0.0
      %1196 = vmatpush.xpose.msra.mxu0 0.0
      %1197 = vmatpush.xpose.msra.mxu0 0.0
      %1198 = vmatpush.xpose.msra.mxu0 0.0
      %1199 = vmatpush.xpose.msra.mxu0 0.0
      %1200 = vmatpush.xpose.msra.mxu0 0.0
      %1201 = vmatpush.xpose.msra.mxu0 0.0
      %1202 = vmatpush.xpose.msra.mxu0 0.0
      %1203 = vmatpush.xpose.msra.mxu0 0.0
      %1204 = vmatpush.xpose.msra.mxu0 0.0
      %1205 = vmatpush.xpose.msra.mxu0 0.0
      %1206 = vmatpush.xpose.msra.mxu0 %v1192
      %1207 = vmatpush.xpose.msra.mxu0 %v1189
      %1208 = vmatpush.xpose.msra.mxu0 %v1186
      %1209 = vmatpush.xpose.msra.mxu0 %v1183
      %1210 = vmatmul.f32.gmra.mxu0 %v1177
      %v1211 = vpop.f32.mrf.mxu0
      %v1212 = vadd.f32 0.0, %v1211
      %1213 = vmatmul.f32.gmra.mxu0 %v1180
      %v1214 = vpop.f32.mrf.mxu0
      %v1215 = vadd.f32 0.0, %v1214
      %1216 = vdwg.mxu0
      %v1218 = vsel %vm970, %v214, 0
      %v1221 = vsel %vm970, %v215, 0
      %v1224 = vsel %vm970, %v482, 0
      %v1227 = vsel %vm970, %v483, 0
      %v1230 = vsel %vm970, %v484, 0
      %v1233 = vsel %vm970, %v485, 0
      %1235 = vmatpush.xpose.msra.mxu0 0.0
      %1236 = vmatpush.xpose.msra.mxu0 0.0
      %1237 = vmatpush.xpose.msra.mxu0 0.0
      %1238 = vmatpush.xpose.msra.mxu0 0.0
      %1239 = vmatpush.xpose.msra.mxu0 0.0
      %1240 = vmatpush.xpose.msra.mxu0 0.0
      %1241 = vmatpush.xpose.msra.mxu0 0.0
      %1242 = vmatpush.xpose.msra.mxu0 0.0
      %1243 = vmatpush.xpose.msra.mxu0 0.0
      %1244 = vmatpush.xpose.msra.mxu0 0.0
      %1245 = vmatpush.xpose.msra.mxu0 0.0
      %1246 = vmatpush.xpose.msra.mxu0 0.0
      %1247 = vmatpush.xpose.msra.mxu0 %v1233
      %1248 = vmatpush.xpose.msra.mxu0 %v1230
      %1249 = vmatpush.xpose.msra.mxu0 %v1227
      %1250 = vmatpush.xpose.msra.mxu0 %v1224
      %1251 = vmatmul.f32.gmra.mxu0 %v1218
      %v1252 = vpop.f32.mrf.mxu0
      %v1253 = vadd.f32 0.0, %v1252
      %1254 = vmatmul.f32.gmra.mxu0 %v1221
      %v1255 = vpop.f32.mrf.mxu0
      %v1256 = vadd.f32 0.0, %v1255
      %1257 = vdwg.mxu0
      %v1259 = vsel %vm970, %v216, 0
      %v1262 = vsel %vm970, %v217, 0
      %v1265 = vsel %vm970, %v486, 0
      %v1268 = vsel %vm970, %v487, 0
      %v1271 = vsel %vm970, %v488, 0
      %v1274 = vsel %vm970, %v489, 0
      %1276 = vmatpush.xpose.msra.mxu0 0.0
      %1277 = vmatpush.xpose.msra.mxu0 0.0
      %1278 = vmatpush.xpose.msra.mxu0 0.0
      %1279 = vmatpush.xpose.msra.mxu0 0.0
      %1280 = vmatpush.xpose.msra.mxu0 0.0
      %1281 = vmatpush.xpose.msra.mxu0 0.0
      %1282 = vmatpush.xpose.msra.mxu0 0.0
      %1283 = vmatpush.xpose.msra.mxu0 0.0
      %1284 = vmatpush.xpose.msra.mxu0 0.0
      %1285 = vmatpush.xpose.msra.mxu0 0.0
      %1286 = vmatpush.xpose.msra.mxu0 0.0
      %1287 = vmatpush.xpose.msra.mxu0 0.0
      %1288 = vmatpush.xpose.msra.mxu0 %v1274
      %1289 = vmatpush.xpose.msra.mxu0 %v1271
      %1290 = vmatpush.xpose.msra.mxu0 %v1268
      %1291 = vmatpush.xpose.msra.mxu0 %v1265
      %1292 = vmatmul.f32.gmra.mxu0 %v1259
      %v1293 = vpop.f32.mrf.mxu0
      %v1294 = vadd.f32 0.0, %v1293
      %1295 = vmatmul.f32.gmra.mxu0 %v1262
      %v1296 = vpop.f32.mrf.mxu0
      %v1297 = vadd.f32 0.0, %v1296
      %1298 = vdwg.mxu0
      %v1300 = vsel %vm970, %v218, 0
      %v1303 = vsel %vm970, %v219, 0
      %v1306 = vsel %vm970, %v490, 0
      %v1309 = vsel %vm970, %v491, 0
      %v1312 = vsel %vm970, %v492, 0
      %v1315 = vsel %vm970, %v493, 0
      %1317 = vmatpush.xpose.msra.mxu0 0.0
      %1318 = vmatpush.xpose.msra.mxu0 0.0
      %1319 = vmatpush.xpose.msra.mxu0 0.0
      %1320 = vmatpush.xpose.msra.mxu0 0.0
      %1321 = vmatpush.xpose.msra.mxu0 0.0
      %1322 = vmatpush.xpose.msra.mxu0 0.0
      %1323 = vmatpush.xpose.msra.mxu0 0.0
      %1324 = vmatpush.xpose.msra.mxu0 0.0
      %1325 = vmatpush.xpose.msra.mxu0 0.0
      %1326 = vmatpush.xpose.msra.mxu0 0.0
      %1327 = vmatpush.xpose.msra.mxu0 0.0
      %1328 = vmatpush.xpose.msra.mxu0 0.0
      %1329 = vmatpush.xpose.msra.mxu0 %v1315
      %1330 = vmatpush.xpose.msra.mxu0 %v1312
      %1331 = vmatpush.xpose.msra.mxu0 %v1309
      %1332 = vmatpush.xpose.msra.mxu0 %v1306
      %1333 = vmatmul.f32.gmra.mxu0 %v1300
      %v1334 = vpop.f32.mrf.mxu0
      %v1335 = vadd.f32 0.0, %v1334
      %1336 = vmatmul.f32.gmra.mxu0 %v1303
      %v1337 = vpop.f32.mrf.mxu0
      %v1338 = vadd.f32 0.0, %v1337
      %1339 = vdwg.mxu0
      %v1341 = vsel %vm970, %v220, 0
      %v1344 = vsel %vm970, %v221, 0
      %v1347 = vsel %vm970, %v494, 0
      %v1350 = vsel %vm970, %v495, 0
      %v1353 = vsel %vm970, %v496, 0
      %v1356 = vsel %vm970, %v497, 0
      %1358 = vmatpush.xpose.msra.mxu0 0.0
      %1359 = vmatpush.xpose.msra.mxu0 0.0
      %1360 = vmatpush.xpose.msra.mxu0 0.0
      %1361 = vmatpush.xpose.msra.mxu0 0.0
      %1362 = vmatpush.xpose.msra.mxu0 0.0
      %1363 = vmatpush.xpose.msra.mxu0 0.0
      %1364 = vmatpush.xpose.msra.mxu0 0.0
      %1365 = vmatpush.xpose.msra.mxu0 0.0
      %1366 = vmatpush.xpose.msra.mxu0 0.0
      %1367 = vmatpush.xpose.msra.mxu0 0.0
      %1368 = vmatpush.xpose.msra.mxu0 0.0
      %1369 = vmatpush.xpose.msra.mxu0 0.0
      %1370 = vmatpush.xpose.msra.mxu0 %v1356
      %1371 = vmatpush.xpose.msra.mxu0 %v1353
      %1372 = vmatpush.xpose.msra.mxu0 %v1350
      %1373 = vmatpush.xpose.msra.mxu0 %v1347
      %1374 = vmatmul.f32.gmra.mxu0 %v1341
      %v1375 = vpop.f32.mrf.mxu0
      %v1376 = vadd.f32 0.0, %v1375
      %1377 = vmatmul.f32.gmra.mxu0 %v1344
      %v1378 = vpop.f32.mrf.mxu0
      %v1379 = vadd.f32 0.0, %v1378
      %1380 = vdwg.mxu0
      %v1382 = vsel %vm970, %v222, 0
      %v1385 = vsel %vm970, %v223, 0
      %v1388 = vsel %vm970, %v498, 0
      %v1391 = vsel %vm970, %v499, 0
      %v1394 = vsel %vm970, %v500, 0
      %v1397 = vsel %vm970, %v501, 0
      %1399 = vmatpush.xpose.msra.mxu0 0.0
      %1400 = vmatpush.xpose.msra.mxu0 0.0
      %1401 = vmatpush.xpose.msra.mxu0 0.0
      %1402 = vmatpush.xpose.msra.mxu0 0.0
      %1403 = vmatpush.xpose.msra.mxu0 0.0
      %1404 = vmatpush.xpose.msra.mxu0 0.0
      %1405 = vmatpush.xpose.msra.mxu0 0.0
      %1406 = vmatpush.xpose.msra.mxu0 0.0
      %1407 = vmatpush.xpose.msra.mxu0 0.0
      %1408 = vmatpush.xpose.msra.mxu0 0.0
      %1409 = vmatpush.xpose.msra.mxu0 0.0
      %1410 = vmatpush.xpose.msra.mxu0 0.0
      %1411 = vmatpush.xpose.msra.mxu0 %v1397
      %1412 = vmatpush.xpose.msra.mxu0 %v1394
      %1413 = vmatpush.xpose.msra.mxu0 %v1391
      %1414 = vmatpush.xpose.msra.mxu0 %v1388
      %1415 = vmatmul.f32.gmra.mxu0 %v1382
      %v1416 = vpop.f32.mrf.mxu0
      %v1417 = vadd.f32 0.0, %v1416
      %1418 = vmatmul.f32.gmra.mxu0 %v1385
      %v1419 = vpop.f32.mrf.mxu0
      %v1420 = vadd.f32 0.0, %v1419
      %1421 = vdwg.mxu0
      %v1423 = vsel %vm970, %v224, 0
      %v1426 = vsel %vm970, %v225, 0
      %v1429 = vsel %vm970, %v502, 0
      %v1432 = vsel %vm970, %v503, 0
      %v1435 = vsel %vm970, %v504, 0
      %v1438 = vsel %vm970, %v505, 0
      %1440 = vmatpush.xpose.msra.mxu0 0.0
      %1441 = vmatpush.xpose.msra.mxu0 0.0
      %1442 = vmatpush.xpose.msra.mxu0 0.0
      %1443 = vmatpush.xpose.msra.mxu0 0.0
      %1444 = vmatpush.xpose.msra.mxu0 0.0
      %1445 = vmatpush.xpose.msra.mxu0 0.0
      %1446 = vmatpush.xpose.msra.mxu0 0.0
      %1447 = vmatpush.xpose.msra.mxu0 0.0
      %1448 = vmatpush.xpose.msra.mxu0 0.0
      %1449 = vmatpush.xpose.msra.mxu0 0.0
      %1450 = vmatpush.xpose.msra.mxu0 0.0
      %1451 = vmatpush.xpose.msra.mxu0 0.0
      %1452 = vmatpush.xpose.msra.mxu0 %v1438
      %1453 = vmatpush.xpose.msra.mxu0 %v1435
      %1454 = vmatpush.xpose.msra.mxu0 %v1432
      %1455 = vmatpush.xpose.msra.mxu0 %v1429
      %1456 = vmatmul.f32.gmra.mxu0 %v1423
      %v1457 = vpop.f32.mrf.mxu0
      %v1458 = vadd.f32 0.0, %v1457
      %1459 = vmatmul.f32.gmra.mxu0 %v1426
      %v1460 = vpop.f32.mrf.mxu0
      %v1461 = vadd.f32 0.0, %v1460
      %1462 = vdwg.mxu0
      %v1464 = vsel %vm970, %v226, 0
      %v1467 = vsel %vm970, %v227, 0
      %v1470 = vsel %vm970, %v506, 0
      %v1473 = vsel %vm970, %v507, 0
      %v1476 = vsel %vm970, %v508, 0
      %v1479 = vsel %vm970, %v509, 0
      %1481 = vmatpush.xpose.msra.mxu0 0.0
      %1482 = vmatpush.xpose.msra.mxu0 0.0
      %1483 = vmatpush.xpose.msra.mxu0 0.0
      %1484 = vmatpush.xpose.msra.mxu0 0.0
      %1485 = vmatpush.xpose.msra.mxu0 0.0
      %1486 = vmatpush.xpose.msra.mxu0 0.0
      %1487 = vmatpush.xpose.msra.mxu0 0.0
      %1488 = vmatpush.xpose.msra.mxu0 0.0
      %1489 = vmatpush.xpose.msra.mxu0 0.0
      %1490 = vmatpush.xpose.msra.mxu0 0.0
      %1491 = vmatpush.xpose.msra.mxu0 0.0
      %1492 = vmatpush.xpose.msra.mxu0 0.0
      %1493 = vmatpush.xpose.msra.mxu0 %v1479
      %1494 = vmatpush.xpose.msra.mxu0 %v1476
      %1495 = vmatpush.xpose.msra.mxu0 %v1473
      %1496 = vmatpush.xpose.msra.mxu0 %v1470
      %1497 = vmatmul.f32.gmra.mxu0 %v1464
      %v1498 = vpop.f32.mrf.mxu0
      %v1499 = vadd.f32 0.0, %v1498
      %1500 = vmatmul.f32.gmra.mxu0 %v1467
      %v1501 = vpop.f32.mrf.mxu0
      %v1502 = vadd.f32 0.0, %v1501
      %1503 = vdwg.mxu0
      %v1505 = vsel %vm970, %v228, 0
      %v1508 = vsel %vm970, %v229, 0
      %v1511 = vsel %vm970, %v510, 0
      %v1514 = vsel %vm970, %v511, 0
      %v1517 = vsel %vm970, %v512, 0
      %v1520 = vsel %vm970, %v513, 0
      %1522 = vmatpush.xpose.msra.mxu0 0.0
      %1523 = vmatpush.xpose.msra.mxu0 0.0
      %1524 = vmatpush.xpose.msra.mxu0 0.0
      %1525 = vmatpush.xpose.msra.mxu0 0.0
      %1526 = vmatpush.xpose.msra.mxu0 0.0
      %1527 = vmatpush.xpose.msra.mxu0 0.0
      %1528 = vmatpush.xpose.msra.mxu0 0.0
      %1529 = vmatpush.xpose.msra.mxu0 0.0
      %1530 = vmatpush.xpose.msra.mxu0 0.0
      %1531 = vmatpush.xpose.msra.mxu0 0.0
      %1532 = vmatpush.xpose.msra.mxu0 0.0
      %1533 = vmatpush.xpose.msra.mxu0 0.0
      %1534 = vmatpush.xpose.msra.mxu0 %v1520
      %1535 = vmatpush.xpose.msra.mxu0 %v1517
      %1536 = vmatpush.xpose.msra.mxu0 %v1514
      %1537 = vmatpush.xpose.msra.mxu0 %v1511
      %1538 = vmatmul.f32.gmra.mxu0 %v1505
      %v1539 = vpop.f32.mrf.mxu0
      %v1540 = vadd.f32 0.0, %v1539
      %1541 = vmatmul.f32.gmra.mxu0 %v1508
      %v1542 = vpop.f32.mrf.mxu0
      %v1543 = vadd.f32 0.0, %v1542
      %1544 = vdwg.mxu0
      %v1546 = vsel %vm970, %v230, 0
      %v1549 = vsel %vm970, %v231, 0
      %v1552 = vsel %vm970, %v514, 0
      %v1555 = vsel %vm970, %v515, 0
      %v1558 = vsel %vm970, %v516, 0
      %v1561 = vsel %vm970, %v517, 0
      %1563 = vmatpush.xpose.msra.mxu0 0.0
      %1564 = vmatpush.xpose.msra.mxu0 0.0
      %1565 = vmatpush.xpose.msra.mxu0 0.0
      %1566 = vmatpush.xpose.msra.mxu0 0.0
      %1567 = vmatpush.xpose.msra.mxu0 0.0
      %1568 = vmatpush.xpose.msra.mxu0 0.0
      %1569 = vmatpush.xpose.msra.mxu0 0.0
      %1570 = vmatpush.xpose.msra.mxu0 0.0
      %1571 = vmatpush.xpose.msra.mxu0 0.0
      %1572 = vmatpush.xpose.msra.mxu0 0.0
      %1573 = vmatpush.xpose.msra.mxu0 0.0
      %1574 = vmatpush.xpose.msra.mxu0 0.0
      %1575 = vmatpush.xpose.msra.mxu0 %v1561
      %1576 = vmatpush.xpose.msra.mxu0 %v1558
      %1577 = vmatpush.xpose.msra.mxu0 %v1555
      %1578 = vmatpush.xpose.msra.mxu0 %v1552
      %1579 = vmatmul.f32.gmra.mxu0 %v1546
      %v1580 = vpop.f32.mrf.mxu0
      %v1581 = vadd.f32 0.0, %v1580
      %1582 = vmatmul.f32.gmra.mxu0 %v1549
      %v1583 = vpop.f32.mrf.mxu0
      %v1584 = vadd.f32 0.0, %v1583
      %1585 = vdwg.mxu0
      %v1587 = vsel %vm970, %v232, 0
      %v1590 = vsel %vm970, %v233, 0
      %v1593 = vsel %vm970, %v518, 0
      %v1596 = vsel %vm970, %v519, 0
      %v1599 = vsel %vm970, %v520, 0
      %v1602 = vsel %vm970, %v521, 0
      %1604 = vmatpush.xpose.msra.mxu0 0.0
      %1605 = vmatpush.xpose.msra.mxu0 0.0
      %1606 = vmatpush.xpose.msra.mxu0 0.0
      %1607 = vmatpush.xpose.msra.mxu0 0.0
      %1608 = vmatpush.xpose.msra.mxu0 0.0
      %1609 = vmatpush.xpose.msra.mxu0 0.0
      %1610 = vmatpush.xpose.msra.mxu0 0.0
      %1611 = vmatpush.xpose.msra.mxu0 0.0
      %1612 = vmatpush.xpose.msra.mxu0 0.0
      %1613 = vmatpush.xpose.msra.mxu0 0.0
      %1614 = vmatpush.xpose.msra.mxu0 0.0
      %1615 = vmatpush.xpose.msra.mxu0 0.0
      %1616 = vmatpush.xpose.msra.mxu0 %v1602
      %1617 = vmatpush.xpose.msra.mxu0 %v1599
      %1618 = vmatpush.xpose.msra.mxu0 %v1596
      %1619 = vmatpush.xpose.msra.mxu0 %v1593
      %1620 = vmatmul.f32.gmra.mxu0 %v1587
      %v1621 = vpop.f32.mrf.mxu0
      %v1622 = vadd.f32 0.0, %v1621
      %1623 = vmatmul.f32.gmra.mxu0 %v1590
      %v1624 = vpop.f32.mrf.mxu0
      %v1625 = vadd.f32 0.0, %v1624
      %1626 = vdwg.mxu0
      %v1628 = vsel %vm970, %v234, 0
      %v1631 = vsel %vm970, %v235, 0
      %v1634 = vsel %vm970, %v522, 0
      %v1637 = vsel %vm970, %v523, 0
      %v1640 = vsel %vm970, %v524, 0
      %v1643 = vsel %vm970, %v525, 0
      %1645 = vmatpush.xpose.msra.mxu0 0.0
      %1646 = vmatpush.xpose.msra.mxu0 0.0
      %1647 = vmatpush.xpose.msra.mxu0 0.0
      %1648 = vmatpush.xpose.msra.mxu0 0.0
      %1649 = vmatpush.xpose.msra.mxu0 0.0
      %1650 = vmatpush.xpose.msra.mxu0 0.0
      %1651 = vmatpush.xpose.msra.mxu0 0.0
      %1652 = vmatpush.xpose.msra.mxu0 0.0
      %1653 = vmatpush.xpose.msra.mxu0 0.0
      %1654 = vmatpush.xpose.msra.mxu0 0.0
      %1655 = vmatpush.xpose.msra.mxu0 0.0
      %1656 = vmatpush.xpose.msra.mxu0 0.0
      %1657 = vmatpush.xpose.msra.mxu0 %v1643
      %1658 = vmatpush.xpose.msra.mxu0 %v1640
      %1659 = vmatpush.xpose.msra.mxu0 %v1637
      %1660 = vmatpush.xpose.msra.mxu0 %v1634
      %1661 = vmatmul.f32.gmra.mxu0 %v1628
      %v1662 = vpop.f32.mrf.mxu0
      %v1663 = vadd.f32 0.0, %v1662
      %1664 = vmatmul.f32.gmra.mxu0 %v1631
      %v1665 = vpop.f32.mrf.mxu0
      %v1666 = vadd.f32 0.0, %v1665
      %1667 = vdwg.mxu0
      %v1669 = vsel %vm970, %v236, 0
      %v1672 = vsel %vm970, %v237, 0
      %v1675 = vsel %vm970, %v526, 0
      %v1678 = vsel %vm970, %v527, 0
      %v1681 = vsel %vm970, %v528, 0
      %v1684 = vsel %vm970, %v529, 0
      %1686 = vmatpush.xpose.msra.mxu0 0.0
      %1687 = vmatpush.xpose.msra.mxu0 0.0
      %1688 = vmatpush.xpose.msra.mxu0 0.0
      %1689 = vmatpush.xpose.msra.mxu0 0.0
      %1690 = vmatpush.xpose.msra.mxu0 0.0
      %1691 = vmatpush.xpose.msra.mxu0 0.0
      %1692 = vmatpush.xpose.msra.mxu0 0.0
      %1693 = vmatpush.xpose.msra.mxu0 0.0
      %1694 = vmatpush.xpose.msra.mxu0 0.0
      %1695 = vmatpush.xpose.msra.mxu0 0.0
      %1696 = vmatpush.xpose.msra.mxu0 0.0
      %1697 = vmatpush.xpose.msra.mxu0 0.0
      %1698 = vmatpush.xpose.msra.mxu0 %v1684
      %1699 = vmatpush.xpose.msra.mxu0 %v1681
      %1700 = vmatpush.xpose.msra.mxu0 %v1678
      %1701 = vmatpush.xpose.msra.mxu0 %v1675
      %1702 = vmatmul.f32.gmra.mxu0 %v1669
      %v1703 = vpop.f32.mrf.mxu0
      %v1704 = vadd.f32 0.0, %v1703
      %1705 = vmatmul.f32.gmra.mxu0 %v1672
      %v1706 = vpop.f32.mrf.mxu0
      %v1707 = vadd.f32 0.0, %v1706
      %1708 = vdwg.mxu0
      %v1710 = vsel %vm970, %v238, 0
      %v1713 = vsel %vm970, %v239, 0
      %v1716 = vsel %vm970, %v530, 0
      %v1719 = vsel %vm970, %v531, 0
      %v1722 = vsel %vm970, %v532, 0
      %v1725 = vsel %vm970, %v533, 0
      %1727 = vmatpush.xpose.msra.mxu0 0.0
      %1728 = vmatpush.xpose.msra.mxu0 0.0
      %1729 = vmatpush.xpose.msra.mxu0 0.0
      %1730 = vmatpush.xpose.msra.mxu0 0.0
      %1731 = vmatpush.xpose.msra.mxu0 0.0
      %1732 = vmatpush.xpose.msra.mxu0 0.0
      %1733 = vmatpush.xpose.msra.mxu0 0.0
      %1734 = vmatpush.xpose.msra.mxu0 0.0
      %1735 = vmatpush.xpose.msra.mxu0 0.0
      %1736 = vmatpush.xpose.msra.mxu0 0.0
      %1737 = vmatpush.xpose.msra.mxu0 0.0
      %1738 = vmatpush.xpose.msra.mxu0 0.0
      %1739 = vmatpush.xpose.msra.mxu0 %v1725
      %1740 = vmatpush.xpose.msra.mxu0 %v1722
      %1741 = vmatpush.xpose.msra.mxu0 %v1719
      %1742 = vmatpush.xpose.msra.mxu0 %v1716
      %1743 = vmatmul.f32.gmra.mxu0 %v1710
      %v1744 = vpop.f32.mrf.mxu0
      %v1745 = vadd.f32 0.0, %v1744
      %1746 = vmatmul.f32.gmra.mxu0 %v1713
      %v1747 = vpop.f32.mrf.mxu0
      %v1748 = vadd.f32 0.0, %v1747
      %1749 = vdwg.mxu0
      %v1751 = vsel %vm970, %v240, 0
      %v1754 = vsel %vm970, %v241, 0
      %v1757 = vsel %vm970, %v534, 0
      %v1760 = vsel %vm970, %v535, 0
      %v1763 = vsel %vm970, %v536, 0
      %v1766 = vsel %vm970, %v537, 0
      %1768 = vmatpush.xpose.msra.mxu0 0.0
      %1769 = vmatpush.xpose.msra.mxu0 0.0
      %1770 = vmatpush.xpose.msra.mxu0 0.0
      %1771 = vmatpush.xpose.msra.mxu0 0.0
      %1772 = vmatpush.xpose.msra.mxu0 0.0
      %1773 = vmatpush.xpose.msra.mxu0 0.0
      %1774 = vmatpush.xpose.msra.mxu0 0.0
      %1775 = vmatpush.xpose.msra.mxu0 0.0
      %1776 = vmatpush.xpose.msra.mxu0 0.0
      %1777 = vmatpush.xpose.msra.mxu0 0.0
      %1778 = vmatpush.xpose.msra.mxu0 0.0
      %1779 = vmatpush.xpose.msra.mxu0 0.0
      %1780 = vmatpush.xpose.msra.mxu0 %v1766
      %1781 = vmatpush.xpose.msra.mxu0 %v1763
      %1782 = vmatpush.xpose.msra.mxu0 %v1760
      %1783 = vmatpush.xpose.msra.mxu0 %v1757
      %1784 = vmatmul.f32.gmra.mxu0 %v1751
      %v1785 = vpop.f32.mrf.mxu0
      %v1786 = vadd.f32 0.0, %v1785
      %1787 = vmatmul.f32.gmra.mxu0 %v1754
      %v1788 = vpop.f32.mrf.mxu0
      %v1789 = vadd.f32 0.0, %v1788
      %1790 = vdwg.mxu0
      %v1792 = vsel %vm970, %v242, 0
      %v1795 = vsel %vm970, %v243, 0
      %v1798 = vsel %vm970, %v538, 0
      %v1801 = vsel %vm970, %v539, 0
      %v1804 = vsel %vm970, %v540, 0
      %v1807 = vsel %vm970, %v541, 0
      %1809 = vmatpush.xpose.msra.mxu0 0.0
      %1810 = vmatpush.xpose.msra.mxu0 0.0
      %1811 = vmatpush.xpose.msra.mxu0 0.0
      %1812 = vmatpush.xpose.msra.mxu0 0.0
      %1813 = vmatpush.xpose.msra.mxu0 0.0
      %1814 = vmatpush.xpose.msra.mxu0 0.0
      %1815 = vmatpush.xpose.msra.mxu0 0.0
      %1816 = vmatpush.xpose.msra.mxu0 0.0
      %1817 = vmatpush.xpose.msra.mxu0 0.0
      %1818 = vmatpush.xpose.msra.mxu0 0.0
      %1819 = vmatpush.xpose.msra.mxu0 0.0
      %1820 = vmatpush.xpose.msra.mxu0 0.0
      %1821 = vmatpush.xpose.msra.mxu0 %v1807
      %1822 = vmatpush.xpose.msra.mxu0 %v1804
      %1823 = vmatpush.xpose.msra.mxu0 %v1801
      %1824 = vmatpush.xpose.msra.mxu0 %v1798
      %1825 = vmatmul.f32.gmra.mxu0 %v1792
      %v1826 = vpop.f32.mrf.mxu0
      %v1827 = vadd.f32 0.0, %v1826
      %1828 = vmatmul.f32.gmra.mxu0 %v1795
      %v1829 = vpop.f32.mrf.mxu0
      %v1830 = vadd.f32 0.0, %v1829
      %1831 = vdwg.mxu0
      %v1833 = vsel %vm970, %v244, 0
      %v1836 = vsel %vm970, %v245, 0
      %v1839 = vsel %vm970, %v542, 0
      %v1842 = vsel %vm970, %v543, 0
      %v1845 = vsel %vm970, %v544, 0
      %v1848 = vsel %vm970, %v545, 0
      %1850 = vmatpush.xpose.msra.mxu0 0.0
      %1851 = vmatpush.xpose.msra.mxu0 0.0
      %1852 = vmatpush.xpose.msra.mxu0 0.0
      %1853 = vmatpush.xpose.msra.mxu0 0.0
      %1854 = vmatpush.xpose.msra.mxu0 0.0
      %1855 = vmatpush.xpose.msra.mxu0 0.0
      %1856 = vmatpush.xpose.msra.mxu0 0.0
      %1857 = vmatpush.xpose.msra.mxu0 0.0
      %1858 = vmatpush.xpose.msra.mxu0 0.0
      %1859 = vmatpush.xpose.msra.mxu0 0.0
      %1860 = vmatpush.xpose.msra.mxu0 0.0
      %1861 = vmatpush.xpose.msra.mxu0 0.0
      %1862 = vmatpush.xpose.msra.mxu0 %v1848
      %1863 = vmatpush.xpose.msra.mxu0 %v1845
      %1864 = vmatpush.xpose.msra.mxu0 %v1842
      %1865 = vmatpush.xpose.msra.mxu0 %v1839
      %1866 = vmatmul.f32.gmra.mxu0 %v1833
      %v1867 = vpop.f32.mrf.mxu0
      %v1868 = vadd.f32 0.0, %v1867
      %1869 = vmatmul.f32.gmra.mxu0 %v1836
      %v1870 = vpop.f32.mrf.mxu0
      %v1871 = vadd.f32 0.0, %v1870
      %1872 = vdwg.mxu0
      %v1874 = vsel %vm970, %v246, 0
      %v1877 = vsel %vm970, %v247, 0
      %v1880 = vsel %vm970, %v546, 0
      %v1883 = vsel %vm970, %v547, 0
      %v1886 = vsel %vm970, %v548, 0
      %v1889 = vsel %vm970, %v549, 0
      %1891 = vmatpush.xpose.msra.mxu0 0.0
      %1892 = vmatpush.xpose.msra.mxu0 0.0
      %1893 = vmatpush.xpose.msra.mxu0 0.0
      %1894 = vmatpush.xpose.msra.mxu0 0.0
      %1895 = vmatpush.xpose.msra.mxu0 0.0
      %1896 = vmatpush.xpose.msra.mxu0 0.0
      %1897 = vmatpush.xpose.msra.mxu0 0.0
      %1898 = vmatpush.xpose.msra.mxu0 0.0
      %1899 = vmatpush.xpose.msra.mxu0 0.0
      %1900 = vmatpush.xpose.msra.mxu0 0.0
      %1901 = vmatpush.xpose.msra.mxu0 0.0
      %1902 = vmatpush.xpose.msra.mxu0 0.0
      %1903 = vmatpush.xpose.msra.mxu0 %v1889
      %1904 = vmatpush.xpose.msra.mxu0 %v1886
      %1905 = vmatpush.xpose.msra.mxu0 %v1883
      %1906 = vmatpush.xpose.msra.mxu0 %v1880
      %1907 = vmatmul.f32.gmra.mxu0 %v1874
      %v1908 = vpop.f32.mrf.mxu0
      %v1909 = vadd.f32 0.0, %v1908
      %1910 = vmatmul.f32.gmra.mxu0 %v1877
      %v1911 = vpop.f32.mrf.mxu0
      %v1912 = vadd.f32 0.0, %v1911
      %1913 = vdwg.mxu0
      %v1915 = vsel %vm970, %v248, 0
      %v1918 = vsel %vm970, %v249, 0
      %v1921 = vsel %vm970, %v550, 0
      %v1924 = vsel %vm970, %v551, 0
      %v1927 = vsel %vm970, %v552, 0
      %v1930 = vsel %vm970, %v553, 0
      %1932 = vmatpush.xpose.msra.mxu0 0.0
      %1933 = vmatpush.xpose.msra.mxu0 0.0
      %1934 = vmatpush.xpose.msra.mxu0 0.0
      %1935 = vmatpush.xpose.msra.mxu0 0.0
      %1936 = vmatpush.xpose.msra.mxu0 0.0
      %1937 = vmatpush.xpose.msra.mxu0 0.0
      %1938 = vmatpush.xpose.msra.mxu0 0.0
      %1939 = vmatpush.xpose.msra.mxu0 0.0
      %1940 = vmatpush.xpose.msra.mxu0 0.0
      %1941 = vmatpush.xpose.msra.mxu0 0.0
      %1942 = vmatpush.xpose.msra.mxu0 0.0
      %1943 = vmatpush.xpose.msra.mxu0 0.0
      %1944 = vmatpush.xpose.msra.mxu0 %v1930
      %1945 = vmatpush.xpose.msra.mxu0 %v1927
      %1946 = vmatpush.xpose.msra.mxu0 %v1924
      %1947 = vmatpush.xpose.msra.mxu0 %v1921
      %1948 = vmatmul.f32.gmra.mxu0 %v1915
      %v1949 = vpop.f32.mrf.mxu0
      %v1950 = vadd.f32 0.0, %v1949
      %1951 = vmatmul.f32.gmra.mxu0 %v1918
      %v1952 = vpop.f32.mrf.mxu0
      %v1953 = vadd.f32 0.0, %v1952
      %1954 = vdwg.mxu0
      %v1956 = vsel %vm970, %v250, 0
      %v1959 = vsel %vm970, %v251, 0
      %v1962 = vsel %vm970, %v554, 0
      %v1965 = vsel %vm970, %v555, 0
      %v1968 = vsel %vm970, %v556, 0
      %v1971 = vsel %vm970, %v557, 0
      %1973 = vmatpush.xpose.msra.mxu0 0.0
      %1974 = vmatpush.xpose.msra.mxu0 0.0
      %1975 = vmatpush.xpose.msra.mxu0 0.0
      %1976 = vmatpush.xpose.msra.mxu0 0.0
      %1977 = vmatpush.xpose.msra.mxu0 0.0
      %1978 = vmatpush.xpose.msra.mxu0 0.0
      %1979 = vmatpush.xpose.msra.mxu0 0.0
      %1980 = vmatpush.xpose.msra.mxu0 0.0
      %1981 = vmatpush.xpose.msra.mxu0 0.0
      %1982 = vmatpush.xpose.msra.mxu0 0.0
      %1983 = vmatpush.xpose.msra.mxu0 0.0
      %1984 = vmatpush.xpose.msra.mxu0 0.0
      %1985 = vmatpush.xpose.msra.mxu0 %v1971
      %1986 = vmatpush.xpose.msra.mxu0 %v1968
      %1987 = vmatpush.xpose.msra.mxu0 %v1965
      %1988 = vmatpush.xpose.msra.mxu0 %v1962
      %1989 = vmatmul.f32.gmra.mxu0 %v1956
      %v1990 = vpop.f32.mrf.mxu0
      %v1991 = vadd.f32 0.0, %v1990
      %1992 = vmatmul.f32.gmra.mxu0 %v1959
      %v1993 = vpop.f32.mrf.mxu0
      %v1994 = vadd.f32 0.0, %v1993
      %1995 = vdwg.mxu0
      %v1997 = vsel %vm970, %v252, 0
      %v2000 = vsel %vm970, %v253, 0
      %v2003 = vsel %vm970, %v558, 0
      %v2006 = vsel %vm970, %v559, 0
      %v2009 = vsel %vm970, %v560, 0
      %v2012 = vsel %vm970, %v561, 0
      %2014 = vmatpush.xpose.msra.mxu0 0.0
      %2015 = vmatpush.xpose.msra.mxu0 0.0
      %2016 = vmatpush.xpose.msra.mxu0 0.0
      %2017 = vmatpush.xpose.msra.mxu0 0.0
      %2018 = vmatpush.xpose.msra.mxu0 0.0
      %2019 = vmatpush.xpose.msra.mxu0 0.0
      %2020 = vmatpush.xpose.msra.mxu0 0.0
      %2021 = vmatpush.xpose.msra.mxu0 0.0
      %2022 = vmatpush.xpose.msra.mxu0 0.0
      %2023 = vmatpush.xpose.msra.mxu0 0.0
      %2024 = vmatpush.xpose.msra.mxu0 0.0
      %2025 = vmatpush.xpose.msra.mxu0 0.0
      %2026 = vmatpush.xpose.msra.mxu0 %v2012
      %2027 = vmatpush.xpose.msra.mxu0 %v2009
      %2028 = vmatpush.xpose.msra.mxu0 %v2006
      %2029 = vmatpush.xpose.msra.mxu0 %v2003
      %2030 = vmatmul.f32.gmra.mxu0 %v1997
      %v2031 = vpop.f32.mrf.mxu0
      %v2032 = vadd.f32 0.0, %v2031
      %2033 = vmatmul.f32.gmra.mxu0 %v2000
      %v2034 = vpop.f32.mrf.mxu0
      %v2035 = vadd.f32 0.0, %v2034
      %2036 = vdwg.mxu0
      %v2038 = vsel %vm970, %v254, 0
      %v2041 = vsel %vm970, %v255, 0
      %v2044 = vsel %vm970, %v562, 0
      %v2047 = vsel %vm970, %v563, 0
      %v2050 = vsel %vm970, %v564, 0
      %v2053 = vsel %vm970, %v565, 0
      %2055 = vmatpush.xpose.msra.mxu0 0.0
      %2056 = vmatpush.xpose.msra.mxu0 0.0
      %2057 = vmatpush.xpose.msra.mxu0 0.0
      %2058 = vmatpush.xpose.msra.mxu0 0.0
      %2059 = vmatpush.xpose.msra.mxu0 0.0
      %2060 = vmatpush.xpose.msra.mxu0 0.0
      %2061 = vmatpush.xpose.msra.mxu0 0.0
      %2062 = vmatpush.xpose.msra.mxu0 0.0
      %2063 = vmatpush.xpose.msra.mxu0 0.0
      %2064 = vmatpush.xpose.msra.mxu0 0.0
      %2065 = vmatpush.xpose.msra.mxu0 0.0
      %2066 = vmatpush.xpose.msra.mxu0 0.0
      %2067 = vmatpush.xpose.msra.mxu0 %v2053
      %2068 = vmatpush.xpose.msra.mxu0 %v2050
      %2069 = vmatpush.xpose.msra.mxu0 %v2047
      %2070 = vmatpush.xpose.msra.mxu0 %v2044
      %2071 = vmatmul.f32.gmra.mxu0 %v2038
      %v2072 = vpop.f32.mrf.mxu0
      %v2073 = vadd.f32 0.0, %v2072
      %2074 = vmatmul.f32.gmra.mxu0 %v2041
      %v2075 = vpop.f32.mrf.mxu0
      %v2076 = vadd.f32 0.0, %v2075
      %2077 = vdwg.mxu0
      %v2079 = vsel %vm970, %v256, 0
      %v2082 = vsel %vm970, %v257, 0
      %v2085 = vsel %vm970, %v566, 0
      %v2088 = vsel %vm970, %v567, 0
      %v2091 = vsel %vm970, %v568, 0
      %v2094 = vsel %vm970, %v569, 0
      %2096 = vmatpush.xpose.msra.mxu0 0.0
      %2097 = vmatpush.xpose.msra.mxu0 0.0
      %2098 = vmatpush.xpose.msra.mxu0 0.0
      %2099 = vmatpush.xpose.msra.mxu0 0.0
      %2100 = vmatpush.xpose.msra.mxu0 0.0
      %2101 = vmatpush.xpose.msra.mxu0 0.0
      %2102 = vmatpush.xpose.msra.mxu0 0.0
      %2103 = vmatpush.xpose.msra.mxu0 0.0
      %2104 = vmatpush.xpose.msra.mxu0 0.0
      %2105 = vmatpush.xpose.msra.mxu0 0.0
      %2106 = vmatpush.xpose.msra.mxu0 0.0
      %2107 = vmatpush.xpose.msra.mxu0 0.0
      %2108 = vmatpush.xpose.msra.mxu0 %v2094
      %2109 = vmatpush.xpose.msra.mxu0 %v2091
      %2110 = vmatpush.xpose.msra.mxu0 %v2088
      %2111 = vmatpush.xpose.msra.mxu0 %v2085
      %2112 = vmatmul.f32.gmra.mxu0 %v2079
      %v2113 = vpop.f32.mrf.mxu0
      %v2114 = vadd.f32 0.0, %v2113
      %2115 = vmatmul.f32.gmra.mxu0 %v2082
      %v2116 = vpop.f32.mrf.mxu0
      %v2117 = vadd.f32 0.0, %v2116
      %2118 = vdwg.mxu0
      %v2120 = vsel %vm970, %v258, 0
      %v2123 = vsel %vm970, %v259, 0
      %v2126 = vsel %vm970, %v570, 0
      %v2129 = vsel %vm970, %v571, 0
      %v2132 = vsel %vm970, %v572, 0
      %v2135 = vsel %vm970, %v573, 0
      %2137 = vmatpush.xpose.msra.mxu0 0.0
      %2138 = vmatpush.xpose.msra.mxu0 0.0
      %2139 = vmatpush.xpose.msra.mxu0 0.0
      %2140 = vmatpush.xpose.msra.mxu0 0.0
      %2141 = vmatpush.xpose.msra.mxu0 0.0
      %2142 = vmatpush.xpose.msra.mxu0 0.0
      %2143 = vmatpush.xpose.msra.mxu0 0.0
      %2144 = vmatpush.xpose.msra.mxu0 0.0
      %2145 = vmatpush.xpose.msra.mxu0 0.0
      %2146 = vmatpush.xpose.msra.mxu0 0.0
      %2147 = vmatpush.xpose.msra.mxu0 0.0
      %2148 = vmatpush.xpose.msra.mxu0 0.0
      %2149 = vmatpush.xpose.msra.mxu0 %v2135
      %2150 = vmatpush.xpose.msra.mxu0 %v2132
      %2151 = vmatpush.xpose.msra.mxu0 %v2129
      %2152 = vmatpush.xpose.msra.mxu0 %v2126
      %2153 = vmatmul.f32.gmra.mxu0 %v2120
      %v2154 = vpop.f32.mrf.mxu0
      %v2155 = vadd.f32 0.0, %v2154
      %2156 = vmatmul.f32.gmra.mxu0 %v2123
      %v2157 = vpop.f32.mrf.mxu0
      %v2158 = vadd.f32 0.0, %v2157
      %2159 = vdwg.mxu0
      %v2161 = vsel %vm970, %v260, 0
      %v2164 = vsel %vm970, %v261, 0
      %v2167 = vsel %vm970, %v574, 0
      %v2170 = vsel %vm970, %v575, 0
      %v2173 = vsel %vm970, %v576, 0
      %v2176 = vsel %vm970, %v577, 0
      %2178 = vmatpush.xpose.msra.mxu0 0.0
      %2179 = vmatpush.xpose.msra.mxu0 0.0
      %2180 = vmatpush.xpose.msra.mxu0 0.0
      %2181 = vmatpush.xpose.msra.mxu0 0.0
      %2182 = vmatpush.xpose.msra.mxu0 0.0
      %2183 = vmatpush.xpose.msra.mxu0 0.0
      %2184 = vmatpush.xpose.msra.mxu0 0.0
      %2185 = vmatpush.xpose.msra.mxu0 0.0
      %2186 = vmatpush.xpose.msra.mxu0 0.0
      %2187 = vmatpush.xpose.msra.mxu0 0.0
      %2188 = vmatpush.xpose.msra.mxu0 0.0
      %2189 = vmatpush.xpose.msra.mxu0 0.0
      %2190 = vmatpush.xpose.msra.mxu0 %v2176
      %2191 = vmatpush.xpose.msra.mxu0 %v2173
      %2192 = vmatpush.xpose.msra.mxu0 %v2170
      %2193 = vmatpush.xpose.msra.mxu0 %v2167
      %2194 = vmatmul.f32.gmra.mxu0 %v2161
      %v2195 = vpop.f32.mrf.mxu0
      %v2196 = vadd.f32 0.0, %v2195
      %2197 = vmatmul.f32.gmra.mxu0 %v2164
      %v2198 = vpop.f32.mrf.mxu0
      %v2199 = vadd.f32 0.0, %v2198
      %2200 = vdwg.mxu0
      %v2202 = vsel %vm970, %v262, 0
      %v2205 = vsel %vm970, %v263, 0
      %v2208 = vsel %vm970, %v578, 0
      %v2211 = vsel %vm970, %v579, 0
      %v2214 = vsel %vm970, %v580, 0
      %v2217 = vsel %vm970, %v581, 0
      %2219 = vmatpush.xpose.msra.mxu0 0.0
      %2220 = vmatpush.xpose.msra.mxu0 0.0
      %2221 = vmatpush.xpose.msra.mxu0 0.0
      %2222 = vmatpush.xpose.msra.mxu0 0.0
      %2223 = vmatpush.xpose.msra.mxu0 0.0
      %2224 = vmatpush.xpose.msra.mxu0 0.0
      %2225 = vmatpush.xpose.msra.mxu0 0.0
      %2226 = vmatpush.xpose.msra.mxu0 0.0
      %2227 = vmatpush.xpose.msra.mxu0 0.0
      %2228 = vmatpush.xpose.msra.mxu0 0.0
      %2229 = vmatpush.xpose.msra.mxu0 0.0
      %2230 = vmatpush.xpose.msra.mxu0 0.0
      %2231 = vmatpush.xpose.msra.mxu0 %v2217
      %2232 = vmatpush.xpose.msra.mxu0 %v2214
      %2233 = vmatpush.xpose.msra.mxu0 %v2211
      %2234 = vmatpush.xpose.msra.mxu0 %v2208
      %2235 = vmatmul.f32.gmra.mxu0 %v2202
      %v2236 = vpop.f32.mrf.mxu0
      %v2237 = vadd.f32 0.0, %v2236
      %2238 = vmatmul.f32.gmra.mxu0 %v2205
      %v2239 = vpop.f32.mrf.mxu0
      %v2240 = vadd.f32 0.0, %v2239
      %2241 = vdwg.mxu0
      %v2243 = vsel %vm970, %v264, 0
      %v2246 = vsel %vm970, %v265, 0
      %v2249 = vsel %vm970, %v582, 0
      %v2252 = vsel %vm970, %v583, 0
      %v2255 = vsel %vm970, %v584, 0
      %v2258 = vsel %vm970, %v585, 0
      %2260 = vmatpush.xpose.msra.mxu0 0.0
      %2261 = vmatpush.xpose.msra.mxu0 0.0
      %2262 = vmatpush.xpose.msra.mxu0 0.0
      %2263 = vmatpush.xpose.msra.mxu0 0.0
      %2264 = vmatpush.xpose.msra.mxu0 0.0
      %2265 = vmatpush.xpose.msra.mxu0 0.0
      %2266 = vmatpush.xpose.msra.mxu0 0.0
      %2267 = vmatpush.xpose.msra.mxu0 0.0
      %2268 = vmatpush.xpose.msra.mxu0 0.0
      %2269 = vmatpush.xpose.msra.mxu0 0.0
      %2270 = vmatpush.xpose.msra.mxu0 0.0
      %2271 = vmatpush.xpose.msra.mxu0 0.0
      %2272 = vmatpush.xpose.msra.mxu0 %v2258
      %2273 = vmatpush.xpose.msra.mxu0 %v2255
      %2274 = vmatpush.xpose.msra.mxu0 %v2252
      %2275 = vmatpush.xpose.msra.mxu0 %v2249
      %2276 = vmatmul.f32.gmra.mxu0 %v2243
      %v2277 = vpop.f32.mrf.mxu0
      %v2278 = vadd.f32 0.0, %v2277
      %2279 = vmatmul.f32.gmra.mxu0 %v2246
      %v2280 = vpop.f32.mrf.mxu0
      %v2281 = vadd.f32 0.0, %v2280
      %2282 = vdwg.mxu0
      %v2284 = vsel %vm970, %v266, 0
      %v2287 = vsel %vm970, %v267, 0
      %v2290 = vsel %vm970, %v586, 0
      %v2293 = vsel %vm970, %v587, 0
      %v2296 = vsel %vm970, %v588, 0
      %v2299 = vsel %vm970, %v589, 0
      %2301 = vmatpush.xpose.msra.mxu0 0.0
      %2302 = vmatpush.xpose.msra.mxu0 0.0
      %2303 = vmatpush.xpose.msra.mxu0 0.0
      %2304 = vmatpush.xpose.msra.mxu0 0.0
      %2305 = vmatpush.xpose.msra.mxu0 0.0
      %2306 = vmatpush.xpose.msra.mxu0 0.0
      %2307 = vmatpush.xpose.msra.mxu0 0.0
      %2308 = vmatpush.xpose.msra.mxu0 0.0
      %2309 = vmatpush.xpose.msra.mxu0 0.0
      %2310 = vmatpush.xpose.msra.mxu0 0.0
      %2311 = vmatpush.xpose.msra.mxu0 0.0
      %2312 = vmatpush.xpose.msra.mxu0 0.0
      %2313 = vmatpush.xpose.msra.mxu0 %v2299
      %2314 = vmatpush.xpose.msra.mxu0 %v2296
      %2315 = vmatpush.xpose.msra.mxu0 %v2293
      %2316 = vmatpush.xpose.msra.mxu0 %v2290
      %2317 = vmatmul.f32.gmra.mxu0 %v2284
      %v2318 = vpop.f32.mrf.mxu0
      %v2319 = vadd.f32 0.0, %v2318
      %2320 = vmatmul.f32.gmra.mxu0 %v2287
      %v2321 = vpop.f32.mrf.mxu0
      %v2322 = vadd.f32 0.0, %v2321
      %2323 = vdwg.mxu0
      %v2325 = vsel %vm970, %v268, 0
      %v2328 = vsel %vm970, %v269, 0
      %v2331 = vsel %vm970, %v590, 0
      %v2334 = vsel %vm970, %v591, 0
      %v2337 = vsel %vm970, %v592, 0
      %v2340 = vsel %vm970, %v593, 0
      %2342 = vmatpush.xpose.msra.mxu0 0.0
      %2343 = vmatpush.xpose.msra.mxu0 0.0
      %2344 = vmatpush.xpose.msra.mxu0 0.0
      %2345 = vmatpush.xpose.msra.mxu0 0.0
      %2346 = vmatpush.xpose.msra.mxu0 0.0
      %2347 = vmatpush.xpose.msra.mxu0 0.0
      %2348 = vmatpush.xpose.msra.mxu0 0.0
      %2349 = vmatpush.xpose.msra.mxu0 0.0
      %2350 = vmatpush.xpose.msra.mxu0 0.0
      %2351 = vmatpush.xpose.msra.mxu0 0.0
      %2352 = vmatpush.xpose.msra.mxu0 0.0
      %2353 = vmatpush.xpose.msra.mxu0 0.0
      %2354 = vmatpush.xpose.msra.mxu0 %v2340
      %2355 = vmatpush.xpose.msra.mxu0 %v2337
      %2356 = vmatpush.xpose.msra.mxu0 %v2334
      %2357 = vmatpush.xpose.msra.mxu0 %v2331
      %2358 = vmatmul.f32.gmra.mxu0 %v2325
      %v2359 = vpop.f32.mrf.mxu0
      %v2360 = vadd.f32 0.0, %v2359
      %2361 = vmatmul.f32.gmra.mxu0 %v2328
      %v2362 = vpop.f32.mrf.mxu0
      %v2363 = vadd.f32 0.0, %v2362
      %2364 = vdwg.mxu0
      %v2366 = vsel %vm970, %v270, 0
      %v2369 = vsel %vm970, %v271, 0
      %v2372 = vsel %vm970, %v594, 0
      %v2375 = vsel %vm970, %v595, 0
      %v2378 = vsel %vm970, %v596, 0
      %v2381 = vsel %vm970, %v597, 0
      %2383 = vmatpush.xpose.msra.mxu0 0.0
      %2384 = vmatpush.xpose.msra.mxu0 0.0
      %2385 = vmatpush.xpose.msra.mxu0 0.0
      %2386 = vmatpush.xpose.msra.mxu0 0.0
      %2387 = vmatpush.xpose.msra.mxu0 0.0
      %2388 = vmatpush.xpose.msra.mxu0 0.0
      %2389 = vmatpush.xpose.msra.mxu0 0.0
      %2390 = vmatpush.xpose.msra.mxu0 0.0
      %2391 = vmatpush.xpose.msra.mxu0 0.0
      %2392 = vmatpush.xpose.msra.mxu0 0.0
      %2393 = vmatpush.xpose.msra.mxu0 0.0
      %2394 = vmatpush.xpose.msra.mxu0 0.0
      %2395 = vmatpush.xpose.msra.mxu0 %v2381
      %2396 = vmatpush.xpose.msra.mxu0 %v2378
      %2397 = vmatpush.xpose.msra.mxu0 %v2375
      %2398 = vmatpush.xpose.msra.mxu0 %v2372
      %2399 = vmatmul.f32.gmra.mxu0 %v2366
      %v2400 = vpop.f32.mrf.mxu0
      %v2401 = vadd.f32 0.0, %v2400
      %2402 = vmatmul.f32.gmra.mxu0 %v2369
      %v2403 = vpop.f32.mrf.mxu0
      %v2404 = vadd.f32 0.0, %v2403
      %2405 = vdwg.mxu0
      %v2407 = vsel %vm970, %v272, 0
      %v2410 = vsel %vm970, %v273, 0
      %v2413 = vsel %vm970, %v598, 0
      %v2416 = vsel %vm970, %v599, 0
      %v2419 = vsel %vm970, %v600, 0
      %v2422 = vsel %vm970, %v601, 0
      %2424 = vmatpush.xpose.msra.mxu0 0.0
      %2425 = vmatpush.xpose.msra.mxu0 0.0
      %2426 = vmatpush.xpose.msra.mxu0 0.0
      %2427 = vmatpush.xpose.msra.mxu0 0.0
      %2428 = vmatpush.xpose.msra.mxu0 0.0
      %2429 = vmatpush.xpose.msra.mxu0 0.0
      %2430 = vmatpush.xpose.msra.mxu0 0.0
      %2431 = vmatpush.xpose.msra.mxu0 0.0
      %2432 = vmatpush.xpose.msra.mxu0 0.0
      %2433 = vmatpush.xpose.msra.mxu0 0.0
      %2434 = vmatpush.xpose.msra.mxu0 0.0
      %2435 = vmatpush.xpose.msra.mxu0 0.0
      %2436 = vmatpush.xpose.msra.mxu0 %v2422
      %2437 = vmatpush.xpose.msra.mxu0 %v2419
      %2438 = vmatpush.xpose.msra.mxu0 %v2416
      %2439 = vmatpush.xpose.msra.mxu0 %v2413
      %2440 = vmatmul.f32.gmra.mxu0 %v2407
      %v2441 = vpop.f32.mrf.mxu0
      %v2442 = vadd.f32 0.0, %v2441
      %2443 = vmatmul.f32.gmra.mxu0 %v2410
      %v2444 = vpop.f32.mrf.mxu0
      %v2445 = vadd.f32 0.0, %v2444
      %2446 = vdwg.mxu0
      %v2448 = vsel %vm970, %v274, 0
      %v2451 = vsel %vm970, %v275, 0
      %v2454 = vsel %vm970, %v602, 0
      %v2457 = vsel %vm970, %v603, 0
      %v2460 = vsel %vm970, %v604, 0
      %v2463 = vsel %vm970, %v605, 0
      %2465 = vmatpush.xpose.msra.mxu0 0.0
      %2466 = vmatpush.xpose.msra.mxu0 0.0
      %2467 = vmatpush.xpose.msra.mxu0 0.0
      %2468 = vmatpush.xpose.msra.mxu0 0.0
      %2469 = vmatpush.xpose.msra.mxu0 0.0
      %2470 = vmatpush.xpose.msra.mxu0 0.0
      %2471 = vmatpush.xpose.msra.mxu0 0.0
      %2472 = vmatpush.xpose.msra.mxu0 0.0
      %2473 = vmatpush.xpose.msra.mxu0 0.0
      %2474 = vmatpush.xpose.msra.mxu0 0.0
      %2475 = vmatpush.xpose.msra.mxu0 0.0
      %2476 = vmatpush.xpose.msra.mxu0 0.0
      %2477 = vmatpush.xpose.msra.mxu0 %v2463
      %2478 = vmatpush.xpose.msra.mxu0 %v2460
      %2479 = vmatpush.xpose.msra.mxu0 %v2457
      %2480 = vmatpush.xpose.msra.mxu0 %v2454
      %2481 = vmatmul.f32.gmra.mxu0 %v2448
      %v2482 = vpop.f32.mrf.mxu0
      %v2483 = vadd.f32 0.0, %v2482
      %2484 = vmatmul.f32.gmra.mxu0 %v2451
      %v2485 = vpop.f32.mrf.mxu0
      %v2486 = vadd.f32 0.0, %v2485
      %2487 = vdwg.mxu0
      %v2489 = vsel %vm970, %v276, 0
      %v2492 = vsel %vm970, %v277, 0
      %v2495 = vsel %vm970, %v606, 0
      %v2498 = vsel %vm970, %v607, 0
      %v2501 = vsel %vm970, %v608, 0
      %v2504 = vsel %vm970, %v609, 0
      %2506 = vmatpush.xpose.msra.mxu0 0.0
      %2507 = vmatpush.xpose.msra.mxu0 0.0
      %2508 = vmatpush.xpose.msra.mxu0 0.0
      %2509 = vmatpush.xpose.msra.mxu0 0.0
      %2510 = vmatpush.xpose.msra.mxu0 0.0
      %2511 = vmatpush.xpose.msra.mxu0 0.0
      %2512 = vmatpush.xpose.msra.mxu0 0.0
      %2513 = vmatpush.xpose.msra.mxu0 0.0
      %2514 = vmatpush.xpose.msra.mxu0 0.0
      %2515 = vmatpush.xpose.msra.mxu0 0.0
      %2516 = vmatpush.xpose.msra.mxu0 0.0
      %2517 = vmatpush.xpose.msra.mxu0 0.0
      %2518 = vmatpush.xpose.msra.mxu0 %v2504
      %2519 = vmatpush.xpose.msra.mxu0 %v2501
      %2520 = vmatpush.xpose.msra.mxu0 %v2498
      %2521 = vmatpush.xpose.msra.mxu0 %v2495
      %2522 = vmatmul.f32.gmra.mxu0 %v2489
      %v2523 = vpop.f32.mrf.mxu0
      %v2524 = vadd.f32 0.0, %v2523
      %2525 = vmatmul.f32.gmra.mxu0 %v2492
      %v2526 = vpop.f32.mrf.mxu0
      %v2527 = vadd.f32 0.0, %v2526
      %2528 = vdwg.mxu0
      %v2530 = vsel %vm970, %v278, 0
      %v2533 = vsel %vm970, %v279, 0
      %v2536 = vsel %vm970, %v610, 0
      %v2539 = vsel %vm970, %v611, 0
      %v2542 = vsel %vm970, %v612, 0
      %v2545 = vsel %vm970, %v613, 0
      %2547 = vmatpush.xpose.msra.mxu0 0.0
      %2548 = vmatpush.xpose.msra.mxu0 0.0
      %2549 = vmatpush.xpose.msra.mxu0 0.0
      %2550 = vmatpush.xpose.msra.mxu0 0.0
      %2551 = vmatpush.xpose.msra.mxu0 0.0
      %2552 = vmatpush.xpose.msra.mxu0 0.0
      %2553 = vmatpush.xpose.msra.mxu0 0.0
      %2554 = vmatpush.xpose.msra.mxu0 0.0
      %2555 = vmatpush.xpose.msra.mxu0 0.0
      %2556 = vmatpush.xpose.msra.mxu0 0.0
      %2557 = vmatpush.xpose.msra.mxu0 0.0
      %2558 = vmatpush.xpose.msra.mxu0 0.0
      %2559 = vmatpush.xpose.msra.mxu0 %v2545
      %2560 = vmatpush.xpose.msra.mxu0 %v2542
      %2561 = vmatpush.xpose.msra.mxu0 %v2539
      %2562 = vmatpush.xpose.msra.mxu0 %v2536
      %2563 = vmatmul.f32.gmra.mxu0 %v2530
      %v2564 = vpop.f32.mrf.mxu0
      %v2565 = vadd.f32 0.0, %v2564
      %2566 = vmatmul.f32.gmra.mxu0 %v2533
      %v2567 = vpop.f32.mrf.mxu0
      %v2568 = vadd.f32 0.0, %v2567
      %2569 = vdwg.mxu0
      %v2571 = vsel %vm970, %v280, 0
      %v2574 = vsel %vm970, %v281, 0
      %v2577 = vsel %vm970, %v614, 0
      %v2580 = vsel %vm970, %v615, 0
      %v2583 = vsel %vm970, %v616, 0
      %v2586 = vsel %vm970, %v617, 0
      %2588 = vmatpush.xpose.msra.mxu0 0.0
      %2589 = vmatpush.xpose.msra.mxu0 0.0
      %2590 = vmatpush.xpose.msra.mxu0 0.0
      %2591 = vmatpush.xpose.msra.mxu0 0.0
      %2592 = vmatpush.xpose.msra.mxu0 0.0
      %2593 = vmatpush.xpose.msra.mxu0 0.0
      %2594 = vmatpush.xpose.msra.mxu0 0.0
      %2595 = vmatpush.xpose.msra.mxu0 0.0
      %2596 = vmatpush.xpose.msra.mxu0 0.0
      %2597 = vmatpush.xpose.msra.mxu0 0.0
      %2598 = vmatpush.xpose.msra.mxu0 0.0
      %2599 = vmatpush.xpose.msra.mxu0 0.0
      %2600 = vmatpush.xpose.msra.mxu0 %v2586
      %2601 = vmatpush.xpose.msra.mxu0 %v2583
      %2602 = vmatpush.xpose.msra.mxu0 %v2580
      %2603 = vmatpush.xpose.msra.mxu0 %v2577
      %2604 = vmatmul.f32.gmra.mxu0 %v2571
      %v2605 = vpop.f32.mrf.mxu0
      %v2606 = vadd.f32 0.0, %v2605
      %2607 = vmatmul.f32.gmra.mxu0 %v2574
      %v2608 = vpop.f32.mrf.mxu0
      %v2609 = vadd.f32 0.0, %v2608
      %2610 = vdwg.mxu0
      %v2612 = vsel %vm970, %v282, 0
      %v2615 = vsel %vm970, %v283, 0
      %v2618 = vsel %vm970, %v618, 0
      %v2621 = vsel %vm970, %v619, 0
      %v2624 = vsel %vm970, %v620, 0
      %v2627 = vsel %vm970, %v621, 0
      %2629 = vmatpush.xpose.msra.mxu0 0.0
      %2630 = vmatpush.xpose.msra.mxu0 0.0
      %2631 = vmatpush.xpose.msra.mxu0 0.0
      %2632 = vmatpush.xpose.msra.mxu0 0.0
      %2633 = vmatpush.xpose.msra.mxu0 0.0
      %2634 = vmatpush.xpose.msra.mxu0 0.0
      %2635 = vmatpush.xpose.msra.mxu0 0.0
      %2636 = vmatpush.xpose.msra.mxu0 0.0
      %2637 = vmatpush.xpose.msra.mxu0 0.0
      %2638 = vmatpush.xpose.msra.mxu0 0.0
      %2639 = vmatpush.xpose.msra.mxu0 0.0
      %2640 = vmatpush.xpose.msra.mxu0 0.0
      %2641 = vmatpush.xpose.msra.mxu0 %v2627
      %2642 = vmatpush.xpose.msra.mxu0 %v2624
      %2643 = vmatpush.xpose.msra.mxu0 %v2621
      %2644 = vmatpush.xpose.msra.mxu0 %v2618
      %2645 = vmatmul.f32.gmra.mxu0 %v2612
      %v2646 = vpop.f32.mrf.mxu0
      %v2647 = vadd.f32 0.0, %v2646
      %2648 = vmatmul.f32.gmra.mxu0 %v2615
      %v2649 = vpop.f32.mrf.mxu0
      %v2650 = vadd.f32 0.0, %v2649
      %2651 = vdwg.mxu0
      %v2653 = vsel %vm970, %v284, 0
      %v2656 = vsel %vm970, %v285, 0
      %v2659 = vsel %vm970, %v622, 0
      %v2662 = vsel %vm970, %v623, 0
      %v2665 = vsel %vm970, %v624, 0
      %v2668 = vsel %vm970, %v625, 0
      %2670 = vmatpush.xpose.msra.mxu0 0.0
      %2671 = vmatpush.xpose.msra.mxu0 0.0
      %2672 = vmatpush.xpose.msra.mxu0 0.0
      %2673 = vmatpush.xpose.msra.mxu0 0.0
      %2674 = vmatpush.xpose.msra.mxu0 0.0
      %2675 = vmatpush.xpose.msra.mxu0 0.0
      %2676 = vmatpush.xpose.msra.mxu0 0.0
      %2677 = vmatpush.xpose.msra.mxu0 0.0
      %2678 = vmatpush.xpose.msra.mxu0 0.0
      %2679 = vmatpush.xpose.msra.mxu0 0.0
      %2680 = vmatpush.xpose.msra.mxu0 0.0
      %2681 = vmatpush.xpose.msra.mxu0 0.0
      %2682 = vmatpush.xpose.msra.mxu0 %v2668
      %2683 = vmatpush.xpose.msra.mxu0 %v2665
      %2684 = vmatpush.xpose.msra.mxu0 %v2662
      %2685 = vmatpush.xpose.msra.mxu0 %v2659
      %2686 = vmatmul.f32.gmra.mxu0 %v2653
      %v2687 = vpop.f32.mrf.mxu0
      %v2688 = vadd.f32 0.0, %v2687
      %2689 = vmatmul.f32.gmra.mxu0 %v2656
      %v2690 = vpop.f32.mrf.mxu0
      %v2691 = vadd.f32 0.0, %v2690
      %2692 = vdwg.mxu0
      %v2694 = vsel %vm970, %v286, 0
      %v2697 = vsel %vm970, %v287, 0
      %v2700 = vsel %vm970, %v626, 0
      %v2703 = vsel %vm970, %v627, 0
      %v2706 = vsel %vm970, %v628, 0
      %v2709 = vsel %vm970, %v629, 0
      %2711 = vmatpush.xpose.msra.mxu0 0.0
      %2712 = vmatpush.xpose.msra.mxu0 0.0
      %2713 = vmatpush.xpose.msra.mxu0 0.0
      %2714 = vmatpush.xpose.msra.mxu0 0.0
      %2715 = vmatpush.xpose.msra.mxu0 0.0
      %2716 = vmatpush.xpose.msra.mxu0 0.0
      %2717 = vmatpush.xpose.msra.mxu0 0.0
      %2718 = vmatpush.xpose.msra.mxu0 0.0
      %2719 = vmatpush.xpose.msra.mxu0 0.0
      %2720 = vmatpush.xpose.msra.mxu0 0.0
      %2721 = vmatpush.xpose.msra.mxu0 0.0
      %2722 = vmatpush.xpose.msra.mxu0 0.0
      %2723 = vmatpush.xpose.msra.mxu0 %v2709
      %2724 = vmatpush.xpose.msra.mxu0 %v2706
      %2725 = vmatpush.xpose.msra.mxu0 %v2703
      %2726 = vmatpush.xpose.msra.mxu0 %v2700
      %2727 = vmatmul.f32.gmra.mxu0 %v2694
      %v2728 = vpop.f32.mrf.mxu0
      %v2729 = vadd.f32 0.0, %v2728
      %2730 = vmatmul.f32.gmra.mxu0 %v2697
      %v2731 = vpop.f32.mrf.mxu0
      %v2732 = vadd.f32 0.0, %v2731
      %2733 = vdwg.mxu0
      %v2735 = vsel %vm970, %v288, 0
      %v2738 = vsel %vm970, %v289, 0
      %v2741 = vsel %vm970, %v630, 0
      %v2744 = vsel %vm970, %v631, 0
      %v2747 = vsel %vm970, %v632, 0
      %v2750 = vsel %vm970, %v633, 0
      %2752 = vmatpush.xpose.msra.mxu0 0.0
      %2753 = vmatpush.xpose.msra.mxu0 0.0
      %2754 = vmatpush.xpose.msra.mxu0 0.0
      %2755 = vmatpush.xpose.msra.mxu0 0.0
      %2756 = vmatpush.xpose.msra.mxu0 0.0
      %2757 = vmatpush.xpose.msra.mxu0 0.0
      %2758 = vmatpush.xpose.msra.mxu0 0.0
      %2759 = vmatpush.xpose.msra.mxu0 0.0
      %2760 = vmatpush.xpose.msra.mxu0 0.0
      %2761 = vmatpush.xpose.msra.mxu0 0.0
      %2762 = vmatpush.xpose.msra.mxu0 0.0
      %2763 = vmatpush.xpose.msra.mxu0 0.0
      %2764 = vmatpush.xpose.msra.mxu0 %v2750
      %2765 = vmatpush.xpose.msra.mxu0 %v2747
      %2766 = vmatpush.xpose.msra.mxu0 %v2744
      %2767 = vmatpush.xpose.msra.mxu0 %v2741
      %2768 = vmatmul.f32.gmra.mxu0 %v2735
      %v2769 = vpop.f32.mrf.mxu0
      %v2770 = vadd.f32 0.0, %v2769
      %2771 = vmatmul.f32.gmra.mxu0 %v2738
      %v2772 = vpop.f32.mrf.mxu0
      %v2773 = vadd.f32 0.0, %v2772
      %2774 = vdwg.mxu0
      %v2776 = vsel %vm970, %v290, 0
      %v2779 = vsel %vm970, %v291, 0
      %v2782 = vsel %vm970, %v634, 0
      %v2785 = vsel %vm970, %v635, 0
      %v2788 = vsel %vm970, %v636, 0
      %v2791 = vsel %vm970, %v637, 0
      %2793 = vmatpush.xpose.msra.mxu0 0.0
      %2794 = vmatpush.xpose.msra.mxu0 0.0
      %2795 = vmatpush.xpose.msra.mxu0 0.0
      %2796 = vmatpush.xpose.msra.mxu0 0.0
      %2797 = vmatpush.xpose.msra.mxu0 0.0
      %2798 = vmatpush.xpose.msra.mxu0 0.0
      %2799 = vmatpush.xpose.msra.mxu0 0.0
      %2800 = vmatpush.xpose.msra.mxu0 0.0
      %2801 = vmatpush.xpose.msra.mxu0 0.0
      %2802 = vmatpush.xpose.msra.mxu0 0.0
      %2803 = vmatpush.xpose.msra.mxu0 0.0
      %2804 = vmatpush.xpose.msra.mxu0 0.0
      %2805 = vmatpush.xpose.msra.mxu0 %v2791
      %2806 = vmatpush.xpose.msra.mxu0 %v2788
      %2807 = vmatpush.xpose.msra.mxu0 %v2785
      %2808 = vmatpush.xpose.msra.mxu0 %v2782
      %2809 = vmatmul.f32.gmra.mxu0 %v2776
      %v2810 = vpop.f32.mrf.mxu0
      %v2811 = vadd.f32 0.0, %v2810
      %2812 = vmatmul.f32.gmra.mxu0 %v2779
      %v2813 = vpop.f32.mrf.mxu0
      %v2814 = vadd.f32 0.0, %v2813
      %2815 = vdwg.mxu0
      %v2817 = vsel %vm970, %v292, 0
      %v2820 = vsel %vm970, %v293, 0
      %v2823 = vsel %vm970, %v638, 0
      %v2826 = vsel %vm970, %v639, 0
      %v2829 = vsel %vm970, %v640, 0
      %v2832 = vsel %vm970, %v641, 0
      %2834 = vmatpush.xpose.msra.mxu0 0.0
      %2835 = vmatpush.xpose.msra.mxu0 0.0
      %2836 = vmatpush.xpose.msra.mxu0 0.0
      %2837 = vmatpush.xpose.msra.mxu0 0.0
      %2838 = vmatpush.xpose.msra.mxu0 0.0
      %2839 = vmatpush.xpose.msra.mxu0 0.0
      %2840 = vmatpush.xpose.msra.mxu0 0.0
      %2841 = vmatpush.xpose.msra.mxu0 0.0
      %2842 = vmatpush.xpose.msra.mxu0 0.0
      %2843 = vmatpush.xpose.msra.mxu0 0.0
      %2844 = vmatpush.xpose.msra.mxu0 0.0
      %2845 = vmatpush.xpose.msra.mxu0 0.0
      %2846 = vmatpush.xpose.msra.mxu0 %v2832
      %2847 = vmatpush.xpose.msra.mxu0 %v2829
      %2848 = vmatpush.xpose.msra.mxu0 %v2826
      %2849 = vmatpush.xpose.msra.mxu0 %v2823
      %2850 = vmatmul.f32.gmra.mxu0 %v2817
      %v2851 = vpop.f32.mrf.mxu0
      %v2852 = vadd.f32 0.0, %v2851
      %2853 = vmatmul.f32.gmra.mxu0 %v2820
      %v2854 = vpop.f32.mrf.mxu0
      %v2855 = vadd.f32 0.0, %v2854
      %2856 = vdwg.mxu0
      %v2858 = vsel %vm970, %v294, 0
      %v2861 = vsel %vm970, %v295, 0
      %v2864 = vsel %vm970, %v642, 0
      %v2867 = vsel %vm970, %v643, 0
      %v2870 = vsel %vm970, %v644, 0
      %v2873 = vsel %vm970, %v645, 0
      %2875 = vmatpush.xpose.msra.mxu0 0.0
      %2876 = vmatpush.xpose.msra.mxu0 0.0
      %2877 = vmatpush.xpose.msra.mxu0 0.0
      %2878 = vmatpush.xpose.msra.mxu0 0.0
      %2879 = vmatpush.xpose.msra.mxu0 0.0
      %2880 = vmatpush.xpose.msra.mxu0 0.0
      %2881 = vmatpush.xpose.msra.mxu0 0.0
      %2882 = vmatpush.xpose.msra.mxu0 0.0
      %2883 = vmatpush.xpose.msra.mxu0 0.0
      %2884 = vmatpush.xpose.msra.mxu0 0.0
      %2885 = vmatpush.xpose.msra.mxu0 0.0
      %2886 = vmatpush.xpose.msra.mxu0 0.0
      %2887 = vmatpush.xpose.msra.mxu0 %v2873
      %2888 = vmatpush.xpose.msra.mxu0 %v2870
      %2889 = vmatpush.xpose.msra.mxu0 %v2867
      %2890 = vmatpush.xpose.msra.mxu0 %v2864
      %2891 = vmatmul.f32.gmra.mxu0 %v2858
      %v2892 = vpop.f32.mrf.mxu0
      %v2893 = vadd.f32 0.0, %v2892
      %2894 = vmatmul.f32.gmra.mxu0 %v2861
      %v2895 = vpop.f32.mrf.mxu0
      %v2896 = vadd.f32 0.0, %v2895
      %2897 = vdwg.mxu0
      %v2899 = vsel %vm970, %v296, 0
      %v2902 = vsel %vm970, %v297, 0
      %v2905 = vsel %vm970, %v646, 0
      %v2908 = vsel %vm970, %v647, 0
      %v2911 = vsel %vm970, %v648, 0
      %v2914 = vsel %vm970, %v649, 0
      %2916 = vmatpush.xpose.msra.mxu0 0.0
      %2917 = vmatpush.xpose.msra.mxu0 0.0
      %2918 = vmatpush.xpose.msra.mxu0 0.0
      %2919 = vmatpush.xpose.msra.mxu0 0.0
      %2920 = vmatpush.xpose.msra.mxu0 0.0
      %2921 = vmatpush.xpose.msra.mxu0 0.0
      %2922 = vmatpush.xpose.msra.mxu0 0.0
      %2923 = vmatpush.xpose.msra.mxu0 0.0
      %2924 = vmatpush.xpose.msra.mxu0 0.0
      %2925 = vmatpush.xpose.msra.mxu0 0.0
      %2926 = vmatpush.xpose.msra.mxu0 0.0
      %2927 = vmatpush.xpose.msra.mxu0 0.0
      %2928 = vmatpush.xpose.msra.mxu0 %v2914
      %2929 = vmatpush.xpose.msra.mxu0 %v2911
      %2930 = vmatpush.xpose.msra.mxu0 %v2908
      %2931 = vmatpush.xpose.msra.mxu0 %v2905
      %2932 = vmatmul.f32.gmra.mxu0 %v2899
      %v2933 = vpop.f32.mrf.mxu0
      %v2934 = vadd.f32 0.0, %v2933
      %2935 = vmatmul.f32.gmra.mxu0 %v2902
      %v2936 = vpop.f32.mrf.mxu0
      %v2937 = vadd.f32 0.0, %v2936
      %2938 = vdwg.mxu0
      %v2940 = vsel %vm970, %v298, 0
      %v2943 = vsel %vm970, %v299, 0
      %v2946 = vsel %vm970, %v650, 0
      %v2949 = vsel %vm970, %v651, 0
      %v2952 = vsel %vm970, %v652, 0
      %v2955 = vsel %vm970, %v653, 0
      %2957 = vmatpush.xpose.msra.mxu0 0.0
      %2958 = vmatpush.xpose.msra.mxu0 0.0
      %2959 = vmatpush.xpose.msra.mxu0 0.0
      %2960 = vmatpush.xpose.msra.mxu0 0.0
      %2961 = vmatpush.xpose.msra.mxu0 0.0
      %2962 = vmatpush.xpose.msra.mxu0 0.0
      %2963 = vmatpush.xpose.msra.mxu0 0.0
      %2964 = vmatpush.xpose.msra.mxu0 0.0
      %2965 = vmatpush.xpose.msra.mxu0 0.0
      %2966 = vmatpush.xpose.msra.mxu0 0.0
      %2967 = vmatpush.xpose.msra.mxu0 0.0
      %2968 = vmatpush.xpose.msra.mxu0 0.0
      %2969 = vmatpush.xpose.msra.mxu0 %v2955
      %2970 = vmatpush.xpose.msra.mxu0 %v2952
      %2971 = vmatpush.xpose.msra.mxu0 %v2949
      %2972 = vmatpush.xpose.msra.mxu0 %v2946
      %2973 = vmatmul.f32.gmra.mxu0 %v2940
      %v2974 = vpop.f32.mrf.mxu0
      %v2975 = vadd.f32 0.0, %v2974
      %2976 = vmatmul.f32.gmra.mxu0 %v2943
      %v2977 = vpop.f32.mrf.mxu0
      %v2978 = vadd.f32 0.0, %v2977
      %2979 = vdwg.mxu0
      %v2981 = vsel %vm970, %v300, 0
      %v2984 = vsel %vm970, %v301, 0
      %v2987 = vsel %vm970, %v654, 0
      %v2990 = vsel %vm970, %v655, 0
      %v2993 = vsel %vm970, %v656, 0
      %v2996 = vsel %vm970, %v657, 0
      %2998 = vmatpush.xpose.msra.mxu0 0.0
      %2999 = vmatpush.xpose.msra.mxu0 0.0
      %3000 = vmatpush.xpose.msra.mxu0 0.0
      %3001 = vmatpush.xpose.msra.mxu0 0.0
      %3002 = vmatpush.xpose.msra.mxu0 0.0
      %3003 = vmatpush.xpose.msra.mxu0 0.0
      %3004 = vmatpush.xpose.msra.mxu0 0.0
      %3005 = vmatpush.xpose.msra.mxu0 0.0
      %3006 = vmatpush.xpose.msra.mxu0 0.0
      %3007 = vmatpush.xpose.msra.mxu0 0.0
      %3008 = vmatpush.xpose.msra.mxu0 0.0
      %3009 = vmatpush.xpose.msra.mxu0 0.0
      %3010 = vmatpush.xpose.msra.mxu0 %v2996
      %3011 = vmatpush.xpose.msra.mxu0 %v2993
      %3012 = vmatpush.xpose.msra.mxu0 %v2990
      %3013 = vmatpush.xpose.msra.mxu0 %v2987
      %3014 = vmatmul.f32.gmra.mxu0 %v2981
      %v3015 = vpop.f32.mrf.mxu0
      %v3016 = vadd.f32 0.0, %v3015
      %3017 = vmatmul.f32.gmra.mxu0 %v2984
      %v3018 = vpop.f32.mrf.mxu0
      %v3019 = vadd.f32 0.0, %v3018
      %3020 = vdwg.mxu0
      %v3022 = vsel %vm970, %v302, 0
      %v3025 = vsel %vm970, %v303, 0
      %v3028 = vsel %vm970, %v658, 0
      %v3031 = vsel %vm970, %v659, 0
      %v3034 = vsel %vm970, %v660, 0
      %v3037 = vsel %vm970, %v661, 0
      %3039 = vmatpush.xpose.msra.mxu0 0.0
      %3040 = vmatpush.xpose.msra.mxu0 0.0
      %3041 = vmatpush.xpose.msra.mxu0 0.0
      %3042 = vmatpush.xpose.msra.mxu0 0.0
      %3043 = vmatpush.xpose.msra.mxu0 0.0
      %3044 = vmatpush.xpose.msra.mxu0 0.0
      %3045 = vmatpush.xpose.msra.mxu0 0.0
      %3046 = vmatpush.xpose.msra.mxu0 0.0
      %3047 = vmatpush.xpose.msra.mxu0 0.0
      %3048 = vmatpush.xpose.msra.mxu0 0.0
      %3049 = vmatpush.xpose.msra.mxu0 0.0
      %3050 = vmatpush.xpose.msra.mxu0 0.0
      %3051 = vmatpush.xpose.msra.mxu0 %v3037
      %3052 = vmatpush.xpose.msra.mxu0 %v3034
      %3053 = vmatpush.xpose.msra.mxu0 %v3031
      %3054 = vmatpush.xpose.msra.mxu0 %v3028
      %3055 = vmatmul.f32.gmra.mxu0 %v3022
      %v3056 = vpop.f32.mrf.mxu0
      %v3057 = vadd.f32 0.0, %v3056
      %3058 = vmatmul.f32.gmra.mxu0 %v3025
      %v3059 = vpop.f32.mrf.mxu0
      %v3060 = vadd.f32 0.0, %v3059
      %3061 = vdwg.mxu0
      %v3063 = vsel %vm970, %v304, 0
      %v3066 = vsel %vm970, %v305, 0
      %v3069 = vsel %vm970, %v662, 0
      %v3072 = vsel %vm970, %v663, 0
      %v3075 = vsel %vm970, %v664, 0
      %v3078 = vsel %vm970, %v665, 0
      %3080 = vmatpush.xpose.msra.mxu0 0.0
      %3081 = vmatpush.xpose.msra.mxu0 0.0
      %3082 = vmatpush.xpose.msra.mxu0 0.0
      %3083 = vmatpush.xpose.msra.mxu0 0.0
      %3084 = vmatpush.xpose.msra.mxu0 0.0
      %3085 = vmatpush.xpose.msra.mxu0 0.0
      %3086 = vmatpush.xpose.msra.mxu0 0.0
      %3087 = vmatpush.xpose.msra.mxu0 0.0
      %3088 = vmatpush.xpose.msra.mxu0 0.0
      %3089 = vmatpush.xpose.msra.mxu0 0.0
      %3090 = vmatpush.xpose.msra.mxu0 0.0
      %3091 = vmatpush.xpose.msra.mxu0 0.0
      %3092 = vmatpush.xpose.msra.mxu0 %v3078
      %3093 = vmatpush.xpose.msra.mxu0 %v3075
      %3094 = vmatpush.xpose.msra.mxu0 %v3072
      %3095 = vmatpush.xpose.msra.mxu0 %v3069
      %3096 = vmatmul.f32.gmra.mxu0 %v3063
      %v3097 = vpop.f32.mrf.mxu0
      %v3098 = vadd.f32 0.0, %v3097
      %3099 = vmatmul.f32.gmra.mxu0 %v3066
      %v3100 = vpop.f32.mrf.mxu0
      %v3101 = vadd.f32 0.0, %v3100
      %3102 = vdwg.mxu0
      %v3104 = vsel %vm970, %v306, 0
      %v3107 = vsel %vm970, %v307, 0
      %v3110 = vsel %vm970, %v666, 0
      %v3113 = vsel %vm970, %v667, 0
      %v3116 = vsel %vm970, %v668, 0
      %v3119 = vsel %vm970, %v669, 0
      %3121 = vmatpush.xpose.msra.mxu0 0.0
      %3122 = vmatpush.xpose.msra.mxu0 0.0
      %3123 = vmatpush.xpose.msra.mxu0 0.0
      %3124 = vmatpush.xpose.msra.mxu0 0.0
      %3125 = vmatpush.xpose.msra.mxu0 0.0
      %3126 = vmatpush.xpose.msra.mxu0 0.0
      %3127 = vmatpush.xpose.msra.mxu0 0.0
      %3128 = vmatpush.xpose.msra.mxu0 0.0
      %3129 = vmatpush.xpose.msra.mxu0 0.0
      %3130 = vmatpush.xpose.msra.mxu0 0.0
      %3131 = vmatpush.xpose.msra.mxu0 0.0
      %3132 = vmatpush.xpose.msra.mxu0 0.0
      %3133 = vmatpush.xpose.msra.mxu0 %v3119
      %3134 = vmatpush.xpose.msra.mxu0 %v3116
      %3135 = vmatpush.xpose.msra.mxu0 %v3113
      %3136 = vmatpush.xpose.msra.mxu0 %v3110
      %3137 = vmatmul.f32.gmra.mxu0 %v3104
      %v3138 = vpop.f32.mrf.mxu0
      %v3139 = vadd.f32 0.0, %v3138
      %3140 = vmatmul.f32.gmra.mxu0 %v3107
      %v3141 = vpop.f32.mrf.mxu0
      %v3142 = vadd.f32 0.0, %v3141
      %3143 = vdwg.mxu0
      %v3145 = vsel %vm970, %v308, 0
      %v3148 = vsel %vm970, %v309, 0
      %v3151 = vsel %vm970, %v670, 0
      %v3154 = vsel %vm970, %v671, 0
      %v3157 = vsel %vm970, %v672, 0
      %v3160 = vsel %vm970, %v673, 0
      %3162 = vmatpush.xpose.msra.mxu0 0.0
      %3163 = vmatpush.xpose.msra.mxu0 0.0
      %3164 = vmatpush.xpose.msra.mxu0 0.0
      %3165 = vmatpush.xpose.msra.mxu0 0.0
      %3166 = vmatpush.xpose.msra.mxu0 0.0
      %3167 = vmatpush.xpose.msra.mxu0 0.0
      %3168 = vmatpush.xpose.msra.mxu0 0.0
      %3169 = vmatpush.xpose.msra.mxu0 0.0
      %3170 = vmatpush.xpose.msra.mxu0 0.0
      %3171 = vmatpush.xpose.msra.mxu0 0.0
      %3172 = vmatpush.xpose.msra.mxu0 0.0
      %3173 = vmatpush.xpose.msra.mxu0 0.0
      %3174 = vmatpush.xpose.msra.mxu0 %v3160
      %3175 = vmatpush.xpose.msra.mxu0 %v3157
      %3176 = vmatpush.xpose.msra.mxu0 %v3154
      %3177 = vmatpush.xpose.msra.mxu0 %v3151
      %3178 = vmatmul.f32.gmra.mxu0 %v3145
      %v3179 = vpop.f32.mrf.mxu0
      %v3180 = vadd.f32 0.0, %v3179
      %3181 = vmatmul.f32.gmra.mxu0 %v3148
      %v3182 = vpop.f32.mrf.mxu0
      %v3183 = vadd.f32 0.0, %v3182
      %3184 = vdwg.mxu0
      %v3186 = vsel %vm970, %v310, 0
      %v3189 = vsel %vm970, %v311, 0
      %v3192 = vsel %vm970, %v674, 0
      %v3195 = vsel %vm970, %v675, 0
      %v3198 = vsel %vm970, %v676, 0
      %v3201 = vsel %vm970, %v677, 0
      %3203 = vmatpush.xpose.msra.mxu0 0.0
      %3204 = vmatpush.xpose.msra.mxu0 0.0
      %3205 = vmatpush.xpose.msra.mxu0 0.0
      %3206 = vmatpush.xpose.msra.mxu0 0.0
      %3207 = vmatpush.xpose.msra.mxu0 0.0
      %3208 = vmatpush.xpose.msra.mxu0 0.0
      %3209 = vmatpush.xpose.msra.mxu0 0.0
      %3210 = vmatpush.xpose.msra.mxu0 0.0
      %3211 = vmatpush.xpose.msra.mxu0 0.0
      %3212 = vmatpush.xpose.msra.mxu0 0.0
      %3213 = vmatpush.xpose.msra.mxu0 0.0
      %3214 = vmatpush.xpose.msra.mxu0 0.0
      %3215 = vmatpush.xpose.msra.mxu0 %v3201
      %3216 = vmatpush.xpose.msra.mxu0 %v3198
      %3217 = vmatpush.xpose.msra.mxu0 %v3195
      %3218 = vmatpush.xpose.msra.mxu0 %v3192
      %3219 = vmatmul.f32.gmra.mxu0 %v3186
      %v3220 = vpop.f32.mrf.mxu0
      %v3221 = vadd.f32 0.0, %v3220
      %3222 = vmatmul.f32.gmra.mxu0 %v3189
      %v3223 = vpop.f32.mrf.mxu0
      %v3224 = vadd.f32 0.0, %v3223
      %3225 = vdwg.mxu0
      %v3227 = vsel %vm970, %v312, 0
      %v3230 = vsel %vm970, %v313, 0
      %v3233 = vsel %vm970, %v678, 0
      %v3236 = vsel %vm970, %v679, 0
      %v3239 = vsel %vm970, %v680, 0
      %v3242 = vsel %vm970, %v681, 0
      %3244 = vmatpush.xpose.msra.mxu0 0.0
      %3245 = vmatpush.xpose.msra.mxu0 0.0
      %3246 = vmatpush.xpose.msra.mxu0 0.0
      %3247 = vmatpush.xpose.msra.mxu0 0.0
      %3248 = vmatpush.xpose.msra.mxu0 0.0
      %3249 = vmatpush.xpose.msra.mxu0 0.0
      %3250 = vmatpush.xpose.msra.mxu0 0.0
      %3251 = vmatpush.xpose.msra.mxu0 0.0
      %3252 = vmatpush.xpose.msra.mxu0 0.0
      %3253 = vmatpush.xpose.msra.mxu0 0.0
      %3254 = vmatpush.xpose.msra.mxu0 0.0
      %3255 = vmatpush.xpose.msra.mxu0 0.0
      %3256 = vmatpush.xpose.msra.mxu0 %v3242
      %3257 = vmatpush.xpose.msra.mxu0 %v3239
      %3258 = vmatpush.xpose.msra.mxu0 %v3236
      %3259 = vmatpush.xpose.msra.mxu0 %v3233
      %3260 = vmatmul.f32.gmra.mxu0 %v3227
      %v3261 = vpop.f32.mrf.mxu0
      %v3262 = vadd.f32 0.0, %v3261
      %3263 = vmatmul.f32.gmra.mxu0 %v3230
      %v3264 = vpop.f32.mrf.mxu0
      %v3265 = vadd.f32 0.0, %v3264
      %3266 = vdwg.mxu0
      %v3268 = vsel %vm970, %v314, 0
      %v3271 = vsel %vm970, %v315, 0
      %v3274 = vsel %vm970, %v682, 0
      %v3277 = vsel %vm970, %v683, 0
      %v3280 = vsel %vm970, %v684, 0
      %v3283 = vsel %vm970, %v685, 0
      %3285 = vmatpush.xpose.msra.mxu0 0.0
      %3286 = vmatpush.xpose.msra.mxu0 0.0
      %3287 = vmatpush.xpose.msra.mxu0 0.0
      %3288 = vmatpush.xpose.msra.mxu0 0.0
      %3289 = vmatpush.xpose.msra.mxu0 0.0
      %3290 = vmatpush.xpose.msra.mxu0 0.0
      %3291 = vmatpush.xpose.msra.mxu0 0.0
      %3292 = vmatpush.xpose.msra.mxu0 0.0
      %3293 = vmatpush.xpose.msra.mxu0 0.0
      %3294 = vmatpush.xpose.msra.mxu0 0.0
      %3295 = vmatpush.xpose.msra.mxu0 0.0
      %3296 = vmatpush.xpose.msra.mxu0 0.0
      %3297 = vmatpush.xpose.msra.mxu0 %v3283
      %3298 = vmatpush.xpose.msra.mxu0 %v3280
      %3299 = vmatpush.xpose.msra.mxu0 %v3277
      %3300 = vmatpush.xpose.msra.mxu0 %v3274
      %3301 = vmatmul.f32.gmra.mxu0 %v3268
      %v3302 = vpop.f32.mrf.mxu0
      %v3303 = vadd.f32 0.0, %v3302
      %3304 = vmatmul.f32.gmra.mxu0 %v3271
      %v3305 = vpop.f32.mrf.mxu0
      %v3306 = vadd.f32 0.0, %v3305
      %3307 = vdwg.mxu0
      %v3309 = vsel %vm970, %v316, 0
      %v3312 = vsel %vm970, %v317, 0
      %v3315 = vsel %vm970, %v686, 0
      %v3318 = vsel %vm970, %v687, 0
      %v3321 = vsel %vm970, %v688, 0
      %v3324 = vsel %vm970, %v689, 0
      %3326 = vmatpush.xpose.msra.mxu0 0.0
      %3327 = vmatpush.xpose.msra.mxu0 0.0
      %3328 = vmatpush.xpose.msra.mxu0 0.0
      %3329 = vmatpush.xpose.msra.mxu0 0.0
      %3330 = vmatpush.xpose.msra.mxu0 0.0
      %3331 = vmatpush.xpose.msra.mxu0 0.0
      %3332 = vmatpush.xpose.msra.mxu0 0.0
      %3333 = vmatpush.xpose.msra.mxu0 0.0
      %3334 = vmatpush.xpose.msra.mxu0 0.0
      %3335 = vmatpush.xpose.msra.mxu0 0.0
      %3336 = vmatpush.xpose.msra.mxu0 0.0
      %3337 = vmatpush.xpose.msra.mxu0 0.0
      %3338 = vmatpush.xpose.msra.mxu0 %v3324
      %3339 = vmatpush.xpose.msra.mxu0 %v3321
      %3340 = vmatpush.xpose.msra.mxu0 %v3318
      %3341 = vmatpush.xpose.msra.mxu0 %v3315
      %3342 = vmatmul.f32.gmra.mxu0 %v3309
      %v3343 = vpop.f32.mrf.mxu0
      %v3344 = vadd.f32 0.0, %v3343
      %3345 = vmatmul.f32.gmra.mxu0 %v3312
      %v3346 = vpop.f32.mrf.mxu0
      %v3347 = vadd.f32 0.0, %v3346
      %3348 = vdwg.mxu0
      %v3350 = vsel %vm970, %v318, 0
      %v3353 = vsel %vm970, %v319, 0
      %v3356 = vsel %vm970, %v690, 0
      %v3359 = vsel %vm970, %v691, 0
      %v3362 = vsel %vm970, %v692, 0
      %v3365 = vsel %vm970, %v693, 0
      %3367 = vmatpush.xpose.msra.mxu0 0.0
      %3368 = vmatpush.xpose.msra.mxu0 0.0
      %3369 = vmatpush.xpose.msra.mxu0 0.0
      %3370 = vmatpush.xpose.msra.mxu0 0.0
      %3371 = vmatpush.xpose.msra.mxu0 0.0
      %3372 = vmatpush.xpose.msra.mxu0 0.0
      %3373 = vmatpush.xpose.msra.mxu0 0.0
      %3374 = vmatpush.xpose.msra.mxu0 0.0
      %3375 = vmatpush.xpose.msra.mxu0 0.0
      %3376 = vmatpush.xpose.msra.mxu0 0.0
      %3377 = vmatpush.xpose.msra.mxu0 0.0
      %3378 = vmatpush.xpose.msra.mxu0 0.0
      %3379 = vmatpush.xpose.msra.mxu0 %v3365
      %3380 = vmatpush.xpose.msra.mxu0 %v3362
      %3381 = vmatpush.xpose.msra.mxu0 %v3359
      %3382 = vmatpush.xpose.msra.mxu0 %v3356
      %3383 = vmatmul.f32.gmra.mxu0 %v3350
      %v3384 = vpop.f32.mrf.mxu0
      %v3385 = vadd.f32 0.0, %v3384
      %3386 = vmatmul.f32.gmra.mxu0 %v3353
      %v3387 = vpop.f32.mrf.mxu0
      %v3388 = vadd.f32 0.0, %v3387
      %3389 = vdwg.mxu0
      %v3391 = vsel %vm970, %v320, 0
      %v3394 = vsel %vm970, %v321, 0
      %v3397 = vsel %vm970, %v694, 0
      %v3400 = vsel %vm970, %v695, 0
      %v3403 = vsel %vm970, %v696, 0
      %v3406 = vsel %vm970, %v697, 0
      %3408 = vmatpush.xpose.msra.mxu0 0.0
      %3409 = vmatpush.xpose.msra.mxu0 0.0
      %3410 = vmatpush.xpose.msra.mxu0 0.0
      %3411 = vmatpush.xpose.msra.mxu0 0.0
      %3412 = vmatpush.xpose.msra.mxu0 0.0
      %3413 = vmatpush.xpose.msra.mxu0 0.0
      %3414 = vmatpush.xpose.msra.mxu0 0.0
      %3415 = vmatpush.xpose.msra.mxu0 0.0
      %3416 = vmatpush.xpose.msra.mxu0 0.0
      %3417 = vmatpush.xpose.msra.mxu0 0.0
      %3418 = vmatpush.xpose.msra.mxu0 0.0
      %3419 = vmatpush.xpose.msra.mxu0 0.0
      %3420 = vmatpush.xpose.msra.mxu0 %v3406
      %3421 = vmatpush.xpose.msra.mxu0 %v3403
      %3422 = vmatpush.xpose.msra.mxu0 %v3400
      %3423 = vmatpush.xpose.msra.mxu0 %v3397
      %3424 = vmatmul.f32.gmra.mxu0 %v3391
      %v3425 = vpop.f32.mrf.mxu0
      %v3426 = vadd.f32 0.0, %v3425
      %3427 = vmatmul.f32.gmra.mxu0 %v3394
      %v3428 = vpop.f32.mrf.mxu0
      %v3429 = vadd.f32 0.0, %v3428
      %3430 = vdwg.mxu0
      %v3432 = vsel %vm970, %v322, 0
      %v3435 = vsel %vm970, %v323, 0
      %v3438 = vsel %vm970, %v698, 0
      %v3441 = vsel %vm970, %v699, 0
      %v3444 = vsel %vm970, %v700, 0
      %v3447 = vsel %vm970, %v701, 0
      %3449 = vmatpush.xpose.msra.mxu0 0.0
      %3450 = vmatpush.xpose.msra.mxu0 0.0
      %3451 = vmatpush.xpose.msra.mxu0 0.0
      %3452 = vmatpush.xpose.msra.mxu0 0.0
      %3453 = vmatpush.xpose.msra.mxu0 0.0
      %3454 = vmatpush.xpose.msra.mxu0 0.0
      %3455 = vmatpush.xpose.msra.mxu0 0.0
      %3456 = vmatpush.xpose.msra.mxu0 0.0
      %3457 = vmatpush.xpose.msra.mxu0 0.0
      %3458 = vmatpush.xpose.msra.mxu0 0.0
      %3459 = vmatpush.xpose.msra.mxu0 0.0
      %3460 = vmatpush.xpose.msra.mxu0 0.0
      %3461 = vmatpush.xpose.msra.mxu0 %v3447
      %3462 = vmatpush.xpose.msra.mxu0 %v3444
      %3463 = vmatpush.xpose.msra.mxu0 %v3441
      %3464 = vmatpush.xpose.msra.mxu0 %v3438
      %3465 = vmatmul.f32.gmra.mxu0 %v3432
      %v3466 = vpop.f32.mrf.mxu0
      %v3467 = vadd.f32 0.0, %v3466
      %3468 = vmatmul.f32.gmra.mxu0 %v3435
      %v3469 = vpop.f32.mrf.mxu0
      %v3470 = vadd.f32 0.0, %v3469
      %3471 = vdwg.mxu0
      %v3473 = vsel %vm970, %v324, 0
      %v3476 = vsel %vm970, %v325, 0
      %v3479 = vsel %vm970, %v702, 0
      %v3482 = vsel %vm970, %v703, 0
      %v3485 = vsel %vm970, %v704, 0
      %v3488 = vsel %vm970, %v705, 0
      %3490 = vmatpush.xpose.msra.mxu0 0.0
      %3491 = vmatpush.xpose.msra.mxu0 0.0
      %3492 = vmatpush.xpose.msra.mxu0 0.0
      %3493 = vmatpush.xpose.msra.mxu0 0.0
      %3494 = vmatpush.xpose.msra.mxu0 0.0
      %3495 = vmatpush.xpose.msra.mxu0 0.0
      %3496 = vmatpush.xpose.msra.mxu0 0.0
      %3497 = vmatpush.xpose.msra.mxu0 0.0
      %3498 = vmatpush.xpose.msra.mxu0 0.0
      %3499 = vmatpush.xpose.msra.mxu0 0.0
      %3500 = vmatpush.xpose.msra.mxu0 0.0
      %3501 = vmatpush.xpose.msra.mxu0 0.0
      %3502 = vmatpush.xpose.msra.mxu0 %v3488
      %3503 = vmatpush.xpose.msra.mxu0 %v3485
      %3504 = vmatpush.xpose.msra.mxu0 %v3482
      %3505 = vmatpush.xpose.msra.mxu0 %v3479
      %3506 = vmatmul.f32.gmra.mxu0 %v3473
      %v3507 = vpop.f32.mrf.mxu0
      %v3508 = vadd.f32 0.0, %v3507
      %3509 = vmatmul.f32.gmra.mxu0 %v3476
      %v3510 = vpop.f32.mrf.mxu0
      %v3511 = vadd.f32 0.0, %v3510
      %3512 = vdwg.mxu0
      %v3514 = vsel %vm970, %v326, 0
      %v3517 = vsel %vm970, %v327, 0
      %v3520 = vsel %vm970, %v706, 0
      %v3523 = vsel %vm970, %v707, 0
      %v3526 = vsel %vm970, %v708, 0
      %v3529 = vsel %vm970, %v709, 0
      %3531 = vmatpush.xpose.msra.mxu0 0.0
      %3532 = vmatpush.xpose.msra.mxu0 0.0
      %3533 = vmatpush.xpose.msra.mxu0 0.0
      %3534 = vmatpush.xpose.msra.mxu0 0.0
      %3535 = vmatpush.xpose.msra.mxu0 0.0
      %3536 = vmatpush.xpose.msra.mxu0 0.0
      %3537 = vmatpush.xpose.msra.mxu0 0.0
      %3538 = vmatpush.xpose.msra.mxu0 0.0
      %3539 = vmatpush.xpose.msra.mxu0 0.0
      %3540 = vmatpush.xpose.msra.mxu0 0.0
      %3541 = vmatpush.xpose.msra.mxu0 0.0
      %3542 = vmatpush.xpose.msra.mxu0 0.0
      %3543 = vmatpush.xpose.msra.mxu0 %v3529
      %3544 = vmatpush.xpose.msra.mxu0 %v3526
      %3545 = vmatpush.xpose.msra.mxu0 %v3523
      %3546 = vmatpush.xpose.msra.mxu0 %v3520
      %3547 = vmatmul.f32.gmra.mxu0 %v3514
      %v3548 = vpop.f32.mrf.mxu0
      %v3549 = vadd.f32 0.0, %v3548
      %3550 = vmatmul.f32.gmra.mxu0 %v3517
      %v3551 = vpop.f32.mrf.mxu0
      %v3552 = vadd.f32 0.0, %v3551
      %3553 = vdwg.mxu0
      %v3555 = vsel %vm970, %v328, 0
      %v3558 = vsel %vm970, %v329, 0
      %v3561 = vsel %vm970, %v710, 0
      %v3564 = vsel %vm970, %v711, 0
      %v3567 = vsel %vm970, %v712, 0
      %v3570 = vsel %vm970, %v713, 0
      %3572 = vmatpush.xpose.msra.mxu0 0.0
      %3573 = vmatpush.xpose.msra.mxu0 0.0
      %3574 = vmatpush.xpose.msra.mxu0 0.0
      %3575 = vmatpush.xpose.msra.mxu0 0.0
      %3576 = vmatpush.xpose.msra.mxu0 0.0
      %3577 = vmatpush.xpose.msra.mxu0 0.0
      %3578 = vmatpush.xpose.msra.mxu0 0.0
      %3579 = vmatpush.xpose.msra.mxu0 0.0
      %3580 = vmatpush.xpose.msra.mxu0 0.0
      %3581 = vmatpush.xpose.msra.mxu0 0.0
      %3582 = vmatpush.xpose.msra.mxu0 0.0
      %3583 = vmatpush.xpose.msra.mxu0 0.0
      %3584 = vmatpush.xpose.msra.mxu0 %v3570
      %3585 = vmatpush.xpose.msra.mxu0 %v3567
      %3586 = vmatpush.xpose.msra.mxu0 %v3564
      %3587 = vmatpush.xpose.msra.mxu0 %v3561
      %3588 = vmatmul.f32.gmra.mxu0 %v3555
      %v3589 = vpop.f32.mrf.mxu0
      %v3590 = vadd.f32 0.0, %v3589
      %3591 = vmatmul.f32.gmra.mxu0 %v3558
      %v3592 = vpop.f32.mrf.mxu0
      %v3593 = vadd.f32 0.0, %v3592
      %3594 = vdwg.mxu0
      %v3596 = vsel %vm970, %v330, 0
      %v3599 = vsel %vm970, %v331, 0
      %v3602 = vsel %vm970, %v714, 0
      %v3605 = vsel %vm970, %v715, 0
      %v3608 = vsel %vm970, %v716, 0
      %v3611 = vsel %vm970, %v717, 0
      %3613 = vmatpush.xpose.msra.mxu0 0.0
      %3614 = vmatpush.xpose.msra.mxu0 0.0
      %3615 = vmatpush.xpose.msra.mxu0 0.0
      %3616 = vmatpush.xpose.msra.mxu0 0.0
      %3617 = vmatpush.xpose.msra.mxu0 0.0
      %3618 = vmatpush.xpose.msra.mxu0 0.0
      %3619 = vmatpush.xpose.msra.mxu0 0.0
      %3620 = vmatpush.xpose.msra.mxu0 0.0
      %3621 = vmatpush.xpose.msra.mxu0 0.0
      %3622 = vmatpush.xpose.msra.mxu0 0.0
      %3623 = vmatpush.xpose.msra.mxu0 0.0
      %3624 = vmatpush.xpose.msra.mxu0 0.0
      %3625 = vmatpush.xpose.msra.mxu0 %v3611
      %3626 = vmatpush.xpose.msra.mxu0 %v3608
      %3627 = vmatpush.xpose.msra.mxu0 %v3605
      %3628 = vmatpush.xpose.msra.mxu0 %v3602
      %3629 = vmatmul.f32.gmra.mxu0 %v3596
      %v3630 = vpop.f32.mrf.mxu0
      %v3631 = vadd.f32 0.0, %v3630
      %3632 = vmatmul.f32.gmra.mxu0 %v3599
      %v3633 = vpop.f32.mrf.mxu0
      %v3634 = vadd.f32 0.0, %v3633
      %3635 = vdwg.mxu0
      %v3637 = vsel %vm970, %v332, 0
      %v3640 = vsel %vm970, %v333, 0
      %v3643 = vsel %vm970, %v718, 0
      %v3646 = vsel %vm970, %v719, 0
      %v3649 = vsel %vm970, %v720, 0
      %v3652 = vsel %vm970, %v721, 0
      %3654 = vmatpush.xpose.msra.mxu0 0.0
      %3655 = vmatpush.xpose.msra.mxu0 0.0
      %3656 = vmatpush.xpose.msra.mxu0 0.0
      %3657 = vmatpush.xpose.msra.mxu0 0.0
      %3658 = vmatpush.xpose.msra.mxu0 0.0
      %3659 = vmatpush.xpose.msra.mxu0 0.0
      %3660 = vmatpush.xpose.msra.mxu0 0.0
      %3661 = vmatpush.xpose.msra.mxu0 0.0
      %3662 = vmatpush.xpose.msra.mxu0 0.0
      %3663 = vmatpush.xpose.msra.mxu0 0.0
      %3664 = vmatpush.xpose.msra.mxu0 0.0
      %3665 = vmatpush.xpose.msra.mxu0 0.0
      %3666 = vmatpush.xpose.msra.mxu0 %v3652
      %3667 = vmatpush.xpose.msra.mxu0 %v3649
      %3668 = vmatpush.xpose.msra.mxu0 %v3646
      %3669 = vmatpush.xpose.msra.mxu0 %v3643
      %3670 = vmatmul.f32.gmra.mxu0 %v3637
      %v3671 = vpop.f32.mrf.mxu0
      %v3672 = vadd.f32 0.0, %v3671
      %3673 = vmatmul.f32.gmra.mxu0 %v3640
      %v3674 = vpop.f32.mrf.mxu0
      %v3675 = vadd.f32 0.0, %v3674
      %3676 = vdwg.mxu0
      %v3678 = vsel %vm970, %v334, 0
      %v3681 = vsel %vm970, %v335, 0
      %v3684 = vsel %vm970, %v722, 0
      %v3687 = vsel %vm970, %v723, 0
      %v3690 = vsel %vm970, %v724, 0
      %v3693 = vsel %vm970, %v725, 0
      %3695 = vmatpush.xpose.msra.mxu0 0.0
      %3696 = vmatpush.xpose.msra.mxu0 0.0
      %3697 = vmatpush.xpose.msra.mxu0 0.0
      %3698 = vmatpush.xpose.msra.mxu0 0.0
      %3699 = vmatpush.xpose.msra.mxu0 0.0
      %3700 = vmatpush.xpose.msra.mxu0 0.0
      %3701 = vmatpush.xpose.msra.mxu0 0.0
      %3702 = vmatpush.xpose.msra.mxu0 0.0
      %3703 = vmatpush.xpose.msra.mxu0 0.0
      %3704 = vmatpush.xpose.msra.mxu0 0.0
      %3705 = vmatpush.xpose.msra.mxu0 0.0
      %3706 = vmatpush.xpose.msra.mxu0 0.0
      %3707 = vmatpush.xpose.msra.mxu0 %v3693
      %3708 = vmatpush.xpose.msra.mxu0 %v3690
      %3709 = vmatpush.xpose.msra.mxu0 %v3687
      %3710 = vmatpush.xpose.msra.mxu0 %v3684
      %3711 = vmatmul.f32.gmra.mxu0 %v3678
      %v3712 = vpop.f32.mrf.mxu0
      %v3713 = vadd.f32 0.0, %v3712
      %3714 = vmatmul.f32.gmra.mxu0 %v3681
      %v3715 = vpop.f32.mrf.mxu0
      %v3716 = vadd.f32 0.0, %v3715
      %3717 = vdwg.mxu0
      %v3719 = vsel %vm970, %v336, 0
      %v3722 = vsel %vm970, %v337, 0
      %v3725 = vsel %vm970, %v726, 0
      %v3728 = vsel %vm970, %v727, 0
      %v3731 = vsel %vm970, %v728, 0
      %v3734 = vsel %vm970, %v729, 0
      %3736 = vmatpush.xpose.msra.mxu0 0.0
      %3737 = vmatpush.xpose.msra.mxu0 0.0
      %3738 = vmatpush.xpose.msra.mxu0 0.0
      %3739 = vmatpush.xpose.msra.mxu0 0.0
      %3740 = vmatpush.xpose.msra.mxu0 0.0
      %3741 = vmatpush.xpose.msra.mxu0 0.0
      %3742 = vmatpush.xpose.msra.mxu0 0.0
      %3743 = vmatpush.xpose.msra.mxu0 0.0
      %3744 = vmatpush.xpose.msra.mxu0 0.0
      %3745 = vmatpush.xpose.msra.mxu0 0.0
      %3746 = vmatpush.xpose.msra.mxu0 0.0
      %3747 = vmatpush.xpose.msra.mxu0 0.0
      %3748 = vmatpush.xpose.msra.mxu0 %v3734
      %3749 = vmatpush.xpose.msra.mxu0 %v3731
      %3750 = vmatpush.xpose.msra.mxu0 %v3728
      %3751 = vmatpush.xpose.msra.mxu0 %v3725
      %3752 = vmatmul.f32.gmra.mxu0 %v3719
      %v3753 = vpop.f32.mrf.mxu0
      %v3754 = vadd.f32 0.0, %v3753
      %3755 = vmatmul.f32.gmra.mxu0 %v3722
      %v3756 = vpop.f32.mrf.mxu0
      %v3757 = vadd.f32 0.0, %v3756
      %3758 = vdwg.mxu0
      %v3760 = vsel %vm970, %v338, 0
      %v3763 = vsel %vm970, %v339, 0
      %v3766 = vsel %vm970, %v730, 0
      %v3769 = vsel %vm970, %v731, 0
      %v3772 = vsel %vm970, %v732, 0
      %v3775 = vsel %vm970, %v733, 0
      %3777 = vmatpush.xpose.msra.mxu0 0.0
      %3778 = vmatpush.xpose.msra.mxu0 0.0
      %3779 = vmatpush.xpose.msra.mxu0 0.0
      %3780 = vmatpush.xpose.msra.mxu0 0.0
      %3781 = vmatpush.xpose.msra.mxu0 0.0
      %3782 = vmatpush.xpose.msra.mxu0 0.0
      %3783 = vmatpush.xpose.msra.mxu0 0.0
      %3784 = vmatpush.xpose.msra.mxu0 0.0
      %3785 = vmatpush.xpose.msra.mxu0 0.0
      %3786 = vmatpush.xpose.msra.mxu0 0.0
      %3787 = vmatpush.xpose.msra.mxu0 0.0
      %3788 = vmatpush.xpose.msra.mxu0 0.0
      %3789 = vmatpush.xpose.msra.mxu0 %v3775
      %3790 = vmatpush.xpose.msra.mxu0 %v3772
      %3791 = vmatpush.xpose.msra.mxu0 %v3769
      %3792 = vmatpush.xpose.msra.mxu0 %v3766
      %3793 = vmatmul.f32.gmra.mxu0 %v3760
      %v3794 = vpop.f32.mrf.mxu0
      %v3795 = vadd.f32 0.0, %v3794
      %3796 = vmatmul.f32.gmra.mxu0 %v3763
      %v3797 = vpop.f32.mrf.mxu0
      %v3798 = vadd.f32 0.0, %v3797
      %3799 = vdwg.mxu0
      %v3801 = vsel %vm970, %v340, 0
      %v3804 = vsel %vm970, %v341, 0
      %v3807 = vsel %vm970, %v734, 0
      %v3810 = vsel %vm970, %v735, 0
      %v3813 = vsel %vm970, %v736, 0
      %v3816 = vsel %vm970, %v737, 0
      %3818 = vmatpush.xpose.msra.mxu0 0.0
      %3819 = vmatpush.xpose.msra.mxu0 0.0
      %3820 = vmatpush.xpose.msra.mxu0 0.0
      %3821 = vmatpush.xpose.msra.mxu0 0.0
      %3822 = vmatpush.xpose.msra.mxu0 0.0
      %3823 = vmatpush.xpose.msra.mxu0 0.0
      %3824 = vmatpush.xpose.msra.mxu0 0.0
      %3825 = vmatpush.xpose.msra.mxu0 0.0
      %3826 = vmatpush.xpose.msra.mxu0 0.0
      %3827 = vmatpush.xpose.msra.mxu0 0.0
      %3828 = vmatpush.xpose.msra.mxu0 0.0
      %3829 = vmatpush.xpose.msra.mxu0 0.0
      %3830 = vmatpush.xpose.msra.mxu0 %v3816
      %3831 = vmatpush.xpose.msra.mxu0 %v3813
      %3832 = vmatpush.xpose.msra.mxu0 %v3810
      %3833 = vmatpush.xpose.msra.mxu0 %v3807
      %3834 = vmatmul.f32.gmra.mxu0 %v3801
      %v3835 = vpop.f32.mrf.mxu0
      %v3836 = vadd.f32 0.0, %v3835
      %3837 = vmatmul.f32.gmra.mxu0 %v3804
      %v3838 = vpop.f32.mrf.mxu0
      %v3839 = vadd.f32 0.0, %v3838
      %3840 = vdwg.mxu0
      %v3842 = vsel %vm970, %v342, 0
      %v3845 = vsel %vm970, %v343, 0
      %v3848 = vsel %vm970, %v738, 0
      %v3851 = vsel %vm970, %v739, 0
      %v3854 = vsel %vm970, %v740, 0
      %v3857 = vsel %vm970, %v741, 0
      %3859 = vmatpush.xpose.msra.mxu0 0.0
      %3860 = vmatpush.xpose.msra.mxu0 0.0
      %3861 = vmatpush.xpose.msra.mxu0 0.0
      %3862 = vmatpush.xpose.msra.mxu0 0.0
      %3863 = vmatpush.xpose.msra.mxu0 0.0
      %3864 = vmatpush.xpose.msra.mxu0 0.0
      %3865 = vmatpush.xpose.msra.mxu0 0.0
      %3866 = vmatpush.xpose.msra.mxu0 0.0
      %3867 = vmatpush.xpose.msra.mxu0 0.0
      %3868 = vmatpush.xpose.msra.mxu0 0.0
      %3869 = vmatpush.xpose.msra.mxu0 0.0
      %3870 = vmatpush.xpose.msra.mxu0 0.0
      %3871 = vmatpush.xpose.msra.mxu0 %v3857
      %3872 = vmatpush.xpose.msra.mxu0 %v3854
      %3873 = vmatpush.xpose.msra.mxu0 %v3851
      %3874 = vmatpush.xpose.msra.mxu0 %v3848
      %3875 = vmatmul.f32.gmra.mxu0 %v3842
      %v3876 = vpop.f32.mrf.mxu0
      %v3877 = vadd.f32 0.0, %v3876
      %3878 = vmatmul.f32.gmra.mxu0 %v3845
      %v3879 = vpop.f32.mrf.mxu0
      %v3880 = vadd.f32 0.0, %v3879
      %3881 = vdwg.mxu0
      %v3883 = vsel %vm970, %v344, 0
      %v3886 = vsel %vm970, %v345, 0
      %v3889 = vsel %vm970, %v742, 0
      %v3892 = vsel %vm970, %v743, 0
      %v3895 = vsel %vm970, %v744, 0
      %v3898 = vsel %vm970, %v745, 0
      %3900 = vmatpush.xpose.msra.mxu0 0.0
      %3901 = vmatpush.xpose.msra.mxu0 0.0
      %3902 = vmatpush.xpose.msra.mxu0 0.0
      %3903 = vmatpush.xpose.msra.mxu0 0.0
      %3904 = vmatpush.xpose.msra.mxu0 0.0
      %3905 = vmatpush.xpose.msra.mxu0 0.0
      %3906 = vmatpush.xpose.msra.mxu0 0.0
      %3907 = vmatpush.xpose.msra.mxu0 0.0
      %3908 = vmatpush.xpose.msra.mxu0 0.0
      %3909 = vmatpush.xpose.msra.mxu0 0.0
      %3910 = vmatpush.xpose.msra.mxu0 0.0
      %3911 = vmatpush.xpose.msra.mxu0 0.0
      %3912 = vmatpush.xpose.msra.mxu0 %v3898
      %3913 = vmatpush.xpose.msra.mxu0 %v3895
      %3914 = vmatpush.xpose.msra.mxu0 %v3892
      %3915 = vmatpush.xpose.msra.mxu0 %v3889
      %3916 = vmatmul.f32.gmra.mxu0 %v3883
      %v3917 = vpop.f32.mrf.mxu0
      %v3918 = vadd.f32 0.0, %v3917
      %3919 = vmatmul.f32.gmra.mxu0 %v3886
      %v3920 = vpop.f32.mrf.mxu0
      %v3921 = vadd.f32 0.0, %v3920
      %3922 = vdwg.mxu0
      %v3924 = vsel %vm970, %v346, 0
      %v3927 = vsel %vm970, %v347, 0
      %v3930 = vsel %vm970, %v746, 0
      %v3933 = vsel %vm970, %v747, 0
      %v3936 = vsel %vm970, %v748, 0
      %v3939 = vsel %vm970, %v749, 0
      %3941 = vmatpush.xpose.msra.mxu0 0.0
      %3942 = vmatpush.xpose.msra.mxu0 0.0
      %3943 = vmatpush.xpose.msra.mxu0 0.0
      %3944 = vmatpush.xpose.msra.mxu0 0.0
      %3945 = vmatpush.xpose.msra.mxu0 0.0
      %3946 = vmatpush.xpose.msra.mxu0 0.0
      %3947 = vmatpush.xpose.msra.mxu0 0.0
      %3948 = vmatpush.xpose.msra.mxu0 0.0
      %3949 = vmatpush.xpose.msra.mxu0 0.0
      %3950 = vmatpush.xpose.msra.mxu0 0.0
      %3951 = vmatpush.xpose.msra.mxu0 0.0
      %3952 = vmatpush.xpose.msra.mxu0 0.0
      %3953 = vmatpush.xpose.msra.mxu0 %v3939
      %3954 = vmatpush.xpose.msra.mxu0 %v3936
      %3955 = vmatpush.xpose.msra.mxu0 %v3933
      %3956 = vmatpush.xpose.msra.mxu0 %v3930
      %3957 = vmatmul.f32.gmra.mxu0 %v3924
      %v3958 = vpop.f32.mrf.mxu0
      %v3959 = vadd.f32 0.0, %v3958
      %3960 = vmatmul.f32.gmra.mxu0 %v3927
      %v3961 = vpop.f32.mrf.mxu0
      %v3962 = vadd.f32 0.0, %v3961
      %3963 = vdwg.mxu0
      %v3965 = vsel %vm970, %v348, 0
      %v3968 = vsel %vm970, %v349, 0
      %v3971 = vsel %vm970, %v750, 0
      %v3974 = vsel %vm970, %v751, 0
      %v3977 = vsel %vm970, %v752, 0
      %v3980 = vsel %vm970, %v753, 0
      %3982 = vmatpush.xpose.msra.mxu0 0.0
      %3983 = vmatpush.xpose.msra.mxu0 0.0
      %3984 = vmatpush.xpose.msra.mxu0 0.0
      %3985 = vmatpush.xpose.msra.mxu0 0.0
      %3986 = vmatpush.xpose.msra.mxu0 0.0
      %3987 = vmatpush.xpose.msra.mxu0 0.0
      %3988 = vmatpush.xpose.msra.mxu0 0.0
      %3989 = vmatpush.xpose.msra.mxu0 0.0
      %3990 = vmatpush.xpose.msra.mxu0 0.0
      %3991 = vmatpush.xpose.msra.mxu0 0.0
      %3992 = vmatpush.xpose.msra.mxu0 0.0
      %3993 = vmatpush.xpose.msra.mxu0 0.0
      %3994 = vmatpush.xpose.msra.mxu0 %v3980
      %3995 = vmatpush.xpose.msra.mxu0 %v3977
      %3996 = vmatpush.xpose.msra.mxu0 %v3974
      %3997 = vmatpush.xpose.msra.mxu0 %v3971
      %3998 = vmatmul.f32.gmra.mxu0 %v3965
      %v3999 = vpop.f32.mrf.mxu0
      %v4000 = vadd.f32 0.0, %v3999
      %4001 = vmatmul.f32.gmra.mxu0 %v3968
      %v4002 = vpop.f32.mrf.mxu0
      %v4003 = vadd.f32 0.0, %v4002
      %4004 = vdwg.mxu0
      %v4006 = vsel %vm970, %v350, 0
      %v4009 = vsel %vm970, %v351, 0
      %v4012 = vsel %vm970, %v754, 0
      %v4015 = vsel %vm970, %v755, 0
      %v4018 = vsel %vm970, %v756, 0
      %v4021 = vsel %vm970, %v757, 0
      %4023 = vmatpush.xpose.msra.mxu0 0.0
      %4024 = vmatpush.xpose.msra.mxu0 0.0
      %4025 = vmatpush.xpose.msra.mxu0 0.0
      %4026 = vmatpush.xpose.msra.mxu0 0.0
      %4027 = vmatpush.xpose.msra.mxu0 0.0
      %4028 = vmatpush.xpose.msra.mxu0 0.0
      %4029 = vmatpush.xpose.msra.mxu0 0.0
      %4030 = vmatpush.xpose.msra.mxu0 0.0
      %4031 = vmatpush.xpose.msra.mxu0 0.0
      %4032 = vmatpush.xpose.msra.mxu0 0.0
      %4033 = vmatpush.xpose.msra.mxu0 0.0
      %4034 = vmatpush.xpose.msra.mxu0 0.0
      %4035 = vmatpush.xpose.msra.mxu0 %v4021
      %4036 = vmatpush.xpose.msra.mxu0 %v4018
      %4037 = vmatpush.xpose.msra.mxu0 %v4015
      %4038 = vmatpush.xpose.msra.mxu0 %v4012
      %4039 = vmatmul.f32.gmra.mxu0 %v4006
      %v4040 = vpop.f32.mrf.mxu0
      %v4041 = vadd.f32 0.0, %v4040
      %4042 = vmatmul.f32.gmra.mxu0 %v4009
      %v4043 = vpop.f32.mrf.mxu0
      %v4044 = vadd.f32 0.0, %v4043
      %4045 = vdwg.mxu0
      %v4047 = vsel %vm970, %v352, 0
      %v4050 = vsel %vm970, %v353, 0
      %v4053 = vsel %vm970, %v758, 0
      %v4056 = vsel %vm970, %v759, 0
      %v4059 = vsel %vm970, %v760, 0
      %v4062 = vsel %vm970, %v761, 0
      %4064 = vmatpush.xpose.msra.mxu0 0.0
      %4065 = vmatpush.xpose.msra.mxu0 0.0
      %4066 = vmatpush.xpose.msra.mxu0 0.0
      %4067 = vmatpush.xpose.msra.mxu0 0.0
      %4068 = vmatpush.xpose.msra.mxu0 0.0
      %4069 = vmatpush.xpose.msra.mxu0 0.0
      %4070 = vmatpush.xpose.msra.mxu0 0.0
      %4071 = vmatpush.xpose.msra.mxu0 0.0
      %4072 = vmatpush.xpose.msra.mxu0 0.0
      %4073 = vmatpush.xpose.msra.mxu0 0.0
      %4074 = vmatpush.xpose.msra.mxu0 0.0
      %4075 = vmatpush.xpose.msra.mxu0 0.0
      %4076 = vmatpush.xpose.msra.mxu0 %v4062
      %4077 = vmatpush.xpose.msra.mxu0 %v4059
      %4078 = vmatpush.xpose.msra.mxu0 %v4056
      %4079 = vmatpush.xpose.msra.mxu0 %v4053
      %4080 = vmatmul.f32.gmra.mxu0 %v4047
      %v4081 = vpop.f32.mrf.mxu0
      %v4082 = vadd.f32 0.0, %v4081
      %4083 = vmatmul.f32.gmra.mxu0 %v4050
      %v4084 = vpop.f32.mrf.mxu0
      %v4085 = vadd.f32 0.0, %v4084
      %4086 = vdwg.mxu0
      %v4088 = vsel %vm970, %v354, 0
      %v4091 = vsel %vm970, %v355, 0
      %v4094 = vsel %vm970, %v762, 0
      %v4097 = vsel %vm970, %v763, 0
      %v4100 = vsel %vm970, %v764, 0
      %v4103 = vsel %vm970, %v765, 0
      %4105 = vmatpush.xpose.msra.mxu0 0.0
      %4106 = vmatpush.xpose.msra.mxu0 0.0
      %4107 = vmatpush.xpose.msra.mxu0 0.0
      %4108 = vmatpush.xpose.msra.mxu0 0.0
      %4109 = vmatpush.xpose.msra.mxu0 0.0
      %4110 = vmatpush.xpose.msra.mxu0 0.0
      %4111 = vmatpush.xpose.msra.mxu0 0.0
      %4112 = vmatpush.xpose.msra.mxu0 0.0
      %4113 = vmatpush.xpose.msra.mxu0 0.0
      %4114 = vmatpush.xpose.msra.mxu0 0.0
      %4115 = vmatpush.xpose.msra.mxu0 0.0
      %4116 = vmatpush.xpose.msra.mxu0 0.0
      %4117 = vmatpush.xpose.msra.mxu0 %v4103
      %4118 = vmatpush.xpose.msra.mxu0 %v4100
      %4119 = vmatpush.xpose.msra.mxu0 %v4097
      %4120 = vmatpush.xpose.msra.mxu0 %v4094
      %4121 = vmatmul.f32.gmra.mxu0 %v4088
      %v4122 = vpop.f32.mrf.mxu0
      %v4123 = vadd.f32 0.0, %v4122
      %4124 = vmatmul.f32.gmra.mxu0 %v4091
      %v4125 = vpop.f32.mrf.mxu0
      %v4126 = vadd.f32 0.0, %v4125
      %4127 = vdwg.mxu0
      %v4129 = vsel %vm970, %v356, 0
      %v4132 = vsel %vm970, %v357, 0
      %v4135 = vsel %vm970, %v766, 0
      %v4138 = vsel %vm970, %v767, 0
      %v4141 = vsel %vm970, %v768, 0
      %v4144 = vsel %vm970, %v769, 0
      %4146 = vmatpush.xpose.msra.mxu0 0.0
      %4147 = vmatpush.xpose.msra.mxu0 0.0
      %4148 = vmatpush.xpose.msra.mxu0 0.0
      %4149 = vmatpush.xpose.msra.mxu0 0.0
      %4150 = vmatpush.xpose.msra.mxu0 0.0
      %4151 = vmatpush.xpose.msra.mxu0 0.0
      %4152 = vmatpush.xpose.msra.mxu0 0.0
      %4153 = vmatpush.xpose.msra.mxu0 0.0
      %4154 = vmatpush.xpose.msra.mxu0 0.0
      %4155 = vmatpush.xpose.msra.mxu0 0.0
      %4156 = vmatpush.xpose.msra.mxu0 0.0
      %4157 = vmatpush.xpose.msra.mxu0 0.0
      %4158 = vmatpush.xpose.msra.mxu0 %v4144
      %4159 = vmatpush.xpose.msra.mxu0 %v4141
      %4160 = vmatpush.xpose.msra.mxu0 %v4138
      %4161 = vmatpush.xpose.msra.mxu0 %v4135
      %4162 = vmatmul.f32.gmra.mxu0 %v4129
      %v4163 = vpop.f32.mrf.mxu0
      %v4164 = vadd.f32 0.0, %v4163
      %4165 = vmatmul.f32.gmra.mxu0 %v4132
      %v4166 = vpop.f32.mrf.mxu0
      %v4167 = vadd.f32 0.0, %v4166
      %4168 = vdwg.mxu0
      %v4170 = vsel %vm970, %v358, 0
      %v4173 = vsel %vm970, %v359, 0
      %v4176 = vsel %vm970, %v770, 0
      %v4179 = vsel %vm970, %v771, 0
      %v4182 = vsel %vm970, %v772, 0
      %v4185 = vsel %vm970, %v773, 0
      %4187 = vmatpush.xpose.msra.mxu0 0.0
      %4188 = vmatpush.xpose.msra.mxu0 0.0
      %4189 = vmatpush.xpose.msra.mxu0 0.0
      %4190 = vmatpush.xpose.msra.mxu0 0.0
      %4191 = vmatpush.xpose.msra.mxu0 0.0
      %4192 = vmatpush.xpose.msra.mxu0 0.0
      %4193 = vmatpush.xpose.msra.mxu0 0.0
      %4194 = vmatpush.xpose.msra.mxu0 0.0
      %4195 = vmatpush.xpose.msra.mxu0 0.0
      %4196 = vmatpush.xpose.msra.mxu0 0.0
      %4197 = vmatpush.xpose.msra.mxu0 0.0
      %4198 = vmatpush.xpose.msra.mxu0 0.0
      %4199 = vmatpush.xpose.msra.mxu0 %v4185
      %4200 = vmatpush.xpose.msra.mxu0 %v4182
      %4201 = vmatpush.xpose.msra.mxu0 %v4179
      %4202 = vmatpush.xpose.msra.mxu0 %v4176
      %4203 = vmatmul.f32.gmra.mxu0 %v4170
      %v4204 = vpop.f32.mrf.mxu0
      %v4205 = vadd.f32 0.0, %v4204
      %4206 = vmatmul.f32.gmra.mxu0 %v4173
      %v4207 = vpop.f32.mrf.mxu0
      %v4208 = vadd.f32 0.0, %v4207
      %4209 = vdwg.mxu0
      %v4211 = vsel %vm970, %v360, 0
      %v4214 = vsel %vm970, %v361, 0
      %v4217 = vsel %vm970, %v774, 0
      %v4220 = vsel %vm970, %v775, 0
      %v4223 = vsel %vm970, %v776, 0
      %v4226 = vsel %vm970, %v777, 0
      %4228 = vmatpush.xpose.msra.mxu0 0.0
      %4229 = vmatpush.xpose.msra.mxu0 0.0
      %4230 = vmatpush.xpose.msra.mxu0 0.0
      %4231 = vmatpush.xpose.msra.mxu0 0.0
      %4232 = vmatpush.xpose.msra.mxu0 0.0
      %4233 = vmatpush.xpose.msra.mxu0 0.0
      %4234 = vmatpush.xpose.msra.mxu0 0.0
      %4235 = vmatpush.xpose.msra.mxu0 0.0
      %4236 = vmatpush.xpose.msra.mxu0 0.0
      %4237 = vmatpush.xpose.msra.mxu0 0.0
      %4238 = vmatpush.xpose.msra.mxu0 0.0
      %4239 = vmatpush.xpose.msra.mxu0 0.0
      %4240 = vmatpush.xpose.msra.mxu0 %v4226
      %4241 = vmatpush.xpose.msra.mxu0 %v4223
      %4242 = vmatpush.xpose.msra.mxu0 %v4220
      %4243 = vmatpush.xpose.msra.mxu0 %v4217
      %4244 = vmatmul.f32.gmra.mxu0 %v4211
      %v4245 = vpop.f32.mrf.mxu0
      %v4246 = vadd.f32 0.0, %v4245
      %4247 = vmatmul.f32.gmra.mxu0 %v4214
      %v4248 = vpop.f32.mrf.mxu0
      %v4249 = vadd.f32 0.0, %v4248
      %4250 = vdwg.mxu0
      %v4252 = vsel %vm970, %v362, 0
      %v4255 = vsel %vm970, %v363, 0
      %v4258 = vsel %vm970, %v778, 0
      %v4261 = vsel %vm970, %v779, 0
      %v4264 = vsel %vm970, %v780, 0
      %v4267 = vsel %vm970, %v781, 0
      %4269 = vmatpush.xpose.msra.mxu0 0.0
      %4270 = vmatpush.xpose.msra.mxu0 0.0
      %4271 = vmatpush.xpose.msra.mxu0 0.0
      %4272 = vmatpush.xpose.msra.mxu0 0.0
      %4273 = vmatpush.xpose.msra.mxu0 0.0
      %4274 = vmatpush.xpose.msra.mxu0 0.0
      %4275 = vmatpush.xpose.msra.mxu0 0.0
      %4276 = vmatpush.xpose.msra.mxu0 0.0
      %4277 = vmatpush.xpose.msra.mxu0 0.0
      %4278 = vmatpush.xpose.msra.mxu0 0.0
      %4279 = vmatpush.xpose.msra.mxu0 0.0
      %4280 = vmatpush.xpose.msra.mxu0 0.0
      %4281 = vmatpush.xpose.msra.mxu0 %v4267
      %4282 = vmatpush.xpose.msra.mxu0 %v4264
      %4283 = vmatpush.xpose.msra.mxu0 %v4261
      %4284 = vmatpush.xpose.msra.mxu0 %v4258
      %4285 = vmatmul.f32.gmra.mxu0 %v4252
      %v4286 = vpop.f32.mrf.mxu0
      %v4287 = vadd.f32 0.0, %v4286
      %4288 = vmatmul.f32.gmra.mxu0 %v4255
      %v4289 = vpop.f32.mrf.mxu0
      %v4290 = vadd.f32 0.0, %v4289
      %4291 = vdwg.mxu0
      %v4293 = vsel %vm970, %v364, 0
      %v4296 = vsel %vm970, %v365, 0
      %v4299 = vsel %vm970, %v782, 0
      %v4302 = vsel %vm970, %v783, 0
      %v4305 = vsel %vm970, %v784, 0
      %v4308 = vsel %vm970, %v785, 0
      %4310 = vmatpush.xpose.msra.mxu0 0.0
      %4311 = vmatpush.xpose.msra.mxu0 0.0
      %4312 = vmatpush.xpose.msra.mxu0 0.0
      %4313 = vmatpush.xpose.msra.mxu0 0.0
      %4314 = vmatpush.xpose.msra.mxu0 0.0
      %4315 = vmatpush.xpose.msra.mxu0 0.0
      %4316 = vmatpush.xpose.msra.mxu0 0.0
      %4317 = vmatpush.xpose.msra.mxu0 0.0
      %4318 = vmatpush.xpose.msra.mxu0 0.0
      %4319 = vmatpush.xpose.msra.mxu0 0.0
      %4320 = vmatpush.xpose.msra.mxu0 0.0
      %4321 = vmatpush.xpose.msra.mxu0 0.0
      %4322 = vmatpush.xpose.msra.mxu0 %v4308
      %4323 = vmatpush.xpose.msra.mxu0 %v4305
      %4324 = vmatpush.xpose.msra.mxu0 %v4302
      %4325 = vmatpush.xpose.msra.mxu0 %v4299
      %4326 = vmatmul.f32.gmra.mxu0 %v4293
      %v4327 = vpop.f32.mrf.mxu0
      %v4328 = vadd.f32 0.0, %v4327
      %4329 = vmatmul.f32.gmra.mxu0 %v4296
      %v4330 = vpop.f32.mrf.mxu0
      %v4331 = vadd.f32 0.0, %v4330
      %4332 = vdwg.mxu0
      %v4334 = vsel %vm970, %v366, 0
      %v4337 = vsel %vm970, %v367, 0
      %v4340 = vsel %vm970, %v786, 0
      %v4343 = vsel %vm970, %v787, 0
      %v4346 = vsel %vm970, %v788, 0
      %v4349 = vsel %vm970, %v789, 0
      %4351 = vmatpush.xpose.msra.mxu0 0.0
      %4352 = vmatpush.xpose.msra.mxu0 0.0
      %4353 = vmatpush.xpose.msra.mxu0 0.0
      %4354 = vmatpush.xpose.msra.mxu0 0.0
      %4355 = vmatpush.xpose.msra.mxu0 0.0
      %4356 = vmatpush.xpose.msra.mxu0 0.0
      %4357 = vmatpush.xpose.msra.mxu0 0.0
      %4358 = vmatpush.xpose.msra.mxu0 0.0
      %4359 = vmatpush.xpose.msra.mxu0 0.0
      %4360 = vmatpush.xpose.msra.mxu0 0.0
      %4361 = vmatpush.xpose.msra.mxu0 0.0
      %4362 = vmatpush.xpose.msra.mxu0 0.0
      %4363 = vmatpush.xpose.msra.mxu0 %v4349
      %4364 = vmatpush.xpose.msra.mxu0 %v4346
      %4365 = vmatpush.xpose.msra.mxu0 %v4343
      %4366 = vmatpush.xpose.msra.mxu0 %v4340
      %4367 = vmatmul.f32.gmra.mxu0 %v4334
      %v4368 = vpop.f32.mrf.mxu0
      %v4369 = vadd.f32 0.0, %v4368
      %4370 = vmatmul.f32.gmra.mxu0 %v4337
      %v4371 = vpop.f32.mrf.mxu0
      %v4372 = vadd.f32 0.0, %v4371
      %4373 = vdwg.mxu0
      %v4375 = vsel %vm970, %v368, 0
      %v4378 = vsel %vm970, %v369, 0
      %v4381 = vsel %vm970, %v790, 0
      %v4384 = vsel %vm970, %v791, 0
      %v4387 = vsel %vm970, %v792, 0
      %v4390 = vsel %vm970, %v793, 0
      %4392 = vmatpush.xpose.msra.mxu0 0.0
      %4393 = vmatpush.xpose.msra.mxu0 0.0
      %4394 = vmatpush.xpose.msra.mxu0 0.0
      %4395 = vmatpush.xpose.msra.mxu0 0.0
      %4396 = vmatpush.xpose.msra.mxu0 0.0
      %4397 = vmatpush.xpose.msra.mxu0 0.0
      %4398 = vmatpush.xpose.msra.mxu0 0.0
      %4399 = vmatpush.xpose.msra.mxu0 0.0
      %4400 = vmatpush.xpose.msra.mxu0 0.0
      %4401 = vmatpush.xpose.msra.mxu0 0.0
      %4402 = vmatpush.xpose.msra.mxu0 0.0
      %4403 = vmatpush.xpose.msra.mxu0 0.0
      %4404 = vmatpush.xpose.msra.mxu0 %v4390
      %4405 = vmatpush.xpose.msra.mxu0 %v4387
      %4406 = vmatpush.xpose.msra.mxu0 %v4384
      %4407 = vmatpush.xpose.msra.mxu0 %v4381
      %4408 = vmatmul.f32.gmra.mxu0 %v4375
      %v4409 = vpop.f32.mrf.mxu0
      %v4410 = vadd.f32 0.0, %v4409
      %4411 = vmatmul.f32.gmra.mxu0 %v4378
      %v4412 = vpop.f32.mrf.mxu0
      %v4413 = vadd.f32 0.0, %v4412
      %4414 = vdwg.mxu0
      %v4416 = vsel %vm970, %v370, 0
      %v4419 = vsel %vm970, %v371, 0
      %v4422 = vsel %vm970, %v794, 0
      %v4425 = vsel %vm970, %v795, 0
      %v4428 = vsel %vm970, %v796, 0
      %v4431 = vsel %vm970, %v797, 0
      %4433 = vmatpush.xpose.msra.mxu0 0.0
      %4434 = vmatpush.xpose.msra.mxu0 0.0
      %4435 = vmatpush.xpose.msra.mxu0 0.0
      %4436 = vmatpush.xpose.msra.mxu0 0.0
      %4437 = vmatpush.xpose.msra.mxu0 0.0
      %4438 = vmatpush.xpose.msra.mxu0 0.0
      %4439 = vmatpush.xpose.msra.mxu0 0.0
      %4440 = vmatpush.xpose.msra.mxu0 0.0
      %4441 = vmatpush.xpose.msra.mxu0 0.0
      %4442 = vmatpush.xpose.msra.mxu0 0.0
      %4443 = vmatpush.xpose.msra.mxu0 0.0
      %4444 = vmatpush.xpose.msra.mxu0 0.0
      %4445 = vmatpush.xpose.msra.mxu0 %v4431
      %4446 = vmatpush.xpose.msra.mxu0 %v4428
      %4447 = vmatpush.xpose.msra.mxu0 %v4425
      %4448 = vmatpush.xpose.msra.mxu0 %v4422
      %4449 = vmatmul.f32.gmra.mxu0 %v4416
      %v4450 = vpop.f32.mrf.mxu0
      %v4451 = vadd.f32 0.0, %v4450
      %4452 = vmatmul.f32.gmra.mxu0 %v4419
      %v4453 = vpop.f32.mrf.mxu0
      %v4454 = vadd.f32 0.0, %v4453
      %4455 = vdwg.mxu0
      %v4457 = vsel %vm970, %v372, 0
      %v4460 = vsel %vm970, %v373, 0
      %v4463 = vsel %vm970, %v798, 0
      %v4466 = vsel %vm970, %v799, 0
      %v4469 = vsel %vm970, %v800, 0
      %v4472 = vsel %vm970, %v801, 0
      %4474 = vmatpush.xpose.msra.mxu0 0.0
      %4475 = vmatpush.xpose.msra.mxu0 0.0
      %4476 = vmatpush.xpose.msra.mxu0 0.0
      %4477 = vmatpush.xpose.msra.mxu0 0.0
      %4478 = vmatpush.xpose.msra.mxu0 0.0
      %4479 = vmatpush.xpose.msra.mxu0 0.0
      %4480 = vmatpush.xpose.msra.mxu0 0.0
      %4481 = vmatpush.xpose.msra.mxu0 0.0
      %4482 = vmatpush.xpose.msra.mxu0 0.0
      %4483 = vmatpush.xpose.msra.mxu0 0.0
      %4484 = vmatpush.xpose.msra.mxu0 0.0
      %4485 = vmatpush.xpose.msra.mxu0 0.0
      %4486 = vmatpush.xpose.msra.mxu0 %v4472
      %4487 = vmatpush.xpose.msra.mxu0 %v4469
      %4488 = vmatpush.xpose.msra.mxu0 %v4466
      %4489 = vmatpush.xpose.msra.mxu0 %v4463
      %4490 = vmatmul.f32.gmra.mxu0 %v4457
      %v4491 = vpop.f32.mrf.mxu0
      %v4492 = vadd.f32 0.0, %v4491
      %4493 = vmatmul.f32.gmra.mxu0 %v4460
      %v4494 = vpop.f32.mrf.mxu0
      %v4495 = vadd.f32 0.0, %v4494
      %4496 = vdwg.mxu0
      %v4498 = vsel %vm970, %v374, 0
      %v4501 = vsel %vm970, %v375, 0
      %v4504 = vsel %vm970, %v802, 0
      %v4507 = vsel %vm970, %v803, 0
      %v4510 = vsel %vm970, %v804, 0
      %v4513 = vsel %vm970, %v805, 0
      %4515 = vmatpush.xpose.msra.mxu0 0.0
      %4516 = vmatpush.xpose.msra.mxu0 0.0
      %4517 = vmatpush.xpose.msra.mxu0 0.0
      %4518 = vmatpush.xpose.msra.mxu0 0.0
      %4519 = vmatpush.xpose.msra.mxu0 0.0
      %4520 = vmatpush.xpose.msra.mxu0 0.0
      %4521 = vmatpush.xpose.msra.mxu0 0.0
      %4522 = vmatpush.xpose.msra.mxu0 0.0
      %4523 = vmatpush.xpose.msra.mxu0 0.0
      %4524 = vmatpush.xpose.msra.mxu0 0.0
      %4525 = vmatpush.xpose.msra.mxu0 0.0
      %4526 = vmatpush.xpose.msra.mxu0 0.0
      %4527 = vmatpush.xpose.msra.mxu0 %v4513
      %4528 = vmatpush.xpose.msra.mxu0 %v4510
      %4529 = vmatpush.xpose.msra.mxu0 %v4507
      %4530 = vmatpush.xpose.msra.mxu0 %v4504
      %4531 = vmatmul.f32.gmra.mxu0 %v4498
      %v4532 = vpop.f32.mrf.mxu0
      %v4533 = vadd.f32 0.0, %v4532
      %4534 = vmatmul.f32.gmra.mxu0 %v4501
      %v4535 = vpop.f32.mrf.mxu0
      %v4536 = vadd.f32 0.0, %v4535
      %4537 = vdwg.mxu0
      %v4539 = vsel %vm970, %v376, 0
      %v4542 = vsel %vm970, %v377, 0
      %v4545 = vsel %vm970, %v806, 0
      %v4548 = vsel %vm970, %v807, 0
      %v4551 = vsel %vm970, %v808, 0
      %v4554 = vsel %vm970, %v809, 0
      %4556 = vmatpush.xpose.msra.mxu0 0.0
      %4557 = vmatpush.xpose.msra.mxu0 0.0
      %4558 = vmatpush.xpose.msra.mxu0 0.0
      %4559 = vmatpush.xpose.msra.mxu0 0.0
      %4560 = vmatpush.xpose.msra.mxu0 0.0
      %4561 = vmatpush.xpose.msra.mxu0 0.0
      %4562 = vmatpush.xpose.msra.mxu0 0.0
      %4563 = vmatpush.xpose.msra.mxu0 0.0
      %4564 = vmatpush.xpose.msra.mxu0 0.0
      %4565 = vmatpush.xpose.msra.mxu0 0.0
      %4566 = vmatpush.xpose.msra.mxu0 0.0
      %4567 = vmatpush.xpose.msra.mxu0 0.0
      %4568 = vmatpush.xpose.msra.mxu0 %v4554
      %4569 = vmatpush.xpose.msra.mxu0 %v4551
      %4570 = vmatpush.xpose.msra.mxu0 %v4548
      %4571 = vmatpush.xpose.msra.mxu0 %v4545
      %4572 = vmatmul.f32.gmra.mxu0 %v4539
      %v4573 = vpop.f32.mrf.mxu0
      %v4574 = vadd.f32 0.0, %v4573
      %4575 = vmatmul.f32.gmra.mxu0 %v4542
      %v4576 = vpop.f32.mrf.mxu0
      %v4577 = vadd.f32 0.0, %v4576
      %4578 = vdwg.mxu0
      %v4580 = vsel %vm970, %v378, 0
      %v4583 = vsel %vm970, %v379, 0
      %v4586 = vsel %vm970, %v810, 0
      %v4589 = vsel %vm970, %v811, 0
      %v4592 = vsel %vm970, %v812, 0
      %v4595 = vsel %vm970, %v813, 0
      %4597 = vmatpush.xpose.msra.mxu0 0.0
      %4598 = vmatpush.xpose.msra.mxu0 0.0
      %4599 = vmatpush.xpose.msra.mxu0 0.0
      %4600 = vmatpush.xpose.msra.mxu0 0.0
      %4601 = vmatpush.xpose.msra.mxu0 0.0
      %4602 = vmatpush.xpose.msra.mxu0 0.0
      %4603 = vmatpush.xpose.msra.mxu0 0.0
      %4604 = vmatpush.xpose.msra.mxu0 0.0
      %4605 = vmatpush.xpose.msra.mxu0 0.0
      %4606 = vmatpush.xpose.msra.mxu0 0.0
      %4607 = vmatpush.xpose.msra.mxu0 0.0
      %4608 = vmatpush.xpose.msra.mxu0 0.0
      %4609 = vmatpush.xpose.msra.mxu0 %v4595
      %4610 = vmatpush.xpose.msra.mxu0 %v4592
      %4611 = vmatpush.xpose.msra.mxu0 %v4589
      %4612 = vmatpush.xpose.msra.mxu0 %v4586
      %4613 = vmatmul.f32.gmra.mxu0 %v4580
      %v4614 = vpop.f32.mrf.mxu0
      %v4615 = vadd.f32 0.0, %v4614
      %4616 = vmatmul.f32.gmra.mxu0 %v4583
      %v4617 = vpop.f32.mrf.mxu0
      %v4618 = vadd.f32 0.0, %v4617
      %4619 = vdwg.mxu0
      %v4621 = vsel %vm970, %v380, 0
      %v4624 = vsel %vm970, %v381, 0
      %v4627 = vsel %vm970, %v814, 0
      %v4630 = vsel %vm970, %v815, 0
      %v4633 = vsel %vm970, %v816, 0
      %v4636 = vsel %vm970, %v817, 0
      %4638 = vmatpush.xpose.msra.mxu0 0.0
      %4639 = vmatpush.xpose.msra.mxu0 0.0
      %4640 = vmatpush.xpose.msra.mxu0 0.0
      %4641 = vmatpush.xpose.msra.mxu0 0.0
      %4642 = vmatpush.xpose.msra.mxu0 0.0
      %4643 = vmatpush.xpose.msra.mxu0 0.0
      %4644 = vmatpush.xpose.msra.mxu0 0.0
      %4645 = vmatpush.xpose.msra.mxu0 0.0
      %4646 = vmatpush.xpose.msra.mxu0 0.0
      %4647 = vmatpush.xpose.msra.mxu0 0.0
      %4648 = vmatpush.xpose.msra.mxu0 0.0
      %4649 = vmatpush.xpose.msra.mxu0 0.0
      %4650 = vmatpush.xpose.msra.mxu0 %v4636
      %4651 = vmatpush.xpose.msra.mxu0 %v4633
      %4652 = vmatpush.xpose.msra.mxu0 %v4630
      %4653 = vmatpush.xpose.msra.mxu0 %v4627
      %4654 = vmatmul.f32.gmra.mxu0 %v4621
      %v4655 = vpop.f32.mrf.mxu0
      %v4656 = vadd.f32 0.0, %v4655
      %4657 = vmatmul.f32.gmra.mxu0 %v4624
      %v4658 = vpop.f32.mrf.mxu0
      %v4659 = vadd.f32 0.0, %v4658
      %4660 = vdwg.mxu0
      %v4662 = vsel %vm970, %v382, 0
      %v4665 = vsel %vm970, %v383, 0
      %v4668 = vsel %vm970, %v818, 0
      %v4671 = vsel %vm970, %v819, 0
      %v4674 = vsel %vm970, %v820, 0
      %v4677 = vsel %vm970, %v821, 0
      %4679 = vmatpush.xpose.msra.mxu0 0.0
      %4680 = vmatpush.xpose.msra.mxu0 0.0
      %4681 = vmatpush.xpose.msra.mxu0 0.0
      %4682 = vmatpush.xpose.msra.mxu0 0.0
      %4683 = vmatpush.xpose.msra.mxu0 0.0
      %4684 = vmatpush.xpose.msra.mxu0 0.0
      %4685 = vmatpush.xpose.msra.mxu0 0.0
      %4686 = vmatpush.xpose.msra.mxu0 0.0
      %4687 = vmatpush.xpose.msra.mxu0 0.0
      %4688 = vmatpush.xpose.msra.mxu0 0.0
      %4689 = vmatpush.xpose.msra.mxu0 0.0
      %4690 = vmatpush.xpose.msra.mxu0 0.0
      %4691 = vmatpush.xpose.msra.mxu0 %v4677
      %4692 = vmatpush.xpose.msra.mxu0 %v4674
      %4693 = vmatpush.xpose.msra.mxu0 %v4671
      %4694 = vmatpush.xpose.msra.mxu0 %v4668
      %4695 = vmatmul.f32.gmra.mxu0 %v4662
      %v4696 = vpop.f32.mrf.mxu0
      %v4697 = vadd.f32 0.0, %v4696
      %4698 = vmatmul.f32.gmra.mxu0 %v4665
      %v4699 = vpop.f32.mrf.mxu0
      %v4700 = vadd.f32 0.0, %v4699
      %4701 = vdwg.mxu0
      %v4703 = vsel %vm970, %v384, 0
      %v4706 = vsel %vm970, %v385, 0
      %v4709 = vsel %vm970, %v822, 0
      %v4712 = vsel %vm970, %v823, 0
      %v4715 = vsel %vm970, %v824, 0
      %v4718 = vsel %vm970, %v825, 0
      %4720 = vmatpush.xpose.msra.mxu0 0.0
      %4721 = vmatpush.xpose.msra.mxu0 0.0
      %4722 = vmatpush.xpose.msra.mxu0 0.0
      %4723 = vmatpush.xpose.msra.mxu0 0.0
      %4724 = vmatpush.xpose.msra.mxu0 0.0
      %4725 = vmatpush.xpose.msra.mxu0 0.0
      %4726 = vmatpush.xpose.msra.mxu0 0.0
      %4727 = vmatpush.xpose.msra.mxu0 0.0
      %4728 = vmatpush.xpose.msra.mxu0 0.0
      %4729 = vmatpush.xpose.msra.mxu0 0.0
      %4730 = vmatpush.xpose.msra.mxu0 0.0
      %4731 = vmatpush.xpose.msra.mxu0 0.0
      %4732 = vmatpush.xpose.msra.mxu0 %v4718
      %4733 = vmatpush.xpose.msra.mxu0 %v4715
      %4734 = vmatpush.xpose.msra.mxu0 %v4712
      %4735 = vmatpush.xpose.msra.mxu0 %v4709
      %4736 = vmatmul.f32.gmra.mxu0 %v4703
      %v4737 = vpop.f32.mrf.mxu0
      %v4738 = vadd.f32 0.0, %v4737
      %4739 = vmatmul.f32.gmra.mxu0 %v4706
      %v4740 = vpop.f32.mrf.mxu0
      %v4741 = vadd.f32 0.0, %v4740
      %4742 = vdwg.mxu0
      %v4744 = vsel %vm970, %v386, 0
      %v4747 = vsel %vm970, %v387, 0
      %v4750 = vsel %vm970, %v826, 0
      %v4753 = vsel %vm970, %v827, 0
      %v4756 = vsel %vm970, %v828, 0
      %v4759 = vsel %vm970, %v829, 0
      %4761 = vmatpush.xpose.msra.mxu0 0.0
      %4762 = vmatpush.xpose.msra.mxu0 0.0
      %4763 = vmatpush.xpose.msra.mxu0 0.0
      %4764 = vmatpush.xpose.msra.mxu0 0.0
      %4765 = vmatpush.xpose.msra.mxu0 0.0
      %4766 = vmatpush.xpose.msra.mxu0 0.0
      %4767 = vmatpush.xpose.msra.mxu0 0.0
      %4768 = vmatpush.xpose.msra.mxu0 0.0
      %4769 = vmatpush.xpose.msra.mxu0 0.0
      %4770 = vmatpush.xpose.msra.mxu0 0.0
      %4771 = vmatpush.xpose.msra.mxu0 0.0
      %4772 = vmatpush.xpose.msra.mxu0 0.0
      %4773 = vmatpush.xpose.msra.mxu0 %v4759
      %4774 = vmatpush.xpose.msra.mxu0 %v4756
      %4775 = vmatpush.xpose.msra.mxu0 %v4753
      %4776 = vmatpush.xpose.msra.mxu0 %v4750
      %4777 = vmatmul.f32.gmra.mxu0 %v4744
      %v4778 = vpop.f32.mrf.mxu0
      %v4779 = vadd.f32 0.0, %v4778
      %4780 = vmatmul.f32.gmra.mxu0 %v4747
      %v4781 = vpop.f32.mrf.mxu0
      %v4782 = vadd.f32 0.0, %v4781
      %4783 = vdwg.mxu0
      %v4785 = vsel %vm970, %v388, 0
      %v4788 = vsel %vm970, %v389, 0
      %v4791 = vsel %vm970, %v830, 0
      %v4794 = vsel %vm970, %v831, 0
      %v4797 = vsel %vm970, %v832, 0
      %v4800 = vsel %vm970, %v833, 0
      %4802 = vmatpush.xpose.msra.mxu0 0.0
      %4803 = vmatpush.xpose.msra.mxu0 0.0
      %4804 = vmatpush.xpose.msra.mxu0 0.0
      %4805 = vmatpush.xpose.msra.mxu0 0.0
      %4806 = vmatpush.xpose.msra.mxu0 0.0
      %4807 = vmatpush.xpose.msra.mxu0 0.0
      %4808 = vmatpush.xpose.msra.mxu0 0.0
      %4809 = vmatpush.xpose.msra.mxu0 0.0
      %4810 = vmatpush.xpose.msra.mxu0 0.0
      %4811 = vmatpush.xpose.msra.mxu0 0.0
      %4812 = vmatpush.xpose.msra.mxu0 0.0
      %4813 = vmatpush.xpose.msra.mxu0 0.0
      %4814 = vmatpush.xpose.msra.mxu0 %v4800
      %4815 = vmatpush.xpose.msra.mxu0 %v4797
      %4816 = vmatpush.xpose.msra.mxu0 %v4794
      %4817 = vmatpush.xpose.msra.mxu0 %v4791
      %4818 = vmatmul.f32.gmra.mxu0 %v4785
      %v4819 = vpop.f32.mrf.mxu0
      %v4820 = vadd.f32 0.0, %v4819
      %4821 = vmatmul.f32.gmra.mxu0 %v4788
      %v4822 = vpop.f32.mrf.mxu0
      %v4823 = vadd.f32 0.0, %v4822
      %4824 = vdwg.mxu0
      %v4826 = vsel %vm970, %v390, 0
      %v4829 = vsel %vm970, %v391, 0
      %v4832 = vsel %vm970, %v834, 0
      %v4835 = vsel %vm970, %v835, 0
      %v4838 = vsel %vm970, %v836, 0
      %v4841 = vsel %vm970, %v837, 0
      %4843 = vmatpush.xpose.msra.mxu0 0.0
      %4844 = vmatpush.xpose.msra.mxu0 0.0
      %4845 = vmatpush.xpose.msra.mxu0 0.0
      %4846 = vmatpush.xpose.msra.mxu0 0.0
      %4847 = vmatpush.xpose.msra.mxu0 0.0
      %4848 = vmatpush.xpose.msra.mxu0 0.0
      %4849 = vmatpush.xpose.msra.mxu0 0.0
      %4850 = vmatpush.xpose.msra.mxu0 0.0
      %4851 = vmatpush.xpose.msra.mxu0 0.0
      %4852 = vmatpush.xpose.msra.mxu0 0.0
      %4853 = vmatpush.xpose.msra.mxu0 0.0
      %4854 = vmatpush.xpose.msra.mxu0 0.0
      %4855 = vmatpush.xpose.msra.mxu0 %v4841
      %4856 = vmatpush.xpose.msra.mxu0 %v4838
      %4857 = vmatpush.xpose.msra.mxu0 %v4835
      %4858 = vmatpush.xpose.msra.mxu0 %v4832
      %4859 = vmatmul.f32.gmra.mxu0 %v4826
      %v4860 = vpop.f32.mrf.mxu0
      %v4861 = vadd.f32 0.0, %v4860
      %4862 = vmatmul.f32.gmra.mxu0 %v4829
      %v4863 = vpop.f32.mrf.mxu0
      %v4864 = vadd.f32 0.0, %v4863
      %4865 = vdwg.mxu0
      %v4867 = vsel %vm970, %v392, 0
      %v4870 = vsel %vm970, %v393, 0
      %v4873 = vsel %vm970, %v838, 0
      %v4876 = vsel %vm970, %v839, 0
      %v4879 = vsel %vm970, %v840, 0
      %v4882 = vsel %vm970, %v841, 0
      %4884 = vmatpush.xpose.msra.mxu0 0.0
      %4885 = vmatpush.xpose.msra.mxu0 0.0
      %4886 = vmatpush.xpose.msra.mxu0 0.0
      %4887 = vmatpush.xpose.msra.mxu0 0.0
      %4888 = vmatpush.xpose.msra.mxu0 0.0
      %4889 = vmatpush.xpose.msra.mxu0 0.0
      %4890 = vmatpush.xpose.msra.mxu0 0.0
      %4891 = vmatpush.xpose.msra.mxu0 0.0
      %4892 = vmatpush.xpose.msra.mxu0 0.0
      %4893 = vmatpush.xpose.msra.mxu0 0.0
      %4894 = vmatpush.xpose.msra.mxu0 0.0
      %4895 = vmatpush.xpose.msra.mxu0 0.0
      %4896 = vmatpush.xpose.msra.mxu0 %v4882
      %4897 = vmatpush.xpose.msra.mxu0 %v4879
      %4898 = vmatpush.xpose.msra.mxu0 %v4876
      %4899 = vmatpush.xpose.msra.mxu0 %v4873
      %4900 = vmatmul.f32.gmra.mxu0 %v4867
      %v4901 = vpop.f32.mrf.mxu0
      %v4902 = vadd.f32 0.0, %v4901
      %4903 = vmatmul.f32.gmra.mxu0 %v4870
      %v4904 = vpop.f32.mrf.mxu0
      %v4905 = vadd.f32 0.0, %v4904
      %4906 = vdwg.mxu0
      %v4908 = vsel %vm970, %v394, 0
      %v4911 = vsel %vm970, %v395, 0
      %v4914 = vsel %vm970, %v842, 0
      %v4917 = vsel %vm970, %v843, 0
      %v4920 = vsel %vm970, %v844, 0
      %v4923 = vsel %vm970, %v845, 0
      %4925 = vmatpush.xpose.msra.mxu0 0.0
      %4926 = vmatpush.xpose.msra.mxu0 0.0
      %4927 = vmatpush.xpose.msra.mxu0 0.0
      %4928 = vmatpush.xpose.msra.mxu0 0.0
      %4929 = vmatpush.xpose.msra.mxu0 0.0
      %4930 = vmatpush.xpose.msra.mxu0 0.0
      %4931 = vmatpush.xpose.msra.mxu0 0.0
      %4932 = vmatpush.xpose.msra.mxu0 0.0
      %4933 = vmatpush.xpose.msra.mxu0 0.0
      %4934 = vmatpush.xpose.msra.mxu0 0.0
      %4935 = vmatpush.xpose.msra.mxu0 0.0
      %4936 = vmatpush.xpose.msra.mxu0 0.0
      %4937 = vmatpush.xpose.msra.mxu0 %v4923
      %4938 = vmatpush.xpose.msra.mxu0 %v4920
      %4939 = vmatpush.xpose.msra.mxu0 %v4917
      %4940 = vmatpush.xpose.msra.mxu0 %v4914
      %4941 = vmatmul.f32.gmra.mxu0 %v4908
      %v4942 = vpop.f32.mrf.mxu0
      %v4943 = vadd.f32 0.0, %v4942
      %4944 = vmatmul.f32.gmra.mxu0 %v4911
      %v4945 = vpop.f32.mrf.mxu0
      %v4946 = vadd.f32 0.0, %v4945
      %4947 = vdwg.mxu0
      %v4949 = vsel %vm970, %v396, 0
      %v4952 = vsel %vm970, %v397, 0
      %v4955 = vsel %vm970, %v846, 0
      %v4958 = vsel %vm970, %v847, 0
      %v4961 = vsel %vm970, %v848, 0
      %v4964 = vsel %vm970, %v849, 0
      %4966 = vmatpush.xpose.msra.mxu0 0.0
      %4967 = vmatpush.xpose.msra.mxu0 0.0
      %4968 = vmatpush.xpose.msra.mxu0 0.0
      %4969 = vmatpush.xpose.msra.mxu0 0.0
      %4970 = vmatpush.xpose.msra.mxu0 0.0
      %4971 = vmatpush.xpose.msra.mxu0 0.0
      %4972 = vmatpush.xpose.msra.mxu0 0.0
      %4973 = vmatpush.xpose.msra.mxu0 0.0
      %4974 = vmatpush.xpose.msra.mxu0 0.0
      %4975 = vmatpush.xpose.msra.mxu0 0.0
      %4976 = vmatpush.xpose.msra.mxu0 0.0
      %4977 = vmatpush.xpose.msra.mxu0 0.0
      %4978 = vmatpush.xpose.msra.mxu0 %v4964
      %4979 = vmatpush.xpose.msra.mxu0 %v4961
      %4980 = vmatpush.xpose.msra.mxu0 %v4958
      %4981 = vmatpush.xpose.msra.mxu0 %v4955
      %4982 = vmatmul.f32.gmra.mxu0 %v4949
      %v4983 = vpop.f32.mrf.mxu0
      %v4984 = vadd.f32 0.0, %v4983
      %4985 = vmatmul.f32.gmra.mxu0 %v4952
      %v4986 = vpop.f32.mrf.mxu0
      %v4987 = vadd.f32 0.0, %v4986
      %4988 = vdwg.mxu0
      %v4990 = vsel %vm970, %v398, 0
      %v4993 = vsel %vm970, %v399, 0
      %v4996 = vsel %vm970, %v850, 0
      %v4999 = vsel %vm970, %v851, 0
      %v5002 = vsel %vm970, %v852, 0
      %v5005 = vsel %vm970, %v853, 0
      %5007 = vmatpush.xpose.msra.mxu0 0.0
      %5008 = vmatpush.xpose.msra.mxu0 0.0
      %5009 = vmatpush.xpose.msra.mxu0 0.0
      %5010 = vmatpush.xpose.msra.mxu0 0.0
      %5011 = vmatpush.xpose.msra.mxu0 0.0
      %5012 = vmatpush.xpose.msra.mxu0 0.0
      %5013 = vmatpush.xpose.msra.mxu0 0.0
      %5014 = vmatpush.xpose.msra.mxu0 0.0
      %5015 = vmatpush.xpose.msra.mxu0 0.0
      %5016 = vmatpush.xpose.msra.mxu0 0.0
      %5017 = vmatpush.xpose.msra.mxu0 0.0
      %5018 = vmatpush.xpose.msra.mxu0 0.0
      %5019 = vmatpush.xpose.msra.mxu0 %v5005
      %5020 = vmatpush.xpose.msra.mxu0 %v5002
      %5021 = vmatpush.xpose.msra.mxu0 %v4999
      %5022 = vmatpush.xpose.msra.mxu0 %v4996
      %5023 = vmatmul.f32.gmra.mxu0 %v4990
      %v5024 = vpop.f32.mrf.mxu0
      %v5025 = vadd.f32 0.0, %v5024
      %5026 = vmatmul.f32.gmra.mxu0 %v4993
      %v5027 = vpop.f32.mrf.mxu0
      %v5028 = vadd.f32 0.0, %v5027
      %5029 = vdwg.mxu0
      %v5031 = vsel %vm970, %v400, 0
      %v5034 = vsel %vm970, %v401, 0
      %v5037 = vsel %vm970, %v854, 0
      %v5040 = vsel %vm970, %v855, 0
      %v5043 = vsel %vm970, %v856, 0
      %v5046 = vsel %vm970, %v857, 0
      %5048 = vmatpush.xpose.msra.mxu0 0.0
      %5049 = vmatpush.xpose.msra.mxu0 0.0
      %5050 = vmatpush.xpose.msra.mxu0 0.0
      %5051 = vmatpush.xpose.msra.mxu0 0.0
      %5052 = vmatpush.xpose.msra.mxu0 0.0
      %5053 = vmatpush.xpose.msra.mxu0 0.0
      %5054 = vmatpush.xpose.msra.mxu0 0.0
      %5055 = vmatpush.xpose.msra.mxu0 0.0
      %5056 = vmatpush.xpose.msra.mxu0 0.0
      %5057 = vmatpush.xpose.msra.mxu0 0.0
      %5058 = vmatpush.xpose.msra.mxu0 0.0
      %5059 = vmatpush.xpose.msra.mxu0 0.0
      %5060 = vmatpush.xpose.msra.mxu0 %v5046
      %5061 = vmatpush.xpose.msra.mxu0 %v5043
      %5062 = vmatpush.xpose.msra.mxu0 %v5040
      %5063 = vmatpush.xpose.msra.mxu0 %v5037
      %5064 = vmatmul.f32.gmra.mxu0 %v5031
      %v5065 = vpop.f32.mrf.mxu0
      %v5066 = vadd.f32 0.0, %v5065
      %5067 = vmatmul.f32.gmra.mxu0 %v5034
      %v5068 = vpop.f32.mrf.mxu0
      %v5069 = vadd.f32 0.0, %v5068
      %5070 = vdwg.mxu0
      %v5072 = vsel %vm970, %v402, 0
      %v5075 = vsel %vm970, %v403, 0
      %v5078 = vsel %vm970, %v858, 0
      %v5081 = vsel %vm970, %v859, 0
      %v5084 = vsel %vm970, %v860, 0
      %v5087 = vsel %vm970, %v861, 0
      %5089 = vmatpush.xpose.msra.mxu0 0.0
      %5090 = vmatpush.xpose.msra.mxu0 0.0
      %5091 = vmatpush.xpose.msra.mxu0 0.0
      %5092 = vmatpush.xpose.msra.mxu0 0.0
      %5093 = vmatpush.xpose.msra.mxu0 0.0
      %5094 = vmatpush.xpose.msra.mxu0 0.0
      %5095 = vmatpush.xpose.msra.mxu0 0.0
      %5096 = vmatpush.xpose.msra.mxu0 0.0
      %5097 = vmatpush.xpose.msra.mxu0 0.0
      %5098 = vmatpush.xpose.msra.mxu0 0.0
      %5099 = vmatpush.xpose.msra.mxu0 0.0
      %5100 = vmatpush.xpose.msra.mxu0 0.0
      %5101 = vmatpush.xpose.msra.mxu0 %v5087
      %5102 = vmatpush.xpose.msra.mxu0 %v5084
      %5103 = vmatpush.xpose.msra.mxu0 %v5081
      %5104 = vmatpush.xpose.msra.mxu0 %v5078
      %5105 = vmatmul.f32.gmra.mxu0 %v5072
      %v5106 = vpop.f32.mrf.mxu0
      %v5107 = vadd.f32 0.0, %v5106
      %5108 = vmatmul.f32.gmra.mxu0 %v5075
      %v5109 = vpop.f32.mrf.mxu0
      %v5110 = vadd.f32 0.0, %v5109
      %5111 = vdwg.mxu0
      %v5113 = vsel %vm970, %v404, 0
      %v5116 = vsel %vm970, %v405, 0
      %v5119 = vsel %vm970, %v862, 0
      %v5122 = vsel %vm970, %v863, 0
      %v5125 = vsel %vm970, %v864, 0
      %v5128 = vsel %vm970, %v865, 0
      %5130 = vmatpush.xpose.msra.mxu0 0.0
      %5131 = vmatpush.xpose.msra.mxu0 0.0
      %5132 = vmatpush.xpose.msra.mxu0 0.0
      %5133 = vmatpush.xpose.msra.mxu0 0.0
      %5134 = vmatpush.xpose.msra.mxu0 0.0
      %5135 = vmatpush.xpose.msra.mxu0 0.0
      %5136 = vmatpush.xpose.msra.mxu0 0.0
      %5137 = vmatpush.xpose.msra.mxu0 0.0
      %5138 = vmatpush.xpose.msra.mxu0 0.0
      %5139 = vmatpush.xpose.msra.mxu0 0.0
      %5140 = vmatpush.xpose.msra.mxu0 0.0
      %5141 = vmatpush.xpose.msra.mxu0 0.0
      %5142 = vmatpush.xpose.msra.mxu0 %v5128
      %5143 = vmatpush.xpose.msra.mxu0 %v5125
      %5144 = vmatpush.xpose.msra.mxu0 %v5122
      %5145 = vmatpush.xpose.msra.mxu0 %v5119
      %5146 = vmatmul.f32.gmra.mxu0 %v5113
      %v5147 = vpop.f32.mrf.mxu0
      %v5148 = vadd.f32 0.0, %v5147
      %5149 = vmatmul.f32.gmra.mxu0 %v5116
      %v5150 = vpop.f32.mrf.mxu0
      %v5151 = vadd.f32 0.0, %v5150
      %5152 = vdwg.mxu0
      %v5154 = vsel %vm970, %v406, 0
      %v5157 = vsel %vm970, %v407, 0
      %v5160 = vsel %vm970, %v866, 0
      %v5163 = vsel %vm970, %v867, 0
      %v5166 = vsel %vm970, %v868, 0
      %v5169 = vsel %vm970, %v869, 0
      %5171 = vmatpush.xpose.msra.mxu0 0.0
      %5172 = vmatpush.xpose.msra.mxu0 0.0
      %5173 = vmatpush.xpose.msra.mxu0 0.0
      %5174 = vmatpush.xpose.msra.mxu0 0.0
      %5175 = vmatpush.xpose.msra.mxu0 0.0
      %5176 = vmatpush.xpose.msra.mxu0 0.0
      %5177 = vmatpush.xpose.msra.mxu0 0.0
      %5178 = vmatpush.xpose.msra.mxu0 0.0
      %5179 = vmatpush.xpose.msra.mxu0 0.0
      %5180 = vmatpush.xpose.msra.mxu0 0.0
      %5181 = vmatpush.xpose.msra.mxu0 0.0
      %5182 = vmatpush.xpose.msra.mxu0 0.0
      %5183 = vmatpush.xpose.msra.mxu0 %v5169
      %5184 = vmatpush.xpose.msra.mxu0 %v5166
      %5185 = vmatpush.xpose.msra.mxu0 %v5163
      %5186 = vmatpush.xpose.msra.mxu0 %v5160
      %5187 = vmatmul.f32.gmra.mxu0 %v5154
      %v5188 = vpop.f32.mrf.mxu0
      %v5189 = vadd.f32 0.0, %v5188
      %5190 = vmatmul.f32.gmra.mxu0 %v5157
      %v5191 = vpop.f32.mrf.mxu0
      %v5192 = vadd.f32 0.0, %v5191
      %5193 = vdwg.mxu0
      %v5195 = vsel %vm970, %v408, 0
      %v5198 = vsel %vm970, %v409, 0
      %v5201 = vsel %vm970, %v870, 0
      %v5204 = vsel %vm970, %v871, 0
      %v5207 = vsel %vm970, %v872, 0
      %v5210 = vsel %vm970, %v873, 0
      %5212 = vmatpush.xpose.msra.mxu0 0.0
      %5213 = vmatpush.xpose.msra.mxu0 0.0
      %5214 = vmatpush.xpose.msra.mxu0 0.0
      %5215 = vmatpush.xpose.msra.mxu0 0.0
      %5216 = vmatpush.xpose.msra.mxu0 0.0
      %5217 = vmatpush.xpose.msra.mxu0 0.0
      %5218 = vmatpush.xpose.msra.mxu0 0.0
      %5219 = vmatpush.xpose.msra.mxu0 0.0
      %5220 = vmatpush.xpose.msra.mxu0 0.0
      %5221 = vmatpush.xpose.msra.mxu0 0.0
      %5222 = vmatpush.xpose.msra.mxu0 0.0
      %5223 = vmatpush.xpose.msra.mxu0 0.0
      %5224 = vmatpush.xpose.msra.mxu0 %v5210
      %5225 = vmatpush.xpose.msra.mxu0 %v5207
      %5226 = vmatpush.xpose.msra.mxu0 %v5204
      %5227 = vmatpush.xpose.msra.mxu0 %v5201
      %5228 = vmatmul.f32.gmra.mxu0 %v5195
      %v5229 = vpop.f32.mrf.mxu0
      %v5230 = vadd.f32 0.0, %v5229
      %5231 = vmatmul.f32.gmra.mxu0 %v5198
      %v5232 = vpop.f32.mrf.mxu0
      %v5233 = vadd.f32 0.0, %v5232
      %5234 = vdwg.mxu0
      %v5236 = vsel %vm970, %v410, 0
      %v5239 = vsel %vm970, %v411, 0
      %v5242 = vsel %vm970, %v874, 0
      %v5245 = vsel %vm970, %v875, 0
      %v5248 = vsel %vm970, %v876, 0
      %v5251 = vsel %vm970, %v877, 0
      %5253 = vmatpush.xpose.msra.mxu0 0.0
      %5254 = vmatpush.xpose.msra.mxu0 0.0
      %5255 = vmatpush.xpose.msra.mxu0 0.0
      %5256 = vmatpush.xpose.msra.mxu0 0.0
      %5257 = vmatpush.xpose.msra.mxu0 0.0
      %5258 = vmatpush.xpose.msra.mxu0 0.0
      %5259 = vmatpush.xpose.msra.mxu0 0.0
      %5260 = vmatpush.xpose.msra.mxu0 0.0
      %5261 = vmatpush.xpose.msra.mxu0 0.0
      %5262 = vmatpush.xpose.msra.mxu0 0.0
      %5263 = vmatpush.xpose.msra.mxu0 0.0
      %5264 = vmatpush.xpose.msra.mxu0 0.0
      %5265 = vmatpush.xpose.msra.mxu0 %v5251
      %5266 = vmatpush.xpose.msra.mxu0 %v5248
      %5267 = vmatpush.xpose.msra.mxu0 %v5245
      %5268 = vmatpush.xpose.msra.mxu0 %v5242
      %5269 = vmatmul.f32.gmra.mxu0 %v5236
      %v5270 = vpop.f32.mrf.mxu0
      %v5271 = vadd.f32 0.0, %v5270
      %5272 = vmatmul.f32.gmra.mxu0 %v5239
      %v5273 = vpop.f32.mrf.mxu0
      %v5274 = vadd.f32 0.0, %v5273
      %5275 = vdwg.mxu0
      %v5277 = vsel %vm970, %v412, 0
      %v5280 = vsel %vm970, %v413, 0
      %v5283 = vsel %vm970, %v878, 0
      %v5286 = vsel %vm970, %v879, 0
      %v5289 = vsel %vm970, %v880, 0
      %v5292 = vsel %vm970, %v881, 0
      %5294 = vmatpush.xpose.msra.mxu0 0.0
      %5295 = vmatpush.xpose.msra.mxu0 0.0
      %5296 = vmatpush.xpose.msra.mxu0 0.0
      %5297 = vmatpush.xpose.msra.mxu0 0.0
      %5298 = vmatpush.xpose.msra.mxu0 0.0
      %5299 = vmatpush.xpose.msra.mxu0 0.0
      %5300 = vmatpush.xpose.msra.mxu0 0.0
      %5301 = vmatpush.xpose.msra.mxu0 0.0
      %5302 = vmatpush.xpose.msra.mxu0 0.0
      %5303 = vmatpush.xpose.msra.mxu0 0.0
      %5304 = vmatpush.xpose.msra.mxu0 0.0
      %5305 = vmatpush.xpose.msra.mxu0 0.0
      %5306 = vmatpush.xpose.msra.mxu0 %v5292
      %5307 = vmatpush.xpose.msra.mxu0 %v5289
      %5308 = vmatpush.xpose.msra.mxu0 %v5286
      %5309 = vmatpush.xpose.msra.mxu0 %v5283
      %5310 = vmatmul.f32.gmra.mxu0 %v5277
      %v5311 = vpop.f32.mrf.mxu0
      %v5312 = vadd.f32 0.0, %v5311
      %5313 = vmatmul.f32.gmra.mxu0 %v5280
      %v5314 = vpop.f32.mrf.mxu0
      %v5315 = vadd.f32 0.0, %v5314
      %5316 = vdwg.mxu0
      %v5318 = vsel %vm970, %v414, 0
      %v5321 = vsel %vm970, %v415, 0
      %v5324 = vsel %vm970, %v882, 0
      %v5327 = vsel %vm970, %v883, 0
      %v5330 = vsel %vm970, %v884, 0
      %v5333 = vsel %vm970, %v885, 0
      %5335 = vmatpush.xpose.msra.mxu0 0.0
      %5336 = vmatpush.xpose.msra.mxu0 0.0
      %5337 = vmatpush.xpose.msra.mxu0 0.0
      %5338 = vmatpush.xpose.msra.mxu0 0.0
      %5339 = vmatpush.xpose.msra.mxu0 0.0
      %5340 = vmatpush.xpose.msra.mxu0 0.0
      %5341 = vmatpush.xpose.msra.mxu0 0.0
      %5342 = vmatpush.xpose.msra.mxu0 0.0
      %5343 = vmatpush.xpose.msra.mxu0 0.0
      %5344 = vmatpush.xpose.msra.mxu0 0.0
      %5345 = vmatpush.xpose.msra.mxu0 0.0
      %5346 = vmatpush.xpose.msra.mxu0 0.0
      %5347 = vmatpush.xpose.msra.mxu0 %v5333
      %5348 = vmatpush.xpose.msra.mxu0 %v5330
      %5349 = vmatpush.xpose.msra.mxu0 %v5327
      %5350 = vmatpush.xpose.msra.mxu0 %v5324
      %5351 = vmatmul.f32.gmra.mxu0 %v5318
      %v5352 = vpop.f32.mrf.mxu0
      %v5353 = vadd.f32 0.0, %v5352
      %5354 = vmatmul.f32.gmra.mxu0 %v5321
      %v5355 = vpop.f32.mrf.mxu0
      %v5356 = vadd.f32 0.0, %v5355
      %5357 = vdwg.mxu0
      %v5359 = vsel %vm970, %v416, 0
      %v5362 = vsel %vm970, %v417, 0
      %v5365 = vsel %vm970, %v886, 0
      %v5368 = vsel %vm970, %v887, 0
      %v5371 = vsel %vm970, %v888, 0
      %v5374 = vsel %vm970, %v889, 0
      %5376 = vmatpush.xpose.msra.mxu0 0.0
      %5377 = vmatpush.xpose.msra.mxu0 0.0
      %5378 = vmatpush.xpose.msra.mxu0 0.0
      %5379 = vmatpush.xpose.msra.mxu0 0.0
      %5380 = vmatpush.xpose.msra.mxu0 0.0
      %5381 = vmatpush.xpose.msra.mxu0 0.0
      %5382 = vmatpush.xpose.msra.mxu0 0.0
      %5383 = vmatpush.xpose.msra.mxu0 0.0
      %5384 = vmatpush.xpose.msra.mxu0 0.0
      %5385 = vmatpush.xpose.msra.mxu0 0.0
      %5386 = vmatpush.xpose.msra.mxu0 0.0
      %5387 = vmatpush.xpose.msra.mxu0 0.0
      %5388 = vmatpush.xpose.msra.mxu0 %v5374
      %5389 = vmatpush.xpose.msra.mxu0 %v5371
      %5390 = vmatpush.xpose.msra.mxu0 %v5368
      %5391 = vmatpush.xpose.msra.mxu0 %v5365
      %5392 = vmatmul.f32.gmra.mxu0 %v5359
      %v5393 = vpop.f32.mrf.mxu0
      %v5394 = vadd.f32 0.0, %v5393
      %5395 = vmatmul.f32.gmra.mxu0 %v5362
      %v5396 = vpop.f32.mrf.mxu0
      %v5397 = vadd.f32 0.0, %v5396
      %5398 = vdwg.mxu0
      %v5400 = vsel %vm970, %v418, 0
      %v5403 = vsel %vm970, %v419, 0
      %v5406 = vsel %vm970, %v890, 0
      %v5409 = vsel %vm970, %v891, 0
      %v5412 = vsel %vm970, %v892, 0
      %v5415 = vsel %vm970, %v893, 0
      %5417 = vmatpush.xpose.msra.mxu0 0.0
      %5418 = vmatpush.xpose.msra.mxu0 0.0
      %5419 = vmatpush.xpose.msra.mxu0 0.0
      %5420 = vmatpush.xpose.msra.mxu0 0.0
      %5421 = vmatpush.xpose.msra.mxu0 0.0
      %5422 = vmatpush.xpose.msra.mxu0 0.0
      %5423 = vmatpush.xpose.msra.mxu0 0.0
      %5424 = vmatpush.xpose.msra.mxu0 0.0
      %5425 = vmatpush.xpose.msra.mxu0 0.0
      %5426 = vmatpush.xpose.msra.mxu0 0.0
      %5427 = vmatpush.xpose.msra.mxu0 0.0
      %5428 = vmatpush.xpose.msra.mxu0 0.0
      %5429 = vmatpush.xpose.msra.mxu0 %v5415
      %5430 = vmatpush.xpose.msra.mxu0 %v5412
      %5431 = vmatpush.xpose.msra.mxu0 %v5409
      %5432 = vmatpush.xpose.msra.mxu0 %v5406
      %5433 = vmatmul.f32.gmra.mxu0 %v5400
      %v5434 = vpop.f32.mrf.mxu0
      %v5435 = vadd.f32 0.0, %v5434
      %5436 = vmatmul.f32.gmra.mxu0 %v5403
      %v5437 = vpop.f32.mrf.mxu0
      %v5438 = vadd.f32 0.0, %v5437
      %5439 = vdwg.mxu0
      %v5441 = vsel %vm970, %v420, 0
      %v5444 = vsel %vm970, %v421, 0
      %v5447 = vsel %vm970, %v894, 0
      %v5450 = vsel %vm970, %v895, 0
      %v5453 = vsel %vm970, %v896, 0
      %v5456 = vsel %vm970, %v897, 0
      %5458 = vmatpush.xpose.msra.mxu0 0.0
      %5459 = vmatpush.xpose.msra.mxu0 0.0
      %5460 = vmatpush.xpose.msra.mxu0 0.0
      %5461 = vmatpush.xpose.msra.mxu0 0.0
      %5462 = vmatpush.xpose.msra.mxu0 0.0
      %5463 = vmatpush.xpose.msra.mxu0 0.0
      %5464 = vmatpush.xpose.msra.mxu0 0.0
      %5465 = vmatpush.xpose.msra.mxu0 0.0
      %5466 = vmatpush.xpose.msra.mxu0 0.0
      %5467 = vmatpush.xpose.msra.mxu0 0.0
      %5468 = vmatpush.xpose.msra.mxu0 0.0
      %5469 = vmatpush.xpose.msra.mxu0 0.0
      %5470 = vmatpush.xpose.msra.mxu0 %v5456
      %5471 = vmatpush.xpose.msra.mxu0 %v5453
      %5472 = vmatpush.xpose.msra.mxu0 %v5450
      %5473 = vmatpush.xpose.msra.mxu0 %v5447
      %5474 = vmatmul.f32.gmra.mxu0 %v5441
      %v5475 = vpop.f32.mrf.mxu0
      %v5476 = vadd.f32 0.0, %v5475
      %5477 = vmatmul.f32.gmra.mxu0 %v5444
      %v5478 = vpop.f32.mrf.mxu0
      %v5479 = vadd.f32 0.0, %v5478
      %5480 = vdwg.mxu0
      %v5482 = vsel %vm970, %v422, 0
      %v5485 = vsel %vm970, %v423, 0
      %v5488 = vsel %vm970, %v898, 0
      %v5491 = vsel %vm970, %v899, 0
      %v5494 = vsel %vm970, %v900, 0
      %v5497 = vsel %vm970, %v901, 0
      %5499 = vmatpush.xpose.msra.mxu0 0.0
      %5500 = vmatpush.xpose.msra.mxu0 0.0
      %5501 = vmatpush.xpose.msra.mxu0 0.0
      %5502 = vmatpush.xpose.msra.mxu0 0.0
      %5503 = vmatpush.xpose.msra.mxu0 0.0
      %5504 = vmatpush.xpose.msra.mxu0 0.0
      %5505 = vmatpush.xpose.msra.mxu0 0.0
      %5506 = vmatpush.xpose.msra.mxu0 0.0
      %5507 = vmatpush.xpose.msra.mxu0 0.0
      %5508 = vmatpush.xpose.msra.mxu0 0.0
      %5509 = vmatpush.xpose.msra.mxu0 0.0
      %5510 = vmatpush.xpose.msra.mxu0 0.0
      %5511 = vmatpush.xpose.msra.mxu0 %v5497
      %5512 = vmatpush.xpose.msra.mxu0 %v5494
      %5513 = vmatpush.xpose.msra.mxu0 %v5491
      %5514 = vmatpush.xpose.msra.mxu0 %v5488
      %5515 = vmatmul.f32.gmra.mxu0 %v5482
      %v5516 = vpop.f32.mrf.mxu0
      %v5517 = vadd.f32 0.0, %v5516
      %5518 = vmatmul.f32.gmra.mxu0 %v5485
      %v5519 = vpop.f32.mrf.mxu0
      %v5520 = vadd.f32 0.0, %v5519
      %5521 = vdwg.mxu0
      %v5523 = vsel %vm970, %v424, 0
      %v5526 = vsel %vm970, %v425, 0
      %v5529 = vsel %vm970, %v902, 0
      %v5532 = vsel %vm970, %v903, 0
      %v5535 = vsel %vm970, %v904, 0
      %v5538 = vsel %vm970, %v905, 0
      %5540 = vmatpush.xpose.msra.mxu0 0.0
      %5541 = vmatpush.xpose.msra.mxu0 0.0
      %5542 = vmatpush.xpose.msra.mxu0 0.0
      %5543 = vmatpush.xpose.msra.mxu0 0.0
      %5544 = vmatpush.xpose.msra.mxu0 0.0
      %5545 = vmatpush.xpose.msra.mxu0 0.0
      %5546 = vmatpush.xpose.msra.mxu0 0.0
      %5547 = vmatpush.xpose.msra.mxu0 0.0
      %5548 = vmatpush.xpose.msra.mxu0 0.0
      %5549 = vmatpush.xpose.msra.mxu0 0.0
      %5550 = vmatpush.xpose.msra.mxu0 0.0
      %5551 = vmatpush.xpose.msra.mxu0 0.0
      %5552 = vmatpush.xpose.msra.mxu0 %v5538
      %5553 = vmatpush.xpose.msra.mxu0 %v5535
      %5554 = vmatpush.xpose.msra.mxu0 %v5532
      %5555 = vmatpush.xpose.msra.mxu0 %v5529
      %5556 = vmatmul.f32.gmra.mxu0 %v5523
      %v5557 = vpop.f32.mrf.mxu0
      %v5558 = vadd.f32 0.0, %v5557
      %5559 = vmatmul.f32.gmra.mxu0 %v5526
      %v5560 = vpop.f32.mrf.mxu0
      %v5561 = vadd.f32 0.0, %v5560
      %5562 = vdwg.mxu0
      %v5564 = vsel %vm970, %v426, 0
      %v5567 = vsel %vm970, %v427, 0
      %v5570 = vsel %vm970, %v906, 0
      %v5573 = vsel %vm970, %v907, 0
      %v5576 = vsel %vm970, %v908, 0
      %v5579 = vsel %vm970, %v909, 0
      %5581 = vmatpush.xpose.msra.mxu0 0.0
      %5582 = vmatpush.xpose.msra.mxu0 0.0
      %5583 = vmatpush.xpose.msra.mxu0 0.0
      %5584 = vmatpush.xpose.msra.mxu0 0.0
      %5585 = vmatpush.xpose.msra.mxu0 0.0
      %5586 = vmatpush.xpose.msra.mxu0 0.0
      %5587 = vmatpush.xpose.msra.mxu0 0.0
      %5588 = vmatpush.xpose.msra.mxu0 0.0
      %5589 = vmatpush.xpose.msra.mxu0 0.0
      %5590 = vmatpush.xpose.msra.mxu0 0.0
      %5591 = vmatpush.xpose.msra.mxu0 0.0
      %5592 = vmatpush.xpose.msra.mxu0 0.0
      %5593 = vmatpush.xpose.msra.mxu0 %v5579
      %5594 = vmatpush.xpose.msra.mxu0 %v5576
      %5595 = vmatpush.xpose.msra.mxu0 %v5573
      %5596 = vmatpush.xpose.msra.mxu0 %v5570
      %5597 = vmatmul.f32.gmra.mxu0 %v5564
      %v5598 = vpop.f32.mrf.mxu0
      %v5599 = vadd.f32 0.0, %v5598
      %5600 = vmatmul.f32.gmra.mxu0 %v5567
      %v5601 = vpop.f32.mrf.mxu0
      %v5602 = vadd.f32 0.0, %v5601
      %5603 = vdwg.mxu0
      %v5605 = vsel %vm970, %v428, 0
      %v5608 = vsel %vm970, %v429, 0
      %v5611 = vsel %vm970, %v910, 0
      %v5614 = vsel %vm970, %v911, 0
      %v5617 = vsel %vm970, %v912, 0
      %v5620 = vsel %vm970, %v913, 0
      %5622 = vmatpush.xpose.msra.mxu0 0.0
      %5623 = vmatpush.xpose.msra.mxu0 0.0
      %5624 = vmatpush.xpose.msra.mxu0 0.0
      %5625 = vmatpush.xpose.msra.mxu0 0.0
      %5626 = vmatpush.xpose.msra.mxu0 0.0
      %5627 = vmatpush.xpose.msra.mxu0 0.0
      %5628 = vmatpush.xpose.msra.mxu0 0.0
      %5629 = vmatpush.xpose.msra.mxu0 0.0
      %5630 = vmatpush.xpose.msra.mxu0 0.0
      %5631 = vmatpush.xpose.msra.mxu0 0.0
      %5632 = vmatpush.xpose.msra.mxu0 0.0
      %5633 = vmatpush.xpose.msra.mxu0 0.0
      %5634 = vmatpush.xpose.msra.mxu0 %v5620
      %5635 = vmatpush.xpose.msra.mxu0 %v5617
      %5636 = vmatpush.xpose.msra.mxu0 %v5614
      %5637 = vmatpush.xpose.msra.mxu0 %v5611
      %5638 = vmatmul.f32.gmra.mxu0 %v5605
      %v5639 = vpop.f32.mrf.mxu0
      %v5640 = vadd.f32 0.0, %v5639
      %5641 = vmatmul.f32.gmra.mxu0 %v5608
      %v5642 = vpop.f32.mrf.mxu0
      %v5643 = vadd.f32 0.0, %v5642
      %5644 = vdwg.mxu0
      %v5646 = vsel %vm970, %v430, 0
      %v5649 = vsel %vm970, %v431, 0
      %v5652 = vsel %vm970, %v914, 0
      %v5655 = vsel %vm970, %v915, 0
      %v5658 = vsel %vm970, %v916, 0
      %v5661 = vsel %vm970, %v917, 0
      %5663 = vmatpush.xpose.msra.mxu0 0.0
      %5664 = vmatpush.xpose.msra.mxu0 0.0
      %5665 = vmatpush.xpose.msra.mxu0 0.0
      %5666 = vmatpush.xpose.msra.mxu0 0.0
      %5667 = vmatpush.xpose.msra.mxu0 0.0
      %5668 = vmatpush.xpose.msra.mxu0 0.0
      %5669 = vmatpush.xpose.msra.mxu0 0.0
      %5670 = vmatpush.xpose.msra.mxu0 0.0
      %5671 = vmatpush.xpose.msra.mxu0 0.0
      %5672 = vmatpush.xpose.msra.mxu0 0.0
      %5673 = vmatpush.xpose.msra.mxu0 0.0
      %5674 = vmatpush.xpose.msra.mxu0 0.0
      %5675 = vmatpush.xpose.msra.mxu0 %v5661
      %5676 = vmatpush.xpose.msra.mxu0 %v5658
      %5677 = vmatpush.xpose.msra.mxu0 %v5655
      %5678 = vmatpush.xpose.msra.mxu0 %v5652
      %5679 = vmatmul.f32.gmra.mxu0 %v5646
      %v5680 = vpop.f32.mrf.mxu0
      %v5681 = vadd.f32 0.0, %v5680
      %5682 = vmatmul.f32.gmra.mxu0 %v5649
      %v5683 = vpop.f32.mrf.mxu0
      %v5684 = vadd.f32 0.0, %v5683
      %5685 = vdwg.mxu0
      %v5687 = vsel %vm970, %v432, 0
      %v5690 = vsel %vm970, %v433, 0
      %v5693 = vsel %vm970, %v918, 0
      %v5696 = vsel %vm970, %v919, 0
      %v5699 = vsel %vm970, %v920, 0
      %v5702 = vsel %vm970, %v921, 0
      %5704 = vmatpush.xpose.msra.mxu0 0.0
      %5705 = vmatpush.xpose.msra.mxu0 0.0
      %5706 = vmatpush.xpose.msra.mxu0 0.0
      %5707 = vmatpush.xpose.msra.mxu0 0.0
      %5708 = vmatpush.xpose.msra.mxu0 0.0
      %5709 = vmatpush.xpose.msra.mxu0 0.0
      %5710 = vmatpush.xpose.msra.mxu0 0.0
      %5711 = vmatpush.xpose.msra.mxu0 0.0
      %5712 = vmatpush.xpose.msra.mxu0 0.0
      %5713 = vmatpush.xpose.msra.mxu0 0.0
      %5714 = vmatpush.xpose.msra.mxu0 0.0
      %5715 = vmatpush.xpose.msra.mxu0 0.0
      %5716 = vmatpush.xpose.msra.mxu0 %v5702
      %5717 = vmatpush.xpose.msra.mxu0 %v5699
      %5718 = vmatpush.xpose.msra.mxu0 %v5696
      %5719 = vmatpush.xpose.msra.mxu0 %v5693
      %5720 = vmatmul.f32.gmra.mxu0 %v5687
      %v5721 = vpop.f32.mrf.mxu0
      %v5722 = vadd.f32 0.0, %v5721
      %5723 = vmatmul.f32.gmra.mxu0 %v5690
      %v5724 = vpop.f32.mrf.mxu0
      %v5725 = vadd.f32 0.0, %v5724
      %5726 = vdwg.mxu0
      %v5728 = vsel %vm970, %v434, 0
      %v5731 = vsel %vm970, %v435, 0
      %v5734 = vsel %vm970, %v922, 0
      %v5737 = vsel %vm970, %v923, 0
      %v5740 = vsel %vm970, %v924, 0
      %v5743 = vsel %vm970, %v925, 0
      %5745 = vmatpush.xpose.msra.mxu0 0.0
      %5746 = vmatpush.xpose.msra.mxu0 0.0
      %5747 = vmatpush.xpose.msra.mxu0 0.0
      %5748 = vmatpush.xpose.msra.mxu0 0.0
      %5749 = vmatpush.xpose.msra.mxu0 0.0
      %5750 = vmatpush.xpose.msra.mxu0 0.0
      %5751 = vmatpush.xpose.msra.mxu0 0.0
      %5752 = vmatpush.xpose.msra.mxu0 0.0
      %5753 = vmatpush.xpose.msra.mxu0 0.0
      %5754 = vmatpush.xpose.msra.mxu0 0.0
      %5755 = vmatpush.xpose.msra.mxu0 0.0
      %5756 = vmatpush.xpose.msra.mxu0 0.0
      %5757 = vmatpush.xpose.msra.mxu0 %v5743
      %5758 = vmatpush.xpose.msra.mxu0 %v5740
      %5759 = vmatpush.xpose.msra.mxu0 %v5737
      %5760 = vmatpush.xpose.msra.mxu0 %v5734
      %5761 = vmatmul.f32.gmra.mxu0 %v5728
      %v5762 = vpop.f32.mrf.mxu0
      %v5763 = vadd.f32 0.0, %v5762
      %5764 = vmatmul.f32.gmra.mxu0 %v5731
      %v5765 = vpop.f32.mrf.mxu0
      %v5766 = vadd.f32 0.0, %v5765
      %5767 = vdwg.mxu0
      %v5769 = vsel %vm970, %v436, 0
      %v5772 = vsel %vm970, %v437, 0
      %v5775 = vsel %vm970, %v926, 0
      %v5778 = vsel %vm970, %v927, 0
      %v5781 = vsel %vm970, %v928, 0
      %v5784 = vsel %vm970, %v929, 0
      %5786 = vmatpush.xpose.msra.mxu0 0.0
      %5787 = vmatpush.xpose.msra.mxu0 0.0
      %5788 = vmatpush.xpose.msra.mxu0 0.0
      %5789 = vmatpush.xpose.msra.mxu0 0.0
      %5790 = vmatpush.xpose.msra.mxu0 0.0
      %5791 = vmatpush.xpose.msra.mxu0 0.0
      %5792 = vmatpush.xpose.msra.mxu0 0.0
      %5793 = vmatpush.xpose.msra.mxu0 0.0
      %5794 = vmatpush.xpose.msra.mxu0 0.0
      %5795 = vmatpush.xpose.msra.mxu0 0.0
      %5796 = vmatpush.xpose.msra.mxu0 0.0
      %5797 = vmatpush.xpose.msra.mxu0 0.0
      %5798 = vmatpush.xpose.msra.mxu0 %v5784
      %5799 = vmatpush.xpose.msra.mxu0 %v5781
      %5800 = vmatpush.xpose.msra.mxu0 %v5778
      %5801 = vmatpush.xpose.msra.mxu0 %v5775
      %5802 = vmatmul.f32.gmra.mxu0 %v5769
      %v5803 = vpop.f32.mrf.mxu0
      %v5804 = vadd.f32 0.0, %v5803
      %5805 = vmatmul.f32.gmra.mxu0 %v5772
      %v5806 = vpop.f32.mrf.mxu0
      %v5807 = vadd.f32 0.0, %v5806
      %5808 = vdwg.mxu0
      %v5810 = vsel %vm970, %v438, 0
      %v5813 = vsel %vm970, %v439, 0
      %v5816 = vsel %vm970, %v930, 0
      %v5819 = vsel %vm970, %v931, 0
      %v5822 = vsel %vm970, %v932, 0
      %v5825 = vsel %vm970, %v933, 0
      %5827 = vmatpush.xpose.msra.mxu0 0.0
      %5828 = vmatpush.xpose.msra.mxu0 0.0
      %5829 = vmatpush.xpose.msra.mxu0 0.0
      %5830 = vmatpush.xpose.msra.mxu0 0.0
      %5831 = vmatpush.xpose.msra.mxu0 0.0
      %5832 = vmatpush.xpose.msra.mxu0 0.0
      %5833 = vmatpush.xpose.msra.mxu0 0.0
      %5834 = vmatpush.xpose.msra.mxu0 0.0
      %5835 = vmatpush.xpose.msra.mxu0 0.0
      %5836 = vmatpush.xpose.msra.mxu0 0.0
      %5837 = vmatpush.xpose.msra.mxu0 0.0
      %5838 = vmatpush.xpose.msra.mxu0 0.0
      %5839 = vmatpush.xpose.msra.mxu0 %v5825
      %5840 = vmatpush.xpose.msra.mxu0 %v5822
      %5841 = vmatpush.xpose.msra.mxu0 %v5819
      %5842 = vmatpush.xpose.msra.mxu0 %v5816
      %5843 = vmatmul.f32.gmra.mxu0 %v5810
      %v5844 = vpop.f32.mrf.mxu0
      %v5845 = vadd.f32 0.0, %v5844
      %5846 = vmatmul.f32.gmra.mxu0 %v5813
      %v5847 = vpop.f32.mrf.mxu0
      %v5848 = vadd.f32 0.0, %v5847
      %5849 = vdwg.mxu0
      %v5851 = vsel %vm970, %v440, 0
      %v5854 = vsel %vm970, %v441, 0
      %v5857 = vsel %vm970, %v934, 0
      %v5860 = vsel %vm970, %v935, 0
      %v5863 = vsel %vm970, %v936, 0
      %v5866 = vsel %vm970, %v937, 0
      %5868 = vmatpush.xpose.msra.mxu0 0.0
      %5869 = vmatpush.xpose.msra.mxu0 0.0
      %5870 = vmatpush.xpose.msra.mxu0 0.0
      %5871 = vmatpush.xpose.msra.mxu0 0.0
      %5872 = vmatpush.xpose.msra.mxu0 0.0
      %5873 = vmatpush.xpose.msra.mxu0 0.0
      %5874 = vmatpush.xpose.msra.mxu0 0.0
      %5875 = vmatpush.xpose.msra.mxu0 0.0
      %5876 = vmatpush.xpose.msra.mxu0 0.0
      %5877 = vmatpush.xpose.msra.mxu0 0.0
      %5878 = vmatpush.xpose.msra.mxu0 0.0
      %5879 = vmatpush.xpose.msra.mxu0 0.0
      %5880 = vmatpush.xpose.msra.mxu0 %v5866
      %5881 = vmatpush.xpose.msra.mxu0 %v5863
      %5882 = vmatpush.xpose.msra.mxu0 %v5860
      %5883 = vmatpush.xpose.msra.mxu0 %v5857
      %5884 = vmatmul.f32.gmra.mxu0 %v5851
      %v5885 = vpop.f32.mrf.mxu0
      %v5886 = vadd.f32 0.0, %v5885
      %5887 = vmatmul.f32.gmra.mxu0 %v5854
      %v5888 = vpop.f32.mrf.mxu0
      %v5889 = vadd.f32 0.0, %v5888
      %5890 = vdwg.mxu0
      %v5892 = vsel %vm970, %v442, 0
      %v5895 = vsel %vm970, %v443, 0
      %v5898 = vsel %vm970, %v938, 0
      %v5901 = vsel %vm970, %v939, 0
      %v5904 = vsel %vm970, %v940, 0
      %v5907 = vsel %vm970, %v941, 0
      %5909 = vmatpush.xpose.msra.mxu0 0.0
      %5910 = vmatpush.xpose.msra.mxu0 0.0
      %5911 = vmatpush.xpose.msra.mxu0 0.0
      %5912 = vmatpush.xpose.msra.mxu0 0.0
      %5913 = vmatpush.xpose.msra.mxu0 0.0
      %5914 = vmatpush.xpose.msra.mxu0 0.0
      %5915 = vmatpush.xpose.msra.mxu0 0.0
      %5916 = vmatpush.xpose.msra.mxu0 0.0
      %5917 = vmatpush.xpose.msra.mxu0 0.0
      %5918 = vmatpush.xpose.msra.mxu0 0.0
      %5919 = vmatpush.xpose.msra.mxu0 0.0
      %5920 = vmatpush.xpose.msra.mxu0 0.0
      %5921 = vmatpush.xpose.msra.mxu0 %v5907
      %5922 = vmatpush.xpose.msra.mxu0 %v5904
      %5923 = vmatpush.xpose.msra.mxu0 %v5901
      %5924 = vmatpush.xpose.msra.mxu0 %v5898
      %5925 = vmatmul.f32.gmra.mxu0 %v5892
      %v5926 = vpop.f32.mrf.mxu0
      %v5927 = vadd.f32 0.0, %v5926
      %5928 = vmatmul.f32.gmra.mxu0 %v5895
      %v5929 = vpop.f32.mrf.mxu0
      %v5930 = vadd.f32 0.0, %v5929
      %5931 = vdwg.mxu0
      %v5933 = vsel %vm970, %v444, 0
      %v5936 = vsel %vm970, %v445, 0
      %v5939 = vsel %vm970, %v942, 0
      %v5942 = vsel %vm970, %v943, 0
      %v5945 = vsel %vm970, %v944, 0
      %v5948 = vsel %vm970, %v945, 0
      %5950 = vmatpush.xpose.msra.mxu0 0.0
      %5951 = vmatpush.xpose.msra.mxu0 0.0
      %5952 = vmatpush.xpose.msra.mxu0 0.0
      %5953 = vmatpush.xpose.msra.mxu0 0.0
      %5954 = vmatpush.xpose.msra.mxu0 0.0
      %5955 = vmatpush.xpose.msra.mxu0 0.0
      %5956 = vmatpush.xpose.msra.mxu0 0.0
      %5957 = vmatpush.xpose.msra.mxu0 0.0
      %5958 = vmatpush.xpose.msra.mxu0 0.0
      %5959 = vmatpush.xpose.msra.mxu0 0.0
      %5960 = vmatpush.xpose.msra.mxu0 0.0
      %5961 = vmatpush.xpose.msra.mxu0 0.0
      %5962 = vmatpush.xpose.msra.mxu0 %v5948
      %5963 = vmatpush.xpose.msra.mxu0 %v5945
      %5964 = vmatpush.xpose.msra.mxu0 %v5942
      %5965 = vmatpush.xpose.msra.mxu0 %v5939
      %5966 = vmatmul.f32.gmra.mxu0 %v5933
      %v5967 = vpop.f32.mrf.mxu0
      %v5968 = vadd.f32 0.0, %v5967
      %5969 = vmatmul.f32.gmra.mxu0 %v5936
      %v5970 = vpop.f32.mrf.mxu0
      %v5971 = vadd.f32 0.0, %v5970
      %5972 = vdwg.mxu0
      %v5974 = vsel %vm970, %v446, 0
      %v5977 = vsel %vm970, %v447, 0
      %v5980 = vsel %vm970, %v946, 0
      %v5983 = vsel %vm970, %v947, 0
      %v5986 = vsel %vm970, %v948, 0
      %v5989 = vsel %vm970, %v949, 0
      %5991 = vmatpush.xpose.msra.mxu0 0.0
      %5992 = vmatpush.xpose.msra.mxu0 0.0
      %5993 = vmatpush.xpose.msra.mxu0 0.0
      %5994 = vmatpush.xpose.msra.mxu0 0.0
      %5995 = vmatpush.xpose.msra.mxu0 0.0
      %5996 = vmatpush.xpose.msra.mxu0 0.0
      %5997 = vmatpush.xpose.msra.mxu0 0.0
      %5998 = vmatpush.xpose.msra.mxu0 0.0
      %5999 = vmatpush.xpose.msra.mxu0 0.0
      %6000 = vmatpush.xpose.msra.mxu0 0.0
      %6001 = vmatpush.xpose.msra.mxu0 0.0
      %6002 = vmatpush.xpose.msra.mxu0 0.0
      %6003 = vmatpush.xpose.msra.mxu0 %v5989
      %6004 = vmatpush.xpose.msra.mxu0 %v5986
      %6005 = vmatpush.xpose.msra.mxu0 %v5983
      %6006 = vmatpush.xpose.msra.mxu0 %v5980
      %6007 = vmatmul.f32.gmra.mxu0 %v5974
      %v6008 = vpop.f32.mrf.mxu0
      %v6009 = vadd.f32 0.0, %v6008
      %6010 = vmatmul.f32.gmra.mxu0 %v5977
      %v6011 = vpop.f32.mrf.mxu0
      %v6012 = vadd.f32 0.0, %v6011
      %6013 = vdwg.mxu0
      %v6015 = vsel %vm970, %v448, 0
      %v6018 = vsel %vm970, %v449, 0
      %v6021 = vsel %vm970, %v950, 0
      %v6024 = vsel %vm970, %v951, 0
      %v6027 = vsel %vm970, %v952, 0
      %v6030 = vsel %vm970, %v953, 0
      %6032 = vmatpush.xpose.msra.mxu0 0.0
      %6033 = vmatpush.xpose.msra.mxu0 0.0
      %6034 = vmatpush.xpose.msra.mxu0 0.0
      %6035 = vmatpush.xpose.msra.mxu0 0.0
      %6036 = vmatpush.xpose.msra.mxu0 0.0
      %6037 = vmatpush.xpose.msra.mxu0 0.0
      %6038 = vmatpush.xpose.msra.mxu0 0.0
      %6039 = vmatpush.xpose.msra.mxu0 0.0
      %6040 = vmatpush.xpose.msra.mxu0 0.0
      %6041 = vmatpush.xpose.msra.mxu0 0.0
      %6042 = vmatpush.xpose.msra.mxu0 0.0
      %6043 = vmatpush.xpose.msra.mxu0 0.0
      %6044 = vmatpush.xpose.msra.mxu0 %v6030
      %6045 = vmatpush.xpose.msra.mxu0 %v6027
      %6046 = vmatpush.xpose.msra.mxu0 %v6024
      %6047 = vmatpush.xpose.msra.mxu0 %v6021
      %6048 = vmatmul.f32.gmra.mxu0 %v6015
      %v6049 = vpop.f32.mrf.mxu0
      %v6050 = vadd.f32 0.0, %v6049
      %6051 = vmatmul.f32.gmra.mxu0 %v6018
      %v6052 = vpop.f32.mrf.mxu0
      %v6053 = vadd.f32 0.0, %v6052
      %6054 = vdwg.mxu0
      %v6056 = vsel %vm970, %v450, 0
      %v6059 = vsel %vm970, %v451, 0
      %v6062 = vsel %vm970, %v954, 0
      %v6065 = vsel %vm970, %v955, 0
      %v6068 = vsel %vm970, %v956, 0
      %v6071 = vsel %vm970, %v957, 0
      %6073 = vmatpush.xpose.msra.mxu0 0.0
      %6074 = vmatpush.xpose.msra.mxu0 0.0
      %6075 = vmatpush.xpose.msra.mxu0 0.0
      %6076 = vmatpush.xpose.msra.mxu0 0.0
      %6077 = vmatpush.xpose.msra.mxu0 0.0
      %6078 = vmatpush.xpose.msra.mxu0 0.0
      %6079 = vmatpush.xpose.msra.mxu0 0.0
      %6080 = vmatpush.xpose.msra.mxu0 0.0
      %6081 = vmatpush.xpose.msra.mxu0 0.0
      %6082 = vmatpush.xpose.msra.mxu0 0.0
      %6083 = vmatpush.xpose.msra.mxu0 0.0
      %6084 = vmatpush.xpose.msra.mxu0 0.0
      %6085 = vmatpush.xpose.msra.mxu0 %v6071
      %6086 = vmatpush.xpose.msra.mxu0 %v6068
      %6087 = vmatpush.xpose.msra.mxu0 %v6065
      %6088 = vmatpush.xpose.msra.mxu0 %v6062
      %6089 = vmatmul.f32.gmra.mxu0 %v6056
      %v6090 = vpop.f32.mrf.mxu0
      %v6091 = vadd.f32 0.0, %v6090
      %6092 = vmatmul.f32.gmra.mxu0 %v6059
      %v6093 = vpop.f32.mrf.mxu0
      %v6094 = vadd.f32 0.0, %v6093
      %6095 = vdwg.mxu0
      %v6097 = vsel %vm970, %v452, 0
      %v6100 = vsel %vm970, %v453, 0
      %v6103 = vsel %vm970, %v958, 0
      %v6106 = vsel %vm970, %v959, 0
      %v6109 = vsel %vm970, %v960, 0
      %v6112 = vsel %vm970, %v961, 0
      %6114 = vmatpush.xpose.msra.mxu0 0.0
      %6115 = vmatpush.xpose.msra.mxu0 0.0
      %6116 = vmatpush.xpose.msra.mxu0 0.0
      %6117 = vmatpush.xpose.msra.mxu0 0.0
      %6118 = vmatpush.xpose.msra.mxu0 0.0
      %6119 = vmatpush.xpose.msra.mxu0 0.0
      %6120 = vmatpush.xpose.msra.mxu0 0.0
      %6121 = vmatpush.xpose.msra.mxu0 0.0
      %6122 = vmatpush.xpose.msra.mxu0 0.0
      %6123 = vmatpush.xpose.msra.mxu0 0.0
      %6124 = vmatpush.xpose.msra.mxu0 0.0
      %6125 = vmatpush.xpose.msra.mxu0 0.0
      %6126 = vmatpush.xpose.msra.mxu0 %v6112
      %6127 = vmatpush.xpose.msra.mxu0 %v6109
      %6128 = vmatpush.xpose.msra.mxu0 %v6106
      %6129 = vmatpush.xpose.msra.mxu0 %v6103
      %6130 = vmatmul.f32.gmra.mxu0 %v6097
      %v6131 = vpop.f32.mrf.mxu0
      %v6132 = vadd.f32 0.0, %v6131
      %6133 = vmatmul.f32.gmra.mxu0 %v6100
      %v6134 = vpop.f32.mrf.mxu0
      %v6135 = vadd.f32 0.0, %v6134
      %6136 = vdwg.mxu0
      %v6138 = vsel %vm970, %v454, 0
      %v6141 = vsel %vm970, %v455, 0
      %v6144 = vsel %vm970, %v962, 0
      %v6147 = vsel %vm970, %v963, 0
      %v6150 = vsel %vm970, %v964, 0
      %v6153 = vsel %vm970, %v965, 0
      %6155 = vmatpush.xpose.msra.mxu0 0.0
      %6156 = vmatpush.xpose.msra.mxu0 0.0
      %6157 = vmatpush.xpose.msra.mxu0 0.0
      %6158 = vmatpush.xpose.msra.mxu0 0.0
      %6159 = vmatpush.xpose.msra.mxu0 0.0
      %6160 = vmatpush.xpose.msra.mxu0 0.0
      %6161 = vmatpush.xpose.msra.mxu0 0.0
      %6162 = vmatpush.xpose.msra.mxu0 0.0
      %6163 = vmatpush.xpose.msra.mxu0 0.0
      %6164 = vmatpush.xpose.msra.mxu0 0.0
      %6165 = vmatpush.xpose.msra.mxu0 0.0
      %6166 = vmatpush.xpose.msra.mxu0 0.0
      %6167 = vmatpush.xpose.msra.mxu0 %v6153
      %6168 = vmatpush.xpose.msra.mxu0 %v6150
      %6169 = vmatpush.xpose.msra.mxu0 %v6147
      %6170 = vmatpush.xpose.msra.mxu0 %v6144
      %6171 = vmatmul.f32.gmra.mxu0 %v6138
      %v6172 = vpop.f32.mrf.mxu0
      %v6173 = vadd.f32 0.0, %v6172
      %6174 = vmatmul.f32.gmra.mxu0 %v6141
      %v6175 = vpop.f32.mrf.mxu0
      %v6176 = vadd.f32 0.0, %v6175
      %6177 = vdwg.mxu0
      %v6179 = vsel %vm970, %v456, 0
      %v6182 = vsel %vm970, %v457, 0
      %v6185 = vsel %vm970, %v966, 0
      %v6188 = vsel %vm970, %v967, 0
      %v6191 = vsel %vm970, %v968, 0
      %v6194 = vsel %vm970, %v969, 0
      %6196 = vmatpush.xpose.msra.mxu0 0.0
      %6197 = vmatpush.xpose.msra.mxu0 0.0
      %6198 = vmatpush.xpose.msra.mxu0 0.0
      %6199 = vmatpush.xpose.msra.mxu0 0.0
      %6200 = vmatpush.xpose.msra.mxu0 0.0
      %6201 = vmatpush.xpose.msra.mxu0 0.0
      %6202 = vmatpush.xpose.msra.mxu0 0.0
      %6203 = vmatpush.xpose.msra.mxu0 0.0
      %6204 = vmatpush.xpose.msra.mxu0 0.0
      %6205 = vmatpush.xpose.msra.mxu0 0.0
      %6206 = vmatpush.xpose.msra.mxu0 0.0
      %6207 = vmatpush.xpose.msra.mxu0 0.0
      %6208 = vmatpush.xpose.msra.mxu0 %v6194
      %6209 = vmatpush.xpose.msra.mxu0 %v6191
      %6210 = vmatpush.xpose.msra.mxu0 %v6188
      %6211 = vmatpush.xpose.msra.mxu0 %v6185
      %6212 = vmatmul.f32.gmra.mxu0 %v6179
      %v6213 = vpop.f32.mrf.mxu0
      %v6214 = vadd.f32 0.0, %v6213
      %6215 = vmatmul.f32.gmra.mxu0 %v6182
      %v6216 = vpop.f32.mrf.mxu0
      %v6217 = vadd.f32 0.0, %v6216
      %6218 = vdwg.mxu0
      %v6219 = vld [vmem:[%s0] sm:$0xff]
      %v6220 = vld [vmem:[%s0 + $0x8] sm:$0xff]
      %v6221 = vmul.f32 %v1007, %v6219
      %v6222 = vmul.f32 %v1010, %v6220
      %v6223 = vmul.f32 %v1048, %v6219
      %v6224 = vmul.f32 %v1051, %v6220
      %v6225 = vmul.f32 %v1089, %v6219
      %v6226 = vmul.f32 %v1092, %v6220
      %v6227 = vmul.f32 %v1130, %v6219
      %v6228 = vmul.f32 %v1133, %v6220
      %v6229 = vmul.f32 %v1171, %v6219
      %v6230 = vmul.f32 %v1174, %v6220
      %v6231 = vmul.f32 %v1212, %v6219
      %v6232 = vmul.f32 %v1215, %v6220
      %v6233 = vmul.f32 %v1253, %v6219
      %v6234 = vmul.f32 %v1256, %v6220
      %v6235 = vmul.f32 %v1294, %v6219
      %v6236 = vmul.f32 %v1297, %v6220
      %v6237 = vmul.f32 %v1335, %v6219
      %v6238 = vmul.f32 %v1338, %v6220
      %v6239 = vmul.f32 %v1376, %v6219
      %v6240 = vmul.f32 %v1379, %v6220
      %v6241 = vmul.f32 %v1417, %v6219
      %v6242 = vmul.f32 %v1420, %v6220
      %v6243 = vmul.f32 %v1458, %v6219
      %v6244 = vmul.f32 %v1461, %v6220
      %v6245 = vmul.f32 %v1499, %v6219
      %v6246 = vmul.f32 %v1502, %v6220
      %v6247 = vmul.f32 %v1540, %v6219
      %v6248 = vmul.f32 %v1543, %v6220
      %v6249 = vmul.f32 %v1581, %v6219
      %v6250 = vmul.f32 %v1584, %v6220
      %v6251 = vmul.f32 %v1622, %v6219
      %v6252 = vmul.f32 %v1625, %v6220
      %v6253 = vmul.f32 %v1663, %v6219
      %v6254 = vmul.f32 %v1666, %v6220
      %v6255 = vmul.f32 %v1704, %v6219
      %v6256 = vmul.f32 %v1707, %v6220
      %v6257 = vmul.f32 %v1745, %v6219
      %v6258 = vmul.f32 %v1748, %v6220
      %v6259 = vmul.f32 %v1786, %v6219
      %v6260 = vmul.f32 %v1789, %v6220
      %v6261 = vmul.f32 %v1827, %v6219
      %v6262 = vmul.f32 %v1830, %v6220
      %v6263 = vmul.f32 %v1868, %v6219
      %v6264 = vmul.f32 %v1871, %v6220
      %v6265 = vmul.f32 %v1909, %v6219
      %v6266 = vmul.f32 %v1912, %v6220
      %v6267 = vmul.f32 %v1950, %v6219
      %v6268 = vmul.f32 %v1953, %v6220
      %v6269 = vmul.f32 %v1991, %v6219
      %v6270 = vmul.f32 %v1994, %v6220
      %v6271 = vmul.f32 %v2032, %v6219
      %v6272 = vmul.f32 %v2035, %v6220
      %v6273 = vmul.f32 %v2073, %v6219
      %v6274 = vmul.f32 %v2076, %v6220
      %v6275 = vmul.f32 %v2114, %v6219
      %v6276 = vmul.f32 %v2117, %v6220
      %v6277 = vmul.f32 %v2155, %v6219
      %v6278 = vmul.f32 %v2158, %v6220
      %v6279 = vmul.f32 %v2196, %v6219
      %v6280 = vmul.f32 %v2199, %v6220
      %v6281 = vmul.f32 %v2237, %v6219
      %v6282 = vmul.f32 %v2240, %v6220
      %v6283 = vmul.f32 %v2278, %v6219
      %v6284 = vmul.f32 %v2281, %v6220
      %v6285 = vmul.f32 %v2319, %v6219
      %v6286 = vmul.f32 %v2322, %v6220
      %v6287 = vmul.f32 %v2360, %v6219
      %v6288 = vmul.f32 %v2363, %v6220
      %v6289 = vmul.f32 %v2401, %v6219
      %v6290 = vmul.f32 %v2404, %v6220
      %v6291 = vmul.f32 %v2442, %v6219
      %v6292 = vmul.f32 %v2445, %v6220
      %v6293 = vmul.f32 %v2483, %v6219
      %v6294 = vmul.f32 %v2486, %v6220
      %v6295 = vmul.f32 %v2524, %v6219
      %v6296 = vmul.f32 %v2527, %v6220
      %v6297 = vmul.f32 %v2565, %v6219
      %v6298 = vmul.f32 %v2568, %v6220
      %v6299 = vmul.f32 %v2606, %v6219
      %v6300 = vmul.f32 %v2609, %v6220
      %v6301 = vmul.f32 %v2647, %v6219
      %v6302 = vmul.f32 %v2650, %v6220
      %v6303 = vmul.f32 %v2688, %v6219
      %v6304 = vmul.f32 %v2691, %v6220
      %v6305 = vmul.f32 %v2729, %v6219
      %v6306 = vmul.f32 %v2732, %v6220
      %v6307 = vmul.f32 %v2770, %v6219
      %v6308 = vmul.f32 %v2773, %v6220
      %v6309 = vmul.f32 %v2811, %v6219
      %v6310 = vmul.f32 %v2814, %v6220
      %v6311 = vmul.f32 %v2852, %v6219
      %v6312 = vmul.f32 %v2855, %v6220
      %v6313 = vmul.f32 %v2893, %v6219
      %v6314 = vmul.f32 %v2896, %v6220
      %v6315 = vmul.f32 %v2934, %v6219
      %v6316 = vmul.f32 %v2937, %v6220
      %v6317 = vmul.f32 %v2975, %v6219
      %v6318 = vmul.f32 %v2978, %v6220
      %v6319 = vmul.f32 %v3016, %v6219
      %v6320 = vmul.f32 %v3019, %v6220
      %v6321 = vmul.f32 %v3057, %v6219
      %v6322 = vmul.f32 %v3060, %v6220
      %v6323 = vmul.f32 %v3098, %v6219
      %v6324 = vmul.f32 %v3101, %v6220
      %v6325 = vmul.f32 %v3139, %v6219
      %v6326 = vmul.f32 %v3142, %v6220
      %v6327 = vmul.f32 %v3180, %v6219
      %v6328 = vmul.f32 %v3183, %v6220
      %v6329 = vmul.f32 %v3221, %v6219
      %v6330 = vmul.f32 %v3224, %v6220
      %v6331 = vmul.f32 %v3262, %v6219
      %v6332 = vmul.f32 %v3265, %v6220
      %v6333 = vmul.f32 %v3303, %v6219
      %v6334 = vmul.f32 %v3306, %v6220
      %v6335 = vmul.f32 %v3344, %v6219
      %v6336 = vmul.f32 %v3347, %v6220
      %v6337 = vmul.f32 %v3385, %v6219
      %v6338 = vmul.f32 %v3388, %v6220
      %v6339 = vmul.f32 %v3426, %v6219
      %v6340 = vmul.f32 %v3429, %v6220
      %v6341 = vmul.f32 %v3467, %v6219
      %v6342 = vmul.f32 %v3470, %v6220
      %v6343 = vmul.f32 %v3508, %v6219
      %v6344 = vmul.f32 %v3511, %v6220
      %v6345 = vmul.f32 %v3549, %v6219
      %v6346 = vmul.f32 %v3552, %v6220
      %v6347 = vmul.f32 %v3590, %v6219
      %v6348 = vmul.f32 %v3593, %v6220
      %v6349 = vmul.f32 %v3631, %v6219
      %v6350 = vmul.f32 %v3634, %v6220
      %v6351 = vmul.f32 %v3672, %v6219
      %v6352 = vmul.f32 %v3675, %v6220
      %v6353 = vmul.f32 %v3713, %v6219
      %v6354 = vmul.f32 %v3716, %v6220
      %v6355 = vmul.f32 %v3754, %v6219
      %v6356 = vmul.f32 %v3757, %v6220
      %v6357 = vmul.f32 %v3795, %v6219
      %v6358 = vmul.f32 %v3798, %v6220
      %v6359 = vmul.f32 %v3836, %v6219
      %v6360 = vmul.f32 %v3839, %v6220
      %v6361 = vmul.f32 %v3877, %v6219
      %v6362 = vmul.f32 %v3880, %v6220
      %v6363 = vmul.f32 %v3918, %v6219
      %v6364 = vmul.f32 %v3921, %v6220
      %v6365 = vmul.f32 %v3959, %v6219
      %v6366 = vmul.f32 %v3962, %v6220
      %v6367 = vmul.f32 %v4000, %v6219
      %v6368 = vmul.f32 %v4003, %v6220
      %v6369 = vmul.f32 %v4041, %v6219
      %v6370 = vmul.f32 %v4044, %v6220
      %v6371 = vmul.f32 %v4082, %v6219
      %v6372 = vmul.f32 %v4085, %v6220
      %v6373 = vmul.f32 %v4123, %v6219
      %v6374 = vmul.f32 %v4126, %v6220
      %v6375 = vmul.f32 %v4164, %v6219
      %v6376 = vmul.f32 %v4167, %v6220
      %v6377 = vmul.f32 %v4205, %v6219
      %v6378 = vmul.f32 %v4208, %v6220
      %v6379 = vmul.f32 %v4246, %v6219
      %v6380 = vmul.f32 %v4249, %v6220
      %v6381 = vmul.f32 %v4287, %v6219
      %v6382 = vmul.f32 %v4290, %v6220
      %v6383 = vmul.f32 %v4328, %v6219
      %v6384 = vmul.f32 %v4331, %v6220
      %v6385 = vmul.f32 %v4369, %v6219
      %v6386 = vmul.f32 %v4372, %v6220
      %v6387 = vmul.f32 %v4410, %v6219
      %v6388 = vmul.f32 %v4413, %v6220
      %v6389 = vmul.f32 %v4451, %v6219
      %v6390 = vmul.f32 %v4454, %v6220
      %v6391 = vmul.f32 %v4492, %v6219
      %v6392 = vmul.f32 %v4495, %v6220
      %v6393 = vmul.f32 %v4533, %v6219
      %v6394 = vmul.f32 %v4536, %v6220
      %v6395 = vmul.f32 %v4574, %v6219
      %v6396 = vmul.f32 %v4577, %v6220
      %v6397 = vmul.f32 %v4615, %v6219
      %v6398 = vmul.f32 %v4618, %v6220
      %v6399 = vmul.f32 %v4656, %v6219
      %v6400 = vmul.f32 %v4659, %v6220
      %v6401 = vmul.f32 %v4697, %v6219
      %v6402 = vmul.f32 %v4700, %v6220
      %v6403 = vmul.f32 %v4738, %v6219
      %v6404 = vmul.f32 %v4741, %v6220
      %v6405 = vmul.f32 %v4779, %v6219
      %v6406 = vmul.f32 %v4782, %v6220
      %v6407 = vmul.f32 %v4820, %v6219
      %v6408 = vmul.f32 %v4823, %v6220
      %v6409 = vmul.f32 %v4861, %v6219
      %v6410 = vmul.f32 %v4864, %v6220
      %v6411 = vmul.f32 %v4902, %v6219
      %v6412 = vmul.f32 %v4905, %v6220
      %v6413 = vmul.f32 %v4943, %v6219
      %v6414 = vmul.f32 %v4946, %v6220
      %v6415 = vmul.f32 %v4984, %v6219
      %v6416 = vmul.f32 %v4987, %v6220
      %v6417 = vmul.f32 %v5025, %v6219
      %v6418 = vmul.f32 %v5028, %v6220
      %v6419 = vmul.f32 %v5066, %v6219
      %v6420 = vmul.f32 %v5069, %v6220
      %v6421 = vmul.f32 %v5107, %v6219
      %v6422 = vmul.f32 %v5110, %v6220
      %v6423 = vmul.f32 %v5148, %v6219
      %v6424 = vmul.f32 %v5151, %v6220
      %v6425 = vmul.f32 %v5189, %v6219
      %v6426 = vmul.f32 %v5192, %v6220
      %v6427 = vmul.f32 %v5230, %v6219
      %v6428 = vmul.f32 %v5233, %v6220
      %v6429 = vmul.f32 %v5271, %v6219
      %v6430 = vmul.f32 %v5274, %v6220
      %v6431 = vmul.f32 %v5312, %v6219
      %v6432 = vmul.f32 %v5315, %v6220
      %v6433 = vmul.f32 %v5353, %v6219
      %v6434 = vmul.f32 %v5356, %v6220
      %v6435 = vmul.f32 %v5394, %v6219
      %v6436 = vmul.f32 %v5397, %v6220
      %v6437 = vmul.f32 %v5435, %v6219
      %v6438 = vmul.f32 %v5438, %v6220
      %v6439 = vmul.f32 %v5476, %v6219
      %v6440 = vmul.f32 %v5479, %v6220
      %v6441 = vmul.f32 %v5517, %v6219
      %v6442 = vmul.f32 %v5520, %v6220
      %v6443 = vmul.f32 %v5558, %v6219
      %v6444 = vmul.f32 %v5561, %v6220
      %v6445 = vmul.f32 %v5599, %v6219
      %v6446 = vmul.f32 %v5602, %v6220
      %v6447 = vmul.f32 %v5640, %v6219
      %v6448 = vmul.f32 %v5643, %v6220
      %v6449 = vmul.f32 %v5681, %v6219
      %v6450 = vmul.f32 %v5684, %v6220
      %v6451 = vmul.f32 %v5722, %v6219
      %v6452 = vmul.f32 %v5725, %v6220
      %v6453 = vmul.f32 %v5763, %v6219
      %v6454 = vmul.f32 %v5766, %v6220
      %v6455 = vmul.f32 %v5804, %v6219
      %v6456 = vmul.f32 %v5807, %v6220
      %v6457 = vmul.f32 %v5845, %v6219
      %v6458 = vmul.f32 %v5848, %v6220
      %v6459 = vmul.f32 %v5886, %v6219
      %v6460 = vmul.f32 %v5889, %v6220
      %v6461 = vmul.f32 %v5927, %v6219
      %v6462 = vmul.f32 %v5930, %v6220
      %v6463 = vmul.f32 %v5968, %v6219
      %v6464 = vmul.f32 %v5971, %v6220
      %v6465 = vmul.f32 %v6009, %v6219
      %v6466 = vmul.f32 %v6012, %v6220
      %v6467 = vmul.f32 %v6050, %v6219
      %v6468 = vmul.f32 %v6053, %v6220
      %v6469 = vmul.f32 %v6091, %v6219
      %v6470 = vmul.f32 %v6094, %v6220
      %v6471 = vmul.f32 %v6132, %v6219
      %v6472 = vmul.f32 %v6135, %v6220
      %v6473 = vmul.f32 %v6173, %v6219
      %v6474 = vmul.f32 %v6176, %v6220
      %v6475 = vmul.f32 %v6214, %v6219
      %v6476 = vmul.f32 %v6217, %v6220
      %vm6477 = vcmask 261120
      %v6478 = vsel %vm6477, %v6221, 0.0
      %6479 = vadd.xlane.f32.xlu0 %v6478
      %v6480 = vpop.xlane.xlu0 %6479
      %v6481 = vsel %vm6477, %v6222, 0.0
      %6482 = vadd.xlane.f32.xlu0 %v6481
      %v6483 = vpop.xlane.xlu0 %6482
      %v6484 = vsel %vm6477, %v6223, 0.0
      %6485 = vadd.xlane.f32.xlu0 %v6484
      %v6486 = vpop.xlane.xlu0 %6485
      %v6487 = vsel %vm6477, %v6224, 0.0
      %6488 = vadd.xlane.f32.xlu0 %v6487
      %v6489 = vpop.xlane.xlu0 %6488
      %v6490 = vsel %vm6477, %v6225, 0.0
      %6491 = vadd.xlane.f32.xlu0 %v6490
      %v6492 = vpop.xlane.xlu0 %6491
      %v6493 = vsel %vm6477, %v6226, 0.0
      %6494 = vadd.xlane.f32.xlu0 %v6493
      %v6495 = vpop.xlane.xlu0 %6494
      %v6496 = vsel %vm6477, %v6227, 0.0
      %6497 = vadd.xlane.f32.xlu0 %v6496
      %v6498 = vpop.xlane.xlu0 %6497
      %v6499 = vsel %vm6477, %v6228, 0.0
      %6500 = vadd.xlane.f32.xlu0 %v6499
      %v6501 = vpop.xlane.xlu0 %6500
      %v6502 = vsel %vm6477, %v6229, 0.0
      %6503 = vadd.xlane.f32.xlu0 %v6502
      %v6504 = vpop.xlane.xlu0 %6503
      %v6505 = vsel %vm6477, %v6230, 0.0
      %6506 = vadd.xlane.f32.xlu0 %v6505
      %v6507 = vpop.xlane.xlu0 %6506
      %v6508 = vsel %vm6477, %v6231, 0.0
      %6509 = vadd.xlane.f32.xlu0 %v6508
      %v6510 = vpop.xlane.xlu0 %6509
      %v6511 = vsel %vm6477, %v6232, 0.0
      %6512 = vadd.xlane.f32.xlu0 %v6511
      %v6513 = vpop.xlane.xlu0 %6512
      %v6514 = vsel %vm6477, %v6233, 0.0
      %6515 = vadd.xlane.f32.xlu0 %v6514
      %v6516 = vpop.xlane.xlu0 %6515
      %v6517 = vsel %vm6477, %v6234, 0.0
      %6518 = vadd.xlane.f32.xlu0 %v6517
      %v6519 = vpop.xlane.xlu0 %6518
      %v6520 = vsel %vm6477, %v6235, 0.0
      %6521 = vadd.xlane.f32.xlu0 %v6520
      %v6522 = vpop.xlane.xlu0 %6521
      %v6523 = vsel %vm6477, %v6236, 0.0
      %6524 = vadd.xlane.f32.xlu0 %v6523
      %v6525 = vpop.xlane.xlu0 %6524
      %v6526 = vsel %vm6477, %v6237, 0.0
      %6527 = vadd.xlane.f32.xlu0 %v6526
      %v6528 = vpop.xlane.xlu0 %6527
      %v6529 = vsel %vm6477, %v6238, 0.0
      %6530 = vadd.xlane.f32.xlu0 %v6529
      %v6531 = vpop.xlane.xlu0 %6530
      %v6532 = vsel %vm6477, %v6239, 0.0
      %6533 = vadd.xlane.f32.xlu0 %v6532
      %v6534 = vpop.xlane.xlu0 %6533
      %v6535 = vsel %vm6477, %v6240, 0.0
      %6536 = vadd.xlane.f32.xlu0 %v6535
      %v6537 = vpop.xlane.xlu0 %6536
      %v6538 = vsel %vm6477, %v6241, 0.0
      %6539 = vadd.xlane.f32.xlu0 %v6538
      %v6540 = vpop.xlane.xlu0 %6539
      %v6541 = vsel %vm6477, %v6242, 0.0
      %6542 = vadd.xlane.f32.xlu0 %v6541
      %v6543 = vpop.xlane.xlu0 %6542
      %v6544 = vsel %vm6477, %v6243, 0.0
      %6545 = vadd.xlane.f32.xlu0 %v6544
      %v6546 = vpop.xlane.xlu0 %6545
      %v6547 = vsel %vm6477, %v6244, 0.0
      %6548 = vadd.xlane.f32.xlu0 %v6547
      %v6549 = vpop.xlane.xlu0 %6548
      %v6550 = vsel %vm6477, %v6245, 0.0
      %6551 = vadd.xlane.f32.xlu0 %v6550
      %v6552 = vpop.xlane.xlu0 %6551
      %v6553 = vsel %vm6477, %v6246, 0.0
      %6554 = vadd.xlane.f32.xlu0 %v6553
      %v6555 = vpop.xlane.xlu0 %6554
      %v6556 = vsel %vm6477, %v6247, 0.0
      %6557 = vadd.xlane.f32.xlu0 %v6556
      %v6558 = vpop.xlane.xlu0 %6557
      %v6559 = vsel %vm6477, %v6248, 0.0
      %6560 = vadd.xlane.f32.xlu0 %v6559
      %v6561 = vpop.xlane.xlu0 %6560
      %v6562 = vsel %vm6477, %v6249, 0.0
      %6563 = vadd.xlane.f32.xlu0 %v6562
      %v6564 = vpop.xlane.xlu0 %6563
      %v6565 = vsel %vm6477, %v6250, 0.0
      %6566 = vadd.xlane.f32.xlu0 %v6565
      %v6567 = vpop.xlane.xlu0 %6566
      %v6568 = vsel %vm6477, %v6251, 0.0
      %6569 = vadd.xlane.f32.xlu0 %v6568
      %v6570 = vpop.xlane.xlu0 %6569
      %v6571 = vsel %vm6477, %v6252, 0.0
      %6572 = vadd.xlane.f32.xlu0 %v6571
      %v6573 = vpop.xlane.xlu0 %6572
      %v6574 = vsel %vm6477, %v6253, 0.0
      %6575 = vadd.xlane.f32.xlu0 %v6574
      %v6576 = vpop.xlane.xlu0 %6575
      %v6577 = vsel %vm6477, %v6254, 0.0
      %6578 = vadd.xlane.f32.xlu0 %v6577
      %v6579 = vpop.xlane.xlu0 %6578
      %v6580 = vsel %vm6477, %v6255, 0.0
      %6581 = vadd.xlane.f32.xlu0 %v6580
      %v6582 = vpop.xlane.xlu0 %6581
      %v6583 = vsel %vm6477, %v6256, 0.0
      %6584 = vadd.xlane.f32.xlu0 %v6583
      %v6585 = vpop.xlane.xlu0 %6584
      %v6586 = vsel %vm6477, %v6257, 0.0
      %6587 = vadd.xlane.f32.xlu0 %v6586
      %v6588 = vpop.xlane.xlu0 %6587
      %v6589 = vsel %vm6477, %v6258, 0.0
      %6590 = vadd.xlane.f32.xlu0 %v6589
      %v6591 = vpop.xlane.xlu0 %6590
      %v6592 = vsel %vm6477, %v6259, 0.0
      %6593 = vadd.xlane.f32.xlu0 %v6592
      %v6594 = vpop.xlane.xlu0 %6593
      %v6595 = vsel %vm6477, %v6260, 0.0
      %6596 = vadd.xlane.f32.xlu0 %v6595
      %v6597 = vpop.xlane.xlu0 %6596
      %v6598 = vsel %vm6477, %v6261, 0.0
      %6599 = vadd.xlane.f32.xlu0 %v6598
      %v6600 = vpop.xlane.xlu0 %6599
      %v6601 = vsel %vm6477, %v6262, 0.0
      %6602 = vadd.xlane.f32.xlu0 %v6601
      %v6603 = vpop.xlane.xlu0 %6602
      %v6604 = vsel %vm6477, %v6263, 0.0
      %6605 = vadd.xlane.f32.xlu0 %v6604
      %v6606 = vpop.xlane.xlu0 %6605
      %v6607 = vsel %vm6477, %v6264, 0.0
      %6608 = vadd.xlane.f32.xlu0 %v6607
      %v6609 = vpop.xlane.xlu0 %6608
      %v6610 = vsel %vm6477, %v6265, 0.0
      %6611 = vadd.xlane.f32.xlu0 %v6610
      %v6612 = vpop.xlane.xlu0 %6611
      %v6613 = vsel %vm6477, %v6266, 0.0
      %6614 = vadd.xlane.f32.xlu0 %v6613
      %v6615 = vpop.xlane.xlu0 %6614
      %v6616 = vsel %vm6477, %v6267, 0.0
      %6617 = vadd.xlane.f32.xlu0 %v6616
      %v6618 = vpop.xlane.xlu0 %6617
      %v6619 = vsel %vm6477, %v6268, 0.0
      %6620 = vadd.xlane.f32.xlu0 %v6619
      %v6621 = vpop.xlane.xlu0 %6620
      %v6622 = vsel %vm6477, %v6269, 0.0
      %6623 = vadd.xlane.f32.xlu0 %v6622
      %v6624 = vpop.xlane.xlu0 %6623
      %v6625 = vsel %vm6477, %v6270, 0.0
      %6626 = vadd.xlane.f32.xlu0 %v6625
      %v6627 = vpop.xlane.xlu0 %6626
      %v6628 = vsel %vm6477, %v6271, 0.0
      %6629 = vadd.xlane.f32.xlu0 %v6628
      %v6630 = vpop.xlane.xlu0 %6629
      %v6631 = vsel %vm6477, %v6272, 0.0
      %6632 = vadd.xlane.f32.xlu0 %v6631
      %v6633 = vpop.xlane.xlu0 %6632
      %v6634 = vsel %vm6477, %v6273, 0.0
      %6635 = vadd.xlane.f32.xlu0 %v6634
      %v6636 = vpop.xlane.xlu0 %6635
      %v6637 = vsel %vm6477, %v6274, 0.0
      %6638 = vadd.xlane.f32.xlu0 %v6637
      %v6639 = vpop.xlane.xlu0 %6638
      %v6640 = vsel %vm6477, %v6275, 0.0
      %6641 = vadd.xlane.f32.xlu0 %v6640
      %v6642 = vpop.xlane.xlu0 %6641
      %v6643 = vsel %vm6477, %v6276, 0.0
      %6644 = vadd.xlane.f32.xlu0 %v6643
      %v6645 = vpop.xlane.xlu0 %6644
      %v6646 = vsel %vm6477, %v6277, 0.0
      %6647 = vadd.xlane.f32.xlu0 %v6646
      %v6648 = vpop.xlane.xlu0 %6647
      %v6649 = vsel %vm6477, %v6278, 0.0
      %6650 = vadd.xlane.f32.xlu0 %v6649
      %v6651 = vpop.xlane.xlu0 %6650
      %v6652 = vsel %vm6477, %v6279, 0.0
      %6653 = vadd.xlane.f32.xlu0 %v6652
      %v6654 = vpop.xlane.xlu0 %6653
      %v6655 = vsel %vm6477, %v6280, 0.0
      %6656 = vadd.xlane.f32.xlu0 %v6655
      %v6657 = vpop.xlane.xlu0 %6656
      %v6658 = vsel %vm6477, %v6281, 0.0
      %6659 = vadd.xlane.f32.xlu0 %v6658
      %v6660 = vpop.xlane.xlu0 %6659
      %v6661 = vsel %vm6477, %v6282, 0.0
      %6662 = vadd.xlane.f32.xlu0 %v6661
      %v6663 = vpop.xlane.xlu0 %6662
      %v6664 = vsel %vm6477, %v6283, 0.0
      %6665 = vadd.xlane.f32.xlu0 %v6664
      %v6666 = vpop.xlane.xlu0 %6665
      %v6667 = vsel %vm6477, %v6284, 0.0
      %6668 = vadd.xlane.f32.xlu0 %v6667
      %v6669 = vpop.xlane.xlu0 %6668
      %v6670 = vsel %vm6477, %v6285, 0.0
      %6671 = vadd.xlane.f32.xlu0 %v6670
      %v6672 = vpop.xlane.xlu0 %6671
      %v6673 = vsel %vm6477, %v6286, 0.0
      %6674 = vadd.xlane.f32.xlu0 %v6673
      %v6675 = vpop.xlane.xlu0 %6674
      %v6676 = vsel %vm6477, %v6287, 0.0
      %6677 = vadd.xlane.f32.xlu0 %v6676
      %v6678 = vpop.xlane.xlu0 %6677
      %v6679 = vsel %vm6477, %v6288, 0.0
      %6680 = vadd.xlane.f32.xlu0 %v6679
      %v6681 = vpop.xlane.xlu0 %6680
      %v6682 = vsel %vm6477, %v6289, 0.0
      %6683 = vadd.xlane.f32.xlu0 %v6682
      %v6684 = vpop.xlane.xlu0 %6683
      %v6685 = vsel %vm6477, %v6290, 0.0
      %6686 = vadd.xlane.f32.xlu0 %v6685
      %v6687 = vpop.xlane.xlu0 %6686
      %v6688 = vsel %vm6477, %v6291, 0.0
      %6689 = vadd.xlane.f32.xlu0 %v6688
      %v6690 = vpop.xlane.xlu0 %6689
      %v6691 = vsel %vm6477, %v6292, 0.0
      %6692 = vadd.xlane.f32.xlu0 %v6691
      %v6693 = vpop.xlane.xlu0 %6692
      %v6694 = vsel %vm6477, %v6293, 0.0
      %6695 = vadd.xlane.f32.xlu0 %v6694
      %v6696 = vpop.xlane.xlu0 %6695
      %v6697 = vsel %vm6477, %v6294, 0.0
      %6698 = vadd.xlane.f32.xlu0 %v6697
      %v6699 = vpop.xlane.xlu0 %6698
      %v6700 = vsel %vm6477, %v6295, 0.0
      %6701 = vadd.xlane.f32.xlu0 %v6700
      %v6702 = vpop.xlane.xlu0 %6701
      %v6703 = vsel %vm6477, %v6296, 0.0
      %6704 = vadd.xlane.f32.xlu0 %v6703
      %v6705 = vpop.xlane.xlu0 %6704
      %v6706 = vsel %vm6477, %v6297, 0.0
      %6707 = vadd.xlane.f32.xlu0 %v6706
      %v6708 = vpop.xlane.xlu0 %6707
      %v6709 = vsel %vm6477, %v6298, 0.0
      %6710 = vadd.xlane.f32.xlu0 %v6709
      %v6711 = vpop.xlane.xlu0 %6710
      %v6712 = vsel %vm6477, %v6299, 0.0
      %6713 = vadd.xlane.f32.xlu0 %v6712
      %v6714 = vpop.xlane.xlu0 %6713
      %v6715 = vsel %vm6477, %v6300, 0.0
      %6716 = vadd.xlane.f32.xlu0 %v6715
      %v6717 = vpop.xlane.xlu0 %6716
      %v6718 = vsel %vm6477, %v6301, 0.0
      %6719 = vadd.xlane.f32.xlu0 %v6718
      %v6720 = vpop.xlane.xlu0 %6719
      %v6721 = vsel %vm6477, %v6302, 0.0
      %6722 = vadd.xlane.f32.xlu0 %v6721
      %v6723 = vpop.xlane.xlu0 %6722
      %v6724 = vsel %vm6477, %v6303, 0.0
      %6725 = vadd.xlane.f32.xlu0 %v6724
      %v6726 = vpop.xlane.xlu0 %6725
      %v6727 = vsel %vm6477, %v6304, 0.0
      %6728 = vadd.xlane.f32.xlu0 %v6727
      %v6729 = vpop.xlane.xlu0 %6728
      %v6730 = vsel %vm6477, %v6305, 0.0
      %6731 = vadd.xlane.f32.xlu0 %v6730
      %v6732 = vpop.xlane.xlu0 %6731
      %v6733 = vsel %vm6477, %v6306, 0.0
      %6734 = vadd.xlane.f32.xlu0 %v6733
      %v6735 = vpop.xlane.xlu0 %6734
      %v6736 = vsel %vm6477, %v6307, 0.0
      %6737 = vadd.xlane.f32.xlu0 %v6736
      %v6738 = vpop.xlane.xlu0 %6737
      %v6739 = vsel %vm6477, %v6308, 0.0
      %6740 = vadd.xlane.f32.xlu0 %v6739
      %v6741 = vpop.xlane.xlu0 %6740
      %v6742 = vsel %vm6477, %v6309, 0.0
      %6743 = vadd.xlane.f32.xlu0 %v6742
      %v6744 = vpop.xlane.xlu0 %6743
      %v6745 = vsel %vm6477, %v6310, 0.0
      %6746 = vadd.xlane.f32.xlu0 %v6745
      %v6747 = vpop.xlane.xlu0 %6746
      %v6748 = vsel %vm6477, %v6311, 0.0
      %6749 = vadd.xlane.f32.xlu0 %v6748
      %v6750 = vpop.xlane.xlu0 %6749
      %v6751 = vsel %vm6477, %v6312, 0.0
      %6752 = vadd.xlane.f32.xlu0 %v6751
      %v6753 = vpop.xlane.xlu0 %6752
      %v6754 = vsel %vm6477, %v6313, 0.0
      %6755 = vadd.xlane.f32.xlu0 %v6754
      %v6756 = vpop.xlane.xlu0 %6755
      %v6757 = vsel %vm6477, %v6314, 0.0
      %6758 = vadd.xlane.f32.xlu0 %v6757
      %v6759 = vpop.xlane.xlu0 %6758
      %v6760 = vsel %vm6477, %v6315, 0.0
      %6761 = vadd.xlane.f32.xlu0 %v6760
      %v6762 = vpop.xlane.xlu0 %6761
      %v6763 = vsel %vm6477, %v6316, 0.0
      %6764 = vadd.xlane.f32.xlu0 %v6763
      %v6765 = vpop.xlane.xlu0 %6764
      %v6766 = vsel %vm6477, %v6317, 0.0
      %6767 = vadd.xlane.f32.xlu0 %v6766
      %v6768 = vpop.xlane.xlu0 %6767
      %v6769 = vsel %vm6477, %v6318, 0.0
      %6770 = vadd.xlane.f32.xlu0 %v6769
      %v6771 = vpop.xlane.xlu0 %6770
      %v6772 = vsel %vm6477, %v6319, 0.0
      %6773 = vadd.xlane.f32.xlu0 %v6772
      %v6774 = vpop.xlane.xlu0 %6773
      %v6775 = vsel %vm6477, %v6320, 0.0
      %6776 = vadd.xlane.f32.xlu0 %v6775
      %v6777 = vpop.xlane.xlu0 %6776
      %v6778 = vsel %vm6477, %v6321, 0.0
      %6779 = vadd.xlane.f32.xlu0 %v6778
      %v6780 = vpop.xlane.xlu0 %6779
      %v6781 = vsel %vm6477, %v6322, 0.0
      %6782 = vadd.xlane.f32.xlu0 %v6781
      %v6783 = vpop.xlane.xlu0 %6782
      %v6784 = vsel %vm6477, %v6323, 0.0
      %6785 = vadd.xlane.f32.xlu0 %v6784
      %v6786 = vpop.xlane.xlu0 %6785
      %v6787 = vsel %vm6477, %v6324, 0.0
      %6788 = vadd.xlane.f32.xlu0 %v6787
      %v6789 = vpop.xlane.xlu0 %6788
      %v6790 = vsel %vm6477, %v6325, 0.0
      %6791 = vadd.xlane.f32.xlu0 %v6790
      %v6792 = vpop.xlane.xlu0 %6791
      %v6793 = vsel %vm6477, %v6326, 0.0
      %6794 = vadd.xlane.f32.xlu0 %v6793
      %v6795 = vpop.xlane.xlu0 %6794
      %v6796 = vsel %vm6477, %v6327, 0.0
      %6797 = vadd.xlane.f32.xlu0 %v6796
      %v6798 = vpop.xlane.xlu0 %6797
      %v6799 = vsel %vm6477, %v6328, 0.0
      %6800 = vadd.xlane.f32.xlu0 %v6799
      %v6801 = vpop.xlane.xlu0 %6800
      %v6802 = vsel %vm6477, %v6329, 0.0
      %6803 = vadd.xlane.f32.xlu0 %v6802
      %v6804 = vpop.xlane.xlu0 %6803
      %v6805 = vsel %vm6477, %v6330, 0.0
      %6806 = vadd.xlane.f32.xlu0 %v6805
      %v6807 = vpop.xlane.xlu0 %6806
      %v6808 = vsel %vm6477, %v6331, 0.0
      %6809 = vadd.xlane.f32.xlu0 %v6808
      %v6810 = vpop.xlane.xlu0 %6809
      %v6811 = vsel %vm6477, %v6332, 0.0
      %6812 = vadd.xlane.f32.xlu0 %v6811
      %v6813 = vpop.xlane.xlu0 %6812
      %v6814 = vsel %vm6477, %v6333, 0.0
      %6815 = vadd.xlane.f32.xlu0 %v6814
      %v6816 = vpop.xlane.xlu0 %6815
      %v6817 = vsel %vm6477, %v6334, 0.0
      %6818 = vadd.xlane.f32.xlu0 %v6817
      %v6819 = vpop.xlane.xlu0 %6818
      %v6820 = vsel %vm6477, %v6335, 0.0
      %6821 = vadd.xlane.f32.xlu0 %v6820
      %v6822 = vpop.xlane.xlu0 %6821
      %v6823 = vsel %vm6477, %v6336, 0.0
      %6824 = vadd.xlane.f32.xlu0 %v6823
      %v6825 = vpop.xlane.xlu0 %6824
      %v6826 = vsel %vm6477, %v6337, 0.0
      %6827 = vadd.xlane.f32.xlu0 %v6826
      %v6828 = vpop.xlane.xlu0 %6827
      %v6829 = vsel %vm6477, %v6338, 0.0
      %6830 = vadd.xlane.f32.xlu0 %v6829
      %v6831 = vpop.xlane.xlu0 %6830
      %v6832 = vsel %vm6477, %v6339, 0.0
      %6833 = vadd.xlane.f32.xlu0 %v6832
      %v6834 = vpop.xlane.xlu0 %6833
      %v6835 = vsel %vm6477, %v6340, 0.0
      %6836 = vadd.xlane.f32.xlu0 %v6835
      %v6837 = vpop.xlane.xlu0 %6836
      %v6838 = vsel %vm6477, %v6341, 0.0
      %6839 = vadd.xlane.f32.xlu0 %v6838
      %v6840 = vpop.xlane.xlu0 %6839
      %v6841 = vsel %vm6477, %v6342, 0.0
      %6842 = vadd.xlane.f32.xlu0 %v6841
      %v6843 = vpop.xlane.xlu0 %6842
      %v6844 = vsel %vm6477, %v6343, 0.0
      %6845 = vadd.xlane.f32.xlu0 %v6844
      %v6846 = vpop.xlane.xlu0 %6845
      %v6847 = vsel %vm6477, %v6344, 0.0
      %6848 = vadd.xlane.f32.xlu0 %v6847
      %v6849 = vpop.xlane.xlu0 %6848
      %v6850 = vsel %vm6477, %v6345, 0.0
      %6851 = vadd.xlane.f32.xlu0 %v6850
      %v6852 = vpop.xlane.xlu0 %6851
      %v6853 = vsel %vm6477, %v6346, 0.0
      %6854 = vadd.xlane.f32.xlu0 %v6853
      %v6855 = vpop.xlane.xlu0 %6854
      %v6856 = vsel %vm6477, %v6347, 0.0
      %6857 = vadd.xlane.f32.xlu0 %v6856
      %v6858 = vpop.xlane.xlu0 %6857
      %v6859 = vsel %vm6477, %v6348, 0.0
      %6860 = vadd.xlane.f32.xlu0 %v6859
      %v6861 = vpop.xlane.xlu0 %6860
      %v6862 = vsel %vm6477, %v6349, 0.0
      %6863 = vadd.xlane.f32.xlu0 %v6862
      %v6864 = vpop.xlane.xlu0 %6863
      %v6865 = vsel %vm6477, %v6350, 0.0
      %6866 = vadd.xlane.f32.xlu0 %v6865
      %v6867 = vpop.xlane.xlu0 %6866
      %v6868 = vsel %vm6477, %v6351, 0.0
      %6869 = vadd.xlane.f32.xlu0 %v6868
      %v6870 = vpop.xlane.xlu0 %6869
      %v6871 = vsel %vm6477, %v6352, 0.0
      %6872 = vadd.xlane.f32.xlu0 %v6871
      %v6873 = vpop.xlane.xlu0 %6872
      %v6874 = vsel %vm6477, %v6353, 0.0
      %6875 = vadd.xlane.f32.xlu0 %v6874
      %v6876 = vpop.xlane.xlu0 %6875
      %v6877 = vsel %vm6477, %v6354, 0.0
      %6878 = vadd.xlane.f32.xlu0 %v6877
      %v6879 = vpop.xlane.xlu0 %6878
      %v6880 = vsel %vm6477, %v6355, 0.0
      %6881 = vadd.xlane.f32.xlu0 %v6880
      %v6882 = vpop.xlane.xlu0 %6881
      %v6883 = vsel %vm6477, %v6356, 0.0
      %6884 = vadd.xlane.f32.xlu0 %v6883
      %v6885 = vpop.xlane.xlu0 %6884
      %v6886 = vsel %vm6477, %v6357, 0.0
      %6887 = vadd.xlane.f32.xlu0 %v6886
      %v6888 = vpop.xlane.xlu0 %6887
      %v6889 = vsel %vm6477, %v6358, 0.0
      %6890 = vadd.xlane.f32.xlu0 %v6889
      %v6891 = vpop.xlane.xlu0 %6890
      %v6892 = vsel %vm6477, %v6359, 0.0
      %6893 = vadd.xlane.f32.xlu0 %v6892
      %v6894 = vpop.xlane.xlu0 %6893
      %v6895 = vsel %vm6477, %v6360, 0.0
      %6896 = vadd.xlane.f32.xlu0 %v6895
      %v6897 = vpop.xlane.xlu0 %6896
      %v6898 = vsel %vm6477, %v6361, 0.0
      %6899 = vadd.xlane.f32.xlu0 %v6898
      %v6900 = vpop.xlane.xlu0 %6899
      %v6901 = vsel %vm6477, %v6362, 0.0
      %6902 = vadd.xlane.f32.xlu0 %v6901
      %v6903 = vpop.xlane.xlu0 %6902
      %v6904 = vsel %vm6477, %v6363, 0.0
      %6905 = vadd.xlane.f32.xlu0 %v6904
      %v6906 = vpop.xlane.xlu0 %6905
      %v6907 = vsel %vm6477, %v6364, 0.0
      %6908 = vadd.xlane.f32.xlu0 %v6907
      %v6909 = vpop.xlane.xlu0 %6908
      %v6910 = vsel %vm6477, %v6365, 0.0
      %6911 = vadd.xlane.f32.xlu0 %v6910
      %v6912 = vpop.xlane.xlu0 %6911
      %v6913 = vsel %vm6477, %v6366, 0.0
      %6914 = vadd.xlane.f32.xlu0 %v6913
      %v6915 = vpop.xlane.xlu0 %6914
      %v6916 = vsel %vm6477, %v6367, 0.0
      %6917 = vadd.xlane.f32.xlu0 %v6916
      %v6918 = vpop.xlane.xlu0 %6917
      %v6919 = vsel %vm6477, %v6368, 0.0
      %6920 = vadd.xlane.f32.xlu0 %v6919
      %v6921 = vpop.xlane.xlu0 %6920
      %v6922 = vsel %vm6477, %v6369, 0.0
      %6923 = vadd.xlane.f32.xlu0 %v6922
      %v6924 = vpop.xlane.xlu0 %6923
      %v6925 = vsel %vm6477, %v6370, 0.0
      %6926 = vadd.xlane.f32.xlu0 %v6925
      %v6927 = vpop.xlane.xlu0 %6926
      %v6928 = vsel %vm6477, %v6371, 0.0
      %6929 = vadd.xlane.f32.xlu0 %v6928
      %v6930 = vpop.xlane.xlu0 %6929
      %v6931 = vsel %vm6477, %v6372, 0.0
      %6932 = vadd.xlane.f32.xlu0 %v6931
      %v6933 = vpop.xlane.xlu0 %6932
      %v6934 = vsel %vm6477, %v6373, 0.0
      %6935 = vadd.xlane.f32.xlu0 %v6934
      %v6936 = vpop.xlane.xlu0 %6935
      %v6937 = vsel %vm6477, %v6374, 0.0
      %6938 = vadd.xlane.f32.xlu0 %v6937
      %v6939 = vpop.xlane.xlu0 %6938
      %v6940 = vsel %vm6477, %v6375, 0.0
      %6941 = vadd.xlane.f32.xlu0 %v6940
      %v6942 = vpop.xlane.xlu0 %6941
      %v6943 = vsel %vm6477, %v6376, 0.0
      %6944 = vadd.xlane.f32.xlu0 %v6943
      %v6945 = vpop.xlane.xlu0 %6944
      %v6946 = vsel %vm6477, %v6377, 0.0
      %6947 = vadd.xlane.f32.xlu0 %v6946
      %v6948 = vpop.xlane.xlu0 %6947
      %v6949 = vsel %vm6477, %v6378, 0.0
      %6950 = vadd.xlane.f32.xlu0 %v6949
      %v6951 = vpop.xlane.xlu0 %6950
      %v6952 = vsel %vm6477, %v6379, 0.0
      %6953 = vadd.xlane.f32.xlu0 %v6952
      %v6954 = vpop.xlane.xlu0 %6953
      %v6955 = vsel %vm6477, %v6380, 0.0
      %6956 = vadd.xlane.f32.xlu0 %v6955
      %v6957 = vpop.xlane.xlu0 %6956
      %v6958 = vsel %vm6477, %v6381, 0.0
      %6959 = vadd.xlane.f32.xlu0 %v6958
      %v6960 = vpop.xlane.xlu0 %6959
      %v6961 = vsel %vm6477, %v6382, 0.0
      %6962 = vadd.xlane.f32.xlu0 %v6961
      %v6963 = vpop.xlane.xlu0 %6962
      %v6964 = vsel %vm6477, %v6383, 0.0
      %6965 = vadd.xlane.f32.xlu0 %v6964
      %v6966 = vpop.xlane.xlu0 %6965
      %v6967 = vsel %vm6477, %v6384, 0.0
      %6968 = vadd.xlane.f32.xlu0 %v6967
      %v6969 = vpop.xlane.xlu0 %6968
      %v6970 = vsel %vm6477, %v6385, 0.0
      %6971 = vadd.xlane.f32.xlu0 %v6970
      %v6972 = vpop.xlane.xlu0 %6971
      %v6973 = vsel %vm6477, %v6386, 0.0
      %6974 = vadd.xlane.f32.xlu0 %v6973
      %v6975 = vpop.xlane.xlu0 %6974
      %v6976 = vsel %vm6477, %v6387, 0.0
      %6977 = vadd.xlane.f32.xlu0 %v6976
      %v6978 = vpop.xlane.xlu0 %6977
      %v6979 = vsel %vm6477, %v6388, 0.0
      %6980 = vadd.xlane.f32.xlu0 %v6979
      %v6981 = vpop.xlane.xlu0 %6980
      %v6982 = vsel %vm6477, %v6389, 0.0
      %6983 = vadd.xlane.f32.xlu0 %v6982
      %v6984 = vpop.xlane.xlu0 %6983
      %v6985 = vsel %vm6477, %v6390, 0.0
      %6986 = vadd.xlane.f32.xlu0 %v6985
      %v6987 = vpop.xlane.xlu0 %6986
      %v6988 = vsel %vm6477, %v6391, 0.0
      %6989 = vadd.xlane.f32.xlu0 %v6988
      %v6990 = vpop.xlane.xlu0 %6989
      %v6991 = vsel %vm6477, %v6392, 0.0
      %6992 = vadd.xlane.f32.xlu0 %v6991
      %v6993 = vpop.xlane.xlu0 %6992
      %v6994 = vsel %vm6477, %v6393, 0.0
      %6995 = vadd.xlane.f32.xlu0 %v6994
      %v6996 = vpop.xlane.xlu0 %6995
      %v6997 = vsel %vm6477, %v6394, 0.0
      %6998 = vadd.xlane.f32.xlu0 %v6997
      %v6999 = vpop.xlane.xlu0 %6998
      %v7000 = vsel %vm6477, %v6395, 0.0
      %7001 = vadd.xlane.f32.xlu0 %v7000
      %v7002 = vpop.xlane.xlu0 %7001
      %v7003 = vsel %vm6477, %v6396, 0.0
      %7004 = vadd.xlane.f32.xlu0 %v7003
      %v7005 = vpop.xlane.xlu0 %7004
      %v7006 = vsel %vm6477, %v6397, 0.0
      %7007 = vadd.xlane.f32.xlu0 %v7006
      %v7008 = vpop.xlane.xlu0 %7007
      %v7009 = vsel %vm6477, %v6398, 0.0
      %7010 = vadd.xlane.f32.xlu0 %v7009
      %v7011 = vpop.xlane.xlu0 %7010
      %v7012 = vsel %vm6477, %v6399, 0.0
      %7013 = vadd.xlane.f32.xlu0 %v7012
      %v7014 = vpop.xlane.xlu0 %7013
      %v7015 = vsel %vm6477, %v6400, 0.0
      %7016 = vadd.xlane.f32.xlu0 %v7015
      %v7017 = vpop.xlane.xlu0 %7016
      %v7018 = vsel %vm6477, %v6401, 0.0
      %7019 = vadd.xlane.f32.xlu0 %v7018
      %v7020 = vpop.xlane.xlu0 %7019
      %v7021 = vsel %vm6477, %v6402, 0.0
      %7022 = vadd.xlane.f32.xlu0 %v7021
      %v7023 = vpop.xlane.xlu0 %7022
      %v7024 = vsel %vm6477, %v6403, 0.0
      %7025 = vadd.xlane.f32.xlu0 %v7024
      %v7026 = vpop.xlane.xlu0 %7025
      %v7027 = vsel %vm6477, %v6404, 0.0
      %7028 = vadd.xlane.f32.xlu0 %v7027
      %v7029 = vpop.xlane.xlu0 %7028
      %v7030 = vsel %vm6477, %v6405, 0.0
      %7031 = vadd.xlane.f32.xlu0 %v7030
      %v7032 = vpop.xlane.xlu0 %7031
      %v7033 = vsel %vm6477, %v6406, 0.0
      %7034 = vadd.xlane.f32.xlu0 %v7033
      %v7035 = vpop.xlane.xlu0 %7034
      %v7036 = vsel %vm6477, %v6407, 0.0
      %7037 = vadd.xlane.f32.xlu0 %v7036
      %v7038 = vpop.xlane.xlu0 %7037
      %v7039 = vsel %vm6477, %v6408, 0.0
      %7040 = vadd.xlane.f32.xlu0 %v7039
      %v7041 = vpop.xlane.xlu0 %7040
      %v7042 = vsel %vm6477, %v6409, 0.0
      %7043 = vadd.xlane.f32.xlu0 %v7042
      %v7044 = vpop.xlane.xlu0 %7043
      %v7045 = vsel %vm6477, %v6410, 0.0
      %7046 = vadd.xlane.f32.xlu0 %v7045
      %v7047 = vpop.xlane.xlu0 %7046
      %v7048 = vsel %vm6477, %v6411, 0.0
      %7049 = vadd.xlane.f32.xlu0 %v7048
      %v7050 = vpop.xlane.xlu0 %7049
      %v7051 = vsel %vm6477, %v6412, 0.0
      %7052 = vadd.xlane.f32.xlu0 %v7051
      %v7053 = vpop.xlane.xlu0 %7052
      %v7054 = vsel %vm6477, %v6413, 0.0
      %7055 = vadd.xlane.f32.xlu0 %v7054
      %v7056 = vpop.xlane.xlu0 %7055
      %v7057 = vsel %vm6477, %v6414, 0.0
      %7058 = vadd.xlane.f32.xlu0 %v7057
      %v7059 = vpop.xlane.xlu0 %7058
      %v7060 = vsel %vm6477, %v6415, 0.0
      %7061 = vadd.xlane.f32.xlu0 %v7060
      %v7062 = vpop.xlane.xlu0 %7061
      %v7063 = vsel %vm6477, %v6416, 0.0
      %7064 = vadd.xlane.f32.xlu0 %v7063
      %v7065 = vpop.xlane.xlu0 %7064
      %v7066 = vsel %vm6477, %v6417, 0.0
      %7067 = vadd.xlane.f32.xlu0 %v7066
      %v7068 = vpop.xlane.xlu0 %7067
      %v7069 = vsel %vm6477, %v6418, 0.0
      %7070 = vadd.xlane.f32.xlu0 %v7069
      %v7071 = vpop.xlane.xlu0 %7070
      %v7072 = vsel %vm6477, %v6419, 0.0
      %7073 = vadd.xlane.f32.xlu0 %v7072
      %v7074 = vpop.xlane.xlu0 %7073
      %v7075 = vsel %vm6477, %v6420, 0.0
      %7076 = vadd.xlane.f32.xlu0 %v7075
      %v7077 = vpop.xlane.xlu0 %7076
      %v7078 = vsel %vm6477, %v6421, 0.0
      %7079 = vadd.xlane.f32.xlu0 %v7078
      %v7080 = vpop.xlane.xlu0 %7079
      %v7081 = vsel %vm6477, %v6422, 0.0
      %7082 = vadd.xlane.f32.xlu0 %v7081
      %v7083 = vpop.xlane.xlu0 %7082
      %v7084 = vsel %vm6477, %v6423, 0.0
      %7085 = vadd.xlane.f32.xlu0 %v7084
      %v7086 = vpop.xlane.xlu0 %7085
      %v7087 = vsel %vm6477, %v6424, 0.0
      %7088 = vadd.xlane.f32.xlu0 %v7087
      %v7089 = vpop.xlane.xlu0 %7088
      %v7090 = vsel %vm6477, %v6425, 0.0
      %7091 = vadd.xlane.f32.xlu0 %v7090
      %v7092 = vpop.xlane.xlu0 %7091
      %v7093 = vsel %vm6477, %v6426, 0.0
      %7094 = vadd.xlane.f32.xlu0 %v7093
      %v7095 = vpop.xlane.xlu0 %7094
      %v7096 = vsel %vm6477, %v6427, 0.0
      %7097 = vadd.xlane.f32.xlu0 %v7096
      %v7098 = vpop.xlane.xlu0 %7097
      %v7099 = vsel %vm6477, %v6428, 0.0
      %7100 = vadd.xlane.f32.xlu0 %v7099
      %v7101 = vpop.xlane.xlu0 %7100
      %v7102 = vsel %vm6477, %v6429, 0.0
      %7103 = vadd.xlane.f32.xlu0 %v7102
      %v7104 = vpop.xlane.xlu0 %7103
      %v7105 = vsel %vm6477, %v6430, 0.0
      %7106 = vadd.xlane.f32.xlu0 %v7105
      %v7107 = vpop.xlane.xlu0 %7106
      %v7108 = vsel %vm6477, %v6431, 0.0
      %7109 = vadd.xlane.f32.xlu0 %v7108
      %v7110 = vpop.xlane.xlu0 %7109
      %v7111 = vsel %vm6477, %v6432, 0.0
      %7112 = vadd.xlane.f32.xlu0 %v7111
      %v7113 = vpop.xlane.xlu0 %7112
      %v7114 = vsel %vm6477, %v6433, 0.0
      %7115 = vadd.xlane.f32.xlu0 %v7114
      %v7116 = vpop.xlane.xlu0 %7115
      %v7117 = vsel %vm6477, %v6434, 0.0
      %7118 = vadd.xlane.f32.xlu0 %v7117
      %v7119 = vpop.xlane.xlu0 %7118
      %v7120 = vsel %vm6477, %v6435, 0.0
      %7121 = vadd.xlane.f32.xlu0 %v7120
      %v7122 = vpop.xlane.xlu0 %7121
      %v7123 = vsel %vm6477, %v6436, 0.0
      %7124 = vadd.xlane.f32.xlu0 %v7123
      %v7125 = vpop.xlane.xlu0 %7124
      %v7126 = vsel %vm6477, %v6437, 0.0
      %7127 = vadd.xlane.f32.xlu0 %v7126
      %v7128 = vpop.xlane.xlu0 %7127
      %v7129 = vsel %vm6477, %v6438, 0.0
      %7130 = vadd.xlane.f32.xlu0 %v7129
      %v7131 = vpop.xlane.xlu0 %7130
      %v7132 = vsel %vm6477, %v6439, 0.0
      %7133 = vadd.xlane.f32.xlu0 %v7132
      %v7134 = vpop.xlane.xlu0 %7133
      %v7135 = vsel %vm6477, %v6440, 0.0
      %7136 = vadd.xlane.f32.xlu0 %v7135
      %v7137 = vpop.xlane.xlu0 %7136
      %v7138 = vsel %vm6477, %v6441, 0.0
      %7139 = vadd.xlane.f32.xlu0 %v7138
      %v7140 = vpop.xlane.xlu0 %7139
      %v7141 = vsel %vm6477, %v6442, 0.0
      %7142 = vadd.xlane.f32.xlu0 %v7141
      %v7143 = vpop.xlane.xlu0 %7142
      %v7144 = vsel %vm6477, %v6443, 0.0
      %7145 = vadd.xlane.f32.xlu0 %v7144
      %v7146 = vpop.xlane.xlu0 %7145
      %v7147 = vsel %vm6477, %v6444, 0.0
      %7148 = vadd.xlane.f32.xlu0 %v7147
      %v7149 = vpop.xlane.xlu0 %7148
      %v7150 = vsel %vm6477, %v6445, 0.0
      %7151 = vadd.xlane.f32.xlu0 %v7150
      %v7152 = vpop.xlane.xlu0 %7151
      %v7153 = vsel %vm6477, %v6446, 0.0
      %7154 = vadd.xlane.f32.xlu0 %v7153
      %v7155 = vpop.xlane.xlu0 %7154
      %v7156 = vsel %vm6477, %v6447, 0.0
      %7157 = vadd.xlane.f32.xlu0 %v7156
      %v7158 = vpop.xlane.xlu0 %7157
      %v7159 = vsel %vm6477, %v6448, 0.0
      %7160 = vadd.xlane.f32.xlu0 %v7159
      %v7161 = vpop.xlane.xlu0 %7160
      %v7162 = vsel %vm6477, %v6449, 0.0
      %7163 = vadd.xlane.f32.xlu0 %v7162
      %v7164 = vpop.xlane.xlu0 %7163
      %v7165 = vsel %vm6477, %v6450, 0.0
      %7166 = vadd.xlane.f32.xlu0 %v7165
      %v7167 = vpop.xlane.xlu0 %7166
      %v7168 = vsel %vm6477, %v6451, 0.0
      %7169 = vadd.xlane.f32.xlu0 %v7168
      %v7170 = vpop.xlane.xlu0 %7169
      %v7171 = vsel %vm6477, %v6452, 0.0
      %7172 = vadd.xlane.f32.xlu0 %v7171
      %v7173 = vpop.xlane.xlu0 %7172
      %v7174 = vsel %vm6477, %v6453, 0.0
      %7175 = vadd.xlane.f32.xlu0 %v7174
      %v7176 = vpop.xlane.xlu0 %7175
      %v7177 = vsel %vm6477, %v6454, 0.0
      %7178 = vadd.xlane.f32.xlu0 %v7177
      %v7179 = vpop.xlane.xlu0 %7178
      %v7180 = vsel %vm6477, %v6455, 0.0
      %7181 = vadd.xlane.f32.xlu0 %v7180
      %v7182 = vpop.xlane.xlu0 %7181
      %v7183 = vsel %vm6477, %v6456, 0.0
      %7184 = vadd.xlane.f32.xlu0 %v7183
      %v7185 = vpop.xlane.xlu0 %7184
      %v7186 = vsel %vm6477, %v6457, 0.0
      %7187 = vadd.xlane.f32.xlu0 %v7186
      %v7188 = vpop.xlane.xlu0 %7187
      %v7189 = vsel %vm6477, %v6458, 0.0
      %7190 = vadd.xlane.f32.xlu0 %v7189
      %v7191 = vpop.xlane.xlu0 %7190
      %v7192 = vsel %vm6477, %v6459, 0.0
      %7193 = vadd.xlane.f32.xlu0 %v7192
      %v7194 = vpop.xlane.xlu0 %7193
      %v7195 = vsel %vm6477, %v6460, 0.0
      %7196 = vadd.xlane.f32.xlu0 %v7195
      %v7197 = vpop.xlane.xlu0 %7196
      %v7198 = vsel %vm6477, %v6461, 0.0
      %7199 = vadd.xlane.f32.xlu0 %v7198
      %v7200 = vpop.xlane.xlu0 %7199
      %v7201 = vsel %vm6477, %v6462, 0.0
      %7202 = vadd.xlane.f32.xlu0 %v7201
      %v7203 = vpop.xlane.xlu0 %7202
      %v7204 = vsel %vm6477, %v6463, 0.0
      %7205 = vadd.xlane.f32.xlu0 %v7204
      %v7206 = vpop.xlane.xlu0 %7205
      %v7207 = vsel %vm6477, %v6464, 0.0
      %7208 = vadd.xlane.f32.xlu0 %v7207
      %v7209 = vpop.xlane.xlu0 %7208
      %v7210 = vsel %vm6477, %v6465, 0.0
      %7211 = vadd.xlane.f32.xlu0 %v7210
      %v7212 = vpop.xlane.xlu0 %7211
      %v7213 = vsel %vm6477, %v6466, 0.0
      %7214 = vadd.xlane.f32.xlu0 %v7213
      %v7215 = vpop.xlane.xlu0 %7214
      %v7216 = vsel %vm6477, %v6467, 0.0
      %7217 = vadd.xlane.f32.xlu0 %v7216
      %v7218 = vpop.xlane.xlu0 %7217
      %v7219 = vsel %vm6477, %v6468, 0.0
      %7220 = vadd.xlane.f32.xlu0 %v7219
      %v7221 = vpop.xlane.xlu0 %7220
      %v7222 = vsel %vm6477, %v6469, 0.0
      %7223 = vadd.xlane.f32.xlu0 %v7222
      %v7224 = vpop.xlane.xlu0 %7223
      %v7225 = vsel %vm6477, %v6470, 0.0
      %7226 = vadd.xlane.f32.xlu0 %v7225
      %v7227 = vpop.xlane.xlu0 %7226
      %v7228 = vsel %vm6477, %v6471, 0.0
      %7229 = vadd.xlane.f32.xlu0 %v7228
      %v7230 = vpop.xlane.xlu0 %7229
      %v7231 = vsel %vm6477, %v6472, 0.0
      %7232 = vadd.xlane.f32.xlu0 %v7231
      %v7233 = vpop.xlane.xlu0 %7232
      %v7234 = vsel %vm6477, %v6473, 0.0
      %7235 = vadd.xlane.f32.xlu0 %v7234
      %v7236 = vpop.xlane.xlu0 %7235
      %v7237 = vsel %vm6477, %v6474, 0.0
      %7238 = vadd.xlane.f32.xlu0 %v7237
      %v7239 = vpop.xlane.xlu0 %7238
      %v7240 = vsel %vm6477, %v6475, 0.0
      %7241 = vadd.xlane.f32.xlu0 %v7240
      %v7242 = vpop.xlane.xlu0 %7241
      %v7243 = vsel %vm6477, %v6476, 0.0
      %7244 = vadd.xlane.f32.xlu0 %v7243
      %v7245 = vpop.xlane.xlu0 %7244
      %v7502 = vlaneseq
      %v7503 = vand.u32 %v7502, 127
      %v7504 = vperm.slane %v6480, %v7503
      %v7505 = vadd.s32 %v7503, 4294967288
      %v7506 = vperm.slane %v6483, %v7505
      %vm7507 = vcmask 130112
      %v7508 = vsel %vm7507, %v7506, %v7504
      %v7509 = vperm.slane %v6486, %v7503
      %v7510 = vperm.slane %v6489, %v7505
      %v7511 = vsel %vm7507, %v7510, %v7509
      %v7512 = vperm.slane %v6492, %v7503
      %v7513 = vperm.slane %v6495, %v7505
      %v7514 = vsel %vm7507, %v7513, %v7512
      %v7515 = vperm.slane %v6498, %v7503
      %v7516 = vperm.slane %v6501, %v7505
      %v7517 = vsel %vm7507, %v7516, %v7515
      %v7518 = vperm.slane %v6504, %v7503
      %v7519 = vperm.slane %v6507, %v7505
      %v7520 = vsel %vm7507, %v7519, %v7518
      %v7521 = vperm.slane %v6510, %v7503
      %v7522 = vperm.slane %v6513, %v7505
      %v7523 = vsel %vm7507, %v7522, %v7521
      %v7524 = vperm.slane %v6516, %v7503
      %v7525 = vperm.slane %v6519, %v7505
      %v7526 = vsel %vm7507, %v7525, %v7524
      %v7527 = vperm.slane %v6522, %v7503
      %v7528 = vperm.slane %v6525, %v7505
      %v7529 = vsel %vm7507, %v7528, %v7527
      %v7530 = vperm.slane %v6528, %v7503
      %v7531 = vperm.slane %v6531, %v7505
      %v7532 = vsel %vm7507, %v7531, %v7530
      %v7533 = vperm.slane %v6534, %v7503
      %v7534 = vperm.slane %v6537, %v7505
      %v7535 = vsel %vm7507, %v7534, %v7533
      %v7536 = vperm.slane %v6540, %v7503
      %v7537 = vperm.slane %v6543, %v7505
      %v7538 = vsel %vm7507, %v7537, %v7536
      %v7539 = vperm.slane %v6546, %v7503
      %v7540 = vperm.slane %v6549, %v7505
      %v7541 = vsel %vm7507, %v7540, %v7539
      %v7542 = vperm.slane %v6552, %v7503
      %v7543 = vperm.slane %v6555, %v7505
      %v7544 = vsel %vm7507, %v7543, %v7542
      %v7545 = vperm.slane %v6558, %v7503
      %v7546 = vperm.slane %v6561, %v7505
      %v7547 = vsel %vm7507, %v7546, %v7545
      %v7548 = vperm.slane %v6564, %v7503
      %v7549 = vperm.slane %v6567, %v7505
      %v7550 = vsel %vm7507, %v7549, %v7548
      %v7551 = vperm.slane %v6570, %v7503
      %v7552 = vperm.slane %v6573, %v7505
      %v7553 = vsel %vm7507, %v7552, %v7551
      %v7554 = vperm.slane %v6576, %v7503
      %v7555 = vperm.slane %v6579, %v7505
      %v7556 = vsel %vm7507, %v7555, %v7554
      %v7557 = vperm.slane %v6582, %v7503
      %v7558 = vperm.slane %v6585, %v7505
      %v7559 = vsel %vm7507, %v7558, %v7557
      %v7560 = vperm.slane %v6588, %v7503
      %v7561 = vperm.slane %v6591, %v7505
      %v7562 = vsel %vm7507, %v7561, %v7560
      %v7563 = vperm.slane %v6594, %v7503
      %v7564 = vperm.slane %v6597, %v7505
      %v7565 = vsel %vm7507, %v7564, %v7563
      %v7566 = vperm.slane %v6600, %v7503
      %v7567 = vperm.slane %v6603, %v7505
      %v7568 = vsel %vm7507, %v7567, %v7566
      %v7569 = vperm.slane %v6606, %v7503
      %v7570 = vperm.slane %v6609, %v7505
      %v7571 = vsel %vm7507, %v7570, %v7569
      %v7572 = vperm.slane %v6612, %v7503
      %v7573 = vperm.slane %v6615, %v7505
      %v7574 = vsel %vm7507, %v7573, %v7572
      %v7575 = vperm.slane %v6618, %v7503
      %v7576 = vperm.slane %v6621, %v7505
      %v7577 = vsel %vm7507, %v7576, %v7575
      %v7578 = vperm.slane %v6624, %v7503
      %v7579 = vperm.slane %v6627, %v7505
      %v7580 = vsel %vm7507, %v7579, %v7578
      %v7581 = vperm.slane %v6630, %v7503
      %v7582 = vperm.slane %v6633, %v7505
      %v7583 = vsel %vm7507, %v7582, %v7581
      %v7584 = vperm.slane %v6636, %v7503
      %v7585 = vperm.slane %v6639, %v7505
      %v7586 = vsel %vm7507, %v7585, %v7584
      %v7587 = vperm.slane %v6642, %v7503
      %v7588 = vperm.slane %v6645, %v7505
      %v7589 = vsel %vm7507, %v7588, %v7587
      %v7590 = vperm.slane %v6648, %v7503
      %v7591 = vperm.slane %v6651, %v7505
      %v7592 = vsel %vm7507, %v7591, %v7590
      %v7593 = vperm.slane %v6654, %v7503
      %v7594 = vperm.slane %v6657, %v7505
      %v7595 = vsel %vm7507, %v7594, %v7593
      %v7596 = vperm.slane %v6660, %v7503
      %v7597 = vperm.slane %v6663, %v7505
      %v7598 = vsel %vm7507, %v7597, %v7596
      %v7599 = vperm.slane %v6666, %v7503
      %v7600 = vperm.slane %v6669, %v7505
      %v7601 = vsel %vm7507, %v7600, %v7599
      %v7602 = vperm.slane %v6672, %v7503
      %v7603 = vperm.slane %v6675, %v7505
      %v7604 = vsel %vm7507, %v7603, %v7602
      %v7605 = vperm.slane %v6678, %v7503
      %v7606 = vperm.slane %v6681, %v7505
      %v7607 = vsel %vm7507, %v7606, %v7605
      %v7608 = vperm.slane %v6684, %v7503
      %v7609 = vperm.slane %v6687, %v7505
      %v7610 = vsel %vm7507, %v7609, %v7608
      %v7611 = vperm.slane %v6690, %v7503
      %v7612 = vperm.slane %v6693, %v7505
      %v7613 = vsel %vm7507, %v7612, %v7611
      %v7614 = vperm.slane %v6696, %v7503
      %v7615 = vperm.slane %v6699, %v7505
      %v7616 = vsel %vm7507, %v7615, %v7614
      %v7617 = vperm.slane %v6702, %v7503
      %v7618 = vperm.slane %v6705, %v7505
      %v7619 = vsel %vm7507, %v7618, %v7617
      %v7620 = vperm.slane %v6708, %v7503
      %v7621 = vperm.slane %v6711, %v7505
      %v7622 = vsel %vm7507, %v7621, %v7620
      %v7623 = vperm.slane %v6714, %v7503
      %v7624 = vperm.slane %v6717, %v7505
      %v7625 = vsel %vm7507, %v7624, %v7623
      %v7626 = vperm.slane %v6720, %v7503
      %v7627 = vperm.slane %v6723, %v7505
      %v7628 = vsel %vm7507, %v7627, %v7626
      %v7629 = vperm.slane %v6726, %v7503
      %v7630 = vperm.slane %v6729, %v7505
      %v7631 = vsel %vm7507, %v7630, %v7629
      %v7632 = vperm.slane %v6732, %v7503
      %v7633 = vperm.slane %v6735, %v7505
      %v7634 = vsel %vm7507, %v7633, %v7632
      %v7635 = vperm.slane %v6738, %v7503
      %v7636 = vperm.slane %v6741, %v7505
      %v7637 = vsel %vm7507, %v7636, %v7635
      %v7638 = vperm.slane %v6744, %v7503
      %v7639 = vperm.slane %v6747, %v7505
      %v7640 = vsel %vm7507, %v7639, %v7638
      %v7641 = vperm.slane %v6750, %v7503
      %v7642 = vperm.slane %v6753, %v7505
      %v7643 = vsel %vm7507, %v7642, %v7641
      %v7644 = vperm.slane %v6756, %v7503
      %v7645 = vperm.slane %v6759, %v7505
      %v7646 = vsel %vm7507, %v7645, %v7644
      %v7647 = vperm.slane %v6762, %v7503
      %v7648 = vperm.slane %v6765, %v7505
      %v7649 = vsel %vm7507, %v7648, %v7647
      %v7650 = vperm.slane %v6768, %v7503
      %v7651 = vperm.slane %v6771, %v7505
      %v7652 = vsel %vm7507, %v7651, %v7650
      %v7653 = vperm.slane %v6774, %v7503
      %v7654 = vperm.slane %v6777, %v7505
      %v7655 = vsel %vm7507, %v7654, %v7653
      %v7656 = vperm.slane %v6780, %v7503
      %v7657 = vperm.slane %v6783, %v7505
      %v7658 = vsel %vm7507, %v7657, %v7656
      %v7659 = vperm.slane %v6786, %v7503
      %v7660 = vperm.slane %v6789, %v7505
      %v7661 = vsel %vm7507, %v7660, %v7659
      %v7662 = vperm.slane %v6792, %v7503
      %v7663 = vperm.slane %v6795, %v7505
      %v7664 = vsel %vm7507, %v7663, %v7662
      %v7665 = vperm.slane %v6798, %v7503
      %v7666 = vperm.slane %v6801, %v7505
      %v7667 = vsel %vm7507, %v7666, %v7665
      %v7668 = vperm.slane %v6804, %v7503
      %v7669 = vperm.slane %v6807, %v7505
      %v7670 = vsel %vm7507, %v7669, %v7668
      %v7671 = vperm.slane %v6810, %v7503
      %v7672 = vperm.slane %v6813, %v7505
      %v7673 = vsel %vm7507, %v7672, %v7671
      %v7674 = vperm.slane %v6816, %v7503
      %v7675 = vperm.slane %v6819, %v7505
      %v7676 = vsel %vm7507, %v7675, %v7674
      %v7677 = vperm.slane %v6822, %v7503
      %v7678 = vperm.slane %v6825, %v7505
      %v7679 = vsel %vm7507, %v7678, %v7677
      %v7680 = vperm.slane %v6828, %v7503
      %v7681 = vperm.slane %v6831, %v7505
      %v7682 = vsel %vm7507, %v7681, %v7680
      %v7683 = vperm.slane %v6834, %v7503
      %v7684 = vperm.slane %v6837, %v7505
      %v7685 = vsel %vm7507, %v7684, %v7683
      %v7686 = vperm.slane %v6840, %v7503
      %v7687 = vperm.slane %v6843, %v7505
      %v7688 = vsel %vm7507, %v7687, %v7686
      %v7689 = vperm.slane %v6846, %v7503
      %v7690 = vperm.slane %v6849, %v7505
      %v7691 = vsel %vm7507, %v7690, %v7689
      %v7692 = vperm.slane %v6852, %v7503
      %v7693 = vperm.slane %v6855, %v7505
      %v7694 = vsel %vm7507, %v7693, %v7692
      %v7695 = vperm.slane %v6858, %v7503
      %v7696 = vperm.slane %v6861, %v7505
      %v7697 = vsel %vm7507, %v7696, %v7695
      %v7698 = vperm.slane %v6864, %v7503
      %v7699 = vperm.slane %v6867, %v7505
      %v7700 = vsel %vm7507, %v7699, %v7698
      %v7701 = vperm.slane %v6870, %v7503
      %v7702 = vperm.slane %v6873, %v7505
      %v7703 = vsel %vm7507, %v7702, %v7701
      %v7704 = vperm.slane %v6876, %v7503
      %v7705 = vperm.slane %v6879, %v7505
      %v7706 = vsel %vm7507, %v7705, %v7704
      %v7707 = vperm.slane %v6882, %v7503
      %v7708 = vperm.slane %v6885, %v7505
      %v7709 = vsel %vm7507, %v7708, %v7707
      %v7710 = vperm.slane %v6888, %v7503
      %v7711 = vperm.slane %v6891, %v7505
      %v7712 = vsel %vm7507, %v7711, %v7710
      %v7713 = vperm.slane %v6894, %v7503
      %v7714 = vperm.slane %v6897, %v7505
      %v7715 = vsel %vm7507, %v7714, %v7713
      %v7716 = vperm.slane %v6900, %v7503
      %v7717 = vperm.slane %v6903, %v7505
      %v7718 = vsel %vm7507, %v7717, %v7716
      %v7719 = vperm.slane %v6906, %v7503
      %v7720 = vperm.slane %v6909, %v7505
      %v7721 = vsel %vm7507, %v7720, %v7719
      %v7722 = vperm.slane %v6912, %v7503
      %v7723 = vperm.slane %v6915, %v7505
      %v7724 = vsel %vm7507, %v7723, %v7722
      %v7725 = vperm.slane %v6918, %v7503
      %v7726 = vperm.slane %v6921, %v7505
      %v7727 = vsel %vm7507, %v7726, %v7725
      %v7728 = vperm.slane %v6924, %v7503
      %v7729 = vperm.slane %v6927, %v7505
      %v7730 = vsel %vm7507, %v7729, %v7728
      %v7731 = vperm.slane %v6930, %v7503
      %v7732 = vperm.slane %v6933, %v7505
      %v7733 = vsel %vm7507, %v7732, %v7731
      %v7734 = vperm.slane %v6936, %v7503
      %v7735 = vperm.slane %v6939, %v7505
      %v7736 = vsel %vm7507, %v7735, %v7734
      %v7737 = vperm.slane %v6942, %v7503
      %v7738 = vperm.slane %v6945, %v7505
      %v7739 = vsel %vm7507, %v7738, %v7737
      %v7740 = vperm.slane %v6948, %v7503
      %v7741 = vperm.slane %v6951, %v7505
      %v7742 = vsel %vm7507, %v7741, %v7740
      %v7743 = vperm.slane %v6954, %v7503
      %v7744 = vperm.slane %v6957, %v7505
      %v7745 = vsel %vm7507, %v7744, %v7743
      %v7746 = vperm.slane %v6960, %v7503
      %v7747 = vperm.slane %v6963, %v7505
      %v7748 = vsel %vm7507, %v7747, %v7746
      %v7749 = vperm.slane %v6966, %v7503
      %v7750 = vperm.slane %v6969, %v7505
      %v7751 = vsel %vm7507, %v7750, %v7749
      %v7752 = vperm.slane %v6972, %v7503
      %v7753 = vperm.slane %v6975, %v7505
      %v7754 = vsel %vm7507, %v7753, %v7752
      %v7755 = vperm.slane %v6978, %v7503
      %v7756 = vperm.slane %v6981, %v7505
      %v7757 = vsel %vm7507, %v7756, %v7755
      %v7758 = vperm.slane %v6984, %v7503
      %v7759 = vperm.slane %v6987, %v7505
      %v7760 = vsel %vm7507, %v7759, %v7758
      %v7761 = vperm.slane %v6990, %v7503
      %v7762 = vperm.slane %v6993, %v7505
      %v7763 = vsel %vm7507, %v7762, %v7761
      %v7764 = vperm.slane %v6996, %v7503
      %v7765 = vperm.slane %v6999, %v7505
      %v7766 = vsel %vm7507, %v7765, %v7764
      %v7767 = vperm.slane %v7002, %v7503
      %v7768 = vperm.slane %v7005, %v7505
      %v7769 = vsel %vm7507, %v7768, %v7767
      %v7770 = vperm.slane %v7008, %v7503
      %v7771 = vperm.slane %v7011, %v7505
      %v7772 = vsel %vm7507, %v7771, %v7770
      %v7773 = vperm.slane %v7014, %v7503
      %v7774 = vperm.slane %v7017, %v7505
      %v7775 = vsel %vm7507, %v7774, %v7773
      %v7776 = vperm.slane %v7020, %v7503
      %v7777 = vperm.slane %v7023, %v7505
      %v7778 = vsel %vm7507, %v7777, %v7776
      %v7779 = vperm.slane %v7026, %v7503
      %v7780 = vperm.slane %v7029, %v7505
      %v7781 = vsel %vm7507, %v7780, %v7779
      %v7782 = vperm.slane %v7032, %v7503
      %v7783 = vperm.slane %v7035, %v7505
      %v7784 = vsel %vm7507, %v7783, %v7782
      %v7785 = vperm.slane %v7038, %v7503
      %v7786 = vperm.slane %v7041, %v7505
      %v7787 = vsel %vm7507, %v7786, %v7785
      %v7788 = vperm.slane %v7044, %v7503
      %v7789 = vperm.slane %v7047, %v7505
      %v7790 = vsel %vm7507, %v7789, %v7788
      %v7791 = vperm.slane %v7050, %v7503
      %v7792 = vperm.slane %v7053, %v7505
      %v7793 = vsel %vm7507, %v7792, %v7791
      %v7794 = vperm.slane %v7056, %v7503
      %v7795 = vperm.slane %v7059, %v7505
      %v7796 = vsel %vm7507, %v7795, %v7794
      %v7797 = vperm.slane %v7062, %v7503
      %v7798 = vperm.slane %v7065, %v7505
      %v7799 = vsel %vm7507, %v7798, %v7797
      %v7800 = vperm.slane %v7068, %v7503
      %v7801 = vperm.slane %v7071, %v7505
      %v7802 = vsel %vm7507, %v7801, %v7800
      %v7803 = vperm.slane %v7074, %v7503
      %v7804 = vperm.slane %v7077, %v7505
      %v7805 = vsel %vm7507, %v7804, %v7803
      %v7806 = vperm.slane %v7080, %v7503
      %v7807 = vperm.slane %v7083, %v7505
      %v7808 = vsel %vm7507, %v7807, %v7806
      %v7809 = vperm.slane %v7086, %v7503
      %v7810 = vperm.slane %v7089, %v7505
      %v7811 = vsel %vm7507, %v7810, %v7809
      %v7812 = vperm.slane %v7092, %v7503
      %v7813 = vperm.slane %v7095, %v7505
      %v7814 = vsel %vm7507, %v7813, %v7812
      %v7815 = vperm.slane %v7098, %v7503
      %v7816 = vperm.slane %v7101, %v7505
      %v7817 = vsel %vm7507, %v7816, %v7815
      %v7818 = vperm.slane %v7104, %v7503
      %v7819 = vperm.slane %v7107, %v7505
      %v7820 = vsel %vm7507, %v7819, %v7818
      %v7821 = vperm.slane %v7110, %v7503
      %v7822 = vperm.slane %v7113, %v7505
      %v7823 = vsel %vm7507, %v7822, %v7821
      %v7824 = vperm.slane %v7116, %v7503
      %v7825 = vperm.slane %v7119, %v7505
      %v7826 = vsel %vm7507, %v7825, %v7824
      %v7827 = vperm.slane %v7122, %v7503
      %v7828 = vperm.slane %v7125, %v7505
      %v7829 = vsel %vm7507, %v7828, %v7827
      %v7830 = vperm.slane %v7128, %v7503
      %v7831 = vperm.slane %v7131, %v7505
      %v7832 = vsel %vm7507, %v7831, %v7830
      %v7833 = vperm.slane %v7134, %v7503
      %v7834 = vperm.slane %v7137, %v7505
      %v7835 = vsel %vm7507, %v7834, %v7833
      %v7836 = vperm.slane %v7140, %v7503
      %v7837 = vperm.slane %v7143, %v7505
      %v7838 = vsel %vm7507, %v7837, %v7836
      %v7839 = vperm.slane %v7146, %v7503
      %v7840 = vperm.slane %v7149, %v7505
      %v7841 = vsel %vm7507, %v7840, %v7839
      %v7842 = vperm.slane %v7152, %v7503
      %v7843 = vperm.slane %v7155, %v7505
      %v7844 = vsel %vm7507, %v7843, %v7842
      %v7845 = vperm.slane %v7158, %v7503
      %v7846 = vperm.slane %v7161, %v7505
      %v7847 = vsel %vm7507, %v7846, %v7845
      %v7848 = vperm.slane %v7164, %v7503
      %v7849 = vperm.slane %v7167, %v7505
      %v7850 = vsel %vm7507, %v7849, %v7848
      %v7851 = vperm.slane %v7170, %v7503
      %v7852 = vperm.slane %v7173, %v7505
      %v7853 = vsel %vm7507, %v7852, %v7851
      %v7854 = vperm.slane %v7176, %v7503
      %v7855 = vperm.slane %v7179, %v7505
      %v7856 = vsel %vm7507, %v7855, %v7854
      %v7857 = vperm.slane %v7182, %v7503
      %v7858 = vperm.slane %v7185, %v7505
      %v7859 = vsel %vm7507, %v7858, %v7857
      %v7860 = vperm.slane %v7188, %v7503
      %v7861 = vperm.slane %v7191, %v7505
      %v7862 = vsel %vm7507, %v7861, %v7860
      %v7863 = vperm.slane %v7194, %v7503
      %v7864 = vperm.slane %v7197, %v7505
      %v7865 = vsel %vm7507, %v7864, %v7863
      %v7866 = vperm.slane %v7200, %v7503
      %v7867 = vperm.slane %v7203, %v7505
      %v7868 = vsel %vm7507, %v7867, %v7866
      %v7869 = vperm.slane %v7206, %v7503
      %v7870 = vperm.slane %v7209, %v7505
      %v7871 = vsel %vm7507, %v7870, %v7869
      %v7872 = vperm.slane %v7212, %v7503
      %v7873 = vperm.slane %v7215, %v7505
      %v7874 = vsel %vm7507, %v7873, %v7872
      %v7875 = vperm.slane %v7218, %v7503
      %v7876 = vperm.slane %v7221, %v7505
      %v7877 = vsel %vm7507, %v7876, %v7875
      %v7878 = vperm.slane %v7224, %v7503
      %v7879 = vperm.slane %v7227, %v7505
      %v7880 = vsel %vm7507, %v7879, %v7878
      %v7881 = vperm.slane %v7230, %v7503
      %v7882 = vperm.slane %v7233, %v7505
      %v7883 = vsel %vm7507, %v7882, %v7881
      %v7884 = vperm.slane %v7236, %v7503
      %v7885 = vperm.slane %v7239, %v7505
      %v7886 = vsel %vm7507, %v7885, %v7884
      %v7887 = vperm.slane %v7242, %v7503
      %v7888 = vperm.slane %v7245, %v7505
      %v7889 = vsel %vm7507, %v7888, %v7887
      %vm7890 = vcmask 1041409
      %v7891 = vsel %vm7890, %v7511, %v7508
      %vm7892 = vcmask 1042434
      %v7893 = vsel %vm7892, %v7514, %v7891
      %vm7894 = vcmask 1043459
      %v7895 = vsel %vm7894, %v7517, %v7893
      %vm7896 = vcmask 1044484
      %v7897 = vsel %vm7896, %v7520, %v7895
      %vm7898 = vcmask 1045509
      %v7899 = vsel %vm7898, %v7523, %v7897
      %vm7900 = vcmask 1046534
      %v7901 = vsel %vm7900, %v7526, %v7899
      %vm7902 = vcmask 1047559
      %v7903 = vsel %vm7902, %v7529, %v7901
      %v7904 = vsel %vm7890, %v7535, %v7532
      %v7905 = vsel %vm7892, %v7538, %v7904
      %v7906 = vsel %vm7894, %v7541, %v7905
      %v7907 = vsel %vm7896, %v7544, %v7906
      %v7908 = vsel %vm7898, %v7547, %v7907
      %v7909 = vsel %vm7900, %v7550, %v7908
      %v7910 = vsel %vm7902, %v7553, %v7909
      %v7911 = vsel %vm7890, %v7559, %v7556
      %v7912 = vsel %vm7892, %v7562, %v7911
      %v7913 = vsel %vm7894, %v7565, %v7912
      %v7914 = vsel %vm7896, %v7568, %v7913
      %v7915 = vsel %vm7898, %v7571, %v7914
      %v7916 = vsel %vm7900, %v7574, %v7915
      %v7917 = vsel %vm7902, %v7577, %v7916
      %v7918 = vsel %vm7890, %v7583, %v7580
      %v7919 = vsel %vm7892, %v7586, %v7918
      %v7920 = vsel %vm7894, %v7589, %v7919
      %v7921 = vsel %vm7896, %v7592, %v7920
      %v7922 = vsel %vm7898, %v7595, %v7921
      %v7923 = vsel %vm7900, %v7598, %v7922
      %v7924 = vsel %vm7902, %v7601, %v7923
      %v7925 = vsel %vm7890, %v7607, %v7604
      %v7926 = vsel %vm7892, %v7610, %v7925
      %v7927 = vsel %vm7894, %v7613, %v7926
      %v7928 = vsel %vm7896, %v7616, %v7927
      %v7929 = vsel %vm7898, %v7619, %v7928
      %v7930 = vsel %vm7900, %v7622, %v7929
      %v7931 = vsel %vm7902, %v7625, %v7930
      %v7932 = vsel %vm7890, %v7631, %v7628
      %v7933 = vsel %vm7892, %v7634, %v7932
      %v7934 = vsel %vm7894, %v7637, %v7933
      %v7935 = vsel %vm7896, %v7640, %v7934
      %v7936 = vsel %vm7898, %v7643, %v7935
      %v7937 = vsel %vm7900, %v7646, %v7936
      %v7938 = vsel %vm7902, %v7649, %v7937
      %v7939 = vsel %vm7890, %v7655, %v7652
      %v7940 = vsel %vm7892, %v7658, %v7939
      %v7941 = vsel %vm7894, %v7661, %v7940
      %v7942 = vsel %vm7896, %v7664, %v7941
      %v7943 = vsel %vm7898, %v7667, %v7942
      %v7944 = vsel %vm7900, %v7670, %v7943
      %v7945 = vsel %vm7902, %v7673, %v7944
      %v7946 = vsel %vm7890, %v7679, %v7676
      %v7947 = vsel %vm7892, %v7682, %v7946
      %v7948 = vsel %vm7894, %v7685, %v7947
      %v7949 = vsel %vm7896, %v7688, %v7948
      %v7950 = vsel %vm7898, %v7691, %v7949
      %v7951 = vsel %vm7900, %v7694, %v7950
      %v7952 = vsel %vm7902, %v7697, %v7951
      %v7953 = vsel %vm7890, %v7703, %v7700
      %v7954 = vsel %vm7892, %v7706, %v7953
      %v7955 = vsel %vm7894, %v7709, %v7954
      %v7956 = vsel %vm7896, %v7712, %v7955
      %v7957 = vsel %vm7898, %v7715, %v7956
      %v7958 = vsel %vm7900, %v7718, %v7957
      %v7959 = vsel %vm7902, %v7721, %v7958
      %v7960 = vsel %vm7890, %v7727, %v7724
      %v7961 = vsel %vm7892, %v7730, %v7960
      %v7962 = vsel %vm7894, %v7733, %v7961
      %v7963 = vsel %vm7896, %v7736, %v7962
      %v7964 = vsel %vm7898, %v7739, %v7963
      %v7965 = vsel %vm7900, %v7742, %v7964
      %v7966 = vsel %vm7902, %v7745, %v7965
      %v7967 = vsel %vm7890, %v7751, %v7748
      %v7968 = vsel %vm7892, %v7754, %v7967
      %v7969 = vsel %vm7894, %v7757, %v7968
      %v7970 = vsel %vm7896, %v7760, %v7969
      %v7971 = vsel %vm7898, %v7763, %v7970
      %v7972 = vsel %vm7900, %v7766, %v7971
      %v7973 = vsel %vm7902, %v7769, %v7972
      %v7974 = vsel %vm7890, %v7775, %v7772
      %v7975 = vsel %vm7892, %v7778, %v7974
      %v7976 = vsel %vm7894, %v7781, %v7975
      %v7977 = vsel %vm7896, %v7784, %v7976
      %v7978 = vsel %vm7898, %v7787, %v7977
      %v7979 = vsel %vm7900, %v7790, %v7978
      %v7980 = vsel %vm7902, %v7793, %v7979
      %v7981 = vsel %vm7890, %v7799, %v7796
      %v7982 = vsel %vm7892, %v7802, %v7981
      %v7983 = vsel %vm7894, %v7805, %v7982
      %v7984 = vsel %vm7896, %v7808, %v7983
      %v7985 = vsel %vm7898, %v7811, %v7984
      %v7986 = vsel %vm7900, %v7814, %v7985
      %v7987 = vsel %vm7902, %v7817, %v7986
      %v7988 = vsel %vm7890, %v7823, %v7820
      %v7989 = vsel %vm7892, %v7826, %v7988
      %v7990 = vsel %vm7894, %v7829, %v7989
      %v7991 = vsel %vm7896, %v7832, %v7990
      %v7992 = vsel %vm7898, %v7835, %v7991
      %v7993 = vsel %vm7900, %v7838, %v7992
      %v7994 = vsel %vm7902, %v7841, %v7993
      %v7995 = vsel %vm7890, %v7847, %v7844
      %v7996 = vsel %vm7892, %v7850, %v7995
      %v7997 = vsel %vm7894, %v7853, %v7996
      %v7998 = vsel %vm7896, %v7856, %v7997
      %v7999 = vsel %vm7898, %v7859, %v7998
      %v8000 = vsel %vm7900, %v7862, %v7999
      %v8001 = vsel %vm7902, %v7865, %v8000
      %v8002 = vsel %vm7890, %v7871, %v7868
      %v8003 = vsel %vm7892, %v7874, %v8002
      %v8004 = vsel %vm7894, %v7877, %v8003
      %v8005 = vsel %vm7896, %v7880, %v8004
      %v8006 = vsel %vm7898, %v7883, %v8005
      %v8007 = vsel %vm7900, %v7886, %v8006
      %v8008 = vsel %vm7902, %v7889, %v8007
      %vm8025 = vcmask 130048
      %8026 = vst.msk [vmem:[%s200] sm:$0xff] %vm8025, %v7903
      %8027 = vst.msk [vmem:[%s200 + $0x8] sm:$0xff] %vm8025, %v7910
      %8028 = vst.msk [vmem:[%s200 + $0x10] sm:$0xff] %vm8025, %v7917
      %8029 = vst.msk [vmem:[%s200 + $0x18] sm:$0xff] %vm8025, %v7924
      %8030 = vst.msk [vmem:[%s200 + $0x20] sm:$0xff] %vm8025, %v7931
      %8031 = vst.msk [vmem:[%s200 + $0x28] sm:$0xff] %vm8025, %v7938
      %8032 = vst.msk [vmem:[%s200 + $0x30] sm:$0xff] %vm8025, %v7945
      %8033 = vst.msk [vmem:[%s200 + $0x38] sm:$0xff] %vm8025, %v7952
      %8034 = vst.msk [vmem:[%s200 + $0x40] sm:$0xff] %vm8025, %v7959
      %8035 = vst.msk [vmem:[%s200 + $0x48] sm:$0xff] %vm8025, %v7966
      %8036 = vst.msk [vmem:[%s200 + $0x50] sm:$0xff] %vm8025, %v7973
      %8037 = vst.msk [vmem:[%s200 + $0x58] sm:$0xff] %vm8025, %v7980
      %8038 = vst.msk [vmem:[%s200 + $0x60] sm:$0xff] %vm8025, %v7987
      %8039 = vst.msk [vmem:[%s200 + $0x68] sm:$0xff] %vm8025, %v7994
      %8040 = vst.msk [vmem:[%s200 + $0x70] sm:$0xff] %vm8025, %v8001
      %8041 = vst.msk [vmem:[%s200 + $0x78] sm:$0xff] %vm8025, %v8008
      %s8042 = smul.u32 16, %s14
      %p8043 = scmp.lt.s32.totalorder %s8042, 31
      %s8044 = scalar_select %p8043, %s8042, 31
      %s8045 = smul.addr %s8044, 8
      %s8046 = scalar_lea.vmem %s3, %s8045
      // Predicated region
      $region33: #{tpu_custom_call.1} parent=31 // pred_check
        %p8047 = pneg %p105
      $region34: #{tpu_custom_call.1} parent=31 // pred_check_branch
        %8049 = sbr.rel (%p8047) target = $region36
      $region35: #{tpu_custom_call.1} parent=31 // pred_region
        %s8050 = smul.u32 16, %s14
      $region36: #{tpu_custom_call.1} parent=31 // pred_fallthru
        _
    $region32: #{tpu_custom_call.1} parent=5 // pred_fallthru
      _
    %p8051 = scmp.le.s32.totalorder 2, %s9
    // Predicated region
    $region37: #{tpu_custom_call.1} parent=5 // pred_check
      %p8052 = pneg %p8051
    $region38: #{tpu_custom_call.1} parent=5 // pred_check_branch
      %8054 = sbr.rel (%p8052) target = $region40
    $region39: #{tpu_custom_call.1} parent=5 // pred_region
      %s8055 = ssub.s32 %s9, 2
      // Predicated region
      $region41: #{tpu_custom_call.1} parent=39 // pred_check
        %p8056 = pneg %p111
      $region42: #{tpu_custom_call.1} parent=39 // pred_check_branch
        %8058 = sbr.rel (%p8056) target = $region44
      $region43: #{tpu_custom_call.1} parent=39 // pred_region
        %s8059 = smul.u32 16, %s15
        %p8060 = scmp.lt.s32.totalorder %s8059, 31
        %s8061 = scalar_select %p8060, %s8059, 31
        %s8062 = smul.addr %s8061, 8
        %s8063 = scalar_lea.vmem %s3, %s8062
      $region44: #{tpu_custom_call.1} parent=39 // pred_fallthru
        _
    $region40: #{tpu_custom_call.1} parent=5 // pred_fallthru
      _
  $region6: #{tpu_custom_call.1} parent=0 // loop_footer
    %s13 = sadd.s32 1, %s9
  $region7: #{tpu_custom_call.1} parent=0 // loop_footer_branch
    %8 = sbr.rel target = $region3
  $region8: #{tpu_custom_call.1} parent=0 // loop_exit
    _

</llo_original>
